<compile_context>
chip_gen: v7x
topology: tpu7x:2x2x1
jax: 0.10.0
libtpu: 0.0.40
codegen_flags: <defaults>
</compile_context>

<pallas_src>
import math

import jax
import jax.numpy as jnp
import numpy as np
from jax.experimental import pallas as pl
from jax.experimental.pallas import tpu as pltpu

# ----------------------------- small config -----------------------------
B = 2            # batch
H = 4            # num_attention_heads
HIDDEN = 32      # hidden_size
DH = HIDDEN // H                 # head_dim = 8
DPROJ_TOTAL = 16                 # config.attn_down_proj_dim
DLOW = DPROJ_TOTAL // H          # per-head down-proj dim = 4
S = 128          # max_position_embeddings == sequence length here
K = 63           # causal conv kernel size (63, 1)
NUM_DEEP = 2     # num_deep_cnn_layers
INNER = 1        # inner_channel (depthwise per head when == 1)
EPS = 1e-5

HPS = 2          # heads folded per grid step  ->  grid = (H // HPS,) = (2,)

# TODO(synk): base_model decoder layers, embed_tokens, lm_head and the
# training KD/MSE losses use external LLaMA weights and are not reproduced.
# TODO(synk): the exact score scaling used inside the (external) decoder layer
# is unknown; 1/sqrt(DLOW) is used for the low-rank scores.
# TODO(synk): CausalConv2d's class body is not in the spec; left-only zero
# padding of K-1 along the query axis (the standard causal conv) is assumed.


def _ln(x, g, b):
    mu = jnp.mean(x, axis=-1, keepdims=True)
    var = jnp.mean((x - mu) ** 2, axis=-1, keepdims=True)
    return (x - mu) * jax.lax.rsqrt(var + EPS) * g + b


def lorcnn_kernel(q_ref, k_ref, m_ref, ln1g_ref, ln1b_ref,
                  toe_ref, convb_ref, ln2g_ref, ln2b_ref,
                  wdec_ref, decb_ref,
                  pred_ref, scale_ref,
                  xcat_ref):
    g = pl.program_id(0)

    m = m_ref[...]                                    # (DH, DH), scale folded in
    ln1g = ln1g_ref[...]                              # (1, S)
    ln1b = ln1b_ref[...]
    ln2g = ln2g_ref[...]
    ln2b = ln2b_ref[...]
    decb = decb_ref[0, 0]
    # Hoisted once per grid step (JAX does not CSE broadcast_in_dim):
    # w[k] replicated along lanes, keys along sublanes.
    wdec_b = jnp.broadcast_to(wdec_ref[...], (S, S))  # (S, S)

    for hh in range(HPS):
        head = g * HPS + hh                           # true global head index

        # fused low-rank scores  s = q @ (Wq^T Wk / sqrt(dlow)) @ k^T, then LN1.
        # Both batches' queries are stacked along rows -> one (B*S, DH) matmul.
        qh = q_ref[hh]                                # (B*S, DH)
        kh = k_ref[hh]                                # (B*S, DH)
        qm = jnp.dot(qh, m, preferred_element_type=jnp.float32)       # (B*S, DH)
        for b in range(B):
            s = jax.lax.dot_general(
                qm[b * S:(b + 1) * S], kh[b * S:(b + 1) * S],
                (((1,), (1,)), ((), ())),
                preferred_element_type=jnp.float32)   # (S, S)
            # LN1 results written straight into lane-aligned slots (no concat).
            xcat_ref[:, b * S:(b + 1) * S] = _ln(s, ln1g, ln1b)

        # [causal depthwise conv (banded-Toeplitz matmul) -> ReLU] x NUM_DEEP
        # f32 throughout (the bf16 path failed the numerics check).
        x = xcat_ref[...]                             # (S, B*S) f32
        for l in range(NUM_DEEP):
            t = toe_ref[l, hh]                        # (S, S) f32 causal band
            y = jnp.dot(t, x, preferred_element_type=jnp.float32)     # (S, B*S)
            x = jnp.maximum(y + convb_ref[l, head], 0.0)

        # final LN + pred writeback (bf16 store only) + dec scaler (lane-dense)
        rows = []
        for b in range(B):
            xb = _ln(x[:, b * S:(b + 1) * S], ln2g, ln2b)             # (S, S) f32
            pred_ref[b, hh] = xb.astype(jnp.bfloat16)
            # sc[q] = sum_k xb[q, k] * w[k]; computed on xb^T so the result has
            # queries along lanes (unmasked, lane-dense store).
            rows.append(jnp.sum(xb.T * wdec_b, axis=0, keepdims=True))  # (1, S)
        scale_ref[hh] = jnp.concatenate(rows, axis=0) + decb            # (B, S)


def lorcnn_predictor(q, k, m, ln1g, ln1b, toe, convb, ln2g, ln2b,
                     wdec_col, decb):
    # Layout plumbing outside the kernel: heads major, both batches stacked
    # along the row (sublane) axis so q@M is a single matmul per head.
    q_h = jnp.transpose(q, (1, 0, 2, 3)).reshape(H, B * S, DH)
    k_h = jnp.transpose(k, (1, 0, 2, 3)).reshape(H, B * S, DH)

    grid_spec = pltpu.PrefetchScalarGridSpec(
        num_scalar_prefetch=0,
        grid=(H // HPS,),
        in_specs=[
            pl.BlockSpec((HPS, B * S, DH), lambda h: (h, 0, 0)),        # q
            pl.BlockSpec((HPS, B * S, DH), lambda h: (h, 0, 0)),        # k
            pl.BlockSpec((DH, DH), lambda h: (0, 0)),                   # M = Wq^T Wk / sqrt(d)
            pl.BlockSpec((1, S), lambda h: (0, 0)),                     # ln1 gamma
            pl.BlockSpec((1, S), lambda h: (0, 0)),                     # ln1 beta
            pl.BlockSpec((NUM_DEEP, HPS, S, S), lambda h: (0, h, 0, 0)),# toeplitz bank (f32)
            pl.BlockSpec(memory_space=pltpu.MemorySpace.SMEM),          # conv bias (NUM_DEEP, H)
            pl.BlockSpec((1, S), lambda h: (0, 0)),                     # ln2 gamma
            pl.BlockSpec((1, S), lambda h: (0, 0)),                     # ln2 beta
            pl.BlockSpec((S, 1), lambda h: (0, 0)),                     # dec scaler W^T
            pl.BlockSpec(memory_space=pltpu.MemorySpace.SMEM),          # dec scaler bias (1,1)
        ],
        out_specs=[
            pl.BlockSpec((B, HPS, S, S), lambda h: (0, h, 0, 0)),       # predicted scores (bf16)
            pl.BlockSpec((HPS, B, S), lambda h: (h, 0, 0)),             # dec scaler (lane-dense)
        ],
        scratch_shapes=[pltpu.VMEM((S, B * S), jnp.float32)],           # LN1 assembly
    )
    pred, scale_hbs = pl.pallas_call(
        lorcnn_kernel,
        out_shape=(jax.ShapeDtypeStruct((B, H, S, S), jnp.bfloat16),
                   jax.ShapeDtypeStruct((H, B, S), jnp.float32)),
        grid_spec=grid_spec,
        compiler_params=pltpu.CompilerParams(
            dimension_semantics=("parallel",)),
        cost_estimate=pl.CostEstimate(flops=140_000_000,
                                      transcendentals=4096,
                                      bytes_accessed=850_000),
    )(q_h, k_h, m, ln1g, ln1b, toe, convb, ln2g, ln2b, wdec_col, decb)
    # tiny layout plumbing back to (B, H, S, 1)
    scale = jnp.transpose(scale_hbs, (1, 0, 2))[..., None]
    return pred, scale


lorcnn_predictor = jax.jit(lorcnn_predictor)


# ---------------- parameter setup glue (plain JAX, outside kernel) ----------
def build_toeplitz(conv_w):
    """conv_w: (NUM_DEEP, H, K) taps -> (NUM_DEEP, H, S, S) causal band matrices.

    out[t] = sum_k w[k] * x[t + k - (K-1)]   (PyTorch cross-correlation with
    left-only zero padding of K-1, i.e. causal along the query axis).
    """
    t = jnp.arange(S)[:, None]
    tp = jnp.arange(S)[None, :]
    d = t - tp                                   # query index minus key-row index
    widx = (K - 1) - d
    valid = (d >= 0) & (d < K)
    widx_c = jnp.clip(widx, 0, K - 1)
    toe = conv_w[:, :, widx_c]                   # (NUM_DEEP, H, S, S)
    return jnp.where(valid[None, None], toe, 0.0)


def reference(q, k, wq_t, wk_t, ln1g, ln1b, conv_w, conv_b, ln2g, ln2b,
              wdec_t, dec_b):
    """Pure-JAX f32 reference with an explicit shift-and-accumulate causal conv."""
    ql = jnp.einsum("bhsd,de->bhse", q, wq_t)
    kl = jnp.einsum("bhsd,de->bhse", k, wk_t)
    s = jnp.einsum("bhqe,bhke->bhqk", ql, kl) * (1.0 / math.sqrt(DLOW))

    def ln(x, g, b):
        mu = x.mean(-1, keepdims=True)
        var = ((x - mu) ** 2).mean(-1, keepdims=True)
        return (x - mu) / jnp.sqrt(var + EPS) * g + b

    x = ln(s, ln1g, ln1b)
    for l in range(NUM_DEEP):
        xp = jnp.pad(x, ((0, 0), (0, 0), (K - 1, 0), (0, 0)))
        out = jnp.zeros_like(x)
        for kk in range(K):
            out = out + conv_w[l][:, kk][None, :, None, None] * xp[:, :, kk:kk + S, :]
        x = jnp.maximum(out + conv_b[l][None, :, None, None], 0.0)
    x = ln(x, ln2g, ln2b)
    sc = jnp.einsum("bhqk,ko->bhqo", x, wdec_t) + dec_b[0]
    return x, sc


if __name__ == "__main__":
    key = jax.random.PRNGKey(0)
    keys = jax.random.split(key, 12)

    # inputs: per-head q / k states fed to the adapter.
    q = jax.random.normal(keys[0], (B, H, S, DH), jnp.float32)
    k = jax.random.normal(keys[1], (B, H, S, DH), jnp.float32)

    # deterministic synthetic parameters (shapes match module __init__)
    wq_pt = 0.3 * jax.random.normal(keys[2], (DLOW, DH), jnp.float32)     # Linear(DH, DLOW)
    wk_pt = 0.3 * jax.random.normal(keys[3], (DLOW, DH), jnp.float32)
    ln1g = 1.0 + 0.1 * jax.random.normal(keys[4], (S,), jnp.float32)      # LayerNorm(max_pos)
    ln1b = 0.1 * jax.random.normal(keys[5], (S,), jnp.float32)
    conv_w = jax.random.normal(keys[6], (NUM_DEEP, H, K), jnp.float32) / math.sqrt(K)
    conv_b = 0.1 * jax.random.normal(keys[7], (NUM_DEEP, H), jnp.float32)
    ln2g = 1.0 + 0.1 * jax.random.normal(keys[8], (S,), jnp.float32)
    ln2b = 0.1 * jax.random.normal(keys[9], (S,), jnp.float32)
    wdec_pt = jax.random.normal(keys[10], (1, S), jnp.float32) / math.sqrt(S)   # Linear(max_pos, 1)
    dec_b = 0.1 * jax.random.normal(keys[11], (1,), jnp.float32)

    # kernel-layout parameters
    wq_t = wq_pt.T                         # (DH, DLOW)
    wk_t = wk_pt.T
    m = jnp.dot(wq_t, wk_t.T) * (1.0 / math.sqrt(DLOW))   # fused (DH, DH) low-rank proj
    toe = build_toeplitz(conv_w)           # (NUM_DEEP, H, S, S) f32 (correctness)
    wdec_col = wdec_pt.T                   # (S, 1)
    decb_k = dec_b.reshape(1, 1)
    ln1g_k, ln1b_k = ln1g.reshape(1, S), ln1b.reshape(1, S)
    ln2g_k, ln2b_k = ln2g.reshape(1, S), ln2b.reshape(1, S)

    pred, scl = lorcnn_predictor(q, k, m, ln1g_k, ln1b_k, toe, conv_b,
                                 ln2g_k, ln2b_k, wdec_col, decb_k)
    pred = jax.block_until_ready(pred)
    scl = jax.block_until_ready(scl)

    pred_r, scl_r = reference(q, k, wq_t, wk_t, ln1g, ln1b, conv_w, conv_b,
                              ln2g, ln2b, wdec_pt.T, dec_b)
    # pred is stored in bf16 (final cast only); everything upstream is f32.
    np.testing.assert_allclose(np.asarray(pred, dtype=np.float32),
                               np.asarray(pred_r),
                               atol=2e-2, rtol=2e-2)
    np.testing.assert_allclose(np.asarray(scl), np.asarray(scl_r),
                               atol=2e-3, rtol=2e-3)
    print("KERNEL_OK")
</pallas_src>

<mosaic_0001>
module attributes {stable_mosaic.version = 11 : i64} {
  func.func @lorcnn_kernel(%arg0: i32, %arg1: memref<2x256x8xf32, #tpu.memory_space<vmem>>, %arg2: memref<2x256x8xf32, #tpu.memory_space<vmem>>, %arg3: memref<8x8xf32, #tpu.memory_space<vmem>>, %arg4: memref<1x128xf32, #tpu.memory_space<vmem>>, %arg5: memref<1x128xf32, #tpu.memory_space<vmem>>, %arg6: memref<2x2x128x128xf32, #tpu.memory_space<vmem>>, %arg7: memref<2x4xf32, #tpu.memory_space<smem>>, %arg8: memref<1x128xf32, #tpu.memory_space<vmem>>, %arg9: memref<1x128xf32, #tpu.memory_space<vmem>>, %arg10: memref<128x1xf32, #tpu.memory_space<vmem>>, %arg11: memref<1x1xf32, #tpu.memory_space<smem>>, %arg12: memref<2x2x128x128xbf16, #tpu.memory_space<vmem>>, %arg13: memref<2x2x128xf32, #tpu.memory_space<vmem>>, %arg14: memref<128x256xf32, #tpu.memory_space<vmem>>) attributes {dimension_semantics = [#tpu.dimension_semantics<parallel>], iteration_bounds = array<i64: 2>, scalar_prefetch = 0 : i64, scratch_operands = 1 : i64, tpu.core_type = #tpu.core_type<tc>, window_params = [{transform_indices = @transform_0, window_bounds = array<i64: 2, 256, 8>}, {transform_indices = @transform_1, window_bounds = array<i64: 2, 256, 8>}, {pipeline_mode = #tpu.pipeline_mode<synchronous>, transform_indices = @transform_2, window_bounds = array<i64: 8, 8>}, {pipeline_mode = #tpu.pipeline_mode<synchronous>, transform_indices = @transform_3, window_bounds = array<i64: 1, 128>}, {pipeline_mode = #tpu.pipeline_mode<synchronous>, transform_indices = @transform_4, window_bounds = array<i64: 1, 128>}, {transform_indices = @transform_5, window_bounds = array<i64: 2, 2, 128, 128>}, {transform_indices = @transform_6, window_bounds = array<i64: 2, 4>}, {pipeline_mode = #tpu.pipeline_mode<synchronous>, transform_indices = @transform_7, window_bounds = array<i64: 1, 128>}, {pipeline_mode = #tpu.pipeline_mode<synchronous>, transform_indices = @transform_8, window_bounds = array<i64: 1, 128>}, {pipeline_mode = #tpu.pipeline_mode<synchronous>, transform_indices = @transform_9, window_bounds = array<i64: 128, 1>}, {transform_indices = @transform_10, window_bounds = array<i64: 1, 1>}, {transform_indices = @transform_11, window_bounds = array<i64: 2, 2, 128, 128>}, {transform_indices = @transform_12, window_bounds = array<i64: 2, 2, 128>}]} {
    %c0 = arith.constant 0 : index
    %c0_0 = arith.constant 0 : index
    %0 = vector.load %arg3[%c0, %c0_0] : memref<8x8xf32, #tpu.memory_space<vmem>>, vector<8x8xf32>
    %c0_1 = arith.constant 0 : index
    %c0_2 = arith.constant 0 : index
    %1 = vector.load %arg4[%c0_1, %c0_2] : memref<1x128xf32, #tpu.memory_space<vmem>>, vector<1x128xf32>
    %c0_3 = arith.constant 0 : index
    %c0_4 = arith.constant 0 : index
    %2 = vector.load %arg5[%c0_3, %c0_4] : memref<1x128xf32, #tpu.memory_space<vmem>>, vector<1x128xf32>
    %c0_5 = arith.constant 0 : index
    %c0_6 = arith.constant 0 : index
    %3 = vector.load %arg8[%c0_5, %c0_6] : memref<1x128xf32, #tpu.memory_space<vmem>>, vector<1x128xf32>
    %c0_7 = arith.constant 0 : index
    %c0_8 = arith.constant 0 : index
    %4 = vector.load %arg9[%c0_7, %c0_8] : memref<1x128xf32, #tpu.memory_space<vmem>>, vector<1x128xf32>
    %c0_9 = arith.constant 0 : index
    %c0_10 = arith.constant 0 : index
    %5 = memref.load %arg11[%c0_9, %c0_10] : memref<1x1xf32, #tpu.memory_space<smem>>
    %c0_11 = arith.constant 0 : index
    %c0_12 = arith.constant 0 : index
    %6 = vector.load %arg10[%c0_11, %c0_12] : memref<128x1xf32, #tpu.memory_space<vmem>>, vector<128x1xf32>
    %7 = vector.shape_cast %6 : vector<128x1xf32> to vector<128x1xf32>
    %8 = vector.broadcast %7 : vector<128x1xf32> to vector<128x128xf32>
    %c2_i32 = arith.constant 2 : i32
    %9 = arith.muli %arg0, %c2_i32 : i32
    %c0_i32 = arith.constant 0 : i32
    %10 = arith.addi %9, %c0_i32 : i32
    %c0_13 = arith.constant 0 : index
    %c0_14 = arith.constant 0 : index
    %c0_15 = arith.constant 0 : index
    %11 = vector.load %arg1[%c0_13, %c0_14, %c0_15] : memref<2x256x8xf32, #tpu.memory_space<vmem>>, vector<1x256x8xf32>
    %12 = vector.shape_cast %11 : vector<1x256x8xf32> to vector<256x8xf32>
    %c0_16 = arith.constant 0 : index
    %c0_17 = arith.constant 0 : index
    %c0_18 = arith.constant 0 : index
    %13 = vector.load %arg2[%c0_16, %c0_17, %c0_18] : memref<2x256x8xf32, #tpu.memory_space<vmem>>, vector<1x256x8xf32>
    %14 = vector.shape_cast %13 : vector<1x256x8xf32> to vector<256x8xf32>
    %cst = arith.constant dense<0.000000e+00> : vector<256x8xf32>
    %15 = tpu.matmul %12, %0, %cst {dimension_numbers = #tpu.dot_dimension_numbers<[1], [0], [0], [1], [0, 0, 1, 1], [], []>} : vector<256x8xf32>, vector<8x8xf32>, vector<256x8xf32> -> vector<256x8xf32>
    %16 = vector.extract_strided_slice %15 {offsets = [0, 0], sizes = [128, 8], strides = [1, 1]} : vector<256x8xf32> to vector<128x8xf32>
    %17 = vector.extract_strided_slice %14 {offsets = [0, 0], sizes = [128, 8], strides = [1, 1]} : vector<256x8xf32> to vector<128x8xf32>
    %cst_19 = arith.constant dense<0.000000e+00> : vector<128x128xf32>
    %18 = tpu.matmul %16, %17, %cst_19 {dimension_numbers = #tpu.dot_dimension_numbers<[1], [1], [0], [0], [0, 0, 1, 0], [], []>} : vector<128x8xf32>, vector<128x8xf32>, vector<128x128xf32> -> vector<128x128xf32>
    %cst_20 = arith.constant dense<0.000000e+00> : vector<128xf32>
    %19 = vector.multi_reduction <add>, %18, %cst_20 [1] : vector<128x128xf32> to vector<128xf32>
    %20 = vector.shape_cast %19 : vector<128xf32> to vector<128x1xf32>
    %cst_21 = arith.constant 1.280000e+02 : f32
    %21 = vector.broadcast %cst_21 : f32 to vector<128x1xf32>
    %22 = arith.divf %20, %21 : vector<128x1xf32>
    %23 = vector.broadcast %22 : vector<128x1xf32> to vector<128x128xf32>
    %24 = arith.subf %18, %23 : vector<128x128xf32>
    %25 = arith.mulf %24, %24 : vector<128x128xf32>
    %cst_22 = arith.constant dense<0.000000e+00> : vector<128xf32>
    %26 = vector.multi_reduction <add>, %25, %cst_22 [1] : vector<128x128xf32> to vector<128xf32>
    %27 = vector.shape_cast %26 : vector<128xf32> to vector<128x1xf32>
    %cst_23 = arith.constant 1.280000e+02 : f32
    %28 = vector.broadcast %cst_23 : f32 to vector<128x1xf32>
    %29 = arith.divf %27, %28 : vector<128x1xf32>
    %30 = vector.broadcast %22 : vector<128x1xf32> to vector<128x128xf32>
    %31 = arith.subf %18, %30 : vector<128x128xf32>
    %cst_24 = arith.constant 9.99999974E-6 : f32
    %32 = vector.broadcast %cst_24 : f32 to vector<128x1xf32>
    %33 = arith.addf %29, %32 : vector<128x1xf32>
    %34 = math.rsqrt %33 : vector<128x1xf32>
    %35 = vector.broadcast %34 : vector<128x1xf32> to vector<128x128xf32>
    %36 = arith.mulf %31, %35 : vector<128x128xf32>
    %37 = vector.broadcast %1 : vector<1x128xf32> to vector<128x128xf32>
    %38 = arith.mulf %36, %37 : vector<128x128xf32>
    %39 = vector.broadcast %2 : vector<1x128xf32> to vector<128x128xf32>
    %40 = arith.addf %38, %39 : vector<128x128xf32>
    %c0_25 = arith.constant 0 : index
    %c0_26 = arith.constant 0 : index
    %41 = vector.load %arg14[%c0_25, %c0_26] : memref<128x256xf32, #tpu.memory_space<vmem>>, vector<128x128xf32>
    tpu.vector_store %arg14[%c0_25, %c0_26], %40 {strides = array<i32>} : memref<128x256xf32, #tpu.memory_space<vmem>>, vector<128x128xf32>,
    %42 = vector.extract_strided_slice %15 {offsets = [128, 0], sizes = [128, 8], strides = [1, 1]} : vector<256x8xf32> to vector<128x8xf32>
    %43 = vector.extract_strided_slice %14 {offsets = [128, 0], sizes = [128, 8], strides = [1, 1]} : vector<256x8xf32> to vector<128x8xf32>
    %cst_27 = arith.constant dense<0.000000e+00> : vector<128x128xf32>
    %44 = tpu.matmul %42, %43, %cst_27 {dimension_numbers = #tpu.dot_dimension_numbers<[1], [1], [0], [0], [0, 0, 1, 0], [], []>} : vector<128x8xf32>, vector<128x8xf32>, vector<128x128xf32> -> vector<128x128xf32>
    %cst_28 = arith.constant dense<0.000000e+00> : vector<128xf32>
    %45 = vector.multi_reduction <add>, %44, %cst_28 [1] : vector<128x128xf32> to vector<128xf32>
    %46 = vector.shape_cast %45 : vector<128xf32> to vector<128x1xf32>
    %cst_29 = arith.constant 1.280000e+02 : f32
    %47 = vector.broadcast %cst_29 : f32 to vector<128x1xf32>
    %48 = arith.divf %46, %47 : vector<128x1xf32>
    %49 = vector.broadcast %48 : vector<128x1xf32> to vector<128x128xf32>
    %50 = arith.subf %44, %49 : vector<128x128xf32>
    %51 = arith.mulf %50, %50 : vector<128x128xf32>
    %cst_30 = arith.constant dense<0.000000e+00> : vector<128xf32>
    %52 = vector.multi_reduction <add>, %51, %cst_30 [1] : vector<128x128xf32> to vector<128xf32>
    %53 = vector.shape_cast %52 : vector<128xf32> to vector<128x1xf32>
    %cst_31 = arith.constant 1.280000e+02 : f32
    %54 = vector.broadcast %cst_31 : f32 to vector<128x1xf32>
    %55 = arith.divf %53, %54 : vector<128x1xf32>
    %56 = vector.broadcast %48 : vector<128x1xf32> to vector<128x128xf32>
    %57 = arith.subf %44, %56 : vector<128x128xf32>
    %cst_32 = arith.constant 9.99999974E-6 : f32
    %58 = vector.broadcast %cst_32 : f32 to vector<128x1xf32>
    %59 = arith.addf %55, %58 : vector<128x1xf32>
    %60 = math.rsqrt %59 : vector<128x1xf32>
    %61 = vector.broadcast %60 : vector<128x1xf32> to vector<128x128xf32>
    %62 = arith.mulf %57, %61 : vector<128x128xf32>
    %63 = vector.broadcast %1 : vector<1x128xf32> to vector<128x128xf32>
    %64 = arith.mulf %62, %63 : vector<128x128xf32>
    %65 = vector.broadcast %2 : vector<1x128xf32> to vector<128x128xf32>
    %66 = arith.addf %64, %65 : vector<128x128xf32>
    %c0_33 = arith.constant 0 : index
    %c128 = arith.constant 128 : index
    %67 = vector.load %arg14[%c0_33, %c128] : memref<128x256xf32, #tpu.memory_space<vmem>>, vector<128x128xf32>
    tpu.vector_store %arg14[%c0_33, %c128], %66 {strides = array<i32>} : memref<128x256xf32, #tpu.memory_space<vmem>>, vector<128x128xf32>,
    %c0_34 = arith.constant 0 : index
    %c0_35 = arith.constant 0 : index
    %68 = vector.load %arg14[%c0_34, %c0_35] : memref<128x256xf32, #tpu.memory_space<vmem>>, vector<128x256xf32>
    %c0_36 = arith.constant 0 : index
    %c0_37 = arith.constant 0 : index
    %c0_38 = arith.constant 0 : index
    %c0_39 = arith.constant 0 : index
    %69 = vector.load %arg6[%c0_36, %c0_37, %c0_38, %c0_39] : memref<2x2x128x128xf32, #tpu.memory_space<vmem>>, vector<1x1x128x128xf32>
    %70 = vector.shape_cast %69 : vector<1x1x128x128xf32> to vector<128x128xf32>
    %cst_40 = arith.constant dense<0.000000e+00> : vector<128x256xf32>
    %71 = tpu.matmul %70, %68, %cst_40 {dimension_numbers = #tpu.dot_dimension_numbers<[1], [0], [0], [1], [0, 0, 1, 1], [], []>} : vector<128x128xf32>, vector<128x256xf32>, vector<128x256xf32> -> vector<128x256xf32>
    %c0_41 = arith.constant 0 : index
    %72 = arith.index_cast %10 : i32 to index
    %73 = memref.load %arg7[%c0_41, %72] : memref<2x4xf32, #tpu.memory_space<smem>>
    %74 = vector.broadcast %73 : f32 to vector<128x256xf32>
    %75 = arith.addf %71, %74 : vector<128x256xf32>
    %cst_42 = arith.constant 0.000000e+00 : f32
    %76 = vector.broadcast %cst_42 : f32 to vector<128x256xf32>
    %77 = arith.maximumf %75, %76 : vector<128x256xf32>
    %c1 = arith.constant 1 : index
    %c0_43 = arith.constant 0 : index
    %c0_44 = arith.constant 0 : index
    %c0_45 = arith.constant 0 : index
    %78 = vector.load %arg6[%c1, %c0_43, %c0_44, %c0_45] : memref<2x2x128x128xf32, #tpu.memory_space<vmem>>, vector<1x1x128x128xf32>
    %79 = vector.shape_cast %78 : vector<1x1x128x128xf32> to vector<128x128xf32>
    %cst_46 = arith.constant dense<0.000000e+00> : vector<128x256xf32>
    %80 = tpu.matmul %79, %77, %cst_46 {dimension_numbers = #tpu.dot_dimension_numbers<[1], [0], [0], [1], [0, 0, 1, 1], [], []>} : vector<128x128xf32>, vector<128x256xf32>, vector<128x256xf32> -> vector<128x256xf32>
    %c1_47 = arith.constant 1 : index
    %81 = arith.index_cast %10 : i32 to index
    %82 = memref.load %arg7[%c1_47, %81] : memref<2x4xf32, #tpu.memory_space<smem>>
    %83 = vector.broadcast %82 : f32 to vector<128x256xf32>
    %84 = arith.addf %80, %83 : vector<128x256xf32>
    %cst_48 = arith.constant 0.000000e+00 : f32
    %85 = vector.broadcast %cst_48 : f32 to vector<128x256xf32>
    %86 = arith.maximumf %84, %85 : vector<128x256xf32>
    %87 = vector.extract_strided_slice %86 {offsets = [0, 0], sizes = [128, 128], strides = [1, 1]} : vector<128x256xf32> to vector<128x128xf32>
    %cst_49 = arith.constant dense<0.000000e+00> : vector<128xf32>
    %88 = vector.multi_reduction <add>, %87, %cst_49 [1] : vector<128x128xf32> to vector<128xf32>
    %89 = vector.shape_cast %88 : vector<128xf32> to vector<128x1xf32>
    %cst_50 = arith.constant 1.280000e+02 : f32
    %90 = vector.broadcast %cst_50 : f32 to vector<128x1xf32>
    %91 = arith.divf %89, %90 : vector<128x1xf32>
    %92 = vector.broadcast %91 : vector<128x1xf32> to vector<128x128xf32>
    %93 = arith.subf %87, %92 : vector<128x128xf32>
    %94 = arith.mulf %93, %93 : vector<128x128xf32>
    %cst_51 = arith.constant dense<0.000000e+00> : vector<128xf32>
    %95 = vector.multi_reduction <add>, %94, %cst_51 [1] : vector<128x128xf32> to vector<128xf32>
    %96 = vector.shape_cast %95 : vector<128xf32> to vector<128x1xf32>
    %cst_52 = arith.constant 1.280000e+02 : f32
    %97 = vector.broadcast %cst_52 : f32 to vector<128x1xf32>
    %98 = arith.divf %96, %97 : vector<128x1xf32>
    %99 = vector.broadcast %91 : vector<128x1xf32> to vector<128x128xf32>
    %100 = arith.subf %87, %99 : vector<128x128xf32>
    %cst_53 = arith.constant 9.99999974E-6 : f32
    %101 = vector.broadcast %cst_53 : f32 to vector<128x1xf32>
    %102 = arith.addf %98, %101 : vector<128x1xf32>
    %103 = math.rsqrt %102 : vector<128x1xf32>
    %104 = vector.broadcast %103 : vector<128x1xf32> to vector<128x128xf32>
    %105 = arith.mulf %100, %104 : vector<128x128xf32>
    %106 = vector.broadcast %3 : vector<1x128xf32> to vector<128x128xf32>
    %107 = arith.mulf %105, %106 : vector<128x128xf32>
    %108 = vector.broadcast %4 : vector<1x128xf32> to vector<128x128xf32>
    %109 = arith.addf %107, %108 : vector<128x128xf32>
    %110 = arith.truncf %109 : vector<128x128xf32> to vector<128x128xbf16>
    %c0_54 = arith.constant 0 : index
    %c0_55 = arith.constant 0 : index
    %c0_56 = arith.constant 0 : index
    %c0_57 = arith.constant 0 : index
    %111 = vector.load %arg12[%c0_54, %c0_55, %c0_56, %c0_57] : memref<2x2x128x128xbf16, #tpu.memory_space<vmem>>, vector<1x1x128x128xbf16>
    %112 = vector.shape_cast %111 : vector<1x1x128x128xbf16> to vector<128x128xbf16>
    %113 = vector.shape_cast %110 : vector<128x128xbf16> to vector<1x1x128x128xbf16>
    tpu.vector_store %arg12[%c0_54, %c0_55, %c0_56, %c0_57], %113 {strides = array<i32>} : memref<2x2x128x128xbf16, #tpu.memory_space<vmem>>, vector<1x1x128x128xbf16>,
    %114 = tpu.transpose %109, [1, 0] : vector<128x128xf32> -> vector<128x128xf32>
    %115 = arith.mulf %114, %8 : vector<128x128xf32>
    %cst_58 = arith.constant dense<0.000000e+00> : vector<128xf32>
    %116 = vector.multi_reduction <add>, %115, %cst_58 [0] : vector<128x128xf32> to vector<128xf32>
    %117 = vector.shape_cast %116 : vector<128xf32> to vector<1x128xf32>
    %118 = vector.extract_strided_slice %86 {offsets = [0, 128], sizes = [128, 128], strides = [1, 1]} : vector<128x256xf32> to vector<128x128xf32>
    %cst_59 = arith.constant dense<0.000000e+00> : vector<128xf32>
    %119 = vector.multi_reduction <add>, %118, %cst_59 [1] : vector<128x128xf32> to vector<128xf32>
    %120 = vector.shape_cast %119 : vector<128xf32> to vector<128x1xf32>
    %cst_60 = arith.constant 1.280000e+02 : f32
    %121 = vector.broadcast %cst_60 : f32 to vector<128x1xf32>
    %122 = arith.divf %120, %121 : vector<128x1xf32>
    %123 = vector.broadcast %122 : vector<128x1xf32> to vector<128x128xf32>
    %124 = arith.subf %118, %123 : vector<128x128xf32>
    %125 = arith.mulf %124, %124 : vector<128x128xf32>
    %cst_61 = arith.constant dense<0.000000e+00> : vector<128xf32>
    %126 = vector.multi_reduction <add>, %125, %cst_61 [1] : vector<128x128xf32> to vector<128xf32>
    %127 = vector.shape_cast %126 : vector<128xf32> to vector<128x1xf32>
    %cst_62 = arith.constant 1.280000e+02 : f32
    %128 = vector.broadcast %cst_62 : f32 to vector<128x1xf32>
    %129 = arith.divf %127, %128 : vector<128x1xf32>
    %130 = vector.broadcast %122 : vector<128x1xf32> to vector<128x128xf32>
    %131 = arith.subf %118, %130 : vector<128x128xf32>
    %cst_63 = arith.constant 9.99999974E-6 : f32
    %132 = vector.broadcast %cst_63 : f32 to vector<128x1xf32>
    %133 = arith.addf %129, %132 : vector<128x1xf32>
    %134 = math.rsqrt %133 : vector<128x1xf32>
    %135 = vector.broadcast %134 : vector<128x1xf32> to vector<128x128xf32>
    %136 = arith.mulf %131, %135 : vector<128x128xf32>
    %137 = vector.broadcast %3 : vector<1x128xf32> to vector<128x128xf32>
    %138 = arith.mulf %136, %137 : vector<128x128xf32>
    %139 = vector.broadcast %4 : vector<1x128xf32> to vector<128x128xf32>
    %140 = arith.addf %138, %139 : vector<128x128xf32>
    %141 = arith.truncf %140 : vector<128x128xf32> to vector<128x128xbf16>
    %c1_64 = arith.constant 1 : index
    %c0_65 = arith.constant 0 : index
    %c0_66 = arith.constant 0 : index
    %c0_67 = arith.constant 0 : index
    %142 = vector.load %arg12[%c1_64, %c0_65, %c0_66, %c0_67] : memref<2x2x128x128xbf16, #tpu.memory_space<vmem>>, vector<1x1x128x128xbf16>
    %143 = vector.shape_cast %142 : vector<1x1x128x128xbf16> to vector<128x128xbf16>
    %144 = vector.shape_cast %141 : vector<128x128xbf16> to vector<1x1x128x128xbf16>
    tpu.vector_store %arg12[%c1_64, %c0_65, %c0_66, %c0_67], %144 {strides = array<i32>} : memref<2x2x128x128xbf16, #tpu.memory_space<vmem>>, vector<1x1x128x128xbf16>,
    %145 = tpu.transpose %140, [1, 0] : vector<128x128xf32> -> vector<128x128xf32>
    %146 = arith.mulf %145, %8 : vector<128x128xf32>
    %cst_68 = arith.constant dense<0.000000e+00> : vector<128xf32>
    %147 = vector.multi_reduction <add>, %146, %cst_68 [0] : vector<128x128xf32> to vector<128xf32>
    %148 = vector.shape_cast %147 : vector<128xf32> to vector<1x128xf32>
    %149 = tpu.concatenate %117, %148 in 0 : vector<1x128xf32>, vector<1x128xf32> -> vector<2x128xf32>
    %150 = vector.broadcast %5 : f32 to vector<2x128xf32>
    %151 = arith.addf %149, %150 : vector<2x128xf32>
    %c0_69 = arith.constant 0 : index
    %c0_70 = arith.constant 0 : index
    %c0_71 = arith.constant 0 : index
    %152 = vector.load %arg13[%c0_69, %c0_70, %c0_71] : memref<2x2x128xf32, #tpu.memory_space<vmem>>, vector<1x2x128xf32>
    %153 = vector.shape_cast %152 : vector<1x2x128xf32> to vector<2x128xf32>
    %154 = vector.shape_cast %151 : vector<2x128xf32> to vector<1x2x128xf32>
    tpu.vector_store %arg13[%c0_69, %c0_70, %c0_71], %154 {strides = array<i32>} : memref<2x2x128xf32, #tpu.memory_space<vmem>>, vector<1x2x128xf32>,
    %c2_i32_72 = arith.constant 2 : i32
    %155 = arith.muli %arg0, %c2_i32_72 : i32
    %c1_i32 = arith.constant 1 : i32
    %156 = arith.addi %155, %c1_i32 : i32
    %c1_73 = arith.constant 1 : index
    %c0_74 = arith.constant 0 : index
    %c0_75 = arith.constant 0 : index
    %157 = vector.load %arg1[%c1_73, %c0_74, %c0_75] : memref<2x256x8xf32, #tpu.memory_space<vmem>>, vector<1x256x8xf32>
    %158 = vector.shape_cast %157 : vector<1x256x8xf32> to vector<256x8xf32>
    %c1_76 = arith.constant 1 : index
    %c0_77 = arith.constant 0 : index
    %c0_78 = arith.constant 0 : index
    %159 = vector.load %arg2[%c1_76, %c0_77, %c0_78] : memref<2x256x8xf32, #tpu.memory_space<vmem>>, vector<1x256x8xf32>
    %160 = vector.shape_cast %159 : vector<1x256x8xf32> to vector<256x8xf32>
    %cst_79 = arith.constant dense<0.000000e+00> : vector<256x8xf32>
    %161 = tpu.matmul %158, %0, %cst_79 {dimension_numbers = #tpu.dot_dimension_numbers<[1], [0], [0], [1], [0, 0, 1, 1], [], []>} : vector<256x8xf32>, vector<8x8xf32>, vector<256x8xf32> -> vector<256x8xf32>
    %162 = vector.extract_strided_slice %161 {offsets = [0, 0], sizes = [128, 8], strides = [1, 1]} : vector<256x8xf32> to vector<128x8xf32>
    %163 = vector.extract_strided_slice %160 {offsets = [0, 0], sizes = [128, 8], strides = [1, 1]} : vector<256x8xf32> to vector<128x8xf32>
    %cst_80 = arith.constant dense<0.000000e+00> : vector<128x128xf32>
    %164 = tpu.matmul %162, %163, %cst_80 {dimension_numbers = #tpu.dot_dimension_numbers<[1], [1], [0], [0], [0, 0, 1, 0], [], []>} : vector<128x8xf32>, vector<128x8xf32>, vector<128x128xf32> -> vector<128x128xf32>
    %cst_81 = arith.constant dense<0.000000e+00> : vector<128xf32>
    %165 = vector.multi_reduction <add>, %164, %cst_81 [1] : vector<128x128xf32> to vector<128xf32>
    %166 = vector.shape_cast %165 : vector<128xf32> to vector<128x1xf32>
    %cst_82 = arith.constant 1.280000e+02 : f32
    %167 = vector.broadcast %cst_82 : f32 to vector<128x1xf32>
    %168 = arith.divf %166, %167 : vector<128x1xf32>
    %169 = vector.broadcast %168 : vector<128x1xf32> to vector<128x128xf32>
    %170 = arith.subf %164, %169 : vector<128x128xf32>
    %171 = arith.mulf %170, %170 : vector<128x128xf32>
    %cst_83 = arith.constant dense<0.000000e+00> : vector<128xf32>
    %172 = vector.multi_reduction <add>, %171, %cst_83 [1] : vector<128x128xf32> to vector<128xf32>
    %173 = vector.shape_cast %172 : vector<128xf32> to vector<128x1xf32>
    %cst_84 = arith.constant 1.280000e+02 : f32
    %174 = vector.broadcast %cst_84 : f32 to vector<128x1xf32>
    %175 = arith.divf %173, %174 : vector<128x1xf32>
    %176 = vector.broadcast %168 : vector<128x1xf32> to vector<128x128xf32>
    %177 = arith.subf %164, %176 : vector<128x128xf32>
    %cst_85 = arith.constant 9.99999974E-6 : f32
    %178 = vector.broadcast %cst_85 : f32 to vector<128x1xf32>
    %179 = arith.addf %175, %178 : vector<128x1xf32>
    %180 = math.rsqrt %179 : vector<128x1xf32>
    %181 = vector.broadcast %180 : vector<128x1xf32> to vector<128x128xf32>
    %182 = arith.mulf %177, %181 : vector<128x128xf32>
    %183 = vector.broadcast %1 : vector<1x128xf32> to vector<128x128xf32>
    %184 = arith.mulf %182, %183 : vector<128x128xf32>
    %185 = vector.broadcast %2 : vector<1x128xf32> to vector<128x128xf32>
    %186 = arith.addf %184, %185 : vector<128x128xf32>
    %c0_86 = arith.constant 0 : index
    %c0_87 = arith.constant 0 : index
    %187 = vector.load %arg14[%c0_86, %c0_87] : memref<128x256xf32, #tpu.memory_space<vmem>>, vector<128x128xf32>
    tpu.vector_store %arg14[%c0_86, %c0_87], %186 {strides = array<i32>} : memref<128x256xf32, #tpu.memory_space<vmem>>, vector<128x128xf32>,
    %188 = vector.extract_strided_slice %161 {offsets = [128, 0], sizes = [128, 8], strides = [1, 1]} : vector<256x8xf32> to vector<128x8xf32>
    %189 = vector.extract_strided_slice %160 {offsets = [128, 0], sizes = [128, 8], strides = [1, 1]} : vector<256x8xf32> to vector<128x8xf32>
    %cst_88 = arith.constant dense<0.000000e+00> : vector<128x128xf32>
    %190 = tpu.matmul %188, %189, %cst_88 {dimension_numbers = #tpu.dot_dimension_numbers<[1], [1], [0], [0], [0, 0, 1, 0], [], []>} : vector<128x8xf32>, vector<128x8xf32>, vector<128x128xf32> -> vector<128x128xf32>
    %cst_89 = arith.constant dense<0.000000e+00> : vector<128xf32>
    %191 = vector.multi_reduction <add>, %190, %cst_89 [1] : vector<128x128xf32> to vector<128xf32>
    %192 = vector.shape_cast %191 : vector<128xf32> to vector<128x1xf32>
    %cst_90 = arith.constant 1.280000e+02 : f32
    %193 = vector.broadcast %cst_90 : f32 to vector<128x1xf32>
    %194 = arith.divf %192, %193 : vector<128x1xf32>
    %195 = vector.broadcast %194 : vector<128x1xf32> to vector<128x128xf32>
    %196 = arith.subf %190, %195 : vector<128x128xf32>
    %197 = arith.mulf %196, %196 : vector<128x128xf32>
    %cst_91 = arith.constant dense<0.000000e+00> : vector<128xf32>
    %198 = vector.multi_reduction <add>, %197, %cst_91 [1] : vector<128x128xf32> to vector<128xf32>
    %199 = vector.shape_cast %198 : vector<128xf32> to vector<128x1xf32>
    %cst_92 = arith.constant 1.280000e+02 : f32
    %200 = vector.broadcast %cst_92 : f32 to vector<128x1xf32>
    %201 = arith.divf %199, %200 : vector<128x1xf32>
    %202 = vector.broadcast %194 : vector<128x1xf32> to vector<128x128xf32>
    %203 = arith.subf %190, %202 : vector<128x128xf32>
    %cst_93 = arith.constant 9.99999974E-6 : f32
    %204 = vector.broadcast %cst_93 : f32 to vector<128x1xf32>
    %205 = arith.addf %201, %204 : vector<128x1xf32>
    %206 = math.rsqrt %205 : vector<128x1xf32>
    %207 = vector.broadcast %206 : vector<128x1xf32> to vector<128x128xf32>
    %208 = arith.mulf %203, %207 : vector<128x128xf32>
    %209 = vector.broadcast %1 : vector<1x128xf32> to vector<128x128xf32>
    %210 = arith.mulf %208, %209 : vector<128x128xf32>
    %211 = vector.broadcast %2 : vector<1x128xf32> to vector<128x128xf32>
    %212 = arith.addf %210, %211 : vector<128x128xf32>
    %c0_94 = arith.constant 0 : index
    %c128_95 = arith.constant 128 : index
    %213 = vector.load %arg14[%c0_94, %c128_95] : memref<128x256xf32, #tpu.memory_space<vmem>>, vector<128x128xf32>
    tpu.vector_store %arg14[%c0_94, %c128_95], %212 {strides = array<i32>} : memref<128x256xf32, #tpu.memory_space<vmem>>, vector<128x128xf32>,
    %c0_96 = arith.constant 0 : index
    %c0_97 = arith.constant 0 : index
    %214 = vector.load %arg14[%c0_96, %c0_97] : memref<128x256xf32, #tpu.memory_space<vmem>>, vector<128x256xf32>
    %c0_98 = arith.constant 0 : index
    %c1_99 = arith.constant 1 : index
    %c0_100 = arith.constant 0 : index
    %c0_101 = arith.constant 0 : index
    %215 = vector.load %arg6[%c0_98, %c1_99, %c0_100, %c0_101] : memref<2x2x128x128xf32, #tpu.memory_space<vmem>>, vector<1x1x128x128xf32>
    %216 = vector.shape_cast %215 : vector<1x1x128x128xf32> to vector<128x128xf32>
    %cst_102 = arith.constant dense<0.000000e+00> : vector<128x256xf32>
    %217 = tpu.matmul %216, %214, %cst_102 {dimension_numbers = #tpu.dot_dimension_numbers<[1], [0], [0], [1], [0, 0, 1, 1], [], []>} : vector<128x128xf32>, vector<128x256xf32>, vector<128x256xf32> -> vector<128x256xf32>
    %c0_103 = arith.constant 0 : index
    %218 = arith.index_cast %156 : i32 to index
    %219 = memref.load %arg7[%c0_103, %218] : memref<2x4xf32, #tpu.memory_space<smem>>
    %220 = vector.broadcast %219 : f32 to vector<128x256xf32>
    %221 = arith.addf %217, %220 : vector<128x256xf32>
    %cst_104 = arith.constant 0.000000e+00 : f32
    %222 = vector.broadcast %cst_104 : f32 to vector<128x256xf32>
    %223 = arith.maximumf %221, %222 : vector<128x256xf32>
    %c1_105 = arith.constant 1 : index
    %c1_106 = arith.constant 1 : index
    %c0_107 = arith.constant 0 : index
    %c0_108 = arith.constant 0 : index
    %224 = vector.load %arg6[%c1_105, %c1_106, %c0_107, %c0_108] : memref<2x2x128x128xf32, #tpu.memory_space<vmem>>, vector<1x1x128x128xf32>
    %225 = vector.shape_cast %224 : vector<1x1x128x128xf32> to vector<128x128xf32>
    %cst_109 = arith.constant dense<0.000000e+00> : vector<128x256xf32>
    %226 = tpu.matmul %225, %223, %cst_109 {dimension_numbers = #tpu.dot_dimension_numbers<[1], [0], [0], [1], [0, 0, 1, 1], [], []>} : vector<128x128xf32>, vector<128x256xf32>, vector<128x256xf32> -> vector<128x256xf32>
    %c1_110 = arith.constant 1 : index
    %227 = arith.index_cast %156 : i32 to index
    %228 = memref.load %arg7[%c1_110, %227] : memref<2x4xf32, #tpu.memory_space<smem>>
    %229 = vector.broadcast %228 : f32 to vector<128x256xf32>
    %230 = arith.addf %226, %229 : vector<128x256xf32>
    %cst_111 = arith.constant 0.000000e+00 : f32
    %231 = vector.broadcast %cst_111 : f32 to vector<128x256xf32>
    %232 = arith.maximumf %230, %231 : vector<128x256xf32>
    %233 = vector.extract_strided_slice %232 {offsets = [0, 0], sizes = [128, 128], strides = [1, 1]} : vector<128x256xf32> to vector<128x128xf32>
    %cst_112 = arith.constant dense<0.000000e+00> : vector<128xf32>
    %234 = vector.multi_reduction <add>, %233, %cst_112 [1] : vector<128x128xf32> to vector<128xf32>
    %235 = vector.shape_cast %234 : vector<128xf32> to vector<128x1xf32>
    %cst_113 = arith.constant 1.280000e+02 : f32
    %236 = vector.broadcast %cst_113 : f32 to vector<128x1xf32>
    %237 = arith.divf %235, %236 : vector<128x1xf32>
    %238 = vector.broadcast %237 : vector<128x1xf32> to vector<128x128xf32>
    %239 = arith.subf %233, %238 : vector<128x128xf32>
    %240 = arith.mulf %239, %239 : vector<128x128xf32>
    %cst_114 = arith.constant dense<0.000000e+00> : vector<128xf32>
    %241 = vector.multi_reduction <add>, %240, %cst_114 [1] : vector<128x128xf32> to vector<128xf32>
    %242 = vector.shape_cast %241 : vector<128xf32> to vector<128x1xf32>
    %cst_115 = arith.constant 1.280000e+02 : f32
    %243 = vector.broadcast %cst_115 : f32 to vector<128x1xf32>
    %244 = arith.divf %242, %243 : vector<128x1xf32>
    %245 = vector.broadcast %237 : vector<128x1xf32> to vector<128x128xf32>
    %246 = arith.subf %233, %245 : vector<128x128xf32>
    %cst_116 = arith.constant 9.99999974E-6 : f32
    %247 = vector.broadcast %cst_116 : f32 to vector<128x1xf32>
    %248 = arith.addf %244, %247 : vector<128x1xf32>
    %249 = math.rsqrt %248 : vector<128x1xf32>
    %250 = vector.broadcast %249 : vector<128x1xf32> to vector<128x128xf32>
    %251 = arith.mulf %246, %250 : vector<128x128xf32>
    %252 = vector.broadcast %3 : vector<1x128xf32> to vector<128x128xf32>
    %253 = arith.mulf %251, %252 : vector<128x128xf32>
    %254 = vector.broadcast %4 : vector<1x128xf32> to vector<128x128xf32>
    %255 = arith.addf %253, %254 : vector<128x128xf32>
    %256 = arith.truncf %255 : vector<128x128xf32> to vector<128x128xbf16>
    %c0_117 = arith.constant 0 : index
    %c1_118 = arith.constant 1 : index
    %c0_119 = arith.constant 0 : index
    %c0_120 = arith.constant 0 : index
    %257 = vector.load %arg12[%c0_117, %c1_118, %c0_119, %c0_120] : memref<2x2x128x128xbf16, #tpu.memory_space<vmem>>, vector<1x1x128x128xbf16>
    %258 = vector.shape_cast %257 : vector<1x1x128x128xbf16> to vector<128x128xbf16>
    %259 = vector.shape_cast %256 : vector<128x128xbf16> to vector<1x1x128x128xbf16>
    tpu.vector_store %arg12[%c0_117, %c1_118, %c0_119, %c0_120], %259 {strides = array<i32>} : memref<2x2x128x128xbf16, #tpu.memory_space<vmem>>, vector<1x1x128x128xbf16>,
    %260 = tpu.transpose %255, [1, 0] : vector<128x128xf32> -> vector<128x128xf32>
    %261 = arith.mulf %260, %8 : vector<128x128xf32>
    %cst_121 = arith.constant dense<0.000000e+00> : vector<128xf32>
    %262 = vector.multi_reduction <add>, %261, %cst_121 [0] : vector<128x128xf32> to vector<128xf32>
    %263 = vector.shape_cast %262 : vector<128xf32> to vector<1x128xf32>
    %264 = vector.extract_strided_slice %232 {offsets = [0, 128], sizes = [128, 128], strides = [1, 1]} : vector<128x256xf32> to vector<128x128xf32>
    %cst_122 = arith.constant dense<0.000000e+00> : vector<128xf32>
    %265 = vector.multi_reduction <add>, %264, %cst_122 [1] : vector<128x128xf32> to vector<128xf32>
    %266 = vector.shape_cast %265 : vector<128xf32> to vector<128x1xf32>
    %cst_123 = arith.constant 1.280000e+02 : f32
    %267 = vector.broadcast %cst_123 : f32 to vector<128x1xf32>
    %268 = arith.divf %266, %267 : vector<128x1xf32>
    %269 = vector.broadcast %268 : vector<128x1xf32> to vector<128x128xf32>
    %270 = arith.subf %264, %269 : vector<128x128xf32>
    %271 = arith.mulf %270, %270 : vector<128x128xf32>
    %cst_124 = arith.constant dense<0.000000e+00> : vector<128xf32>
    %272 = vector.multi_reduction <add>, %271, %cst_124 [1] : vector<128x128xf32> to vector<128xf32>
    %273 = vector.shape_cast %272 : vector<128xf32> to vector<128x1xf32>
    %cst_125 = arith.constant 1.280000e+02 : f32
    %274 = vector.broadcast %cst_125 : f32 to vector<128x1xf32>
    %275 = arith.divf %273, %274 : vector<128x1xf32>
    %276 = vector.broadcast %268 : vector<128x1xf32> to vector<128x128xf32>
    %277 = arith.subf %264, %276 : vector<128x128xf32>
    %cst_126 = arith.constant 9.99999974E-6 : f32
    %278 = vector.broadcast %cst_126 : f32 to vector<128x1xf32>
    %279 = arith.addf %275, %278 : vector<128x1xf32>
    %280 = math.rsqrt %279 : vector<128x1xf32>
    %281 = vector.broadcast %280 : vector<128x1xf32> to vector<128x128xf32>
    %282 = arith.mulf %277, %281 : vector<128x128xf32>
    %283 = vector.broadcast %3 : vector<1x128xf32> to vector<128x128xf32>
    %284 = arith.mulf %282, %283 : vector<128x128xf32>
    %285 = vector.broadcast %4 : vector<1x128xf32> to vector<128x128xf32>
    %286 = arith.addf %284, %285 : vector<128x128xf32>
    %287 = arith.truncf %286 : vector<128x128xf32> to vector<128x128xbf16>
    %c1_127 = arith.constant 1 : index
    %c1_128 = arith.constant 1 : index
    %c0_129 = arith.constant 0 : index
    %c0_130 = arith.constant 0 : index
    %288 = vector.load %arg12[%c1_127, %c1_128, %c0_129, %c0_130] : memref<2x2x128x128xbf16, #tpu.memory_space<vmem>>, vector<1x1x128x128xbf16>
    %289 = vector.shape_cast %288 : vector<1x1x128x128xbf16> to vector<128x128xbf16>
    %290 = vector.shape_cast %287 : vector<128x128xbf16> to vector<1x1x128x128xbf16>
    tpu.vector_store %arg12[%c1_127, %c1_128, %c0_129, %c0_130], %290 {strides = array<i32>} : memref<2x2x128x128xbf16, #tpu.memory_space<vmem>>, vector<1x1x128x128xbf16>,
    %291 = tpu.transpose %286, [1, 0] : vector<128x128xf32> -> vector<128x128xf32>
    %292 = arith.mulf %291, %8 : vector<128x128xf32>
    %cst_131 = arith.constant dense<0.000000e+00> : vector<128xf32>
    %293 = vector.multi_reduction <add>, %292, %cst_131 [0] : vector<128x128xf32> to vector<128xf32>
    %294 = vector.shape_cast %293 : vector<128xf32> to vector<1x128xf32>
    %295 = tpu.concatenate %263, %294 in 0 : vector<1x128xf32>, vector<1x128xf32> -> vector<2x128xf32>
    %296 = vector.broadcast %5 : f32 to vector<2x128xf32>
    %297 = arith.addf %295, %296 : vector<2x128xf32>
    %c1_132 = arith.constant 1 : index
    %c0_133 = arith.constant 0 : index
    %c0_134 = arith.constant 0 : index
    %298 = vector.load %arg13[%c1_132, %c0_133, %c0_134] : memref<2x2x128xf32, #tpu.memory_space<vmem>>, vector<1x2x128xf32>
    %299 = vector.shape_cast %298 : vector<1x2x128xf32> to vector<2x128xf32>
    %300 = vector.shape_cast %297 : vector<2x128xf32> to vector<1x2x128xf32>
    tpu.vector_store %arg13[%c1_132, %c0_133, %c0_134], %300 {strides = array<i32>} : memref<2x2x128xf32, #tpu.memory_space<vmem>>, vector<1x2x128xf32>,
    return
  }
  func.func @transform_0(%arg0: i32) -> (i32, i32, i32) {
    %c0_i32 = arith.constant 0 : i32
    %c0_i32_0 = arith.constant 0 : i32
    %c0_i32_1 = arith.constant 0 : i32
    return %arg0, %c0_i32, %c0_i32_0 : i32, i32, i32
  }
  func.func @transform_1(%arg0: i32) -> (i32, i32, i32) {
    %c0_i32 = arith.constant 0 : i32
    %c0_i32_0 = arith.constant 0 : i32
    %c0_i32_1 = arith.constant 0 : i32
    return %arg0, %c0_i32, %c0_i32_0 : i32, i32, i32
  }
  func.func @transform_2(%arg0: i32) -> (i32, i32) {
    %c0_i32 = arith.constant 0 : i32
    %c0_i32_0 = arith.constant 0 : i32
    %c0_i32_1 = arith.constant 0 : i32
    return %c0_i32, %c0_i32_0 : i32, i32
  }
  func.func @transform_3(%arg0: i32) -> (i32, i32) {
    %c0_i32 = arith.constant 0 : i32
    %c0_i32_0 = arith.constant 0 : i32
    %c0_i32_1 = arith.constant 0 : i32
    return %c0_i32, %c0_i32_0 : i32, i32
  }
  func.func @transform_4(%arg0: i32) -> (i32, i32) {
    %c0_i32 = arith.constant 0 : i32
    %c0_i32_0 = arith.constant 0 : i32
    %c0_i32_1 = arith.constant 0 : i32
    return %c0_i32, %c0_i32_0 : i32, i32
  }
  func.func @transform_5(%arg0: i32) -> (i32, i32, i32, i32) {
    %c0_i32 = arith.constant 0 : i32
    %c0_i32_0 = arith.constant 0 : i32
    %c0_i32_1 = arith.constant 0 : i32
    %c0_i32_2 = arith.constant 0 : i32
    return %c0_i32, %arg0, %c0_i32_0, %c0_i32_1 : i32, i32, i32, i32
  }
  func.func @transform_6(%arg0: i32) -> (i32, i32) {
    %c0_i32 = arith.constant 0 : i32
    %c0_i32_0 = arith.constant 0 : i32
    %c0_i32_1 = arith.constant 0 : i32
    return %c0_i32, %c0_i32_0 : i32, i32
  }
  func.func @transform_7(%arg0: i32) -> (i32, i32) {
    %c0_i32 = arith.constant 0 : i32
    %c0_i32_0 = arith.constant 0 : i32
    %c0_i32_1 = arith.constant 0 : i32
    return %c0_i32, %c0_i32_0 : i32, i32
  }
  func.func @transform_8(%arg0: i32) -> (i32, i32) {
    %c0_i32 = arith.constant 0 : i32
    %c0_i32_0 = arith.constant 0 : i32
    %c0_i32_1 = arith.constant 0 : i32
    return %c0_i32, %c0_i32_0 : i32, i32
  }
  func.func @transform_9(%arg0: i32) -> (i32, i32) {
    %c0_i32 = arith.constant 0 : i32
    %c0_i32_0 = arith.constant 0 : i32
    %c0_i32_1 = arith.constant 0 : i32
    return %c0_i32, %c0_i32_0 : i32, i32
  }
  func.func @transform_10(%arg0: i32) -> (i32, i32) {
    %c0_i32 = arith.constant 0 : i32
    %c0_i32_0 = arith.constant 0 : i32
    %c0_i32_1 = arith.constant 0 : i32
    return %c0_i32, %c0_i32_0 : i32, i32
  }
  func.func @transform_11(%arg0: i32) -> (i32, i32, i32, i32) {
    %c0_i32 = arith.constant 0 : i32
    %c0_i32_0 = arith.constant 0 : i32
    %c0_i32_1 = arith.constant 0 : i32
    %c0_i32_2 = arith.constant 0 : i32
    return %c0_i32, %arg0, %c0_i32_0, %c0_i32_1 : i32, i32, i32, i32
  }
  func.func @transform_12(%arg0: i32) -> (i32, i32, i32) {
    %c0_i32 = arith.constant 0 : i32
    %c0_i32_0 = arith.constant 0 : i32
    %c0_i32_1 = arith.constant 0 : i32
    return %arg0, %c0_i32, %c0_i32_0 : i32, i32, i32
  }
}

</mosaic_0001>

<llo_original>
// kernel: lorcnn_predictor.1
$region0: #{lorcnn_predictor.1}
  #allocation0 [shape = 'u32[]', space=smem, size = 0x4, offset = 0x4, fixed_abs, tag = 'smem constant byte address 0x4 - core index']
  #allocation1 [shape = 'u32[144,128]{1,0:T(1,128)}', space=vmem, size = 0x12000, scoped, tag = 'internal scratch']
  #allocation2 [shape = 'f32[128,256]{1,0:T(8,128)}', space=vmem, size = 0x20000, scoped, tag = 'scratch operand']
  #allocation3 [shape = 'f32[1,1]{1,0:T(1,128)S(6)}', space=smem, size = 0x200, scoped, tag = 'scoped memory for lorcnn_predictor.1']
  #allocation9 [shape = 's32[]', space=sflag, size = 0x4, offset = 0, fixed_abs, tag = 'sflag constant byte address 0x0 - dummy sync flag']
  %s0 = inlined_call_operand.vmem [shape: f32[4,256,8], index: 0, kind: input, shape index: {}]
  %s1 = inlined_call_operand.vmem [shape: f32[4,256,8], index: 1, kind: input, shape index: {}]
  %s2 = inlined_call_operand.vmem [shape: f32[8,8], index: 2, kind: input, shape index: {}]
  %s3 = inlined_call_operand.vmem [shape: f32[1,128], index: 3, kind: input, shape index: {}]
  %s4 = inlined_call_operand.vmem [shape: f32[1,128], index: 4, kind: input, shape index: {}]
  %s5 = inlined_call_operand.vmem [shape: f32[2,4,128,128], index: 5, kind: input, shape index: {}]
  %s6 = inlined_call_operand.vmem [shape: f32[2,4], index: 6, kind: input, shape index: {}]
  %s7 = inlined_call_operand.vmem [shape: f32[1,128], index: 7, kind: input, shape index: {}]
  %s8 = inlined_call_operand.vmem [shape: f32[1,128], index: 8, kind: input, shape index: {}]
  %s9 = inlined_call_operand.vmem [shape: f32[128,1], index: 9, kind: input, shape index: {}]
  %s10 = inlined_call_operand.<no memory space> [shape: f32[1,1], index: 10, kind: input, shape index: {}]
  %s11 = inlined_call_operand.hbm [shape: bf16[2,4,128,128], index: 11, kind: output, shape index: {0}]
  %s12 = inlined_call_operand.vmem [shape: f32[4,2,128], index: 12, kind: output, shape index: {1}]
  %13 = xla_tuple %s11, %s12
  %s14 = sld [smem:[#allocation0]]
  $region127: #{lorcnn_predictor.1} parent=0
    _
  %s16 = ssub.s32 1, %s14
  %s17 = scalar_select 0, %s16, %s14
  %18 = sst [smem:[#allocation3]] %s10
  $region1: #{lorcnn_predictor.1} parent=0
    #allocation4 [shape = 'u8[524288]{0}', space=vmem, size = 0x80000, scoped, tag = 'input window, operand 5']
    #allocation5 [shape = 'u8[1024]{0}', space=smem, size = 0x400, scoped, tag = 'input window, operand 6, single buffered']
    #allocation6 [shape = 's32[2]{0}', space=sflag, size = 0x8, scoped, tag = 'scoped memory for lorcnn_predictor.1']
    #allocation7 [shape = 's32[2]{0}', space=sflag, size = 0x8, scoped, tag = 'scoped memory for lorcnn_predictor.1']
    #allocation8 [shape = 'u8[262144]{0}', space=vmem, size = 0x40000, scoped, tag = 'output window, operand 0']
    %19 = vsyncpa [#allocation7], 0
    %20 = vsyncpa [#allocation6], 0
    %s21 = scalar_lea.sflag [#allocation6], 1
    %22 = vsyncpa %s21, 0
    loop: start=0, step=1, limit=4
    $region2: #{lorcnn_predictor.1} parent=1 // loop_pre_header
      _
    $region3: #{lorcnn_predictor.1} parent=1 // loop_header
      %s24 = sphi 0, %s28
      %p25 = scmp.ge.s32.totalorder %s24, 4
      %s34 = sphi 0, %s36
      %s37 = sphi 0, %s34
      %s38 = sphi 0, %s37
      %s54 = sphi 0, %s38
      %s60 = sphi 0, %s62
      %s63 = sphi 0, %s60
      %s64 = sphi 0, %s63
      %s80 = sphi 0, %s64
      %s84 = sphi 0, %s84
      %s86 = sphi 0, %s84
      %s87 = sphi 0, %s86
      %s101 = sphi 0, %s87
      %s105 = sphi 0, %s105
      %s107 = sphi 0, %s105
      %s108 = sphi 0, %s107
      %s122 = sphi 0, %s108
      %s126 = sphi 0, %s126
      %s128 = sphi 0, %s126
      %s129 = sphi 0, %s128
      %s143 = sphi 0, %s129
      %s149 = sphi 0, %s151
      %s152 = sphi 0, %s149
      %s153 = sphi 0, %s152
      %s169 = sphi 0, %s153
      %s173 = sphi 0, %s173
      %s175 = sphi 0, %s173
      %s176 = sphi 0, %s175
      %s190 = sphi 0, %s176
      %s194 = sphi 0, %s194
      %s196 = sphi 0, %s194
      %s197 = sphi 0, %s196
      %s211 = sphi 0, %s197
      %s215 = sphi 0, %s215
      %s217 = sphi 0, %s215
      %s218 = sphi 0, %s217
      %s232 = sphi 0, %s218
      %s236 = sphi 0, %s236
      %s238 = sphi 0, %s236
      %s239 = sphi 0, %s238
      %s253 = sphi 0, %s239
      %s257 = sphi 0, %s257
      %s259 = sphi 0, %s257
      %s260 = sphi 0, %s259
      %s274 = sphi 0, %s260
      %s280 = sphi 0, %s282
      %s283 = sphi 0, %s280
      %s284 = sphi 0, %s283
      %s300 = sphi 0, %s284
      %s306 = sphi 0, %s308
      %s309 = sphi 0, %s306
      %s310 = sphi 0, %s309
      %s326 = sphi 0, %s310
    $region4: #{lorcnn_predictor.1} parent=1 // loop_header_branch
      %27 = sbr.rel (%p25) target = $region8
    $region5: #{lorcnn_predictor.1} parent=1 // loop_body
      %s29 = ssub.s32 %s24, 1
      %s30 = ssub.s32 %s24, 2
      %s31 = sadd.s32 %s24, 1
      %s32 = ssub.s32 %s24, %s31
      %p33 = scmp.eq.s32.totalorder %s32, 0
      %s35 = sadd.s32 %s34, 1
      %s36 = scalar_select %p33, %s34, %s35
      %p39 = pneg %p33
      %p40 = scmp.eq.s32.totalorder %s24, 1
      %p41 = por %p39, %p40
      %p42 = scmp.ne.s32.totalorder %s34, %s37
      %p43 = scmp.eq.s32.totalorder %s24, 0
      %p44 = por %p42, %p43
      %p45 = scmp.ne.s32.totalorder %s34, %s37
      %p46 = scmp.eq.s32.totalorder %s29, 1
      %p47 = por %p45, %p46
      %p48 = scmp.ne.s32.totalorder %s37, %s38
      %p49 = scmp.eq.s32.totalorder %s29, 0
      %p50 = por %p48, %p49
      %p51 = scmp.ne.s32.totalorder %s37, %s38
      %p52 = scmp.eq.s32.totalorder %s30, 1
      %p53 = por %p51, %p52
      %p55 = scmp.ne.s32.totalorder %s38, %s54
      %p56 = scmp.eq.s32.totalorder %s30, 0
      %p57 = por %p55, %p56
      %s58 = ssub.s32 %s24, %s31
      %p59 = scmp.eq.s32.totalorder %s58, 0
      %s61 = sadd.s32 %s60, 1
      %s62 = scalar_select %p59, %s60, %s61
      %p65 = pneg %p59
      %p66 = scmp.eq.s32.totalorder %s24, 1
      %p67 = por %p65, %p66
      %p68 = scmp.ne.s32.totalorder %s60, %s63
      %p69 = scmp.eq.s32.totalorder %s24, 0
      %p70 = por %p68, %p69
      %p71 = scmp.ne.s32.totalorder %s60, %s63
      %p72 = scmp.eq.s32.totalorder %s29, 1
      %p73 = por %p71, %p72
      %p74 = scmp.ne.s32.totalorder %s63, %s64
      %p75 = scmp.eq.s32.totalorder %s29, 0
      %p76 = por %p74, %p75
      %p77 = scmp.ne.s32.totalorder %s63, %s64
      %p78 = scmp.eq.s32.totalorder %s30, 1
      %p79 = por %p77, %p78
      %p81 = scmp.ne.s32.totalorder %s64, %s80
      %p82 = scmp.eq.s32.totalorder %s30, 0
      %p83 = por %p81, %p82
      %s85 = sadd.s32 %s84, 1
      %p88 = scmp.eq.s32.totalorder %s24, 1
      %p89 = scmp.ne.s32.totalorder %s84, %s86
      %p90 = scmp.eq.s32.totalorder %s24, 0
      %p91 = por %p89, %p90
      %p92 = scmp.ne.s32.totalorder %s84, %s86
      %p93 = scmp.eq.s32.totalorder %s29, 1
      %p94 = por %p92, %p93
      %p95 = scmp.ne.s32.totalorder %s86, %s87
      %p96 = scmp.eq.s32.totalorder %s29, 0
      %p97 = por %p95, %p96
      %p98 = scmp.ne.s32.totalorder %s86, %s87
      %p99 = scmp.eq.s32.totalorder %s30, 1
      %p100 = por %p98, %p99
      %p102 = scmp.ne.s32.totalorder %s87, %s101
      %p103 = scmp.eq.s32.totalorder %s30, 0
      %p104 = por %p102, %p103
      %s106 = sadd.s32 %s105, 1
      %p109 = scmp.eq.s32.totalorder %s24, 1
      %p110 = scmp.ne.s32.totalorder %s105, %s107
      %p111 = scmp.eq.s32.totalorder %s24, 0
      %p112 = por %p110, %p111
      %p113 = scmp.ne.s32.totalorder %s105, %s107
      %p114 = scmp.eq.s32.totalorder %s29, 1
      %p115 = por %p113, %p114
      %p116 = scmp.ne.s32.totalorder %s107, %s108
      %p117 = scmp.eq.s32.totalorder %s29, 0
      %p118 = por %p116, %p117
      %p119 = scmp.ne.s32.totalorder %s107, %s108
      %p120 = scmp.eq.s32.totalorder %s30, 1
      %p121 = por %p119, %p120
      %p123 = scmp.ne.s32.totalorder %s108, %s122
      %p124 = scmp.eq.s32.totalorder %s30, 0
      %p125 = por %p123, %p124
      %s127 = sadd.s32 %s126, 1
      %p130 = scmp.eq.s32.totalorder %s24, 1
      %p131 = scmp.ne.s32.totalorder %s126, %s128
      %p132 = scmp.eq.s32.totalorder %s24, 0
      %p133 = por %p131, %p132
      %p134 = scmp.ne.s32.totalorder %s126, %s128
      %p135 = scmp.eq.s32.totalorder %s29, 1
      %p136 = por %p134, %p135
      %p137 = scmp.ne.s32.totalorder %s128, %s129
      %p138 = scmp.eq.s32.totalorder %s29, 0
      %p139 = por %p137, %p138
      %p140 = scmp.ne.s32.totalorder %s128, %s129
      %p141 = scmp.eq.s32.totalorder %s30, 1
      %p142 = por %p140, %p141
      %p144 = scmp.ne.s32.totalorder %s129, %s143
      %p145 = scmp.eq.s32.totalorder %s30, 0
      %p146 = por %p144, %p145
      %s147 = ssub.s32 %s24, %s31
      %p148 = scmp.eq.s32.totalorder %s147, 0
      %s150 = sadd.s32 %s149, 1
      %s151 = scalar_select %p148, %s149, %s150
      %p154 = pneg %p148
      %p155 = scmp.eq.s32.totalorder %s24, 1
      %p156 = por %p154, %p155
      %p157 = scmp.ne.s32.totalorder %s149, %s152
      %p158 = scmp.eq.s32.totalorder %s24, 0
      %p159 = por %p157, %p158
      %p160 = scmp.ne.s32.totalorder %s149, %s152
      %p161 = scmp.eq.s32.totalorder %s29, 1
      %p162 = por %p160, %p161
      %p163 = scmp.ne.s32.totalorder %s152, %s153
      %p164 = scmp.eq.s32.totalorder %s29, 0
      %p165 = por %p163, %p164
      %p166 = scmp.ne.s32.totalorder %s152, %s153
      %p167 = scmp.eq.s32.totalorder %s30, 1
      %p168 = por %p166, %p167
      %p170 = scmp.ne.s32.totalorder %s153, %s169
      %p171 = scmp.eq.s32.totalorder %s30, 0
      %p172 = por %p170, %p171
      %s174 = sadd.s32 %s173, 1
      %p177 = scmp.eq.s32.totalorder %s24, 1
      %p178 = scmp.ne.s32.totalorder %s173, %s175
      %p179 = scmp.eq.s32.totalorder %s24, 0
      %p180 = por %p178, %p179
      %p181 = scmp.ne.s32.totalorder %s173, %s175
      %p182 = scmp.eq.s32.totalorder %s29, 1
      %p183 = por %p181, %p182
      %p184 = scmp.ne.s32.totalorder %s175, %s176
      %p185 = scmp.eq.s32.totalorder %s29, 0
      %p186 = por %p184, %p185
      %p187 = scmp.ne.s32.totalorder %s175, %s176
      %p188 = scmp.eq.s32.totalorder %s30, 1
      %p189 = por %p187, %p188
      %p191 = scmp.ne.s32.totalorder %s176, %s190
      %p192 = scmp.eq.s32.totalorder %s30, 0
      %p193 = por %p191, %p192
      %s195 = sadd.s32 %s194, 1
      %p198 = scmp.eq.s32.totalorder %s24, 1
      %p199 = scmp.ne.s32.totalorder %s194, %s196
      %p200 = scmp.eq.s32.totalorder %s24, 0
      %p201 = por %p199, %p200
      %p202 = scmp.ne.s32.totalorder %s194, %s196
      %p203 = scmp.eq.s32.totalorder %s29, 1
      %p204 = por %p202, %p203
      %p205 = scmp.ne.s32.totalorder %s196, %s197
      %p206 = scmp.eq.s32.totalorder %s29, 0
      %p207 = por %p205, %p206
      %p208 = scmp.ne.s32.totalorder %s196, %s197
      %p209 = scmp.eq.s32.totalorder %s30, 1
      %p210 = por %p208, %p209
      %p212 = scmp.ne.s32.totalorder %s197, %s211
      %p213 = scmp.eq.s32.totalorder %s30, 0
      %p214 = por %p212, %p213
      %s216 = sadd.s32 %s215, 1
      %p219 = scmp.eq.s32.totalorder %s24, 1
      %p220 = scmp.ne.s32.totalorder %s215, %s217
      %p221 = scmp.eq.s32.totalorder %s24, 0
      %p222 = por %p220, %p221
      %p223 = scmp.ne.s32.totalorder %s215, %s217
      %p224 = scmp.eq.s32.totalorder %s29, 1
      %p225 = por %p223, %p224
      %p226 = scmp.ne.s32.totalorder %s217, %s218
      %p227 = scmp.eq.s32.totalorder %s29, 0
      %p228 = por %p226, %p227
      %p229 = scmp.ne.s32.totalorder %s217, %s218
      %p230 = scmp.eq.s32.totalorder %s30, 1
      %p231 = por %p229, %p230
      %p233 = scmp.ne.s32.totalorder %s218, %s232
      %p234 = scmp.eq.s32.totalorder %s30, 0
      %p235 = por %p233, %p234
      %s237 = sadd.s32 %s236, 1
      %p240 = scmp.eq.s32.totalorder %s24, 1
      %p241 = scmp.ne.s32.totalorder %s236, %s238
      %p242 = scmp.eq.s32.totalorder %s24, 0
      %p243 = por %p241, %p242
      %p244 = scmp.ne.s32.totalorder %s236, %s238
      %p245 = scmp.eq.s32.totalorder %s29, 1
      %p246 = por %p244, %p245
      %p247 = scmp.ne.s32.totalorder %s238, %s239
      %p248 = scmp.eq.s32.totalorder %s29, 0
      %p249 = por %p247, %p248
      %p250 = scmp.ne.s32.totalorder %s238, %s239
      %p251 = scmp.eq.s32.totalorder %s30, 1
      %p252 = por %p250, %p251
      %p254 = scmp.ne.s32.totalorder %s239, %s253
      %p255 = scmp.eq.s32.totalorder %s30, 0
      %p256 = por %p254, %p255
      %s258 = sadd.s32 %s257, 1
      %p261 = scmp.eq.s32.totalorder %s24, 1
      %p262 = scmp.ne.s32.totalorder %s257, %s259
      %p263 = scmp.eq.s32.totalorder %s24, 0
      %p264 = por %p262, %p263
      %p265 = scmp.ne.s32.totalorder %s257, %s259
      %p266 = scmp.eq.s32.totalorder %s29, 1
      %p267 = por %p265, %p266
      %p268 = scmp.ne.s32.totalorder %s259, %s260
      %p269 = scmp.eq.s32.totalorder %s29, 0
      %p270 = por %p268, %p269
      %p271 = scmp.ne.s32.totalorder %s259, %s260
      %p272 = scmp.eq.s32.totalorder %s30, 1
      %p273 = por %p271, %p272
      %p275 = scmp.ne.s32.totalorder %s260, %s274
      %p276 = scmp.eq.s32.totalorder %s30, 0
      %p277 = por %p275, %p276
      %s278 = ssub.s32 %s24, %s31
      %p279 = scmp.eq.s32.totalorder %s278, 0
      %s281 = sadd.s32 %s280, 1
      %s282 = scalar_select %p279, %s280, %s281
      %p285 = pneg %p279
      %p286 = scmp.eq.s32.totalorder %s24, 1
      %p287 = por %p285, %p286
      %p288 = scmp.ne.s32.totalorder %s280, %s283
      %p289 = scmp.eq.s32.totalorder %s24, 0
      %p290 = por %p288, %p289
      %p291 = scmp.ne.s32.totalorder %s280, %s283
      %p292 = scmp.eq.s32.totalorder %s29, 1
      %p293 = por %p291, %p292
      %p294 = scmp.ne.s32.totalorder %s283, %s284
      %p295 = scmp.eq.s32.totalorder %s29, 0
      %p296 = por %p294, %p295
      %p297 = scmp.ne.s32.totalorder %s283, %s284
      %p298 = scmp.eq.s32.totalorder %s30, 1
      %p299 = por %p297, %p298
      %p301 = scmp.ne.s32.totalorder %s284, %s300
      %p302 = scmp.eq.s32.totalorder %s30, 0
      %p303 = por %p301, %p302
      %s304 = ssub.s32 %s24, %s31
      %p305 = scmp.eq.s32.totalorder %s304, 0
      %s307 = sadd.s32 %s306, 1
      %s308 = scalar_select %p305, %s306, %s307
      %p311 = pneg %p305
      %p312 = scmp.eq.s32.totalorder %s24, 1
      %p313 = por %p311, %p312
      %p314 = scmp.ne.s32.totalorder %s306, %s309
      %p315 = scmp.eq.s32.totalorder %s24, 0
      %p316 = por %p314, %p315
      %p317 = scmp.ne.s32.totalorder %s306, %s309
      %p318 = scmp.eq.s32.totalorder %s29, 1
      %p319 = por %p317, %p318
      %p320 = scmp.ne.s32.totalorder %s309, %s310
      %p321 = scmp.eq.s32.totalorder %s29, 0
      %p322 = por %p320, %p321
      %p323 = scmp.ne.s32.totalorder %s309, %s310
      %p324 = scmp.eq.s32.totalorder %s30, 1
      %p325 = por %p323, %p324
      %p327 = scmp.ne.s32.totalorder %s310, %s326
      %p328 = scmp.eq.s32.totalorder %s30, 0
      %p329 = por %p327, %p328
      %p330 = scmp.le.s32.totalorder 1, %s24
      %p331 = scmp.lt.s32.totalorder %s24, 3
      %p332 = pnand %p330, %p331
      %p333 = pneg %p332
      // Predicated region
      $region9: #{lorcnn_predictor.1} parent=5 // pred_check
        _
      $region10: #{lorcnn_predictor.1} parent=5 // pred_check_branch
        %335 = sbr.rel (%p332) target = $region12
      $region11: #{lorcnn_predictor.1} parent=5 // pred_region
        %s336 = ssub.s32 %s24, 1
        // Predicated region
        $region13: #{lorcnn_predictor.1} parent=11 // pred_check
          %p337 = pneg %p97
        $region14: #{lorcnn_predictor.1} parent=11 // pred_check_branch
          %339 = sbr.rel (%p337) target = $region16
        $region15: #{lorcnn_predictor.1} parent=11 // pred_region
          _
        $region16: #{lorcnn_predictor.1} parent=11 // pred_fallthru
          _
        // Predicated region
        $region17: #{lorcnn_predictor.1} parent=11 // pred_check
          %p340 = pneg %p118
        $region18: #{lorcnn_predictor.1} parent=11 // pred_check_branch
          %342 = sbr.rel (%p340) target = $region20
        $region19: #{lorcnn_predictor.1} parent=11 // pred_region
          _
        $region20: #{lorcnn_predictor.1} parent=11 // pred_fallthru
          _
        // Predicated region
        $region21: #{lorcnn_predictor.1} parent=11 // pred_check
          %p343 = pneg %p139
        $region22: #{lorcnn_predictor.1} parent=11 // pred_check_branch
          %345 = sbr.rel (%p343) target = $region24
        $region23: #{lorcnn_predictor.1} parent=11 // pred_region
          _
        $region24: #{lorcnn_predictor.1} parent=11 // pred_fallthru
          _
        // Predicated region
        $region25: #{lorcnn_predictor.1} parent=11 // pred_check
          %p346 = pneg %p186
        $region26: #{lorcnn_predictor.1} parent=11 // pred_check_branch
          %348 = sbr.rel (%p346) target = $region28
        $region27: #{lorcnn_predictor.1} parent=11 // pred_region
          %s350 = ssub.s32 32, 32
          %351 = vsyncadd [#allocation7], %s350
          %s353 = sshll.u32 %s6, 4
          %s354 = int_to_ptr.vmem [resolvable:$true] %s353
          %356 = dma.vmem_to_smem %s354, 32, [#allocation5], [#allocation7]
        $region28: #{lorcnn_predictor.1} parent=11 // pred_fallthru
          _
        // Predicated region
        $region29: #{lorcnn_predictor.1} parent=11 // pred_check
          %p357 = pneg %p207
        $region30: #{lorcnn_predictor.1} parent=11 // pred_check_branch
          %359 = sbr.rel (%p357) target = $region32
        $region31: #{lorcnn_predictor.1} parent=11 // pred_region
          _
        $region32: #{lorcnn_predictor.1} parent=11 // pred_fallthru
          _
        // Predicated region
        $region33: #{lorcnn_predictor.1} parent=11 // pred_check
          %p360 = pneg %p228
        $region34: #{lorcnn_predictor.1} parent=11 // pred_check_branch
          %362 = sbr.rel (%p360) target = $region36
        $region35: #{lorcnn_predictor.1} parent=11 // pred_region
          _
        $region36: #{lorcnn_predictor.1} parent=11 // pred_fallthru
          _
        // Predicated region
        $region37: #{lorcnn_predictor.1} parent=11 // pred_check
          %p363 = pneg %p249
        $region38: #{lorcnn_predictor.1} parent=11 // pred_check_branch
          %365 = sbr.rel (%p363) target = $region40
        $region39: #{lorcnn_predictor.1} parent=11 // pred_region
          _
        $region40: #{lorcnn_predictor.1} parent=11 // pred_fallthru
          _
        // Predicated region
        $region41: #{lorcnn_predictor.1} parent=11 // pred_check
          %p366 = pneg %p270
        $region42: #{lorcnn_predictor.1} parent=11 // pred_check_branch
          %368 = sbr.rel (%p366) target = $region44
        $region43: #{lorcnn_predictor.1} parent=11 // pred_region
          _
        $region44: #{lorcnn_predictor.1} parent=11 // pred_fallthru
          _
      $region12: #{lorcnn_predictor.1} parent=5 // pred_fallthru
        _
      %p369 = scmp.lt.s32.totalorder %s24, 2
      // Predicated region
      $region45: #{lorcnn_predictor.1} parent=5 // pred_check
        %p370 = pneg %p369
      $region46: #{lorcnn_predictor.1} parent=5 // pred_check_branch
        %372 = sbr.rel (%p370) target = $region48
      $region47: #{lorcnn_predictor.1} parent=5 // pred_region
        // Predicated region
        $region49: #{lorcnn_predictor.1} parent=47 // pred_check
          %p373 = pneg %p44
        $region50: #{lorcnn_predictor.1} parent=47 // pred_check_branch
          %375 = sbr.rel (%p373) target = $region52
        $region51: #{lorcnn_predictor.1} parent=47 // pred_region
          %s376 = smul.u32 2, %s24
          %p377 = scmp.lt.s32.totalorder %s376, 3
          %s378 = scalar_select %p377, %s376, 3
          %s379 = smul.addr %s378, 32
          %s380 = smul.addr %s379, 8
          %s381 = scalar_lea.vmem %s0, %s380
          %s382 = smul.u32 2, %s24
        $region52: #{lorcnn_predictor.1} parent=47 // pred_fallthru
          _
        // Predicated region
        $region53: #{lorcnn_predictor.1} parent=47 // pred_check
          %p383 = pneg %p70
        $region54: #{lorcnn_predictor.1} parent=47 // pred_check_branch
          %385 = sbr.rel (%p383) target = $region56
        $region55: #{lorcnn_predictor.1} parent=47 // pred_region
          %s386 = smul.u32 2, %s24
          %p387 = scmp.lt.s32.totalorder %s386, 3
          %s388 = scalar_select %p387, %s386, 3
          %s389 = smul.addr %s388, 32
          %s390 = smul.addr %s389, 8
          %s391 = scalar_lea.vmem %s1, %s390
          %s392 = smul.u32 2, %s24
        $region56: #{lorcnn_predictor.1} parent=47 // pred_fallthru
          _
        // Predicated region
        $region57: #{lorcnn_predictor.1} parent=47 // pred_check
          %p393 = pneg %p159
        $region58: #{lorcnn_predictor.1} parent=47 // pred_check_branch
          %395 = sbr.rel (%p393) target = $region60
        $region59: #{lorcnn_predictor.1} parent=47 // pred_region
          %s396 = sand.u32 %s149, 1
          %s397 = sand.u32 %s149, 1
          %s398 = smul.addr %s397, 512
          %s399 = scalar_lea.vmem [#allocation4], %s398
          %s400 = smul.u32 2, %s24
          %s401 = smul.addr %s400, 16
          %s402 = smul.addr %s401, 8
          %s403 = scalar_lea.vmem %s5, %s402
          // Predicated region
          $region61: #{lorcnn_predictor.1} parent=59 // pred_check
            _
          $region62: #{lorcnn_predictor.1} parent=59 // pred_check_branch
            %405 = sbr.rel (0) target = $region64
          $region63: #{lorcnn_predictor.1} parent=59 // pred_region
            // Predicated region
            $region65: #{lorcnn_predictor.1} parent=63 // pred_check
              _
            $region66: #{lorcnn_predictor.1} parent=63 // pred_check_branch
              %407 = sbr.rel (0) target = $region68
            $region67: #{lorcnn_predictor.1} parent=63 // pred_region
              // Predicated region
              $region80: #{lorcnn_predictor.1} parent=67 // pred_check
                _
              $region81: #{lorcnn_predictor.1} parent=67 // pred_check_branch
                %548 = sbr.rel (0) target = $region83
              $region82: #{lorcnn_predictor.1} parent=67 // pred_region
                loop: start=0, step=1, limit=1
                $region84: #{lorcnn_predictor.1} parent=82 // loop_pre_header
                  _
                $region85: #{lorcnn_predictor.1} parent=82 // loop_header
                  %s550 = sphi 0, %s554
                  %p551 = scmp.ge.s32.totalorder %s550, 1
                  %s555 = sphi %s403, %s403
                  %s556 = sphi %s399, %s399
                $region86: #{lorcnn_predictor.1} parent=82 // loop_header_branch
                  %553 = sbr.rel (%p551) target = $region90
                $region87: #{lorcnn_predictor.1} parent=82 // loop_body
                  %v557 = vld [vmem:[%s555] sm:$0xff]
                  %558 = vst [vmem:[%s556] sm:$0xff] %v557
                  %v559 = vld [vmem:[%s555 + $0x8] sm:$0xff]
                  %560 = vst [vmem:[%s556 + $0x8] sm:$0xff] %v559
                  %v561 = vld [vmem:[%s555 + $0x10] sm:$0xff]
                  %562 = vst [vmem:[%s556 + $0x10] sm:$0xff] %v561
                  %v563 = vld [vmem:[%s555 + $0x18] sm:$0xff]
                  %564 = vst [vmem:[%s556 + $0x18] sm:$0xff] %v563
                  %v565 = vld [vmem:[%s555 + $0x20] sm:$0xff]
                  %566 = vst [vmem:[%s556 + $0x20] sm:$0xff] %v565
                  %v567 = vld [vmem:[%s555 + $0x28] sm:$0xff]
                  %568 = vst [vmem:[%s556 + $0x28] sm:$0xff] %v567
                  %v569 = vld [vmem:[%s555 + $0x30] sm:$0xff]
                  %570 = vst [vmem:[%s556 + $0x30] sm:$0xff] %v569
                  %v571 = vld [vmem:[%s555 + $0x38] sm:$0xff]
                  %572 = vst [vmem:[%s556 + $0x38] sm:$0xff] %v571
                  %v573 = vld [vmem:[%s555 + $0x40] sm:$0xff]
                  %574 = vst [vmem:[%s556 + $0x40] sm:$0xff] %v573
                  %v575 = vld [vmem:[%s555 + $0x48] sm:$0xff]
                  %576 = vst [vmem:[%s556 + $0x48] sm:$0xff] %v575
                  %v577 = vld [vmem:[%s555 + $0x50] sm:$0xff]
                  %578 = vst [vmem:[%s556 + $0x50] sm:$0xff] %v577
                  %v579 = vld [vmem:[%s555 + $0x58] sm:$0xff]
                  %580 = vst [vmem:[%s556 + $0x58] sm:$0xff] %v579
                  %v581 = vld [vmem:[%s555 + $0x60] sm:$0xff]
                  %582 = vst [vmem:[%s556 + $0x60] sm:$0xff] %v581
                  %v583 = vld [vmem:[%s555 + $0x68] sm:$0xff]
                  %584 = vst [vmem:[%s556 + $0x68] sm:$0xff] %v583
                  %v585 = vld [vmem:[%s555 + $0x70] sm:$0xff]
                  %586 = vst [vmem:[%s556 + $0x70] sm:$0xff] %v585
                  %v587 = vld [vmem:[%s555 + $0x78] sm:$0xff]
                  %588 = vst [vmem:[%s556 + $0x78] sm:$0xff] %v587
                  %v589 = vld [vmem:[%s555 + $0x80] sm:$0xff]
                  %590 = vst [vmem:[%s556 + $0x80] sm:$0xff] %v589
                  %v591 = vld [vmem:[%s555 + $0x88] sm:$0xff]
                  %592 = vst [vmem:[%s556 + $0x88] sm:$0xff] %v591
                  %v593 = vld [vmem:[%s555 + $0x90] sm:$0xff]
                  %594 = vst [vmem:[%s556 + $0x90] sm:$0xff] %v593
                  %v595 = vld [vmem:[%s555 + $0x98] sm:$0xff]
                  %596 = vst [vmem:[%s556 + $0x98] sm:$0xff] %v595
                  %v597 = vld [vmem:[%s555 + $0xa0] sm:$0xff]
                  %598 = vst [vmem:[%s556 + $0xa0] sm:$0xff] %v597
                  %v599 = vld [vmem:[%s555 + $0xa8] sm:$0xff]
                  %600 = vst [vmem:[%s556 + $0xa8] sm:$0xff] %v599
                  %v601 = vld [vmem:[%s555 + $0xb0] sm:$0xff]
                  %602 = vst [vmem:[%s556 + $0xb0] sm:$0xff] %v601
                  %v603 = vld [vmem:[%s555 + $0xb8] sm:$0xff]
                  %604 = vst [vmem:[%s556 + $0xb8] sm:$0xff] %v603
                  %v605 = vld [vmem:[%s555 + $0xc0] sm:$0xff]
                  %606 = vst [vmem:[%s556 + $0xc0] sm:$0xff] %v605
                  %v607 = vld [vmem:[%s555 + $0xc8] sm:$0xff]
                  %608 = vst [vmem:[%s556 + $0xc8] sm:$0xff] %v607
                  %v609 = vld [vmem:[%s555 + $0xd0] sm:$0xff]
                  %610 = vst [vmem:[%s556 + $0xd0] sm:$0xff] %v609
                  %v611 = vld [vmem:[%s555 + $0xd8] sm:$0xff]
                  %612 = vst [vmem:[%s556 + $0xd8] sm:$0xff] %v611
                  %v613 = vld [vmem:[%s555 + $0xe0] sm:$0xff]
                  %614 = vst [vmem:[%s556 + $0xe0] sm:$0xff] %v613
                  %v615 = vld [vmem:[%s555 + $0xe8] sm:$0xff]
                  %616 = vst [vmem:[%s556 + $0xe8] sm:$0xff] %v615
                  %v617 = vld [vmem:[%s555 + $0xf0] sm:$0xff]
                  %618 = vst [vmem:[%s556 + $0xf0] sm:$0xff] %v617
                  %v619 = vld [vmem:[%s555 + $0xf8] sm:$0xff]
                  %620 = vst [vmem:[%s556 + $0xf8] sm:$0xff] %v619
                  %v621 = vld [vmem:[%s555 + $0x200] sm:$0xff]
                  %622 = vst [vmem:[%s556 + $0x100] sm:$0xff] %v621
                  %v623 = vld [vmem:[%s555 + $0x208] sm:$0xff]
                  %624 = vst [vmem:[%s556 + $0x108] sm:$0xff] %v623
                  %v625 = vld [vmem:[%s555 + $0x210] sm:$0xff]
                  %626 = vst [vmem:[%s556 + $0x110] sm:$0xff] %v625
                  %v627 = vld [vmem:[%s555 + $0x218] sm:$0xff]
                  %628 = vst [vmem:[%s556 + $0x118] sm:$0xff] %v627
                  %v629 = vld [vmem:[%s555 + $0x220] sm:$0xff]
                  %630 = vst [vmem:[%s556 + $0x120] sm:$0xff] %v629
                  %v631 = vld [vmem:[%s555 + $0x228] sm:$0xff]
                  %632 = vst [vmem:[%s556 + $0x128] sm:$0xff] %v631
                  %v633 = vld [vmem:[%s555 + $0x230] sm:$0xff]
                  %634 = vst [vmem:[%s556 + $0x130] sm:$0xff] %v633
                  %v635 = vld [vmem:[%s555 + $0x238] sm:$0xff]
                  %636 = vst [vmem:[%s556 + $0x138] sm:$0xff] %v635
                  %v637 = vld [vmem:[%s555 + $0x240] sm:$0xff]
                  %638 = vst [vmem:[%s556 + $0x140] sm:$0xff] %v637
                  %v639 = vld [vmem:[%s555 + $0x248] sm:$0xff]
                  %640 = vst [vmem:[%s556 + $0x148] sm:$0xff] %v639
                  %v641 = vld [vmem:[%s555 + $0x250] sm:$0xff]
                  %642 = vst [vmem:[%s556 + $0x150] sm:$0xff] %v641
                  %v643 = vld [vmem:[%s555 + $0x258] sm:$0xff]
                  %644 = vst [vmem:[%s556 + $0x158] sm:$0xff] %v643
                  %v645 = vld [vmem:[%s555 + $0x260] sm:$0xff]
                  %646 = vst [vmem:[%s556 + $0x160] sm:$0xff] %v645
                  %v647 = vld [vmem:[%s555 + $0x268] sm:$0xff]
                  %648 = vst [vmem:[%s556 + $0x168] sm:$0xff] %v647
                  %v649 = vld [vmem:[%s555 + $0x270] sm:$0xff]
                  %650 = vst [vmem:[%s556 + $0x170] sm:$0xff] %v649
                  %v651 = vld [vmem:[%s555 + $0x278] sm:$0xff]
                  %652 = vst [vmem:[%s556 + $0x178] sm:$0xff] %v651
                  %v653 = vld [vmem:[%s555 + $0x280] sm:$0xff]
                  %654 = vst [vmem:[%s556 + $0x180] sm:$0xff] %v653
                  %v655 = vld [vmem:[%s555 + $0x288] sm:$0xff]
                  %656 = vst [vmem:[%s556 + $0x188] sm:$0xff] %v655
                  %v657 = vld [vmem:[%s555 + $0x290] sm:$0xff]
                  %658 = vst [vmem:[%s556 + $0x190] sm:$0xff] %v657
                  %v659 = vld [vmem:[%s555 + $0x298] sm:$0xff]
                  %660 = vst [vmem:[%s556 + $0x198] sm:$0xff] %v659
                  %v661 = vld [vmem:[%s555 + $0x2a0] sm:$0xff]
                  %662 = vst [vmem:[%s556 + $0x1a0] sm:$0xff] %v661
                  %v663 = vld [vmem:[%s555 + $0x2a8] sm:$0xff]
                  %664 = vst [vmem:[%s556 + $0x1a8] sm:$0xff] %v663
                  %v665 = vld [vmem:[%s555 + $0x2b0] sm:$0xff]
                  %666 = vst [vmem:[%s556 + $0x1b0] sm:$0xff] %v665
                  %v667 = vld [vmem:[%s555 + $0x2b8] sm:$0xff]
                  %668 = vst [vmem:[%s556 + $0x1b8] sm:$0xff] %v667
                  %v669 = vld [vmem:[%s555 + $0x2c0] sm:$0xff]
                  %670 = vst [vmem:[%s556 + $0x1c0] sm:$0xff] %v669
                  %v671 = vld [vmem:[%s555 + $0x2c8] sm:$0xff]
                  %672 = vst [vmem:[%s556 + $0x1c8] sm:$0xff] %v671
                  %v673 = vld [vmem:[%s555 + $0x2d0] sm:$0xff]
                  %674 = vst [vmem:[%s556 + $0x1d0] sm:$0xff] %v673
                  %v675 = vld [vmem:[%s555 + $0x2d8] sm:$0xff]
                  %676 = vst [vmem:[%s556 + $0x1d8] sm:$0xff] %v675
                  %v677 = vld [vmem:[%s555 + $0x2e0] sm:$0xff]
                  %678 = vst [vmem:[%s556 + $0x1e0] sm:$0xff] %v677
                  %v679 = vld [vmem:[%s555 + $0x2e8] sm:$0xff]
                  %680 = vst [vmem:[%s556 + $0x1e8] sm:$0xff] %v679
                  %v681 = vld [vmem:[%s555 + $0x2f0] sm:$0xff]
                  %682 = vst [vmem:[%s556 + $0x1f0] sm:$0xff] %v681
                  %v683 = vld [vmem:[%s555 + $0x2f8] sm:$0xff]
                  %684 = vst [vmem:[%s556 + $0x1f8] sm:$0xff] %v683
                $region88: #{lorcnn_predictor.1} parent=82 // loop_footer
                  %s554 = sadd.s32 1, %s550
                $region89: #{lorcnn_predictor.1} parent=82 // loop_footer_branch
                  %549 = sbr.rel target = $region85
                $region90: #{lorcnn_predictor.1} parent=82 // loop_exit
                  _
              $region83: #{lorcnn_predictor.1} parent=67 // pred_fallthru
                _
              // Predicated region
              $region91: #{lorcnn_predictor.1} parent=67 // pred_check
                _
              $region92: #{lorcnn_predictor.1} parent=67 // pred_check_branch
                %686 = sbr.rel target = $region94
              $region93: #{lorcnn_predictor.1} parent=67 // pred_region
                _
              $region94: #{lorcnn_predictor.1} parent=67 // pred_fallthru
                _
            $region68: #{lorcnn_predictor.1} parent=63 // pred_fallthru
              _
            // Predicated region
            $region69: #{lorcnn_predictor.1} parent=63 // pred_check
              _
            $region70: #{lorcnn_predictor.1} parent=63 // pred_check_branch
              %409 = sbr.rel target = $region72
            $region71: #{lorcnn_predictor.1} parent=63 // pred_region
              loop: start=0, step=1, limit=1
              $region73: #{lorcnn_predictor.1} parent=71 // loop_pre_header
                _
              $region74: #{lorcnn_predictor.1} parent=71 // loop_header
                %s412 = sphi 0, %s416
                %p413 = scmp.ge.s32.totalorder %s412, 1
                %s417 = sphi %s403, %s403
                %s418 = sphi %s399, %s399
              $region75: #{lorcnn_predictor.1} parent=71 // loop_header_branch
                %415 = sbr.rel (%p413) target = $region79
              $region76: #{lorcnn_predictor.1} parent=71 // loop_body
                %v419 = vld [vmem:[%s417] sm:$0xff]
                %420 = vst [vmem:[%s418] sm:$0xff] %v419
                %v421 = vld [vmem:[%s417 + $0x8] sm:$0xff]
                %422 = vst [vmem:[%s418 + $0x8] sm:$0xff] %v421
                %v423 = vld [vmem:[%s417 + $0x10] sm:$0xff]
                %424 = vst [vmem:[%s418 + $0x10] sm:$0xff] %v423
                %v425 = vld [vmem:[%s417 + $0x18] sm:$0xff]
                %426 = vst [vmem:[%s418 + $0x18] sm:$0xff] %v425
                %v427 = vld [vmem:[%s417 + $0x20] sm:$0xff]
                %428 = vst [vmem:[%s418 + $0x20] sm:$0xff] %v427
                %v429 = vld [vmem:[%s417 + $0x28] sm:$0xff]
                %430 = vst [vmem:[%s418 + $0x28] sm:$0xff] %v429
                %v431 = vld [vmem:[%s417 + $0x30] sm:$0xff]
                %432 = vst [vmem:[%s418 + $0x30] sm:$0xff] %v431
                %v433 = vld [vmem:[%s417 + $0x38] sm:$0xff]
                %434 = vst [vmem:[%s418 + $0x38] sm:$0xff] %v433
                %v435 = vld [vmem:[%s417 + $0x40] sm:$0xff]
                %436 = vst [vmem:[%s418 + $0x40] sm:$0xff] %v435
                %v437 = vld [vmem:[%s417 + $0x48] sm:$0xff]
                %438 = vst [vmem:[%s418 + $0x48] sm:$0xff] %v437
                %v439 = vld [vmem:[%s417 + $0x50] sm:$0xff]
                %440 = vst [vmem:[%s418 + $0x50] sm:$0xff] %v439
                %v441 = vld [vmem:[%s417 + $0x58] sm:$0xff]
                %442 = vst [vmem:[%s418 + $0x58] sm:$0xff] %v441
                %v443 = vld [vmem:[%s417 + $0x60] sm:$0xff]
                %444 = vst [vmem:[%s418 + $0x60] sm:$0xff] %v443
                %v445 = vld [vmem:[%s417 + $0x68] sm:$0xff]
                %446 = vst [vmem:[%s418 + $0x68] sm:$0xff] %v445
                %v447 = vld [vmem:[%s417 + $0x70] sm:$0xff]
                %448 = vst [vmem:[%s418 + $0x70] sm:$0xff] %v447
                %v449 = vld [vmem:[%s417 + $0x78] sm:$0xff]
                %450 = vst [vmem:[%s418 + $0x78] sm:$0xff] %v449
                %v451 = vld [vmem:[%s417 + $0x80] sm:$0xff]
                %452 = vst [vmem:[%s418 + $0x80] sm:$0xff] %v451
                %v453 = vld [vmem:[%s417 + $0x88] sm:$0xff]
                %454 = vst [vmem:[%s418 + $0x88] sm:$0xff] %v453
                %v455 = vld [vmem:[%s417 + $0x90] sm:$0xff]
                %456 = vst [vmem:[%s418 + $0x90] sm:$0xff] %v455
                %v457 = vld [vmem:[%s417 + $0x98] sm:$0xff]
                %458 = vst [vmem:[%s418 + $0x98] sm:$0xff] %v457
                %v459 = vld [vmem:[%s417 + $0xa0] sm:$0xff]
                %460 = vst [vmem:[%s418 + $0xa0] sm:$0xff] %v459
                %v461 = vld [vmem:[%s417 + $0xa8] sm:$0xff]
                %462 = vst [vmem:[%s418 + $0xa8] sm:$0xff] %v461
                %v463 = vld [vmem:[%s417 + $0xb0] sm:$0xff]
                %464 = vst [vmem:[%s418 + $0xb0] sm:$0xff] %v463
                %v465 = vld [vmem:[%s417 + $0xb8] sm:$0xff]
                %466 = vst [vmem:[%s418 + $0xb8] sm:$0xff] %v465
                %v467 = vld [vmem:[%s417 + $0xc0] sm:$0xff]
                %468 = vst [vmem:[%s418 + $0xc0] sm:$0xff] %v467
                %v469 = vld [vmem:[%s417 + $0xc8] sm:$0xff]
                %470 = vst [vmem:[%s418 + $0xc8] sm:$0xff] %v469
                %v471 = vld [vmem:[%s417 + $0xd0] sm:$0xff]
                %472 = vst [vmem:[%s418 + $0xd0] sm:$0xff] %v471
                %v473 = vld [vmem:[%s417 + $0xd8] sm:$0xff]
                %474 = vst [vmem:[%s418 + $0xd8] sm:$0xff] %v473
                %v475 = vld [vmem:[%s417 + $0xe0] sm:$0xff]
                %476 = vst [vmem:[%s418 + $0xe0] sm:$0xff] %v475
                %v477 = vld [vmem:[%s417 + $0xe8] sm:$0xff]
                %478 = vst [vmem:[%s418 + $0xe8] sm:$0xff] %v477
                %v479 = vld [vmem:[%s417 + $0xf0] sm:$0xff]
                %480 = vst [vmem:[%s418 + $0xf0] sm:$0xff] %v479
                %v481 = vld [vmem:[%s417 + $0xf8] sm:$0xff]
                %482 = vst [vmem:[%s418 + $0xf8] sm:$0xff] %v481
                %v483 = vld [vmem:[%s417 + $0x200] sm:$0xff]
                %484 = vst [vmem:[%s418 + $0x100] sm:$0xff] %v483
                %v485 = vld [vmem:[%s417 + $0x208] sm:$0xff]
                %486 = vst [vmem:[%s418 + $0x108] sm:$0xff] %v485
                %v487 = vld [vmem:[%s417 + $0x210] sm:$0xff]
                %488 = vst [vmem:[%s418 + $0x110] sm:$0xff] %v487
                %v489 = vld [vmem:[%s417 + $0x218] sm:$0xff]
                %490 = vst [vmem:[%s418 + $0x118] sm:$0xff] %v489
                %v491 = vld [vmem:[%s417 + $0x220] sm:$0xff]
                %492 = vst [vmem:[%s418 + $0x120] sm:$0xff] %v491
                %v493 = vld [vmem:[%s417 + $0x228] sm:$0xff]
                %494 = vst [vmem:[%s418 + $0x128] sm:$0xff] %v493
                %v495 = vld [vmem:[%s417 + $0x230] sm:$0xff]
                %496 = vst [vmem:[%s418 + $0x130] sm:$0xff] %v495
                %v497 = vld [vmem:[%s417 + $0x238] sm:$0xff]
                %498 = vst [vmem:[%s418 + $0x138] sm:$0xff] %v497
                %v499 = vld [vmem:[%s417 + $0x240] sm:$0xff]
                %500 = vst [vmem:[%s418 + $0x140] sm:$0xff] %v499
                %v501 = vld [vmem:[%s417 + $0x248] sm:$0xff]
                %502 = vst [vmem:[%s418 + $0x148] sm:$0xff] %v501
                %v503 = vld [vmem:[%s417 + $0x250] sm:$0xff]
                %504 = vst [vmem:[%s418 + $0x150] sm:$0xff] %v503
                %v505 = vld [vmem:[%s417 + $0x258] sm:$0xff]
                %506 = vst [vmem:[%s418 + $0x158] sm:$0xff] %v505
                %v507 = vld [vmem:[%s417 + $0x260] sm:$0xff]
                %508 = vst [vmem:[%s418 + $0x160] sm:$0xff] %v507
                %v509 = vld [vmem:[%s417 + $0x268] sm:$0xff]
                %510 = vst [vmem:[%s418 + $0x168] sm:$0xff] %v509
                %v511 = vld [vmem:[%s417 + $0x270] sm:$0xff]
                %512 = vst [vmem:[%s418 + $0x170] sm:$0xff] %v511
                %v513 = vld [vmem:[%s417 + $0x278] sm:$0xff]
                %514 = vst [vmem:[%s418 + $0x178] sm:$0xff] %v513
                %v515 = vld [vmem:[%s417 + $0x280] sm:$0xff]
                %516 = vst [vmem:[%s418 + $0x180] sm:$0xff] %v515
                %v517 = vld [vmem:[%s417 + $0x288] sm:$0xff]
                %518 = vst [vmem:[%s418 + $0x188] sm:$0xff] %v517
                %v519 = vld [vmem:[%s417 + $0x290] sm:$0xff]
                %520 = vst [vmem:[%s418 + $0x190] sm:$0xff] %v519
                %v521 = vld [vmem:[%s417 + $0x298] sm:$0xff]
                %522 = vst [vmem:[%s418 + $0x198] sm:$0xff] %v521
                %v523 = vld [vmem:[%s417 + $0x2a0] sm:$0xff]
                %524 = vst [vmem:[%s418 + $0x1a0] sm:$0xff] %v523
                %v525 = vld [vmem:[%s417 + $0x2a8] sm:$0xff]
                %526 = vst [vmem:[%s418 + $0x1a8] sm:$0xff] %v525
                %v527 = vld [vmem:[%s417 + $0x2b0] sm:$0xff]
                %528 = vst [vmem:[%s418 + $0x1b0] sm:$0xff] %v527
                %v529 = vld [vmem:[%s417 + $0x2b8] sm:$0xff]
                %530 = vst [vmem:[%s418 + $0x1b8] sm:$0xff] %v529
                %v531 = vld [vmem:[%s417 + $0x2c0] sm:$0xff]
                %532 = vst [vmem:[%s418 + $0x1c0] sm:$0xff] %v531
                %v533 = vld [vmem:[%s417 + $0x2c8] sm:$0xff]
                %534 = vst [vmem:[%s418 + $0x1c8] sm:$0xff] %v533
                %v535 = vld [vmem:[%s417 + $0x2d0] sm:$0xff]
                %536 = vst [vmem:[%s418 + $0x1d0] sm:$0xff] %v535
                %v537 = vld [vmem:[%s417 + $0x2d8] sm:$0xff]
                %538 = vst [vmem:[%s418 + $0x1d8] sm:$0xff] %v537
                %v539 = vld [vmem:[%s417 + $0x2e0] sm:$0xff]
                %540 = vst [vmem:[%s418 + $0x1e0] sm:$0xff] %v539
                %v541 = vld [vmem:[%s417 + $0x2e8] sm:$0xff]
                %542 = vst [vmem:[%s418 + $0x1e8] sm:$0xff] %v541
                %v543 = vld [vmem:[%s417 + $0x2f0] sm:$0xff]
                %544 = vst [vmem:[%s418 + $0x1f0] sm:$0xff] %v543
                %v545 = vld [vmem:[%s417 + $0x2f8] sm:$0xff]
                %546 = vst [vmem:[%s418 + $0x1f8] sm:$0xff] %v545
              $region77: #{lorcnn_predictor.1} parent=71 // loop_footer
                %s416 = sadd.s32 1, %s412
              $region78: #{lorcnn_predictor.1} parent=71 // loop_footer_branch
                %411 = sbr.rel target = $region74
              $region79: #{lorcnn_predictor.1} parent=71 // loop_exit
                _
            $region72: #{lorcnn_predictor.1} parent=63 // pred_fallthru
              _
          $region64: #{lorcnn_predictor.1} parent=59 // pred_fallthru
            _
          %687 = vnop
        $region60: #{lorcnn_predictor.1} parent=47 // pred_fallthru
          _
      $region48: #{lorcnn_predictor.1} parent=5 // pred_fallthru
        _
      %p688 = scmp.le.s32.totalorder 1, %s24
      %p689 = scmp.lt.s32.totalorder %s24, 3
      %p690 = pnand %p688, %p689
      %p691 = pneg %p690
      // Predicated region
      $region95: #{lorcnn_predictor.1} parent=5 // pred_check
        _
      $region96: #{lorcnn_predictor.1} parent=5 // pred_check_branch
        %693 = sbr.rel (%p690) target = $region98
      $region97: #{lorcnn_predictor.1} parent=5 // pred_region
        %s694 = ssub.s32 %s24, 1
        %s695 = sand.u32 %s152, 1
        %s696 = sand.u32 %s152, 1
        %s697 = smul.addr %s696, 512
        %s698 = scalar_lea.vmem [#allocation4], %s697
        // Predicated region
        $region99: #{lorcnn_predictor.1} parent=97 // pred_check
          %p699 = pneg %p165
        $region100: #{lorcnn_predictor.1} parent=97 // pred_check_branch
          %701 = sbr.rel (%p699) target = $region102
        $region101: #{lorcnn_predictor.1} parent=97 // pred_region
          _
        $region102: #{lorcnn_predictor.1} parent=97 // pred_fallthru
          _
        // Predicated region
        $region103: #{lorcnn_predictor.1} parent=97 // pred_check
          %p702 = pneg %p186
        $region104: #{lorcnn_predictor.1} parent=97 // pred_check_branch
          %704 = sbr.rel (%p702) target = $region106
        $region105: #{lorcnn_predictor.1} parent=97 // pred_region
          %705 = dma.done [#allocation7], 32
        $region106: #{lorcnn_predictor.1} parent=97 // pred_fallthru
          _
        %706 = sfence
        %s707 = smul.u32 2, %s29
        %p708 = scmp.lt.s32.totalorder %s707, 3
        %s709 = scalar_select %p708, %s707, 3
        %s710 = smul.addr %s709, 32
        %s711 = smul.addr %s710, 8
        %s712 = scalar_lea.vmem %s0, %s711
        %p713 = pneg %p50
        %p714 = pneg %p47
        %s715 = smul.u32 2, %s29
        %p716 = scmp.lt.s32.totalorder %s715, 3
        %s717 = scalar_select %p716, %s715, 3
        %s718 = smul.addr %s717, 32
        %s719 = smul.addr %s718, 8
        %s720 = scalar_lea.vmem %s1, %s719
        %p721 = pneg %p76
        %p722 = pneg %p73
        %p723 = pneg %p97
        %p724 = pneg %p94
        %p725 = pneg %p118
        %p726 = pneg %p115
        %p727 = pneg %p139
        %p728 = pneg %p136
        %s729 = sand.u32 %s152, 1
        %s730 = sand.u32 %s152, 1
        %s731 = smul.addr %s730, 512
        %s732 = scalar_lea.vmem [#allocation4], %s731
        %p733 = pneg %p165
        %p734 = pneg %p162
        %p735 = pneg %p186
        %p736 = pneg %p183
        %p737 = pneg %p207
        %p738 = pneg %p204
        %p739 = pneg %p228
        %p740 = pneg %p225
        %p741 = pneg %p249
        %p742 = pneg %p246
        %p743 = pneg %p270
        %p744 = pneg %p267
        %p745 = pneg %p296
        %p746 = pneg %p293
        %s747 = sand.u32 %s283, 1
        %s748 = scalar_lea.sflag [#allocation6], %s747
        %s749 = sand.u32 %s283, 1
        %s750 = smul.addr %s749, 256
        %s751 = scalar_lea.vmem [#allocation8], %s750
        %p752 = pneg %p322
        %p753 = pneg %p319
        %s754 = smul.u32 2, %s29
        %p755 = scmp.lt.s32.totalorder %s754, 3
        %s756 = scalar_select %p755, %s754, 3
        %s757 = smul.addr %s756, 2
        %s758 = scalar_lea.vmem %s12, %s757
        %s759 = smul.u32 2, %s29
        %p760 = scmp.lt.s32.totalorder %s759, 3
        %s761 = scalar_select %p760, %s759, 3
        %s762 = smul.addr %s761, 32
        %s763 = smul.addr %s762, 8
        %s764 = scalar_lea.vmem %s0, %s763
        %s765 = smul.u32 2, %s29
        %s766 = smul.u32 2, %s29
        %p767 = scmp.lt.s32.totalorder %s766, 3
        %s768 = scalar_select %p767, %s766, 3
        %s769 = smul.addr %s768, 32
        %s770 = smul.addr %s769, 8
        %s771 = scalar_lea.vmem %s1, %s770
        %s772 = smul.u32 2, %s29
        %s773 = smul.u32 2, %s29
        %s774 = smul.u32 2, %s29
        %s775 = smul.u32 2, %s29
        %p776 = scmp.lt.s32.totalorder %s775, 3
        %s777 = scalar_select %p776, %s775, 3
        %s778 = smul.addr %s777, 2
        %s779 = scalar_lea.vmem %s12, %s778
        %s780 = smul.u32 2, %s29
        %v781 = vld [vmem:[%s2] sm:$0xff]
        %v782 = vld [vmem:[%s3] sm:$0x1]
        %v783 = vld [vmem:[%s4] sm:$0x1]
        %v784 = vld [vmem:[%s7] sm:$0x1]
        %v785 = vld [vmem:[%s8] sm:$0x1]
        %s786 = sld [smem:[#allocation3]]
        %v787 = vld [vmem:[%s9] sm:$0xff]
        %v788 = vld [vmem:[%s9 + $0x8] sm:$0xff]
        %v789 = vld [vmem:[%s9 + $0x10] sm:$0xff]
        %v790 = vld [vmem:[%s9 + $0x18] sm:$0xff]
        %v791 = vld [vmem:[%s9 + $0x20] sm:$0xff]
        %v792 = vld [vmem:[%s9 + $0x28] sm:$0xff]
        %v793 = vld [vmem:[%s9 + $0x30] sm:$0xff]
        %v794 = vld [vmem:[%s9 + $0x38] sm:$0xff]
        %v795 = vld [vmem:[%s9 + $0x40] sm:$0xff]
        %v796 = vld [vmem:[%s9 + $0x48] sm:$0xff]
        %v797 = vld [vmem:[%s9 + $0x50] sm:$0xff]
        %v798 = vld [vmem:[%s9 + $0x58] sm:$0xff]
        %v799 = vld [vmem:[%s9 + $0x60] sm:$0xff]
        %v800 = vld [vmem:[%s9 + $0x68] sm:$0xff]
        %v801 = vld [vmem:[%s9 + $0x70] sm:$0xff]
        %v802 = vld [vmem:[%s9 + $0x78] sm:$0xff]
        %804 = vset.pattern.permute.xlu0 0
        %805 = vperm.xlu0 %804, %v787
        %v806 = vpop.permute.xlu0 %805
        %809 = vset.pattern.permute.xlu0 0
        %810 = vperm.xlu0 %809, %v788
        %v811 = vpop.permute.xlu0 %810
        %814 = vset.pattern.permute.xlu0 0
        %815 = vperm.xlu0 %814, %v789
        %v816 = vpop.permute.xlu0 %815
        %819 = vset.pattern.permute.xlu0 0
        %820 = vperm.xlu0 %819, %v790
        %v821 = vpop.permute.xlu0 %820
        %824 = vset.pattern.permute.xlu0 0
        %825 = vperm.xlu0 %824, %v791
        %v826 = vpop.permute.xlu0 %825
        %829 = vset.pattern.permute.xlu0 0
        %830 = vperm.xlu0 %829, %v792
        %v831 = vpop.permute.xlu0 %830
        %834 = vset.pattern.permute.xlu0 0
        %835 = vperm.xlu0 %834, %v793
        %v836 = vpop.permute.xlu0 %835
        %839 = vset.pattern.permute.xlu0 0
        %840 = vperm.xlu0 %839, %v794
        %v841 = vpop.permute.xlu0 %840
        %844 = vset.pattern.permute.xlu0 0
        %845 = vperm.xlu0 %844, %v795
        %v846 = vpop.permute.xlu0 %845
        %849 = vset.pattern.permute.xlu0 0
        %850 = vperm.xlu0 %849, %v796
        %v851 = vpop.permute.xlu0 %850
        %854 = vset.pattern.permute.xlu0 0
        %855 = vperm.xlu0 %854, %v797
        %v856 = vpop.permute.xlu0 %855
        %859 = vset.pattern.permute.xlu0 0
        %860 = vperm.xlu0 %859, %v798
        %v861 = vpop.permute.xlu0 %860
        %864 = vset.pattern.permute.xlu0 0
        %865 = vperm.xlu0 %864, %v799
        %v866 = vpop.permute.xlu0 %865
        %869 = vset.pattern.permute.xlu0 0
        %870 = vperm.xlu0 %869, %v800
        %v871 = vpop.permute.xlu0 %870
        %874 = vset.pattern.permute.xlu0 0
        %875 = vperm.xlu0 %874, %v801
        %v876 = vpop.permute.xlu0 %875
        %879 = vset.pattern.permute.xlu0 0
        %880 = vperm.xlu0 %879, %v802
        %v881 = vpop.permute.xlu0 %880
        %s883 = smul.u32 %s29, 2
        %v884 = vld [vmem:[%s764] sm:$0xff]
        %v885 = vld [vmem:[%s764 + $0x8] sm:$0xff]
        %v886 = vld [vmem:[%s764 + $0x10] sm:$0xff]
        %v887 = vld [vmem:[%s764 + $0x18] sm:$0xff]
        %v888 = vld [vmem:[%s764 + $0x20] sm:$0xff]
        %v889 = vld [vmem:[%s764 + $0x28] sm:$0xff]
        %v890 = vld [vmem:[%s764 + $0x30] sm:$0xff]
        %v891 = vld [vmem:[%s764 + $0x38] sm:$0xff]
        %v892 = vld [vmem:[%s764 + $0x40] sm:$0xff]
        %v893 = vld [vmem:[%s764 + $0x48] sm:$0xff]
        %v894 = vld [vmem:[%s764 + $0x50] sm:$0xff]
        %v895 = vld [vmem:[%s764 + $0x58] sm:$0xff]
        %v896 = vld [vmem:[%s764 + $0x60] sm:$0xff]
        %v897 = vld [vmem:[%s764 + $0x68] sm:$0xff]
        %v898 = vld [vmem:[%s764 + $0x70] sm:$0xff]
        %v899 = vld [vmem:[%s764 + $0x78] sm:$0xff]
        %v900 = vld [vmem:[%s764 + $0x80] sm:$0xff]
        %v901 = vld [vmem:[%s764 + $0x88] sm:$0xff]
        %v902 = vld [vmem:[%s764 + $0x90] sm:$0xff]
        %v903 = vld [vmem:[%s764 + $0x98] sm:$0xff]
        %v904 = vld [vmem:[%s764 + $0xa0] sm:$0xff]
        %v905 = vld [vmem:[%s764 + $0xa8] sm:$0xff]
        %v906 = vld [vmem:[%s764 + $0xb0] sm:$0xff]
        %v907 = vld [vmem:[%s764 + $0xb8] sm:$0xff]
        %v908 = vld [vmem:[%s764 + $0xc0] sm:$0xff]
        %v909 = vld [vmem:[%s764 + $0xc8] sm:$0xff]
        %v910 = vld [vmem:[%s764 + $0xd0] sm:$0xff]
        %v911 = vld [vmem:[%s764 + $0xd8] sm:$0xff]
        %v912 = vld [vmem:[%s764 + $0xe0] sm:$0xff]
        %v913 = vld [vmem:[%s764 + $0xe8] sm:$0xff]
        %v914 = vld [vmem:[%s764 + $0xf0] sm:$0xff]
        %v915 = vld [vmem:[%s764 + $0xf8] sm:$0xff]
        %v916 = vld [vmem:[%s771] sm:$0xff]
        %v917 = vld [vmem:[%s771 + $0x8] sm:$0xff]
        %v918 = vld [vmem:[%s771 + $0x10] sm:$0xff]
        %v919 = vld [vmem:[%s771 + $0x18] sm:$0xff]
        %v920 = vld [vmem:[%s771 + $0x20] sm:$0xff]
        %v921 = vld [vmem:[%s771 + $0x28] sm:$0xff]
        %v922 = vld [vmem:[%s771 + $0x30] sm:$0xff]
        %v923 = vld [vmem:[%s771 + $0x38] sm:$0xff]
        %v924 = vld [vmem:[%s771 + $0x40] sm:$0xff]
        %v925 = vld [vmem:[%s771 + $0x48] sm:$0xff]
        %v926 = vld [vmem:[%s771 + $0x50] sm:$0xff]
        %v927 = vld [vmem:[%s771 + $0x58] sm:$0xff]
        %v928 = vld [vmem:[%s771 + $0x60] sm:$0xff]
        %v929 = vld [vmem:[%s771 + $0x68] sm:$0xff]
        %v930 = vld [vmem:[%s771 + $0x70] sm:$0xff]
        %v931 = vld [vmem:[%s771 + $0x78] sm:$0xff]
        %v932 = vld [vmem:[%s771 + $0x80] sm:$0xff]
        %v933 = vld [vmem:[%s771 + $0x88] sm:$0xff]
        %v934 = vld [vmem:[%s771 + $0x90] sm:$0xff]
        %v935 = vld [vmem:[%s771 + $0x98] sm:$0xff]
        %v936 = vld [vmem:[%s771 + $0xa0] sm:$0xff]
        %v937 = vld [vmem:[%s771 + $0xa8] sm:$0xff]
        %v938 = vld [vmem:[%s771 + $0xb0] sm:$0xff]
        %v939 = vld [vmem:[%s771 + $0xb8] sm:$0xff]
        %v940 = vld [vmem:[%s771 + $0xc0] sm:$0xff]
        %v941 = vld [vmem:[%s771 + $0xc8] sm:$0xff]
        %v942 = vld [vmem:[%s771 + $0xd0] sm:$0xff]
        %v943 = vld [vmem:[%s771 + $0xd8] sm:$0xff]
        %v944 = vld [vmem:[%s771 + $0xe0] sm:$0xff]
        %v945 = vld [vmem:[%s771 + $0xe8] sm:$0xff]
        %v946 = vld [vmem:[%s771 + $0xf0] sm:$0xff]
        %v947 = vld [vmem:[%s771 + $0xf8] sm:$0xff]
        %vm948 = vcmask 64512
        %v950 = vsel %vm948, %v884, 0
        %v953 = vsel %vm948, %v885, 0
        %v956 = vsel %vm948, %v886, 0
        %v959 = vsel %vm948, %v887, 0
        %v962 = vsel %vm948, %v888, 0
        %v965 = vsel %vm948, %v889, 0
        %v968 = vsel %vm948, %v890, 0
        %v971 = vsel %vm948, %v891, 0
        %v974 = vsel %vm948, %v892, 0
        %v977 = vsel %vm948, %v893, 0
        %v980 = vsel %vm948, %v894, 0
        %v983 = vsel %vm948, %v895, 0
        %v986 = vsel %vm948, %v896, 0
        %v989 = vsel %vm948, %v897, 0
        %v992 = vsel %vm948, %v898, 0
        %v995 = vsel %vm948, %v899, 0
        %v998 = vsel %vm948, %v900, 0
        %v1001 = vsel %vm948, %v901, 0
        %v1004 = vsel %vm948, %v902, 0
        %v1007 = vsel %vm948, %v903, 0
        %v1010 = vsel %vm948, %v904, 0
        %v1013 = vsel %vm948, %v905, 0
        %v1016 = vsel %vm948, %v906, 0
        %v1019 = vsel %vm948, %v907, 0
        %v1022 = vsel %vm948, %v908, 0
        %v1025 = vsel %vm948, %v909, 0
        %v1028 = vsel %vm948, %v910, 0
        %v1031 = vsel %vm948, %v911, 0
        %v1034 = vsel %vm948, %v912, 0
        %v1037 = vsel %vm948, %v913, 0
        %v1040 = vsel %vm948, %v914, 0
        %v1043 = vsel %vm948, %v915, 0
        %1045 = vmatprep.subr.mxu0 0.0
        %1046 = vmatpush1.msra.mxu0 %v781
        %1047 = vmatprep.subr.mxu0 0.0
        %1048 = vmatpush1.msra.mxu0 0.0
        %1049 = vmatprep.subr.mxu0 0.0
        %1050 = vmatpush1.msra.mxu0 0.0
        %1051 = vmatprep.subr.mxu0 0.0
        %1052 = vmatpush1.msra.mxu0 0.0
        %1053 = vmatprep.subr.mxu0 0.0
        %1054 = vmatpush1.msra.mxu0 0.0
        %1055 = vmatprep.subr.mxu0 0.0
        %1056 = vmatpush1.msra.mxu0 0.0
        %1057 = vmatprep.subr.mxu0 0.0
        %1058 = vmatpush1.msra.mxu0 0.0
        %1059 = vmatprep.subr.mxu0 0.0
        %1060 = vmatpush1.msra.mxu0 0.0
        %1061 = vmatprep.subr.mxu0 0.0
        %1062 = vmatpush1.msra.mxu0 0.0
        %1063 = vmatprep.subr.mxu0 0.0
        %1064 = vmatpush1.msra.mxu0 0.0
        %1065 = vmatprep.subr.mxu0 0.0
        %1066 = vmatpush1.msra.mxu0 0.0
        %1067 = vmatprep.subr.mxu0 0.0
        %1068 = vmatpush1.msra.mxu0 0.0
        %1069 = vmatprep.subr.mxu0 0.0
        %1070 = vmatpush1.msra.mxu0 0.0
        %1071 = vmatprep.subr.mxu0 0.0
        %1072 = vmatpush1.msra.mxu0 0.0
        %1073 = vmatprep.subr.mxu0 0.0
        %1074 = vmatpush1.msra.mxu0 0.0
        %1075 = vmatprep.subr.mxu0 0.0
        %1076 = vmatpush1.msra.mxu0 0.0
        %1077 = vmatprep.subr.mxu0 0.0
        %1078 = vmatpush1.msra.mxu0 0.0
        %1079 = vmatprep.subr.mxu0 0.0
        %1080 = vmatpush1.msra.mxu0 0.0
        %1081 = vmatprep.subr.mxu0 0.0
        %1082 = vmatpush1.msra.mxu0 0.0
        %1083 = vmatprep.subr.mxu0 0.0
        %1084 = vmatpush1.msra.mxu0 0.0
        %1085 = vmatprep.subr.mxu0 0.0
        %1086 = vmatpush1.msra.mxu0 0.0
        %1087 = vmatprep.subr.mxu0 0.0
        %1088 = vmatpush1.msra.mxu0 0.0
        %1089 = vmatprep.subr.mxu0 0.0
        %1090 = vmatpush1.msra.mxu0 0.0
        %1091 = vmatprep.subr.mxu0 0.0
        %1092 = vmatpush1.msra.mxu0 0.0
        %1093 = vmatprep.subr.mxu0 0.0
        %1094 = vmatpush1.msra.mxu0 0.0
        %1095 = vmatprep.subr.mxu0 0.0
        %1096 = vmatpush1.msra.mxu0 0.0
        %1097 = vmatprep.subr.mxu0 0.0
        %1098 = vmatpush1.msra.mxu0 0.0
        %1099 = vmatprep.subr.mxu0 0.0
        %1100 = vmatpush1.msra.mxu0 0.0
        %1101 = vmatprep.subr.mxu0 0.0
        %1102 = vmatpush1.msra.mxu0 0.0
        %1103 = vmatprep.subr.mxu0 0.0
        %1104 = vmatpush1.msra.mxu0 0.0
        %1105 = vmatprep.subr.mxu0 0.0
        %1106 = vmatpush1.msra.mxu0 0.0
        %1107 = vmatprep.subr.mxu0 0.0
        %1108 = vmatpush1.msra.mxu0 0.0
        %1109 = vmatprep.mubr.f32.mxu0 0.0
        %1110 = vmatmul.mubr.f32.gmra.mrb[0].mxu0 %v950
        %v1111 = vpop.f32.mrb[0].mxu0
        %v1112 = vadd.f32 0.0, %v1111
        %v1113 = vpop.f32.mrb[0].mxu0
        %1114 = vmatprep.mubr.f32.mxu0 0.0
        %1115 = vmatmul.mubr.f32.gmra.mrb[0].mxu0 %v953
        %v1116 = vpop.f32.mrb[0].mxu0
        %v1117 = vadd.f32 0.0, %v1116
        %v1118 = vpop.f32.mrb[0].mxu0
        %1119 = vmatprep.mubr.f32.mxu0 0.0
        %1120 = vmatmul.mubr.f32.gmra.mrb[0].mxu0 %v956
        %v1121 = vpop.f32.mrb[0].mxu0
        %v1122 = vadd.f32 0.0, %v1121
        %v1123 = vpop.f32.mrb[0].mxu0
        %1124 = vmatprep.mubr.f32.mxu0 0.0
        %1125 = vmatmul.mubr.f32.gmra.mrb[0].mxu0 %v959
        %v1126 = vpop.f32.mrb[0].mxu0
        %v1127 = vadd.f32 0.0, %v1126
        %v1128 = vpop.f32.mrb[0].mxu0
        %1129 = vmatprep.mubr.f32.mxu0 0.0
        %1130 = vmatmul.mubr.f32.gmra.mrb[0].mxu0 %v962
        %v1131 = vpop.f32.mrb[0].mxu0
        %v1132 = vadd.f32 0.0, %v1131
        %v1133 = vpop.f32.mrb[0].mxu0
        %1134 = vmatprep.mubr.f32.mxu0 0.0
        %1135 = vmatmul.mubr.f32.gmra.mrb[0].mxu0 %v965
        %v1136 = vpop.f32.mrb[0].mxu0
        %v1137 = vadd.f32 0.0, %v1136
        %v1138 = vpop.f32.mrb[0].mxu0
        %1139 = vmatprep.mubr.f32.mxu0 0.0
        %1140 = vmatmul.mubr.f32.gmra.mrb[0].mxu0 %v968
        %v1141 = vpop.f32.mrb[0].mxu0
        %v1142 = vadd.f32 0.0, %v1141
        %v1143 = vpop.f32.mrb[0].mxu0
        %1144 = vmatprep.mubr.f32.mxu0 0.0
        %1145 = vmatmul.mubr.f32.gmra.mrb[0].mxu0 %v971
        %v1146 = vpop.f32.mrb[0].mxu0
        %v1147 = vadd.f32 0.0, %v1146
        %v1148 = vpop.f32.mrb[0].mxu0
        %1149 = vmatprep.mubr.f32.mxu0 0.0
        %1150 = vmatmul.mubr.f32.gmra.mrb[0].mxu0 %v974
        %v1151 = vpop.f32.mrb[0].mxu0
        %v1152 = vadd.f32 0.0, %v1151
        %v1153 = vpop.f32.mrb[0].mxu0
        %1154 = vmatprep.mubr.f32.mxu0 0.0
        %1155 = vmatmul.mubr.f32.gmra.mrb[0].mxu0 %v977
        %v1156 = vpop.f32.mrb[0].mxu0
        %v1157 = vadd.f32 0.0, %v1156
        %v1158 = vpop.f32.mrb[0].mxu0
        %1159 = vmatprep.mubr.f32.mxu0 0.0
        %1160 = vmatmul.mubr.f32.gmra.mrb[0].mxu0 %v980
        %v1161 = vpop.f32.mrb[0].mxu0
        %v1162 = vadd.f32 0.0, %v1161
        %v1163 = vpop.f32.mrb[0].mxu0
        %1164 = vmatprep.mubr.f32.mxu0 0.0
        %1165 = vmatmul.mubr.f32.gmra.mrb[0].mxu0 %v983
        %v1166 = vpop.f32.mrb[0].mxu0
        %v1167 = vadd.f32 0.0, %v1166
        %v1168 = vpop.f32.mrb[0].mxu0
        %1169 = vmatprep.mubr.f32.mxu0 0.0
        %1170 = vmatmul.mubr.f32.gmra.mrb[0].mxu0 %v986
        %v1171 = vpop.f32.mrb[0].mxu0
        %v1172 = vadd.f32 0.0, %v1171
        %v1173 = vpop.f32.mrb[0].mxu0
        %1174 = vmatprep.mubr.f32.mxu0 0.0
        %1175 = vmatmul.mubr.f32.gmra.mrb[0].mxu0 %v989
        %v1176 = vpop.f32.mrb[0].mxu0
        %v1177 = vadd.f32 0.0, %v1176
        %v1178 = vpop.f32.mrb[0].mxu0
        %1179 = vmatprep.mubr.f32.mxu0 0.0
        %1180 = vmatmul.mubr.f32.gmra.mrb[0].mxu0 %v992
        %v1181 = vpop.f32.mrb[0].mxu0
        %v1182 = vadd.f32 0.0, %v1181
        %v1183 = vpop.f32.mrb[0].mxu0
        %1184 = vmatprep.mubr.f32.mxu0 0.0
        %1185 = vmatmul.mubr.f32.gmra.mrb[0].mxu0 %v995
        %v1186 = vpop.f32.mrb[0].mxu0
        %v1187 = vadd.f32 0.0, %v1186
        %v1188 = vpop.f32.mrb[0].mxu0
        %1189 = vmatprep.mubr.f32.mxu0 0.0
        %1190 = vmatmul.mubr.f32.gmra.mrb[0].mxu0 %v998
        %v1191 = vpop.f32.mrb[0].mxu0
        %v1192 = vadd.f32 0.0, %v1191
        %v1193 = vpop.f32.mrb[0].mxu0
        %1194 = vmatprep.mubr.f32.mxu0 0.0
        %1195 = vmatmul.mubr.f32.gmra.mrb[0].mxu0 %v1001
        %v1196 = vpop.f32.mrb[0].mxu0
        %v1197 = vadd.f32 0.0, %v1196
        %v1198 = vpop.f32.mrb[0].mxu0
        %1199 = vmatprep.mubr.f32.mxu0 0.0
        %1200 = vmatmul.mubr.f32.gmra.mrb[0].mxu0 %v1004
        %v1201 = vpop.f32.mrb[0].mxu0
        %v1202 = vadd.f32 0.0, %v1201
        %v1203 = vpop.f32.mrb[0].mxu0
        %1204 = vmatprep.mubr.f32.mxu0 0.0
        %1205 = vmatmul.mubr.f32.gmra.mrb[0].mxu0 %v1007
        %v1206 = vpop.f32.mrb[0].mxu0
        %v1207 = vadd.f32 0.0, %v1206
        %v1208 = vpop.f32.mrb[0].mxu0
        %1209 = vmatprep.mubr.f32.mxu0 0.0
        %1210 = vmatmul.mubr.f32.gmra.mrb[0].mxu0 %v1010
        %v1211 = vpop.f32.mrb[0].mxu0
        %v1212 = vadd.f32 0.0, %v1211
        %v1213 = vpop.f32.mrb[0].mxu0
        %1214 = vmatprep.mubr.f32.mxu0 0.0
        %1215 = vmatmul.mubr.f32.gmra.mrb[0].mxu0 %v1013
        %v1216 = vpop.f32.mrb[0].mxu0
        %v1217 = vadd.f32 0.0, %v1216
        %v1218 = vpop.f32.mrb[0].mxu0
        %1219 = vmatprep.mubr.f32.mxu0 0.0
        %1220 = vmatmul.mubr.f32.gmra.mrb[0].mxu0 %v1016
        %v1221 = vpop.f32.mrb[0].mxu0
        %v1222 = vadd.f32 0.0, %v1221
        %v1223 = vpop.f32.mrb[0].mxu0
        %1224 = vmatprep.mubr.f32.mxu0 0.0
        %1225 = vmatmul.mubr.f32.gmra.mrb[0].mxu0 %v1019
        %v1226 = vpop.f32.mrb[0].mxu0
        %v1227 = vadd.f32 0.0, %v1226
        %v1228 = vpop.f32.mrb[0].mxu0
        %1229 = vmatprep.mubr.f32.mxu0 0.0
        %1230 = vmatmul.mubr.f32.gmra.mrb[0].mxu0 %v1022
        %v1231 = vpop.f32.mrb[0].mxu0
        %v1232 = vadd.f32 0.0, %v1231
        %v1233 = vpop.f32.mrb[0].mxu0
        %1234 = vmatprep.mubr.f32.mxu0 0.0
        %1235 = vmatmul.mubr.f32.gmra.mrb[0].mxu0 %v1025
        %v1236 = vpop.f32.mrb[0].mxu0
        %v1237 = vadd.f32 0.0, %v1236
        %v1238 = vpop.f32.mrb[0].mxu0
        %1239 = vmatprep.mubr.f32.mxu0 0.0
        %1240 = vmatmul.mubr.f32.gmra.mrb[0].mxu0 %v1028
        %v1241 = vpop.f32.mrb[0].mxu0
        %v1242 = vadd.f32 0.0, %v1241
        %v1243 = vpop.f32.mrb[0].mxu0
        %1244 = vmatprep.mubr.f32.mxu0 0.0
        %1245 = vmatmul.mubr.f32.gmra.mrb[0].mxu0 %v1031
        %v1246 = vpop.f32.mrb[0].mxu0
        %v1247 = vadd.f32 0.0, %v1246
        %v1248 = vpop.f32.mrb[0].mxu0
        %1249 = vmatprep.mubr.f32.mxu0 0.0
        %1250 = vmatmul.mubr.f32.gmra.mrb[0].mxu0 %v1034
        %v1251 = vpop.f32.mrb[0].mxu0
        %v1252 = vadd.f32 0.0, %v1251
        %v1253 = vpop.f32.mrb[0].mxu0
        %1254 = vmatprep.mubr.f32.mxu0 0.0
        %1255 = vmatmul.mubr.f32.gmra.mrb[0].mxu0 %v1037
        %v1256 = vpop.f32.mrb[0].mxu0
        %v1257 = vadd.f32 0.0, %v1256
        %v1258 = vpop.f32.mrb[0].mxu0
        %1259 = vmatprep.mubr.f32.mxu0 0.0
        %1260 = vmatmul.mubr.f32.gmra.mrb[0].mxu0 %v1040
        %v1261 = vpop.f32.mrb[0].mxu0
        %v1262 = vadd.f32 0.0, %v1261
        %v1263 = vpop.f32.mrb[0].mxu0
        %1264 = vmatprep.mubr.f32.mxu0 0.0
        %1265 = vmatmul.mubr.f32.gmra.mrb[0].mxu0 %v1043
        %v1266 = vpop.f32.mrb[0].mxu0
        %v1267 = vadd.f32 0.0, %v1266
        %v1268 = vpop.f32.mrb[0].mxu0
        %1269 = vdwg.mxu0
        %v1271 = vsel %vm948, %v1112, 0
        %v1274 = vsel %vm948, %v1117, 0
        %v1277 = vsel %vm948, %v1122, 0
        %v1280 = vsel %vm948, %v1127, 0
        %v1283 = vsel %vm948, %v1132, 0
        %v1286 = vsel %vm948, %v1137, 0
        %v1289 = vsel %vm948, %v1142, 0
        %v1292 = vsel %vm948, %v1147, 0
        %v1295 = vsel %vm948, %v1152, 0
        %v1298 = vsel %vm948, %v1157, 0
        %v1301 = vsel %vm948, %v1162, 0
        %v1304 = vsel %vm948, %v1167, 0
        %v1307 = vsel %vm948, %v1172, 0
        %v1310 = vsel %vm948, %v1177, 0
        %v1313 = vsel %vm948, %v1182, 0
        %v1316 = vsel %vm948, %v1187, 0
        %v1319 = vsel %vm948, %v916, 0
        %v1322 = vsel %vm948, %v917, 0
        %v1325 = vsel %vm948, %v918, 0
        %v1328 = vsel %vm948, %v919, 0
        %v1331 = vsel %vm948, %v920, 0
        %v1334 = vsel %vm948, %v921, 0
        %v1337 = vsel %vm948, %v922, 0
        %v1340 = vsel %vm948, %v923, 0
        %v1343 = vsel %vm948, %v924, 0
        %v1346 = vsel %vm948, %v925, 0
        %v1349 = vsel %vm948, %v926, 0
        %v1352 = vsel %vm948, %v927, 0
        %v1355 = vsel %vm948, %v928, 0
        %v1358 = vsel %vm948, %v929, 0
        %v1361 = vsel %vm948, %v930, 0
        %v1364 = vsel %vm948, %v931, 0
        %1366 = vmatprep.subr.mxu0 0.0
        %1367 = vmatpush1.xpose.msra.mxu0 %v1319
        %1368 = vmatprep.subr.mxu0 0.0
        %1369 = vmatpush1.xpose.msra.mxu0 %v1322
        %1370 = vmatprep.subr.mxu0 0.0
        %1371 = vmatpush1.xpose.msra.mxu0 %v1325
        %1372 = vmatprep.subr.mxu0 0.0
        %1373 = vmatpush1.xpose.msra.mxu0 %v1328
        %1374 = vmatprep.subr.mxu0 0.0
        %1375 = vmatpush1.xpose.msra.mxu0 %v1331
        %1376 = vmatprep.subr.mxu0 0.0
        %1377 = vmatpush1.xpose.msra.mxu0 %v1334
        %1378 = vmatprep.subr.mxu0 0.0
        %1379 = vmatpush1.xpose.msra.mxu0 %v1337
        %1380 = vmatprep.subr.mxu0 0.0
        %1381 = vmatpush1.xpose.msra.mxu0 %v1340
        %1382 = vmatprep.subr.mxu0 0.0
        %1383 = vmatpush1.xpose.msra.mxu0 %v1343
        %1384 = vmatprep.subr.mxu0 0.0
        %1385 = vmatpush1.xpose.msra.mxu0 %v1346
        %1386 = vmatprep.subr.mxu0 0.0
        %1387 = vmatpush1.xpose.msra.mxu0 %v1349
        %1388 = vmatprep.subr.mxu0 0.0
        %1389 = vmatpush1.xpose.msra.mxu0 %v1352
        %1390 = vmatprep.subr.mxu0 0.0
        %1391 = vmatpush1.xpose.msra.mxu0 %v1355
        %1392 = vmatprep.subr.mxu0 0.0
        %1393 = vmatpush1.xpose.msra.mxu0 %v1358
        %1394 = vmatprep.subr.mxu0 0.0
        %1395 = vmatpush1.xpose.msra.mxu0 %v1361
        %1396 = vmatprep.subr.mxu0 0.0
        %1397 = vmatpush1.xpose.msra.mxu0 %v1364
        %1398 = vmatprep.subr.mxu0 0.0
        %1399 = vmatpush1.xpose.msra.mxu0 0.0
        %1400 = vmatprep.subr.mxu0 0.0
        %1401 = vmatpush1.xpose.msra.mxu0 0.0
        %1402 = vmatprep.subr.mxu0 0.0
        %1403 = vmatpush1.xpose.msra.mxu0 0.0
        %1404 = vmatprep.subr.mxu0 0.0
        %1405 = vmatpush1.xpose.msra.mxu0 0.0
        %1406 = vmatprep.subr.mxu0 0.0
        %1407 = vmatpush1.xpose.msra.mxu0 0.0
        %1408 = vmatprep.subr.mxu0 0.0
        %1409 = vmatpush1.xpose.msra.mxu0 0.0
        %1410 = vmatprep.subr.mxu0 0.0
        %1411 = vmatpush1.xpose.msra.mxu0 0.0
        %1412 = vmatprep.subr.mxu0 0.0
        %1413 = vmatpush1.xpose.msra.mxu0 0.0
        %1414 = vmatprep.subr.mxu0 0.0
        %1415 = vmatpush1.xpose.msra.mxu0 0.0
        %1416 = vmatprep.subr.mxu0 0.0
        %1417 = vmatpush1.xpose.msra.mxu0 0.0
        %1418 = vmatprep.subr.mxu0 0.0
        %1419 = vmatpush1.xpose.msra.mxu0 0.0
        %1420 = vmatprep.subr.mxu0 0.0
        %1421 = vmatpush1.xpose.msra.mxu0 0.0
        %1422 = vmatprep.subr.mxu0 0.0
        %1423 = vmatpush1.xpose.msra.mxu0 0.0
        %1424 = vmatprep.subr.mxu0 0.0
        %1425 = vmatpush1.xpose.msra.mxu0 0.0
        %1426 = vmatprep.subr.mxu0 0.0
        %1427 = vmatpush1.xpose.msra.mxu0 0.0
        %1428 = vmatprep.subr.mxu0 0.0
        %1429 = vmatpush1.xpose.msra.mxu0 0.0
        %1430 = vmatprep.mubr.f32.mxu0 0.0
        %1431 = vmatmul.mubr.f32.gmra.mrb[0].mxu0 %v1271
        %v1432 = vpop.f32.mrb[0].mxu0
        %v1433 = vadd.f32 0.0, %v1432
        %v1434 = vpop.f32.mrb[0].mxu0
        %1435 = vmatprep.mubr.f32.mxu0 0.0
        %1436 = vmatmul.mubr.f32.gmra.mrb[0].mxu0 %v1274
        %v1437 = vpop.f32.mrb[0].mxu0
        %v1438 = vadd.f32 0.0, %v1437
        %v1439 = vpop.f32.mrb[0].mxu0
        %1440 = vmatprep.mubr.f32.mxu0 0.0
        %1441 = vmatmul.mubr.f32.gmra.mrb[0].mxu0 %v1277
        %v1442 = vpop.f32.mrb[0].mxu0
        %v1443 = vadd.f32 0.0, %v1442
        %v1444 = vpop.f32.mrb[0].mxu0
        %1445 = vmatprep.mubr.f32.mxu0 0.0
        %1446 = vmatmul.mubr.f32.gmra.mrb[0].mxu0 %v1280
        %v1447 = vpop.f32.mrb[0].mxu0
        %v1448 = vadd.f32 0.0, %v1447
        %v1449 = vpop.f32.mrb[0].mxu0
        %1450 = vmatprep.mubr.f32.mxu0 0.0
        %1451 = vmatmul.mubr.f32.gmra.mrb[0].mxu0 %v1283
        %v1452 = vpop.f32.mrb[0].mxu0
        %v1453 = vadd.f32 0.0, %v1452
        %v1454 = vpop.f32.mrb[0].mxu0
        %1455 = vmatprep.mubr.f32.mxu0 0.0
        %1456 = vmatmul.mubr.f32.gmra.mrb[0].mxu0 %v1286
        %v1457 = vpop.f32.mrb[0].mxu0
        %v1458 = vadd.f32 0.0, %v1457
        %v1459 = vpop.f32.mrb[0].mxu0
        %1460 = vmatprep.mubr.f32.mxu0 0.0
        %1461 = vmatmul.mubr.f32.gmra.mrb[0].mxu0 %v1289
        %v1462 = vpop.f32.mrb[0].mxu0
        %v1463 = vadd.f32 0.0, %v1462
        %v1464 = vpop.f32.mrb[0].mxu0
        %1465 = vmatprep.mubr.f32.mxu0 0.0
        %1466 = vmatmul.mubr.f32.gmra.mrb[0].mxu0 %v1292
        %v1467 = vpop.f32.mrb[0].mxu0
        %v1468 = vadd.f32 0.0, %v1467
        %v1469 = vpop.f32.mrb[0].mxu0
        %1470 = vmatprep.mubr.f32.mxu0 0.0
        %1471 = vmatmul.mubr.f32.gmra.mrb[0].mxu0 %v1295
        %v1472 = vpop.f32.mrb[0].mxu0
        %v1473 = vadd.f32 0.0, %v1472
        %v1474 = vpop.f32.mrb[0].mxu0
        %1475 = vmatprep.mubr.f32.mxu0 0.0
        %1476 = vmatmul.mubr.f32.gmra.mrb[0].mxu0 %v1298
        %v1477 = vpop.f32.mrb[0].mxu0
        %v1478 = vadd.f32 0.0, %v1477
        %v1479 = vpop.f32.mrb[0].mxu0
        %1480 = vmatprep.mubr.f32.mxu0 0.0
        %1481 = vmatmul.mubr.f32.gmra.mrb[0].mxu0 %v1301
        %v1482 = vpop.f32.mrb[0].mxu0
        %v1483 = vadd.f32 0.0, %v1482
        %v1484 = vpop.f32.mrb[0].mxu0
        %1485 = vmatprep.mubr.f32.mxu0 0.0
        %1486 = vmatmul.mubr.f32.gmra.mrb[0].mxu0 %v1304
        %v1487 = vpop.f32.mrb[0].mxu0
        %v1488 = vadd.f32 0.0, %v1487
        %v1489 = vpop.f32.mrb[0].mxu0
        %1490 = vmatprep.mubr.f32.mxu0 0.0
        %1491 = vmatmul.mubr.f32.gmra.mrb[0].mxu0 %v1307
        %v1492 = vpop.f32.mrb[0].mxu0
        %v1493 = vadd.f32 0.0, %v1492
        %v1494 = vpop.f32.mrb[0].mxu0
        %1495 = vmatprep.mubr.f32.mxu0 0.0
        %1496 = vmatmul.mubr.f32.gmra.mrb[0].mxu0 %v1310
        %v1497 = vpop.f32.mrb[0].mxu0
        %v1498 = vadd.f32 0.0, %v1497
        %v1499 = vpop.f32.mrb[0].mxu0
        %1500 = vmatprep.mubr.f32.mxu0 0.0
        %1501 = vmatmul.mubr.f32.gmra.mrb[0].mxu0 %v1313
        %v1502 = vpop.f32.mrb[0].mxu0
        %v1503 = vadd.f32 0.0, %v1502
        %v1504 = vpop.f32.mrb[0].mxu0
        %1505 = vmatprep.mubr.f32.mxu0 0.0
        %1506 = vmatmul.mubr.f32.gmra.mrb[0].mxu0 %v1316
        %v1507 = vpop.f32.mrb[0].mxu0
        %v1508 = vadd.f32 0.0, %v1507
        %v1509 = vpop.f32.mrb[0].mxu0
        %1510 = vdwg.mxu0
        %1511 = vadd.xlane.f32.xlu0 %v1433
        %v1512 = vpop.xlane.xlu0 %1511
        %1513 = vadd.xlane.f32.xlu0 %v1438
        %v1514 = vpop.xlane.xlu0 %1513
        %1515 = vadd.xlane.f32.xlu0 %v1443
        %v1516 = vpop.xlane.xlu0 %1515
        %1517 = vadd.xlane.f32.xlu0 %v1448
        %v1518 = vpop.xlane.xlu0 %1517
        %1519 = vadd.xlane.f32.xlu0 %v1453
        %v1520 = vpop.xlane.xlu0 %1519
        %1521 = vadd.xlane.f32.xlu0 %v1458
        %v1522 = vpop.xlane.xlu0 %1521
        %1523 = vadd.xlane.f32.xlu0 %v1463
        %v1524 = vpop.xlane.xlu0 %1523
        %1525 = vadd.xlane.f32.xlu0 %v1468
        %v1526 = vpop.xlane.xlu0 %1525
        %1527 = vadd.xlane.f32.xlu0 %v1473
        %v1528 = vpop.xlane.xlu0 %1527
        %1529 = vadd.xlane.f32.xlu0 %v1478
        %v1530 = vpop.xlane.xlu0 %1529
        %1531 = vadd.xlane.f32.xlu0 %v1483
        %v1532 = vpop.xlane.xlu0 %1531
        %1533 = vadd.xlane.f32.xlu0 %v1488
        %v1534 = vpop.xlane.xlu0 %1533
        %1535 = vadd.xlane.f32.xlu0 %v1493
        %v1536 = vpop.xlane.xlu0 %1535
        %1537 = vadd.xlane.f32.xlu0 %v1498
        %v1538 = vpop.xlane.xlu0 %1537
        %1539 = vadd.xlane.f32.xlu0 %v1503
        %v1540 = vpop.xlane.xlu0 %1539
        %1541 = vadd.xlane.f32.xlu0 %v1508
        %v1542 = vpop.xlane.xlu0 %1541
        %v1543 = vrcp.pop 128.0
        %v1544 = vmul.f32 %v1512, %v1543
        %v1545 = vmul.f32 %v1514, %v1543
        %v1546 = vmul.f32 %v1516, %v1543
        %v1547 = vmul.f32 %v1518, %v1543
        %v1548 = vmul.f32 %v1520, %v1543
        %v1549 = vmul.f32 %v1522, %v1543
        %v1550 = vmul.f32 %v1524, %v1543
        %v1551 = vmul.f32 %v1526, %v1543
        %v1552 = vmul.f32 %v1528, %v1543
        %v1553 = vmul.f32 %v1530, %v1543
        %v1554 = vmul.f32 %v1532, %v1543
        %v1555 = vmul.f32 %v1534, %v1543
        %v1556 = vmul.f32 %v1536, %v1543
        %v1557 = vmul.f32 %v1538, %v1543
        %v1558 = vmul.f32 %v1540, %v1543
        %v1559 = vmul.f32 %v1542, %v1543
        %v1560 = vsub.f32 %v1433, %v1544
        %v1561 = vsub.f32 %v1438, %v1545
        %v1562 = vsub.f32 %v1443, %v1546
        %v1563 = vsub.f32 %v1448, %v1547
        %v1564 = vsub.f32 %v1453, %v1548
        %v1565 = vsub.f32 %v1458, %v1549
        %v1566 = vsub.f32 %v1463, %v1550
        %v1567 = vsub.f32 %v1468, %v1551
        %v1568 = vsub.f32 %v1473, %v1552
        %v1569 = vsub.f32 %v1478, %v1553
        %v1570 = vsub.f32 %v1483, %v1554
        %v1571 = vsub.f32 %v1488, %v1555
        %v1572 = vsub.f32 %v1493, %v1556
        %v1573 = vsub.f32 %v1498, %v1557
        %v1574 = vsub.f32 %v1503, %v1558
        %v1575 = vsub.f32 %v1508, %v1559
        %v1576 = vmul.f32 %v1560, %v1560
        %v1577 = vmul.f32 %v1561, %v1561
        %v1578 = vmul.f32 %v1562, %v1562
        %v1579 = vmul.f32 %v1563, %v1563
        %v1580 = vmul.f32 %v1564, %v1564
        %v1581 = vmul.f32 %v1565, %v1565
        %v1582 = vmul.f32 %v1566, %v1566
        %v1583 = vmul.f32 %v1567, %v1567
        %v1584 = vmul.f32 %v1568, %v1568
        %v1585 = vmul.f32 %v1569, %v1569
        %v1586 = vmul.f32 %v1570, %v1570
        %v1587 = vmul.f32 %v1571, %v1571
        %v1588 = vmul.f32 %v1572, %v1572
        %v1589 = vmul.f32 %v1573, %v1573
        %v1590 = vmul.f32 %v1574, %v1574
        %v1591 = vmul.f32 %v1575, %v1575
        %1592 = vadd.xlane.f32.xlu0 %v1576
        %v1593 = vpop.xlane.xlu0 %1592
        %1594 = vadd.xlane.f32.xlu0 %v1577
        %v1595 = vpop.xlane.xlu0 %1594
        %1596 = vadd.xlane.f32.xlu0 %v1578
        %v1597 = vpop.xlane.xlu0 %1596
        %1598 = vadd.xlane.f32.xlu0 %v1579
        %v1599 = vpop.xlane.xlu0 %1598
        %1600 = vadd.xlane.f32.xlu0 %v1580
        %v1601 = vpop.xlane.xlu0 %1600
        %1602 = vadd.xlane.f32.xlu0 %v1581
        %v1603 = vpop.xlane.xlu0 %1602
        %1604 = vadd.xlane.f32.xlu0 %v1582
        %v1605 = vpop.xlane.xlu0 %1604
        %1606 = vadd.xlane.f32.xlu0 %v1583
        %v1607 = vpop.xlane.xlu0 %1606
        %1608 = vadd.xlane.f32.xlu0 %v1584
        %v1609 = vpop.xlane.xlu0 %1608
        %1610 = vadd.xlane.f32.xlu0 %v1585
        %v1611 = vpop.xlane.xlu0 %1610
        %1612 = vadd.xlane.f32.xlu0 %v1586
        %v1613 = vpop.xlane.xlu0 %1612
        %1614 = vadd.xlane.f32.xlu0 %v1587
        %v1615 = vpop.xlane.xlu0 %1614
        %1616 = vadd.xlane.f32.xlu0 %v1588
        %v1617 = vpop.xlane.xlu0 %1616
        %1618 = vadd.xlane.f32.xlu0 %v1589
        %v1619 = vpop.xlane.xlu0 %1618
        %1620 = vadd.xlane.f32.xlu0 %v1590
        %v1621 = vpop.xlane.xlu0 %1620
        %1622 = vadd.xlane.f32.xlu0 %v1591
        %v1623 = vpop.xlane.xlu0 %1622
        %v1624 = vmul.f32 %v1593, %v1543
        %v1625 = vmul.f32 %v1595, %v1543
        %v1626 = vmul.f32 %v1597, %v1543
        %v1627 = vmul.f32 %v1599, %v1543
        %v1628 = vmul.f32 %v1601, %v1543
        %v1629 = vmul.f32 %v1603, %v1543
        %v1630 = vmul.f32 %v1605, %v1543
        %v1631 = vmul.f32 %v1607, %v1543
        %v1632 = vmul.f32 %v1609, %v1543
        %v1633 = vmul.f32 %v1611, %v1543
        %v1634 = vmul.f32 %v1613, %v1543
        %v1635 = vmul.f32 %v1615, %v1543
        %v1636 = vmul.f32 %v1617, %v1543
        %v1637 = vmul.f32 %v1619, %v1543
        %v1638 = vmul.f32 %v1621, %v1543
        %v1639 = vmul.f32 %v1623, %v1543
        %v1640 = vadd.f32 %v1624, 1e-05
        %v1641 = vadd.f32 %v1625, 1e-05
        %v1642 = vadd.f32 %v1626, 1e-05
        %v1643 = vadd.f32 %v1627, 1e-05
        %v1644 = vadd.f32 %v1628, 1e-05
        %v1645 = vadd.f32 %v1629, 1e-05
        %v1646 = vadd.f32 %v1630, 1e-05
        %v1647 = vadd.f32 %v1631, 1e-05
        %v1648 = vadd.f32 %v1632, 1e-05
        %v1649 = vadd.f32 %v1633, 1e-05
        %v1650 = vadd.f32 %v1634, 1e-05
        %v1651 = vadd.f32 %v1635, 1e-05
        %v1652 = vadd.f32 %v1636, 1e-05
        %v1653 = vadd.f32 %v1637, 1e-05
        %v1654 = vadd.f32 %v1638, 1e-05
        %v1655 = vadd.f32 %v1639, 1e-05
        %v1656 = vrsqrt.pop %v1640
        %v1657 = vrsqrt.pop %v1641
        %v1658 = vrsqrt.pop %v1642
        %v1659 = vrsqrt.pop %v1643
        %v1660 = vrsqrt.pop %v1644
        %v1661 = vrsqrt.pop %v1645
        %v1662 = vrsqrt.pop %v1646
        %v1663 = vrsqrt.pop %v1647
        %v1664 = vrsqrt.pop %v1648
        %v1665 = vrsqrt.pop %v1649
        %v1666 = vrsqrt.pop %v1650
        %v1667 = vrsqrt.pop %v1651
        %v1668 = vrsqrt.pop %v1652
        %v1669 = vrsqrt.pop %v1653
        %v1670 = vrsqrt.pop %v1654
        %v1671 = vrsqrt.pop %v1655
        %v1672 = vmul.f32 %v1560, %v1656
        %v1673 = vmul.f32 %v1561, %v1657
        %v1674 = vmul.f32 %v1562, %v1658
        %v1675 = vmul.f32 %v1563, %v1659
        %v1676 = vmul.f32 %v1564, %v1660
        %v1677 = vmul.f32 %v1565, %v1661
        %v1678 = vmul.f32 %v1566, %v1662
        %v1679 = vmul.f32 %v1567, %v1663
        %v1680 = vmul.f32 %v1568, %v1664
        %v1681 = vmul.f32 %v1569, %v1665
        %v1682 = vmul.f32 %v1570, %v1666
        %v1683 = vmul.f32 %v1571, %v1667
        %v1684 = vmul.f32 %v1572, %v1668
        %v1685 = vmul.f32 %v1573, %v1669
        %v1686 = vmul.f32 %v1574, %v1670
        %v1687 = vmul.f32 %v1575, %v1671
        %v1689 = vlaneseq
        %v1690 = vshrl.u32 %v1689, 7
        %v1691 = vsub.s32 0, %v1690
        %v1692 = vrot.slane %v782, %v1691
        %v1694 = vmul.f32 %v1672, %v1692
        %v1695 = vmul.f32 %v1673, %v1692
        %v1696 = vmul.f32 %v1674, %v1692
        %v1697 = vmul.f32 %v1675, %v1692
        %v1698 = vmul.f32 %v1676, %v1692
        %v1699 = vmul.f32 %v1677, %v1692
        %v1700 = vmul.f32 %v1678, %v1692
        %v1701 = vmul.f32 %v1679, %v1692
        %v1702 = vmul.f32 %v1680, %v1692
        %v1703 = vmul.f32 %v1681, %v1692
        %v1704 = vmul.f32 %v1682, %v1692
        %v1705 = vmul.f32 %v1683, %v1692
        %v1706 = vmul.f32 %v1684, %v1692
        %v1707 = vmul.f32 %v1685, %v1692
        %v1708 = vmul.f32 %v1686, %v1692
        %v1709 = vmul.f32 %v1687, %v1692
        %v1711 = vlaneseq
        %v1712 = vshrl.u32 %v1711, 7
        %v1713 = vsub.s32 0, %v1712
        %v1714 = vrot.slane %v783, %v1713
        %v1716 = vadd.f32 %v1694, %v1714
        %v1717 = vadd.f32 %v1695, %v1714
        %v1718 = vadd.f32 %v1696, %v1714
        %v1719 = vadd.f32 %v1697, %v1714
        %v1720 = vadd.f32 %v1698, %v1714
        %v1721 = vadd.f32 %v1699, %v1714
        %v1722 = vadd.f32 %v1700, %v1714
        %v1723 = vadd.f32 %v1701, %v1714
        %v1724 = vadd.f32 %v1702, %v1714
        %v1725 = vadd.f32 %v1703, %v1714
        %v1726 = vadd.f32 %v1704, %v1714
        %v1727 = vadd.f32 %v1705, %v1714
        %v1728 = vadd.f32 %v1706, %v1714
        %v1729 = vadd.f32 %v1707, %v1714
        %v1730 = vadd.f32 %v1708, %v1714
        %v1731 = vadd.f32 %v1709, %v1714
        %1732 = vst [vmem:[#allocation2] sm:$0xff] %v1716
        %1733 = vst [vmem:[#allocation2 + $0x10] sm:$0xff] %v1717
        %1734 = vst [vmem:[#allocation2 + $0x20] sm:$0xff] %v1718
        %1735 = vst [vmem:[#allocation2 + $0x30] sm:$0xff] %v1719
        %1736 = vst [vmem:[#allocation2 + $0x40] sm:$0xff] %v1720
        %1737 = vst [vmem:[#allocation2 + $0x50] sm:$0xff] %v1721
        %1738 = vst [vmem:[#allocation2 + $0x60] sm:$0xff] %v1722
        %1739 = vst [vmem:[#allocation2 + $0x70] sm:$0xff] %v1723
        %1740 = vst [vmem:[#allocation2 + $0x80] sm:$0xff] %v1724
        %1741 = vst [vmem:[#allocation2 + $0x90] sm:$0xff] %v1725
        %1742 = vst [vmem:[#allocation2 + $0xa0] sm:$0xff] %v1726
        %1743 = vst [vmem:[#allocation2 + $0xb0] sm:$0xff] %v1727
        %1744 = vst [vmem:[#allocation2 + $0xc0] sm:$0xff] %v1728
        %1745 = vst [vmem:[#allocation2 + $0xd0] sm:$0xff] %v1729
        %1746 = vst [vmem:[#allocation2 + $0xe0] sm:$0xff] %v1730
        %1747 = vst [vmem:[#allocation2 + $0xf0] sm:$0xff] %v1731
        %v1749 = vsel %vm948, %v1192, 0
        %v1752 = vsel %vm948, %v1197, 0
        %v1755 = vsel %vm948, %v1202, 0
        %v1758 = vsel %vm948, %v1207, 0
        %v1761 = vsel %vm948, %v1212, 0
        %v1764 = vsel %vm948, %v1217, 0
        %v1767 = vsel %vm948, %v1222, 0
        %v1770 = vsel %vm948, %v1227, 0
        %v1773 = vsel %vm948, %v1232, 0
        %v1776 = vsel %vm948, %v1237, 0
        %v1779 = vsel %vm948, %v1242, 0
        %v1782 = vsel %vm948, %v1247, 0
        %v1785 = vsel %vm948, %v1252, 0
        %v1788 = vsel %vm948, %v1257, 0
        %v1791 = vsel %vm948, %v1262, 0
        %v1794 = vsel %vm948, %v1267, 0
        %v1797 = vsel %vm948, %v932, 0
        %v1800 = vsel %vm948, %v933, 0
        %v1803 = vsel %vm948, %v934, 0
        %v1806 = vsel %vm948, %v935, 0
        %v1809 = vsel %vm948, %v936, 0
        %v1812 = vsel %vm948, %v937, 0
        %v1815 = vsel %vm948, %v938, 0
        %v1818 = vsel %vm948, %v939, 0
        %v1821 = vsel %vm948, %v940, 0
        %v1824 = vsel %vm948, %v941, 0
        %v1827 = vsel %vm948, %v942, 0
        %v1830 = vsel %vm948, %v943, 0
        %v1833 = vsel %vm948, %v944, 0
        %v1836 = vsel %vm948, %v945, 0
        %v1839 = vsel %vm948, %v946, 0
        %v1842 = vsel %vm948, %v947, 0
        %1844 = vmatprep.subr.mxu0 0.0
        %1845 = vmatpush1.xpose.msra.mxu0 %v1797
        %1846 = vmatprep.subr.mxu0 0.0
        %1847 = vmatpush1.xpose.msra.mxu0 %v1800
        %1848 = vmatprep.subr.mxu0 0.0
        %1849 = vmatpush1.xpose.msra.mxu0 %v1803
        %1850 = vmatprep.subr.mxu0 0.0
        %1851 = vmatpush1.xpose.msra.mxu0 %v1806
        %1852 = vmatprep.subr.mxu0 0.0
        %1853 = vmatpush1.xpose.msra.mxu0 %v1809
        %1854 = vmatprep.subr.mxu0 0.0
        %1855 = vmatpush1.xpose.msra.mxu0 %v1812
        %1856 = vmatprep.subr.mxu0 0.0
        %1857 = vmatpush1.xpose.msra.mxu0 %v1815
        %1858 = vmatprep.subr.mxu0 0.0
        %1859 = vmatpush1.xpose.msra.mxu0 %v1818
        %1860 = vmatprep.subr.mxu0 0.0
        %1861 = vmatpush1.xpose.msra.mxu0 %v1821
        %1862 = vmatprep.subr.mxu0 0.0
        %1863 = vmatpush1.xpose.msra.mxu0 %v1824
        %1864 = vmatprep.subr.mxu0 0.0
        %1865 = vmatpush1.xpose.msra.mxu0 %v1827
        %1866 = vmatprep.subr.mxu0 0.0
        %1867 = vmatpush1.xpose.msra.mxu0 %v1830
        %1868 = vmatprep.subr.mxu0 0.0
        %1869 = vmatpush1.xpose.msra.mxu0 %v1833
        %1870 = vmatprep.subr.mxu0 0.0
        %1871 = vmatpush1.xpose.msra.mxu0 %v1836
        %1872 = vmatprep.subr.mxu0 0.0
        %1873 = vmatpush1.xpose.msra.mxu0 %v1839
        %1874 = vmatprep.subr.mxu0 0.0
        %1875 = vmatpush1.xpose.msra.mxu0 %v1842
        %1876 = vmatprep.subr.mxu0 0.0
        %1877 = vmatpush1.xpose.msra.mxu0 0.0
        %1878 = vmatprep.subr.mxu0 0.0
        %1879 = vmatpush1.xpose.msra.mxu0 0.0
        %1880 = vmatprep.subr.mxu0 0.0
        %1881 = vmatpush1.xpose.msra.mxu0 0.0
        %1882 = vmatprep.subr.mxu0 0.0
        %1883 = vmatpush1.xpose.msra.mxu0 0.0
        %1884 = vmatprep.subr.mxu0 0.0
        %1885 = vmatpush1.xpose.msra.mxu0 0.0
        %1886 = vmatprep.subr.mxu0 0.0
        %1887 = vmatpush1.xpose.msra.mxu0 0.0
        %1888 = vmatprep.subr.mxu0 0.0
        %1889 = vmatpush1.xpose.msra.mxu0 0.0
        %1890 = vmatprep.subr.mxu0 0.0
        %1891 = vmatpush1.xpose.msra.mxu0 0.0
        %1892 = vmatprep.subr.mxu0 0.0
        %1893 = vmatpush1.xpose.msra.mxu0 0.0
        %1894 = vmatprep.subr.mxu0 0.0
        %1895 = vmatpush1.xpose.msra.mxu0 0.0
        %1896 = vmatprep.subr.mxu0 0.0
        %1897 = vmatpush1.xpose.msra.mxu0 0.0
        %1898 = vmatprep.subr.mxu0 0.0
        %1899 = vmatpush1.xpose.msra.mxu0 0.0
        %1900 = vmatprep.subr.mxu0 0.0
        %1901 = vmatpush1.xpose.msra.mxu0 0.0
        %1902 = vmatprep.subr.mxu0 0.0
        %1903 = vmatpush1.xpose.msra.mxu0 0.0
        %1904 = vmatprep.subr.mxu0 0.0
        %1905 = vmatpush1.xpose.msra.mxu0 0.0
        %1906 = vmatprep.subr.mxu0 0.0
        %1907 = vmatpush1.xpose.msra.mxu0 0.0
        %1908 = vmatprep.mubr.f32.mxu0 0.0
        %1909 = vmatmul.mubr.f32.gmra.mrb[0].mxu0 %v1749
        %v1910 = vpop.f32.mrb[0].mxu0
        %v1911 = vadd.f32 0.0, %v1910
        %v1912 = vpop.f32.mrb[0].mxu0
        %1913 = vmatprep.mubr.f32.mxu0 0.0
        %1914 = vmatmul.mubr.f32.gmra.mrb[0].mxu0 %v1752
        %v1915 = vpop.f32.mrb[0].mxu0
        %v1916 = vadd.f32 0.0, %v1915
        %v1917 = vpop.f32.mrb[0].mxu0
        %1918 = vmatprep.mubr.f32.mxu0 0.0
        %1919 = vmatmul.mubr.f32.gmra.mrb[0].mxu0 %v1755
        %v1920 = vpop.f32.mrb[0].mxu0
        %v1921 = vadd.f32 0.0, %v1920
        %v1922 = vpop.f32.mrb[0].mxu0
        %1923 = vmatprep.mubr.f32.mxu0 0.0
        %1924 = vmatmul.mubr.f32.gmra.mrb[0].mxu0 %v1758
        %v1925 = vpop.f32.mrb[0].mxu0
        %v1926 = vadd.f32 0.0, %v1925
        %v1927 = vpop.f32.mrb[0].mxu0
        %1928 = vmatprep.mubr.f32.mxu0 0.0
        %1929 = vmatmul.mubr.f32.gmra.mrb[0].mxu0 %v1761
        %v1930 = vpop.f32.mrb[0].mxu0
        %v1931 = vadd.f32 0.0, %v1930
        %v1932 = vpop.f32.mrb[0].mxu0
        %1933 = vmatprep.mubr.f32.mxu0 0.0
        %1934 = vmatmul.mubr.f32.gmra.mrb[0].mxu0 %v1764
        %v1935 = vpop.f32.mrb[0].mxu0
        %v1936 = vadd.f32 0.0, %v1935
        %v1937 = vpop.f32.mrb[0].mxu0
        %1938 = vmatprep.mubr.f32.mxu0 0.0
        %1939 = vmatmul.mubr.f32.gmra.mrb[0].mxu0 %v1767
        %v1940 = vpop.f32.mrb[0].mxu0
        %v1941 = vadd.f32 0.0, %v1940
        %v1942 = vpop.f32.mrb[0].mxu0
        %1943 = vmatprep.mubr.f32.mxu0 0.0
        %1944 = vmatmul.mubr.f32.gmra.mrb[0].mxu0 %v1770
        %v1945 = vpop.f32.mrb[0].mxu0
        %v1946 = vadd.f32 0.0, %v1945
        %v1947 = vpop.f32.mrb[0].mxu0
        %1948 = vmatprep.mubr.f32.mxu0 0.0
        %1949 = vmatmul.mubr.f32.gmra.mrb[0].mxu0 %v1773
        %v1950 = vpop.f32.mrb[0].mxu0
        %v1951 = vadd.f32 0.0, %v1950
        %v1952 = vpop.f32.mrb[0].mxu0
        %1953 = vmatprep.mubr.f32.mxu0 0.0
        %1954 = vmatmul.mubr.f32.gmra.mrb[0].mxu0 %v1776
        %v1955 = vpop.f32.mrb[0].mxu0
        %v1956 = vadd.f32 0.0, %v1955
        %v1957 = vpop.f32.mrb[0].mxu0
        %1958 = vmatprep.mubr.f32.mxu0 0.0
        %1959 = vmatmul.mubr.f32.gmra.mrb[0].mxu0 %v1779
        %v1960 = vpop.f32.mrb[0].mxu0
        %v1961 = vadd.f32 0.0, %v1960
        %v1962 = vpop.f32.mrb[0].mxu0
        %1963 = vmatprep.mubr.f32.mxu0 0.0
        %1964 = vmatmul.mubr.f32.gmra.mrb[0].mxu0 %v1782
        %v1965 = vpop.f32.mrb[0].mxu0
        %v1966 = vadd.f32 0.0, %v1965
        %v1967 = vpop.f32.mrb[0].mxu0
        %1968 = vmatprep.mubr.f32.mxu0 0.0
        %1969 = vmatmul.mubr.f32.gmra.mrb[0].mxu0 %v1785
        %v1970 = vpop.f32.mrb[0].mxu0
        %v1971 = vadd.f32 0.0, %v1970
        %v1972 = vpop.f32.mrb[0].mxu0
        %1973 = vmatprep.mubr.f32.mxu0 0.0
        %1974 = vmatmul.mubr.f32.gmra.mrb[0].mxu0 %v1788
        %v1975 = vpop.f32.mrb[0].mxu0
        %v1976 = vadd.f32 0.0, %v1975
        %v1977 = vpop.f32.mrb[0].mxu0
        %1978 = vmatprep.mubr.f32.mxu0 0.0
        %1979 = vmatmul.mubr.f32.gmra.mrb[0].mxu0 %v1791
        %v1980 = vpop.f32.mrb[0].mxu0
        %v1981 = vadd.f32 0.0, %v1980
        %v1982 = vpop.f32.mrb[0].mxu0
        %1983 = vmatprep.mubr.f32.mxu0 0.0
        %1984 = vmatmul.mubr.f32.gmra.mrb[0].mxu0 %v1794
        %v1985 = vpop.f32.mrb[0].mxu0
        %v1986 = vadd.f32 0.0, %v1985
        %v1987 = vpop.f32.mrb[0].mxu0
        %1988 = vdwg.mxu0
        %1989 = vadd.xlane.f32.xlu0 %v1911
        %v1990 = vpop.xlane.xlu0 %1989
        %1991 = vadd.xlane.f32.xlu0 %v1916
        %v1992 = vpop.xlane.xlu0 %1991
        %1993 = vadd.xlane.f32.xlu0 %v1921
        %v1994 = vpop.xlane.xlu0 %1993
        %1995 = vadd.xlane.f32.xlu0 %v1926
        %v1996 = vpop.xlane.xlu0 %1995
        %1997 = vadd.xlane.f32.xlu0 %v1931
        %v1998 = vpop.xlane.xlu0 %1997
        %1999 = vadd.xlane.f32.xlu0 %v1936
        %v2000 = vpop.xlane.xlu0 %1999
        %2001 = vadd.xlane.f32.xlu0 %v1941
        %v2002 = vpop.xlane.xlu0 %2001
        %2003 = vadd.xlane.f32.xlu0 %v1946
        %v2004 = vpop.xlane.xlu0 %2003
        %2005 = vadd.xlane.f32.xlu0 %v1951
        %v2006 = vpop.xlane.xlu0 %2005
        %2007 = vadd.xlane.f32.xlu0 %v1956
        %v2008 = vpop.xlane.xlu0 %2007
        %2009 = vadd.xlane.f32.xlu0 %v1961
        %v2010 = vpop.xlane.xlu0 %2009
        %2011 = vadd.xlane.f32.xlu0 %v1966
        %v2012 = vpop.xlane.xlu0 %2011
        %2013 = vadd.xlane.f32.xlu0 %v1971
        %v2014 = vpop.xlane.xlu0 %2013
        %2015 = vadd.xlane.f32.xlu0 %v1976
        %v2016 = vpop.xlane.xlu0 %2015
        %2017 = vadd.xlane.f32.xlu0 %v1981
        %v2018 = vpop.xlane.xlu0 %2017
        %2019 = vadd.xlane.f32.xlu0 %v1986
        %v2020 = vpop.xlane.xlu0 %2019
        %v2021 = vmul.f32 %v1990, %v1543
        %v2022 = vmul.f32 %v1992, %v1543
        %v2023 = vmul.f32 %v1994, %v1543
        %v2024 = vmul.f32 %v1996, %v1543
        %v2025 = vmul.f32 %v1998, %v1543
        %v2026 = vmul.f32 %v2000, %v1543
        %v2027 = vmul.f32 %v2002, %v1543
        %v2028 = vmul.f32 %v2004, %v1543
        %v2029 = vmul.f32 %v2006, %v1543
        %v2030 = vmul.f32 %v2008, %v1543
        %v2031 = vmul.f32 %v2010, %v1543
        %v2032 = vmul.f32 %v2012, %v1543
        %v2033 = vmul.f32 %v2014, %v1543
        %v2034 = vmul.f32 %v2016, %v1543
        %v2035 = vmul.f32 %v2018, %v1543
        %v2036 = vmul.f32 %v2020, %v1543
        %v2037 = vsub.f32 %v1911, %v2021
        %v2038 = vsub.f32 %v1916, %v2022
        %v2039 = vsub.f32 %v1921, %v2023
        %v2040 = vsub.f32 %v1926, %v2024
        %v2041 = vsub.f32 %v1931, %v2025
        %v2042 = vsub.f32 %v1936, %v2026
        %v2043 = vsub.f32 %v1941, %v2027
        %v2044 = vsub.f32 %v1946, %v2028
        %v2045 = vsub.f32 %v1951, %v2029
        %v2046 = vsub.f32 %v1956, %v2030
        %v2047 = vsub.f32 %v1961, %v2031
        %v2048 = vsub.f32 %v1966, %v2032
        %v2049 = vsub.f32 %v1971, %v2033
        %v2050 = vsub.f32 %v1976, %v2034
        %v2051 = vsub.f32 %v1981, %v2035
        %v2052 = vsub.f32 %v1986, %v2036
        %v2053 = vmul.f32 %v2037, %v2037
        %v2054 = vmul.f32 %v2038, %v2038
        %v2055 = vmul.f32 %v2039, %v2039
        %v2056 = vmul.f32 %v2040, %v2040
        %v2057 = vmul.f32 %v2041, %v2041
        %v2058 = vmul.f32 %v2042, %v2042
        %v2059 = vmul.f32 %v2043, %v2043
        %v2060 = vmul.f32 %v2044, %v2044
        %v2061 = vmul.f32 %v2045, %v2045
        %v2062 = vmul.f32 %v2046, %v2046
        %v2063 = vmul.f32 %v2047, %v2047
        %v2064 = vmul.f32 %v2048, %v2048
        %v2065 = vmul.f32 %v2049, %v2049
        %v2066 = vmul.f32 %v2050, %v2050
        %v2067 = vmul.f32 %v2051, %v2051
        %v2068 = vmul.f32 %v2052, %v2052
        %2069 = vadd.xlane.f32.xlu0 %v2053
        %v2070 = vpop.xlane.xlu0 %2069
        %2071 = vadd.xlane.f32.xlu0 %v2054
        %v2072 = vpop.xlane.xlu0 %2071
        %2073 = vadd.xlane.f32.xlu0 %v2055
        %v2074 = vpop.xlane.xlu0 %2073
        %2075 = vadd.xlane.f32.xlu0 %v2056
        %v2076 = vpop.xlane.xlu0 %2075
        %2077 = vadd.xlane.f32.xlu0 %v2057
        %v2078 = vpop.xlane.xlu0 %2077
        %2079 = vadd.xlane.f32.xlu0 %v2058
        %v2080 = vpop.xlane.xlu0 %2079
        %2081 = vadd.xlane.f32.xlu0 %v2059
        %v2082 = vpop.xlane.xlu0 %2081
        %2083 = vadd.xlane.f32.xlu0 %v2060
        %v2084 = vpop.xlane.xlu0 %2083
        %2085 = vadd.xlane.f32.xlu0 %v2061
        %v2086 = vpop.xlane.xlu0 %2085
        %2087 = vadd.xlane.f32.xlu0 %v2062
        %v2088 = vpop.xlane.xlu0 %2087
        %2089 = vadd.xlane.f32.xlu0 %v2063
        %v2090 = vpop.xlane.xlu0 %2089
        %2091 = vadd.xlane.f32.xlu0 %v2064
        %v2092 = vpop.xlane.xlu0 %2091
        %2093 = vadd.xlane.f32.xlu0 %v2065
        %v2094 = vpop.xlane.xlu0 %2093
        %2095 = vadd.xlane.f32.xlu0 %v2066
        %v2096 = vpop.xlane.xlu0 %2095
        %2097 = vadd.xlane.f32.xlu0 %v2067
        %v2098 = vpop.xlane.xlu0 %2097
        %2099 = vadd.xlane.f32.xlu0 %v2068
        %v2100 = vpop.xlane.xlu0 %2099
        %v2101 = vmul.f32 %v2070, %v1543
        %v2102 = vmul.f32 %v2072, %v1543
        %v2103 = vmul.f32 %v2074, %v1543
        %v2104 = vmul.f32 %v2076, %v1543
        %v2105 = vmul.f32 %v2078, %v1543
        %v2106 = vmul.f32 %v2080, %v1543
        %v2107 = vmul.f32 %v2082, %v1543
        %v2108 = vmul.f32 %v2084, %v1543
        %v2109 = vmul.f32 %v2086, %v1543
        %v2110 = vmul.f32 %v2088, %v1543
        %v2111 = vmul.f32 %v2090, %v1543
        %v2112 = vmul.f32 %v2092, %v1543
        %v2113 = vmul.f32 %v2094, %v1543
        %v2114 = vmul.f32 %v2096, %v1543
        %v2115 = vmul.f32 %v2098, %v1543
        %v2116 = vmul.f32 %v2100, %v1543
        %v2117 = vadd.f32 %v2101, 1e-05
        %v2118 = vadd.f32 %v2102, 1e-05
        %v2119 = vadd.f32 %v2103, 1e-05
        %v2120 = vadd.f32 %v2104, 1e-05
        %v2121 = vadd.f32 %v2105, 1e-05
        %v2122 = vadd.f32 %v2106, 1e-05
        %v2123 = vadd.f32 %v2107, 1e-05
        %v2124 = vadd.f32 %v2108, 1e-05
        %v2125 = vadd.f32 %v2109, 1e-05
        %v2126 = vadd.f32 %v2110, 1e-05
        %v2127 = vadd.f32 %v2111, 1e-05
        %v2128 = vadd.f32 %v2112, 1e-05
        %v2129 = vadd.f32 %v2113, 1e-05
        %v2130 = vadd.f32 %v2114, 1e-05
        %v2131 = vadd.f32 %v2115, 1e-05
        %v2132 = vadd.f32 %v2116, 1e-05
        %v2133 = vrsqrt.pop %v2117
        %v2134 = vrsqrt.pop %v2118
        %v2135 = vrsqrt.pop %v2119
        %v2136 = vrsqrt.pop %v2120
        %v2137 = vrsqrt.pop %v2121
        %v2138 = vrsqrt.pop %v2122
        %v2139 = vrsqrt.pop %v2123
        %v2140 = vrsqrt.pop %v2124
        %v2141 = vrsqrt.pop %v2125
        %v2142 = vrsqrt.pop %v2126
        %v2143 = vrsqrt.pop %v2127
        %v2144 = vrsqrt.pop %v2128
        %v2145 = vrsqrt.pop %v2129
        %v2146 = vrsqrt.pop %v2130
        %v2147 = vrsqrt.pop %v2131
        %v2148 = vrsqrt.pop %v2132
        %v2149 = vmul.f32 %v2037, %v2133
        %v2150 = vmul.f32 %v2038, %v2134
        %v2151 = vmul.f32 %v2039, %v2135
        %v2152 = vmul.f32 %v2040, %v2136
        %v2153 = vmul.f32 %v2041, %v2137
        %v2154 = vmul.f32 %v2042, %v2138
        %v2155 = vmul.f32 %v2043, %v2139
        %v2156 = vmul.f32 %v2044, %v2140
        %v2157 = vmul.f32 %v2045, %v2141
        %v2158 = vmul.f32 %v2046, %v2142
        %v2159 = vmul.f32 %v2047, %v2143
        %v2160 = vmul.f32 %v2048, %v2144
        %v2161 = vmul.f32 %v2049, %v2145
        %v2162 = vmul.f32 %v2050, %v2146
        %v2163 = vmul.f32 %v2051, %v2147
        %v2164 = vmul.f32 %v2052, %v2148
        %v2165 = vmul.f32 %v2149, %v1692
        %v2166 = vmul.f32 %v2150, %v1692
        %v2167 = vmul.f32 %v2151, %v1692
        %v2168 = vmul.f32 %v2152, %v1692
        %v2169 = vmul.f32 %v2153, %v1692
        %v2170 = vmul.f32 %v2154, %v1692
        %v2171 = vmul.f32 %v2155, %v1692
        %v2172 = vmul.f32 %v2156, %v1692
        %v2173 = vmul.f32 %v2157, %v1692
        %v2174 = vmul.f32 %v2158, %v1692
        %v2175 = vmul.f32 %v2159, %v1692
        %v2176 = vmul.f32 %v2160, %v1692
        %v2177 = vmul.f32 %v2161, %v1692
        %v2178 = vmul.f32 %v2162, %v1692
        %v2179 = vmul.f32 %v2163, %v1692
        %v2180 = vmul.f32 %v2164, %v1692
        %v2181 = vadd.f32 %v2165, %v1714
        %v2182 = vadd.f32 %v2166, %v1714
        %v2183 = vadd.f32 %v2167, %v1714
        %v2184 = vadd.f32 %v2168, %v1714
        %v2185 = vadd.f32 %v2169, %v1714
        %v2186 = vadd.f32 %v2170, %v1714
        %v2187 = vadd.f32 %v2171, %v1714
        %v2188 = vadd.f32 %v2172, %v1714
        %v2189 = vadd.f32 %v2173, %v1714
        %v2190 = vadd.f32 %v2174, %v1714
        %v2191 = vadd.f32 %v2175, %v1714
        %v2192 = vadd.f32 %v2176, %v1714
        %v2193 = vadd.f32 %v2177, %v1714
        %v2194 = vadd.f32 %v2178, %v1714
        %v2195 = vadd.f32 %v2179, %v1714
        %v2196 = vadd.f32 %v2180, %v1714
        %2197 = vst [vmem:[#allocation2 + $0x8] sm:$0xff] %v2181
        %2198 = vst [vmem:[#allocation2 + $0x18] sm:$0xff] %v2182
        %2199 = vst [vmem:[#allocation2 + $0x28] sm:$0xff] %v2183
        %2200 = vst [vmem:[#allocation2 + $0x38] sm:$0xff] %v2184
        %2201 = vst [vmem:[#allocation2 + $0x48] sm:$0xff] %v2185
        %2202 = vst [vmem:[#allocation2 + $0x58] sm:$0xff] %v2186
        %2203 = vst [vmem:[#allocation2 + $0x68] sm:$0xff] %v2187
        %2204 = vst [vmem:[#allocation2 + $0x78] sm:$0xff] %v2188
        %2205 = vst [vmem:[#allocation2 + $0x88] sm:$0xff] %v2189
        %2206 = vst [vmem:[#allocation2 + $0x98] sm:$0xff] %v2190
        %2207 = vst [vmem:[#allocation2 + $0xa8] sm:$0xff] %v2191
        %2208 = vst [vmem:[#allocation2 + $0xb8] sm:$0xff] %v2192
        %2209 = vst [vmem:[#allocation2 + $0xc8] sm:$0xff] %v2193
        %2210 = vst [vmem:[#allocation2 + $0xd8] sm:$0xff] %v2194
        %2211 = vst [vmem:[#allocation2 + $0xe8] sm:$0xff] %v2195
        %2212 = vst [vmem:[#allocation2 + $0xf8] sm:$0xff] %v2196
        %v2213 = vld [vmem:[#allocation2] sm:$0xff]
        %v2214 = vld [vmem:[#allocation2 + $0x8] sm:$0xff]
        %v2215 = vld [vmem:[#allocation2 + $0x10] sm:$0xff]
        %v2216 = vld [vmem:[#allocation2 + $0x18] sm:$0xff]
        %v2217 = vld [vmem:[#allocation2 + $0x20] sm:$0xff]
        %v2218 = vld [vmem:[#allocation2 + $0x28] sm:$0xff]
        %v2219 = vld [vmem:[#allocation2 + $0x30] sm:$0xff]
        %v2220 = vld [vmem:[#allocation2 + $0x38] sm:$0xff]
        %v2221 = vld [vmem:[#allocation2 + $0x40] sm:$0xff]
        %v2222 = vld [vmem:[#allocation2 + $0x48] sm:$0xff]
        %v2223 = vld [vmem:[#allocation2 + $0x50] sm:$0xff]
        %v2224 = vld [vmem:[#allocation2 + $0x58] sm:$0xff]
        %v2225 = vld [vmem:[#allocation2 + $0x60] sm:$0xff]
        %v2226 = vld [vmem:[#allocation2 + $0x68] sm:$0xff]
        %v2227 = vld [vmem:[#allocation2 + $0x70] sm:$0xff]
        %v2228 = vld [vmem:[#allocation2 + $0x78] sm:$0xff]
        %v2229 = vld [vmem:[#allocation2 + $0x80] sm:$0xff]
        %v2230 = vld [vmem:[#allocation2 + $0x88] sm:$0xff]
        %v2231 = vld [vmem:[#allocation2 + $0x90] sm:$0xff]
        %v2232 = vld [vmem:[#allocation2 + $0x98] sm:$0xff]
        %v2233 = vld [vmem:[#allocation2 + $0xa0] sm:$0xff]
        %v2234 = vld [vmem:[#allocation2 + $0xa8] sm:$0xff]
        %v2235 = vld [vmem:[#allocation2 + $0xb0] sm:$0xff]
        %v2236 = vld [vmem:[#allocation2 + $0xb8] sm:$0xff]
        %v2237 = vld [vmem:[#allocation2 + $0xc0] sm:$0xff]
        %v2238 = vld [vmem:[#allocation2 + $0xc8] sm:$0xff]
        %v2239 = vld [vmem:[#allocation2 + $0xd0] sm:$0xff]
        %v2240 = vld [vmem:[#allocation2 + $0xd8] sm:$0xff]
        %v2241 = vld [vmem:[#allocation2 + $0xe0] sm:$0xff]
        %v2242 = vld [vmem:[#allocation2 + $0xe8] sm:$0xff]
        %v2243 = vld [vmem:[#allocation2 + $0xf0] sm:$0xff]
        %v2244 = vld [vmem:[#allocation2 + $0xf8] sm:$0xff]
        %v2245 = vld [vmem:[%s698] sm:$0xff]
        %v2246 = vld [vmem:[%s698 + $0x8] sm:$0xff]
        %v2247 = vld [vmem:[%s698 + $0x10] sm:$0xff]
        %v2248 = vld [vmem:[%s698 + $0x18] sm:$0xff]
        %v2249 = vld [vmem:[%s698 + $0x20] sm:$0xff]
        %v2250 = vld [vmem:[%s698 + $0x28] sm:$0xff]
        %v2251 = vld [vmem:[%s698 + $0x30] sm:$0xff]
        %v2252 = vld [vmem:[%s698 + $0x38] sm:$0xff]
        %v2253 = vld [vmem:[%s698 + $0x40] sm:$0xff]
        %v2254 = vld [vmem:[%s698 + $0x48] sm:$0xff]
        %v2255 = vld [vmem:[%s698 + $0x50] sm:$0xff]
        %v2256 = vld [vmem:[%s698 + $0x58] sm:$0xff]
        %v2257 = vld [vmem:[%s698 + $0x60] sm:$0xff]
        %v2258 = vld [vmem:[%s698 + $0x68] sm:$0xff]
        %v2259 = vld [vmem:[%s698 + $0x70] sm:$0xff]
        %v2260 = vld [vmem:[%s698 + $0x78] sm:$0xff]
        %s2261 = sld [smem:[#allocation5 + %s883]]
        %v2262 = vstv %s2261
        %2263 = vmatprep.subr.mxu0 %v2214
        %2264 = vmatpush1.msra.mxu0 %v2213
        %2265 = vmatprep.subr.mxu0 %v2216
        %2266 = vmatpush1.msra.mxu0 %v2215
        %2267 = vmatprep.subr.mxu0 %v2218
        %2268 = vmatpush1.msra.mxu0 %v2217
        %2269 = vmatprep.subr.mxu0 %v2220
        %2270 = vmatpush1.msra.mxu0 %v2219
        %2271 = vmatprep.subr.mxu0 %v2222
        %2272 = vmatpush1.msra.mxu0 %v2221
        %2273 = vmatprep.subr.mxu0 %v2224
        %2274 = vmatpush1.msra.mxu0 %v2223
        %2275 = vmatprep.subr.mxu0 %v2226
        %2276 = vmatpush1.msra.mxu0 %v2225
        %2277 = vmatprep.subr.mxu0 %v2228
        %2278 = vmatpush1.msra.mxu0 %v2227
        %2279 = vmatprep.subr.mxu0 %v2230
        %2280 = vmatpush1.msra.mxu0 %v2229
        %2281 = vmatprep.subr.mxu0 %v2232
        %2282 = vmatpush1.msra.mxu0 %v2231
        %2283 = vmatprep.subr.mxu0 %v2234
        %2284 = vmatpush1.msra.mxu0 %v2233
        %2285 = vmatprep.subr.mxu0 %v2236
        %2286 = vmatpush1.msra.mxu0 %v2235
        %2287 = vmatprep.subr.mxu0 %v2238
        %2288 = vmatpush1.msra.mxu0 %v2237
        %2289 = vmatprep.subr.mxu0 %v2240
        %2290 = vmatpush1.msra.mxu0 %v2239
        %2291 = vmatprep.subr.mxu0 %v2242
        %2292 = vmatpush1.msra.mxu0 %v2241
        %2293 = vmatprep.subr.mxu0 %v2244
        %2294 = vmatpush1.msra.mxu0 %v2243
        %2295 = vmatprep.subr.mxu0 0.0
        %2296 = vmatpush1.msra.mxu0 0.0
        %2297 = vmatprep.subr.mxu0 0.0
        %2298 = vmatpush1.msra.mxu0 0.0
        %2299 = vmatprep.subr.mxu0 0.0
        %2300 = vmatpush1.msra.mxu0 0.0
        %2301 = vmatprep.subr.mxu0 0.0
        %2302 = vmatpush1.msra.mxu0 0.0
        %2303 = vmatprep.subr.mxu0 0.0
        %2304 = vmatpush1.msra.mxu0 0.0
        %2305 = vmatprep.subr.mxu0 0.0
        %2306 = vmatpush1.msra.mxu0 0.0
        %2307 = vmatprep.subr.mxu0 0.0
        %2308 = vmatpush1.msra.mxu0 0.0
        %2309 = vmatprep.subr.mxu0 0.0
        %2310 = vmatpush1.msra.mxu0 0.0
        %2311 = vmatprep.subr.mxu0 0.0
        %2312 = vmatpush1.msra.mxu0 0.0
        %2313 = vmatprep.subr.mxu0 0.0
        %2314 = vmatpush1.msra.mxu0 0.0
        %2315 = vmatprep.subr.mxu0 0.0
        %2316 = vmatpush1.msra.mxu0 0.0
        %2317 = vmatprep.subr.mxu0 0.0
        %2318 = vmatpush1.msra.mxu0 0.0
        %2319 = vmatprep.subr.mxu0 0.0
        %2320 = vmatpush1.msra.mxu0 0.0
        %2321 = vmatprep.subr.mxu0 0.0
        %2322 = vmatpush1.msra.mxu0 0.0
        %2323 = vmatprep.subr.mxu0 0.0
        %2324 = vmatpush1.msra.mxu0 0.0
        %2325 = vmatprep.subr.mxu0 0.0
        %2326 = vmatpush1.msra.mxu0 0.0
        %2327 = vmatprep.mubr.f32.mxu0 0.0
        %2328 = vmatmul.mubr.f32.gmra.mrb[0].mxu0 %v2245
        %v2329 = vpop.f32.mrb[0].mxu0
        %v2330 = vadd.f32 %v2262, %v2329
        %v2331 = vpop.f32.mrb[0].mxu0
        %v2332 = vadd.f32 %v2262, %v2331
        %2333 = vmatprep.mubr.f32.mxu0 0.0
        %2334 = vmatmul.mubr.f32.gmra.mrb[0].mxu0 %v2246
        %v2335 = vpop.f32.mrb[0].mxu0
        %v2336 = vadd.f32 %v2262, %v2335
        %v2337 = vpop.f32.mrb[0].mxu0
        %v2338 = vadd.f32 %v2262, %v2337
        %2339 = vmatprep.mubr.f32.mxu0 0.0
        %2340 = vmatmul.mubr.f32.gmra.mrb[0].mxu0 %v2247
        %v2341 = vpop.f32.mrb[0].mxu0
        %v2342 = vadd.f32 %v2262, %v2341
        %v2343 = vpop.f32.mrb[0].mxu0
        %v2344 = vadd.f32 %v2262, %v2343
        %2345 = vmatprep.mubr.f32.mxu0 0.0
        %2346 = vmatmul.mubr.f32.gmra.mrb[0].mxu0 %v2248
        %v2347 = vpop.f32.mrb[0].mxu0
        %v2348 = vadd.f32 %v2262, %v2347
        %v2349 = vpop.f32.mrb[0].mxu0
        %v2350 = vadd.f32 %v2262, %v2349
        %2351 = vmatprep.mubr.f32.mxu0 0.0
        %2352 = vmatmul.mubr.f32.gmra.mrb[0].mxu0 %v2249
        %v2353 = vpop.f32.mrb[0].mxu0
        %v2354 = vadd.f32 %v2262, %v2353
        %v2355 = vpop.f32.mrb[0].mxu0
        %v2356 = vadd.f32 %v2262, %v2355
        %2357 = vmatprep.mubr.f32.mxu0 0.0
        %2358 = vmatmul.mubr.f32.gmra.mrb[0].mxu0 %v2250
        %v2359 = vpop.f32.mrb[0].mxu0
        %v2360 = vadd.f32 %v2262, %v2359
        %v2361 = vpop.f32.mrb[0].mxu0
        %v2362 = vadd.f32 %v2262, %v2361
        %2363 = vmatprep.mubr.f32.mxu0 0.0
        %2364 = vmatmul.mubr.f32.gmra.mrb[0].mxu0 %v2251
        %v2365 = vpop.f32.mrb[0].mxu0
        %v2366 = vadd.f32 %v2262, %v2365
        %v2367 = vpop.f32.mrb[0].mxu0
        %v2368 = vadd.f32 %v2262, %v2367
        %2369 = vmatprep.mubr.f32.mxu0 0.0
        %2370 = vmatmul.mubr.f32.gmra.mrb[0].mxu0 %v2252
        %v2371 = vpop.f32.mrb[0].mxu0
        %v2372 = vadd.f32 %v2262, %v2371
        %v2373 = vpop.f32.mrb[0].mxu0
        %v2374 = vadd.f32 %v2262, %v2373
        %2375 = vmatprep.mubr.f32.mxu0 0.0
        %2376 = vmatmul.mubr.f32.gmra.mrb[0].mxu0 %v2253
        %v2377 = vpop.f32.mrb[0].mxu0
        %v2378 = vadd.f32 %v2262, %v2377
        %v2379 = vpop.f32.mrb[0].mxu0
        %v2380 = vadd.f32 %v2262, %v2379
        %2381 = vmatprep.mubr.f32.mxu0 0.0
        %2382 = vmatmul.mubr.f32.gmra.mrb[0].mxu0 %v2254
        %v2383 = vpop.f32.mrb[0].mxu0
        %v2384 = vadd.f32 %v2262, %v2383
        %v2385 = vpop.f32.mrb[0].mxu0
        %v2386 = vadd.f32 %v2262, %v2385
        %2387 = vmatprep.mubr.f32.mxu0 0.0
        %2388 = vmatmul.mubr.f32.gmra.mrb[0].mxu0 %v2255
        %v2389 = vpop.f32.mrb[0].mxu0
        %v2390 = vadd.f32 %v2262, %v2389
        %v2391 = vpop.f32.mrb[0].mxu0
        %v2392 = vadd.f32 %v2262, %v2391
        %2393 = vmatprep.mubr.f32.mxu0 0.0
        %2394 = vmatmul.mubr.f32.gmra.mrb[0].mxu0 %v2256
        %v2395 = vpop.f32.mrb[0].mxu0
        %v2396 = vadd.f32 %v2262, %v2395
        %v2397 = vpop.f32.mrb[0].mxu0
        %v2398 = vadd.f32 %v2262, %v2397
        %2399 = vmatprep.mubr.f32.mxu0 0.0
        %2400 = vmatmul.mubr.f32.gmra.mrb[0].mxu0 %v2257
        %v2401 = vpop.f32.mrb[0].mxu0
        %v2402 = vadd.f32 %v2262, %v2401
        %v2403 = vpop.f32.mrb[0].mxu0
        %v2404 = vadd.f32 %v2262, %v2403
        %2405 = vmatprep.mubr.f32.mxu0 0.0
        %2406 = vmatmul.mubr.f32.gmra.mrb[0].mxu0 %v2258
        %v2407 = vpop.f32.mrb[0].mxu0
        %v2408 = vadd.f32 %v2262, %v2407
        %v2409 = vpop.f32.mrb[0].mxu0
        %v2410 = vadd.f32 %v2262, %v2409
        %2411 = vmatprep.mubr.f32.mxu0 0.0
        %2412 = vmatmul.mubr.f32.gmra.mrb[0].mxu0 %v2259
        %v2413 = vpop.f32.mrb[0].mxu0
        %v2414 = vadd.f32 %v2262, %v2413
        %v2415 = vpop.f32.mrb[0].mxu0
        %v2416 = vadd.f32 %v2262, %v2415
        %2417 = vmatprep.mubr.f32.mxu0 0.0
        %2418 = vmatmul.mubr.f32.gmra.mrb[0].mxu0 %v2260
        %v2419 = vpop.f32.mrb[0].mxu0
        %v2420 = vadd.f32 %v2262, %v2419
        %v2421 = vpop.f32.mrb[0].mxu0
        %v2422 = vadd.f32 %v2262, %v2421
        %2423 = vdwg.mxu0
        %v2424 = vmax.f32 %v2330, 0.0
        %v2425 = vmax.f32 %v2332, 0.0
        %v2426 = vmax.f32 %v2336, 0.0
        %v2427 = vmax.f32 %v2338, 0.0
        %v2428 = vmax.f32 %v2342, 0.0
        %v2429 = vmax.f32 %v2344, 0.0
        %v2430 = vmax.f32 %v2348, 0.0
        %v2431 = vmax.f32 %v2350, 0.0
        %v2432 = vmax.f32 %v2354, 0.0
        %v2433 = vmax.f32 %v2356, 0.0
        %v2434 = vmax.f32 %v2360, 0.0
        %v2435 = vmax.f32 %v2362, 0.0
        %v2436 = vmax.f32 %v2366, 0.0
        %v2437 = vmax.f32 %v2368, 0.0
        %v2438 = vmax.f32 %v2372, 0.0
        %v2439 = vmax.f32 %v2374, 0.0
        %v2440 = vmax.f32 %v2378, 0.0
        %v2441 = vmax.f32 %v2380, 0.0
        %v2442 = vmax.f32 %v2384, 0.0
        %v2443 = vmax.f32 %v2386, 0.0
        %v2444 = vmax.f32 %v2390, 0.0
        %v2445 = vmax.f32 %v2392, 0.0
        %v2446 = vmax.f32 %v2396, 0.0
        %v2447 = vmax.f32 %v2398, 0.0
        %v2448 = vmax.f32 %v2402, 0.0
        %v2449 = vmax.f32 %v2404, 0.0
        %v2450 = vmax.f32 %v2408, 0.0
        %v2451 = vmax.f32 %v2410, 0.0
        %v2452 = vmax.f32 %v2414, 0.0
        %v2453 = vmax.f32 %v2416, 0.0
        %v2454 = vmax.f32 %v2420, 0.0
        %v2455 = vmax.f32 %v2422, 0.0
        %s2456 = scalar_lea.vmem %s698, 256 [#allocation4]
        %v2457 = vld [vmem:[%s2456] sm:$0xff]
        %v2458 = vld [vmem:[%s2456 + $0x8] sm:$0xff]
        %v2459 = vld [vmem:[%s2456 + $0x10] sm:$0xff]
        %v2460 = vld [vmem:[%s2456 + $0x18] sm:$0xff]
        %v2461 = vld [vmem:[%s2456 + $0x20] sm:$0xff]
        %v2462 = vld [vmem:[%s2456 + $0x28] sm:$0xff]
        %v2463 = vld [vmem:[%s2456 + $0x30] sm:$0xff]
        %v2464 = vld [vmem:[%s2456 + $0x38] sm:$0xff]
        %v2465 = vld [vmem:[%s2456 + $0x40] sm:$0xff]
        %v2466 = vld [vmem:[%s2456 + $0x48] sm:$0xff]
        %v2467 = vld [vmem:[%s2456 + $0x50] sm:$0xff]
        %v2468 = vld [vmem:[%s2456 + $0x58] sm:$0xff]
        %v2469 = vld [vmem:[%s2456 + $0x60] sm:$0xff]
        %v2470 = vld [vmem:[%s2456 + $0x68] sm:$0xff]
        %v2471 = vld [vmem:[%s2456 + $0x70] sm:$0xff]
        %v2472 = vld [vmem:[%s2456 + $0x78] sm:$0xff]
        %s2473 = sshra.s32 %s883, 7
        %s2474 = sand.u32 %s883, 127
        %s2475 = sadd.s32 %s2473, 1
        %s2476 = smul.u32 %s2475, 128
        %s2477 = sshra.s32 %s883, 7
        %s2478 = sand.u32 %s883, 127
        %s2479 = sadd.s32 %s2476, %s2478
        %s2480 = sld [smem:[#allocation5 + %s2479]]
        %v2481 = vstv %s2480
        %2482 = vmatprep.subr.mxu0 %v2425
        %2483 = vmatpush1.msra.mxu0 %v2424
        %2484 = vmatprep.subr.mxu0 %v2427
        %2485 = vmatpush1.msra.mxu0 %v2426
        %2486 = vmatprep.subr.mxu0 %v2429
        %2487 = vmatpush1.msra.mxu0 %v2428
        %2488 = vmatprep.subr.mxu0 %v2431
        %2489 = vmatpush1.msra.mxu0 %v2430
        %2490 = vmatprep.subr.mxu0 %v2433
        %2491 = vmatpush1.msra.mxu0 %v2432
        %2492 = vmatprep.subr.mxu0 %v2435
        %2493 = vmatpush1.msra.mxu0 %v2434
        %2494 = vmatprep.subr.mxu0 %v2437
        %2495 = vmatpush1.msra.mxu0 %v2436
        %2496 = vmatprep.subr.mxu0 %v2439
        %2497 = vmatpush1.msra.mxu0 %v2438
        %2498 = vmatprep.subr.mxu0 %v2441
        %2499 = vmatpush1.msra.mxu0 %v2440
        %2500 = vmatprep.subr.mxu0 %v2443
        %2501 = vmatpush1.msra.mxu0 %v2442
        %2502 = vmatprep.subr.mxu0 %v2445
        %2503 = vmatpush1.msra.mxu0 %v2444
        %2504 = vmatprep.subr.mxu0 %v2447
        %2505 = vmatpush1.msra.mxu0 %v2446
        %2506 = vmatprep.subr.mxu0 %v2449
        %2507 = vmatpush1.msra.mxu0 %v2448
        %2508 = vmatprep.subr.mxu0 %v2451
        %2509 = vmatpush1.msra.mxu0 %v2450
        %2510 = vmatprep.subr.mxu0 %v2453
        %2511 = vmatpush1.msra.mxu0 %v2452
        %2512 = vmatprep.subr.mxu0 %v2455
        %2513 = vmatpush1.msra.mxu0 %v2454
        %2514 = vmatprep.subr.mxu0 0.0
        %2515 = vmatpush1.msra.mxu0 0.0
        %2516 = vmatprep.subr.mxu0 0.0
        %2517 = vmatpush1.msra.mxu0 0.0
        %2518 = vmatprep.subr.mxu0 0.0
        %2519 = vmatpush1.msra.mxu0 0.0
        %2520 = vmatprep.subr.mxu0 0.0
        %2521 = vmatpush1.msra.mxu0 0.0
        %2522 = vmatprep.subr.mxu0 0.0
        %2523 = vmatpush1.msra.mxu0 0.0
        %2524 = vmatprep.subr.mxu0 0.0
        %2525 = vmatpush1.msra.mxu0 0.0
        %2526 = vmatprep.subr.mxu0 0.0
        %2527 = vmatpush1.msra.mxu0 0.0
        %2528 = vmatprep.subr.mxu0 0.0
        %2529 = vmatpush1.msra.mxu0 0.0
        %2530 = vmatprep.subr.mxu0 0.0
        %2531 = vmatpush1.msra.mxu0 0.0
        %2532 = vmatprep.subr.mxu0 0.0
        %2533 = vmatpush1.msra.mxu0 0.0
        %2534 = vmatprep.subr.mxu0 0.0
        %2535 = vmatpush1.msra.mxu0 0.0
        %2536 = vmatprep.subr.mxu0 0.0
        %2537 = vmatpush1.msra.mxu0 0.0
        %2538 = vmatprep.subr.mxu0 0.0
        %2539 = vmatpush1.msra.mxu0 0.0
        %2540 = vmatprep.subr.mxu0 0.0
        %2541 = vmatpush1.msra.mxu0 0.0
        %2542 = vmatprep.subr.mxu0 0.0
        %2543 = vmatpush1.msra.mxu0 0.0
        %2544 = vmatprep.subr.mxu0 0.0
        %2545 = vmatpush1.msra.mxu0 0.0
        %2546 = vmatprep.mubr.f32.mxu0 0.0
        %2547 = vmatmul.mubr.f32.gmra.mrb[0].mxu0 %v2457
        %v2548 = vpop.f32.mrb[0].mxu0
        %v2549 = vadd.f32 %v2481, %v2548
        %v2550 = vpop.f32.mrb[0].mxu0
        %v2551 = vadd.f32 %v2481, %v2550
        %2552 = vmatprep.mubr.f32.mxu0 0.0
        %2553 = vmatmul.mubr.f32.gmra.mrb[0].mxu0 %v2458
        %v2554 = vpop.f32.mrb[0].mxu0
        %v2555 = vadd.f32 %v2481, %v2554
        %v2556 = vpop.f32.mrb[0].mxu0
        %v2557 = vadd.f32 %v2481, %v2556
        %2558 = vmatprep.mubr.f32.mxu0 0.0
        %2559 = vmatmul.mubr.f32.gmra.mrb[0].mxu0 %v2459
        %v2560 = vpop.f32.mrb[0].mxu0
        %v2561 = vadd.f32 %v2481, %v2560
        %v2562 = vpop.f32.mrb[0].mxu0
        %v2563 = vadd.f32 %v2481, %v2562
        %2564 = vmatprep.mubr.f32.mxu0 0.0
        %2565 = vmatmul.mubr.f32.gmra.mrb[0].mxu0 %v2460
        %v2566 = vpop.f32.mrb[0].mxu0
        %v2567 = vadd.f32 %v2481, %v2566
        %v2568 = vpop.f32.mrb[0].mxu0
        %v2569 = vadd.f32 %v2481, %v2568
        %2570 = vmatprep.mubr.f32.mxu0 0.0
        %2571 = vmatmul.mubr.f32.gmra.mrb[0].mxu0 %v2461
        %v2572 = vpop.f32.mrb[0].mxu0
        %v2573 = vadd.f32 %v2481, %v2572
        %v2574 = vpop.f32.mrb[0].mxu0
        %v2575 = vadd.f32 %v2481, %v2574
        %2576 = vmatprep.mubr.f32.mxu0 0.0
        %2577 = vmatmul.mubr.f32.gmra.mrb[0].mxu0 %v2462
        %v2578 = vpop.f32.mrb[0].mxu0
        %v2579 = vadd.f32 %v2481, %v2578
        %v2580 = vpop.f32.mrb[0].mxu0
        %v2581 = vadd.f32 %v2481, %v2580
        %2582 = vmatprep.mubr.f32.mxu0 0.0
        %2583 = vmatmul.mubr.f32.gmra.mrb[0].mxu0 %v2463
        %v2584 = vpop.f32.mrb[0].mxu0
        %v2585 = vadd.f32 %v2481, %v2584
        %v2586 = vpop.f32.mrb[0].mxu0
        %v2587 = vadd.f32 %v2481, %v2586
        %2588 = vmatprep.mubr.f32.mxu0 0.0
        %2589 = vmatmul.mubr.f32.gmra.mrb[0].mxu0 %v2464
        %v2590 = vpop.f32.mrb[0].mxu0
        %v2591 = vadd.f32 %v2481, %v2590
        %v2592 = vpop.f32.mrb[0].mxu0
        %v2593 = vadd.f32 %v2481, %v2592
        %2594 = vmatprep.mubr.f32.mxu0 0.0
        %2595 = vmatmul.mubr.f32.gmra.mrb[0].mxu0 %v2465
        %v2596 = vpop.f32.mrb[0].mxu0
        %v2597 = vadd.f32 %v2481, %v2596
        %v2598 = vpop.f32.mrb[0].mxu0
        %v2599 = vadd.f32 %v2481, %v2598
        %2600 = vmatprep.mubr.f32.mxu0 0.0
        %2601 = vmatmul.mubr.f32.gmra.mrb[0].mxu0 %v2466
        %v2602 = vpop.f32.mrb[0].mxu0
        %v2603 = vadd.f32 %v2481, %v2602
        %v2604 = vpop.f32.mrb[0].mxu0
        %v2605 = vadd.f32 %v2481, %v2604
        %2606 = vmatprep.mubr.f32.mxu0 0.0
        %2607 = vmatmul.mubr.f32.gmra.mrb[0].mxu0 %v2467
        %v2608 = vpop.f32.mrb[0].mxu0
        %v2609 = vadd.f32 %v2481, %v2608
        %v2610 = vpop.f32.mrb[0].mxu0
        %v2611 = vadd.f32 %v2481, %v2610
        %2612 = vmatprep.mubr.f32.mxu0 0.0
        %2613 = vmatmul.mubr.f32.gmra.mrb[0].mxu0 %v2468
        %v2614 = vpop.f32.mrb[0].mxu0
        %v2615 = vadd.f32 %v2481, %v2614
        %v2616 = vpop.f32.mrb[0].mxu0
        %v2617 = vadd.f32 %v2481, %v2616
        %2618 = vmatprep.mubr.f32.mxu0 0.0
        %2619 = vmatmul.mubr.f32.gmra.mrb[0].mxu0 %v2469
        %v2620 = vpop.f32.mrb[0].mxu0
        %v2621 = vadd.f32 %v2481, %v2620
        %v2622 = vpop.f32.mrb[0].mxu0
        %v2623 = vadd.f32 %v2481, %v2622
        %2624 = vmatprep.mubr.f32.mxu0 0.0
        %2625 = vmatmul.mubr.f32.gmra.mrb[0].mxu0 %v2470
        %v2626 = vpop.f32.mrb[0].mxu0
        %v2627 = vadd.f32 %v2481, %v2626
        %v2628 = vpop.f32.mrb[0].mxu0
        %v2629 = vadd.f32 %v2481, %v2628
        %2630 = vmatprep.mubr.f32.mxu0 0.0
        %2631 = vmatmul.mubr.f32.gmra.mrb[0].mxu0 %v2471
        %v2632 = vpop.f32.mrb[0].mxu0
        %v2633 = vadd.f32 %v2481, %v2632
        %v2634 = vpop.f32.mrb[0].mxu0
        %v2635 = vadd.f32 %v2481, %v2634
        %2636 = vmatprep.mubr.f32.mxu0 0.0
        %2637 = vmatmul.mubr.f32.gmra.mrb[0].mxu0 %v2472
        %v2638 = vpop.f32.mrb[0].mxu0
        %v2639 = vadd.f32 %v2481, %v2638
        %v2640 = vpop.f32.mrb[0].mxu0
        %v2641 = vadd.f32 %v2481, %v2640
        %2642 = vdwg.mxu0
        %v2643 = vmax.f32 %v2549, 0.0
        %v2644 = vmax.f32 %v2551, 0.0
        %v2645 = vmax.f32 %v2555, 0.0
        %v2646 = vmax.f32 %v2557, 0.0
        %v2647 = vmax.f32 %v2561, 0.0
        %v2648 = vmax.f32 %v2563, 0.0
        %v2649 = vmax.f32 %v2567, 0.0
        %v2650 = vmax.f32 %v2569, 0.0
        %v2651 = vmax.f32 %v2573, 0.0
        %v2652 = vmax.f32 %v2575, 0.0
        %v2653 = vmax.f32 %v2579, 0.0
        %v2654 = vmax.f32 %v2581, 0.0
        %v2655 = vmax.f32 %v2585, 0.0
        %v2656 = vmax.f32 %v2587, 0.0
        %v2657 = vmax.f32 %v2591, 0.0
        %v2658 = vmax.f32 %v2593, 0.0
        %v2659 = vmax.f32 %v2597, 0.0
        %v2660 = vmax.f32 %v2599, 0.0
        %v2661 = vmax.f32 %v2603, 0.0
        %v2662 = vmax.f32 %v2605, 0.0
        %v2663 = vmax.f32 %v2609, 0.0
        %v2664 = vmax.f32 %v2611, 0.0
        %v2665 = vmax.f32 %v2615, 0.0
        %v2666 = vmax.f32 %v2617, 0.0
        %v2667 = vmax.f32 %v2621, 0.0
        %v2668 = vmax.f32 %v2623, 0.0
        %v2669 = vmax.f32 %v2627, 0.0
        %v2670 = vmax.f32 %v2629, 0.0
        %v2671 = vmax.f32 %v2633, 0.0
        %v2672 = vmax.f32 %v2635, 0.0
        %v2673 = vmax.f32 %v2639, 0.0
        %v2674 = vmax.f32 %v2641, 0.0
        %2675 = vadd.xlane.f32.xlu0 %v2643
        %v2676 = vpop.xlane.xlu0 %2675
        %2677 = vadd.xlane.f32.xlu0 %v2645
        %v2678 = vpop.xlane.xlu0 %2677
        %2679 = vadd.xlane.f32.xlu0 %v2647
        %v2680 = vpop.xlane.xlu0 %2679
        %2681 = vadd.xlane.f32.xlu0 %v2649
        %v2682 = vpop.xlane.xlu0 %2681
        %2683 = vadd.xlane.f32.xlu0 %v2651
        %v2684 = vpop.xlane.xlu0 %2683
        %2685 = vadd.xlane.f32.xlu0 %v2653
        %v2686 = vpop.xlane.xlu0 %2685
        %2687 = vadd.xlane.f32.xlu0 %v2655
        %v2688 = vpop.xlane.xlu0 %2687
        %2689 = vadd.xlane.f32.xlu0 %v2657
        %v2690 = vpop.xlane.xlu0 %2689
        %2691 = vadd.xlane.f32.xlu0 %v2659
        %v2692 = vpop.xlane.xlu0 %2691
        %2693 = vadd.xlane.f32.xlu0 %v2661
        %v2694 = vpop.xlane.xlu0 %2693
        %2695 = vadd.xlane.f32.xlu0 %v2663
        %v2696 = vpop.xlane.xlu0 %2695
        %2697 = vadd.xlane.f32.xlu0 %v2665
        %v2698 = vpop.xlane.xlu0 %2697
        %2699 = vadd.xlane.f32.xlu0 %v2667
        %v2700 = vpop.xlane.xlu0 %2699
        %2701 = vadd.xlane.f32.xlu0 %v2669
        %v2702 = vpop.xlane.xlu0 %2701
        %2703 = vadd.xlane.f32.xlu0 %v2671
        %v2704 = vpop.xlane.xlu0 %2703
        %2705 = vadd.xlane.f32.xlu0 %v2673
        %v2706 = vpop.xlane.xlu0 %2705
        %v2707 = vmul.f32 %v2676, %v1543
        %v2708 = vmul.f32 %v2678, %v1543
        %v2709 = vmul.f32 %v2680, %v1543
        %v2710 = vmul.f32 %v2682, %v1543
        %v2711 = vmul.f32 %v2684, %v1543
        %v2712 = vmul.f32 %v2686, %v1543
        %v2713 = vmul.f32 %v2688, %v1543
        %v2714 = vmul.f32 %v2690, %v1543
        %v2715 = vmul.f32 %v2692, %v1543
        %v2716 = vmul.f32 %v2694, %v1543
        %v2717 = vmul.f32 %v2696, %v1543
        %v2718 = vmul.f32 %v2698, %v1543
        %v2719 = vmul.f32 %v2700, %v1543
        %v2720 = vmul.f32 %v2702, %v1543
        %v2721 = vmul.f32 %v2704, %v1543
        %v2722 = vmul.f32 %v2706, %v1543
        %v2723 = vsub.f32 %v2643, %v2707
        %v2724 = vsub.f32 %v2645, %v2708
        %v2725 = vsub.f32 %v2647, %v2709
        %v2726 = vsub.f32 %v2649, %v2710
        %v2727 = vsub.f32 %v2651, %v2711
        %v2728 = vsub.f32 %v2653, %v2712
        %v2729 = vsub.f32 %v2655, %v2713
        %v2730 = vsub.f32 %v2657, %v2714
        %v2731 = vsub.f32 %v2659, %v2715
        %v2732 = vsub.f32 %v2661, %v2716
        %v2733 = vsub.f32 %v2663, %v2717
        %v2734 = vsub.f32 %v2665, %v2718
        %v2735 = vsub.f32 %v2667, %v2719
        %v2736 = vsub.f32 %v2669, %v2720
        %v2737 = vsub.f32 %v2671, %v2721
        %v2738 = vsub.f32 %v2673, %v2722
        %v2739 = vmul.f32 %v2723, %v2723
        %v2740 = vmul.f32 %v2724, %v2724
        %v2741 = vmul.f32 %v2725, %v2725
        %v2742 = vmul.f32 %v2726, %v2726
        %v2743 = vmul.f32 %v2727, %v2727
        %v2744 = vmul.f32 %v2728, %v2728
        %v2745 = vmul.f32 %v2729, %v2729
        %v2746 = vmul.f32 %v2730, %v2730
        %v2747 = vmul.f32 %v2731, %v2731
        %v2748 = vmul.f32 %v2732, %v2732
        %v2749 = vmul.f32 %v2733, %v2733
        %v2750 = vmul.f32 %v2734, %v2734
        %v2751 = vmul.f32 %v2735, %v2735
        %v2752 = vmul.f32 %v2736, %v2736
        %v2753 = vmul.f32 %v2737, %v2737
        %v2754 = vmul.f32 %v2738, %v2738
        %2755 = vadd.xlane.f32.xlu0 %v2739
        %v2756 = vpop.xlane.xlu0 %2755
        %2757 = vadd.xlane.f32.xlu0 %v2740
        %v2758 = vpop.xlane.xlu0 %2757
        %2759 = vadd.xlane.f32.xlu0 %v2741
        %v2760 = vpop.xlane.xlu0 %2759
        %2761 = vadd.xlane.f32.xlu0 %v2742
        %v2762 = vpop.xlane.xlu0 %2761
        %2763 = vadd.xlane.f32.xlu0 %v2743
        %v2764 = vpop.xlane.xlu0 %2763
        %2765 = vadd.xlane.f32.xlu0 %v2744
        %v2766 = vpop.xlane.xlu0 %2765
        %2767 = vadd.xlane.f32.xlu0 %v2745
        %v2768 = vpop.xlane.xlu0 %2767
        %2769 = vadd.xlane.f32.xlu0 %v2746
        %v2770 = vpop.xlane.xlu0 %2769
        %2771 = vadd.xlane.f32.xlu0 %v2747
        %v2772 = vpop.xlane.xlu0 %2771
        %2773 = vadd.xlane.f32.xlu0 %v2748
        %v2774 = vpop.xlane.xlu0 %2773
        %2775 = vadd.xlane.f32.xlu0 %v2749
        %v2776 = vpop.xlane.xlu0 %2775
        %2777 = vadd.xlane.f32.xlu0 %v2750
        %v2778 = vpop.xlane.xlu0 %2777
        %2779 = vadd.xlane.f32.xlu0 %v2751
        %v2780 = vpop.xlane.xlu0 %2779
        %2781 = vadd.xlane.f32.xlu0 %v2752
        %v2782 = vpop.xlane.xlu0 %2781
        %2783 = vadd.xlane.f32.xlu0 %v2753
        %v2784 = vpop.xlane.xlu0 %2783
        %2785 = vadd.xlane.f32.xlu0 %v2754
        %v2786 = vpop.xlane.xlu0 %2785
        %v2787 = vmul.f32 %v2756, %v1543
        %v2788 = vmul.f32 %v2758, %v1543
        %v2789 = vmul.f32 %v2760, %v1543
        %v2790 = vmul.f32 %v2762, %v1543
        %v2791 = vmul.f32 %v2764, %v1543
        %v2792 = vmul.f32 %v2766, %v1543
        %v2793 = vmul.f32 %v2768, %v1543
        %v2794 = vmul.f32 %v2770, %v1543
        %v2795 = vmul.f32 %v2772, %v1543
        %v2796 = vmul.f32 %v2774, %v1543
        %v2797 = vmul.f32 %v2776, %v1543
        %v2798 = vmul.f32 %v2778, %v1543
        %v2799 = vmul.f32 %v2780, %v1543
        %v2800 = vmul.f32 %v2782, %v1543
        %v2801 = vmul.f32 %v2784, %v1543
        %v2802 = vmul.f32 %v2786, %v1543
        %v2803 = vadd.f32 %v2787, 1e-05
        %v2804 = vadd.f32 %v2788, 1e-05
        %v2805 = vadd.f32 %v2789, 1e-05
        %v2806 = vadd.f32 %v2790, 1e-05
        %v2807 = vadd.f32 %v2791, 1e-05
        %v2808 = vadd.f32 %v2792, 1e-05
        %v2809 = vadd.f32 %v2793, 1e-05
        %v2810 = vadd.f32 %v2794, 1e-05
        %v2811 = vadd.f32 %v2795, 1e-05
        %v2812 = vadd.f32 %v2796, 1e-05
        %v2813 = vadd.f32 %v2797, 1e-05
        %v2814 = vadd.f32 %v2798, 1e-05
        %v2815 = vadd.f32 %v2799, 1e-05
        %v2816 = vadd.f32 %v2800, 1e-05
        %v2817 = vadd.f32 %v2801, 1e-05
        %v2818 = vadd.f32 %v2802, 1e-05
        %v2819 = vrsqrt.pop %v2803
        %v2820 = vrsqrt.pop %v2804
        %v2821 = vrsqrt.pop %v2805
        %v2822 = vrsqrt.pop %v2806
        %v2823 = vrsqrt.pop %v2807
        %v2824 = vrsqrt.pop %v2808
        %v2825 = vrsqrt.pop %v2809
        %v2826 = vrsqrt.pop %v2810
        %v2827 = vrsqrt.pop %v2811
        %v2828 = vrsqrt.pop %v2812
        %v2829 = vrsqrt.pop %v2813
        %v2830 = vrsqrt.pop %v2814
        %v2831 = vrsqrt.pop %v2815
        %v2832 = vrsqrt.pop %v2816
        %v2833 = vrsqrt.pop %v2817
        %v2834 = vrsqrt.pop %v2818
        %v2835 = vmul.f32 %v2723, %v2819
        %v2836 = vmul.f32 %v2724, %v2820
        %v2837 = vmul.f32 %v2725, %v2821
        %v2838 = vmul.f32 %v2726, %v2822
        %v2839 = vmul.f32 %v2727, %v2823
        %v2840 = vmul.f32 %v2728, %v2824
        %v2841 = vmul.f32 %v2729, %v2825
        %v2842 = vmul.f32 %v2730, %v2826
        %v2843 = vmul.f32 %v2731, %v2827
        %v2844 = vmul.f32 %v2732, %v2828
        %v2845 = vmul.f32 %v2733, %v2829
        %v2846 = vmul.f32 %v2734, %v2830
        %v2847 = vmul.f32 %v2735, %v2831
        %v2848 = vmul.f32 %v2736, %v2832
        %v2849 = vmul.f32 %v2737, %v2833
        %v2850 = vmul.f32 %v2738, %v2834
        %v2852 = vlaneseq
        %v2853 = vshrl.u32 %v2852, 7
        %v2854 = vsub.s32 0, %v2853
        %v2855 = vrot.slane %v784, %v2854
        %v2857 = vmul.f32 %v2835, %v2855
        %v2858 = vmul.f32 %v2836, %v2855
        %v2859 = vmul.f32 %v2837, %v2855
        %v2860 = vmul.f32 %v2838, %v2855
        %v2861 = vmul.f32 %v2839, %v2855
        %v2862 = vmul.f32 %v2840, %v2855
        %v2863 = vmul.f32 %v2841, %v2855
        %v2864 = vmul.f32 %v2842, %v2855
        %v2865 = vmul.f32 %v2843, %v2855
        %v2866 = vmul.f32 %v2844, %v2855
        %v2867 = vmul.f32 %v2845, %v2855
        %v2868 = vmul.f32 %v2846, %v2855
        %v2869 = vmul.f32 %v2847, %v2855
        %v2870 = vmul.f32 %v2848, %v2855
        %v2871 = vmul.f32 %v2849, %v2855
        %v2872 = vmul.f32 %v2850, %v2855
        %v2874 = vlaneseq
        %v2875 = vshrl.u32 %v2874, 7
        %v2876 = vsub.s32 0, %v2875
        %v2877 = vrot.slane %v785, %v2876
        %v2879 = vadd.f32 %v2857, %v2877
        %v2880 = vadd.f32 %v2858, %v2877
        %v2881 = vadd.f32 %v2859, %v2877
        %v2882 = vadd.f32 %v2860, %v2877
        %v2883 = vadd.f32 %v2861, %v2877
        %v2884 = vadd.f32 %v2862, %v2877
        %v2885 = vadd.f32 %v2863, %v2877
        %v2886 = vadd.f32 %v2864, %v2877
        %v2887 = vadd.f32 %v2865, %v2877
        %v2888 = vadd.f32 %v2866, %v2877
        %v2889 = vadd.f32 %v2867, %v2877
        %v2890 = vadd.f32 %v2868, %v2877
        %v2891 = vadd.f32 %v2869, %v2877
        %v2892 = vadd.f32 %v2870, %v2877
        %v2893 = vadd.f32 %v2871, %v2877
        %v2894 = vadd.f32 %v2872, %v2877
        %v2895 = vpack.c.bf16 %v2880, %v2879
        %v2896 = vpack.c.bf16 %v2882, %v2881
        %v2897 = vpack.c.bf16 %v2884, %v2883
        %v2898 = vpack.c.bf16 %v2886, %v2885
        %v2899 = vpack.c.bf16 %v2888, %v2887
        %v2900 = vpack.c.bf16 %v2890, %v2889
        %v2901 = vpack.c.bf16 %v2892, %v2891
        %v2902 = vpack.c.bf16 %v2894, %v2893
        %v2911 = vunpack.c.l.b16 %v2895
        %v2912 = vunpack.c.h.b16 %v2895
        %v2913 = vunpack.c.l.b16 %v2896
        %v2914 = vunpack.c.h.b16 %v2896
        %v2915 = vunpack.c.l.b16 %v2897
        %v2916 = vunpack.c.h.b16 %v2897
        %v2917 = vunpack.c.l.b16 %v2898
        %v2918 = vunpack.c.h.b16 %v2898
        %v2919 = vunpack.c.l.b16 %v2899
        %v2920 = vunpack.c.h.b16 %v2899
        %v2921 = vunpack.c.l.b16 %v2900
        %v2922 = vunpack.c.h.b16 %v2900
        %v2923 = vunpack.c.l.b16 %v2901
        %v2924 = vunpack.c.h.b16 %v2901
        %v2925 = vunpack.c.l.b16 %v2902
        %v2926 = vunpack.c.h.b16 %v2902
        %v2927 = vpack.c.b16 %v2911, %v2911
        %v2928 = vpack.c.b16 %v2912, %v2912
        %v2929 = vpack.c.b16 %v2913, %v2913
        %v2930 = vpack.c.b16 %v2914, %v2914
        %v2931 = vpack.c.b16 %v2915, %v2915
        %v2932 = vpack.c.b16 %v2916, %v2916
        %v2933 = vpack.c.b16 %v2917, %v2917
        %v2934 = vpack.c.b16 %v2918, %v2918
        %v2935 = vpack.c.b16 %v2919, %v2919
        %v2936 = vpack.c.b16 %v2920, %v2920
        %v2937 = vpack.c.b16 %v2921, %v2921
        %v2938 = vpack.c.b16 %v2922, %v2922
        %v2939 = vpack.c.b16 %v2923, %v2923
        %v2940 = vpack.c.b16 %v2924, %v2924
        %v2941 = vpack.c.b16 %v2925, %v2925
        %v2942 = vpack.c.b16 %v2926, %v2926
        %2959 = vst [vmem:[%s751] sm:$0xf] %v2927
        %2960 = vst [vmem:[%s751 + $0x4] sm:$0xf] %v2928
        %2961 = vst [vmem:[%s751 + $0x8] sm:$0xf] %v2929
        %2962 = vst [vmem:[%s751 + $0xc] sm:$0xf] %v2930
        %2963 = vst [vmem:[%s751 + $0x10] sm:$0xf] %v2931
        %2964 = vst [vmem:[%s751 + $0x14] sm:$0xf] %v2932
        %2965 = vst [vmem:[%s751 + $0x18] sm:$0xf] %v2933
        %2966 = vst [vmem:[%s751 + $0x1c] sm:$0xf] %v2934
        %2967 = vst [vmem:[%s751 + $0x20] sm:$0xf] %v2935
        %2968 = vst [vmem:[%s751 + $0x24] sm:$0xf] %v2936
        %2969 = vst [vmem:[%s751 + $0x28] sm:$0xf] %v2937
        %2970 = vst [vmem:[%s751 + $0x2c] sm:$0xf] %v2938
        %2971 = vst [vmem:[%s751 + $0x30] sm:$0xf] %v2939
        %2972 = vst [vmem:[%s751 + $0x34] sm:$0xf] %v2940
        %2973 = vst [vmem:[%s751 + $0x38] sm:$0xf] %v2941
        %2974 = vst [vmem:[%s751 + $0x3c] sm:$0xf] %v2942
        %2975 = vxpose.xlu0.b32.start [1/16] %v2879, 128
        %2976 = vxpose.xlu0.b32.cont [2/16] %v2880, 128
        %2977 = vxpose.xlu0.b32.cont [3/16] %v2881, 128
        %2978 = vxpose.xlu0.b32.cont [4/16] %v2882, 128
        %2979 = vxpose.xlu0.b32.cont [5/16] %v2883, 128
        %2980 = vxpose.xlu0.b32.cont [6/16] %v2884, 128
        %2981 = vxpose.xlu0.b32.cont [7/16] %v2885, 128
        %2982 = vxpose.xlu0.b32.cont [8/16] %v2886, 128
        %2983 = vxpose.xlu0.b32.cont [9/16] %v2887, 128
        %2984 = vxpose.xlu0.b32.cont [10/16] %v2888, 128
        %2985 = vxpose.xlu0.b32.cont [11/16] %v2889, 128
        %2986 = vxpose.xlu0.b32.cont [12/16] %v2890, 128
        %2987 = vxpose.xlu0.b32.cont [13/16] %v2891, 128
        %2988 = vxpose.xlu0.b32.cont [14/16] %v2892, 128
        %2989 = vxpose.xlu0.b32.cont [15/16] %v2893, 128
        %2990 = vxpose.xlu0.b32.end [16/16] %v2894, 128
        %v2991 = vpop.trf.xlu0
        %v2992 = vpop.trf.xlu0
        %v2993 = vpop.trf.xlu0
        %v2994 = vpop.trf.xlu0
        %v2995 = vpop.trf.xlu0
        %v2996 = vpop.trf.xlu0
        %v2997 = vpop.trf.xlu0
        %v2998 = vpop.trf.xlu0
        %v2999 = vpop.trf.xlu0
        %v3000 = vpop.trf.xlu0
        %v3001 = vpop.trf.xlu0
        %v3002 = vpop.trf.xlu0
        %v3003 = vpop.trf.xlu0
        %v3004 = vpop.trf.xlu0
        %v3005 = vpop.trf.xlu0
        %v3006 = vpop.trf.xlu0
        %v3007 = vmul.f32 %v2991, %v806
        %v3008 = vmul.f32 %v2992, %v811
        %v3009 = vmul.f32 %v2993, %v816
        %v3010 = vmul.f32 %v2994, %v821
        %v3011 = vmul.f32 %v2995, %v826
        %v3012 = vmul.f32 %v2996, %v831
        %v3013 = vmul.f32 %v2997, %v836
        %v3014 = vmul.f32 %v2998, %v841
        %v3015 = vmul.f32 %v2999, %v846
        %v3016 = vmul.f32 %v3000, %v851
        %v3017 = vmul.f32 %v3001, %v856
        %v3018 = vmul.f32 %v3002, %v861
        %v3019 = vmul.f32 %v3003, %v866
        %v3020 = vmul.f32 %v3004, %v871
        %v3021 = vmul.f32 %v3005, %v876
        %v3022 = vmul.f32 %v3006, %v881
        %v3023 = vadd.f32 %v3007, %v3008
        %v3024 = vadd.f32 %v3023, %v3009
        %v3025 = vadd.f32 %v3024, %v3010
        %v3026 = vadd.f32 %v3025, %v3011
        %v3027 = vadd.f32 %v3026, %v3012
        %v3028 = vadd.f32 %v3027, %v3013
        %v3029 = vadd.f32 %v3028, %v3014
        %v3030 = vadd.f32 %v3029, %v3015
        %v3031 = vadd.f32 %v3030, %v3016
        %v3032 = vadd.f32 %v3031, %v3017
        %v3033 = vadd.f32 %v3032, %v3018
        %v3034 = vadd.f32 %v3033, %v3019
        %v3035 = vadd.f32 %v3034, %v3020
        %v3036 = vadd.f32 %v3035, %v3021
        %v3037 = vadd.f32 %v3036, %v3022
        %v3038 = vrot.slane %v3037, 4
        %v3039 = vadd.f32 %v3037, %v3038
        %v3040 = vrot.slane %v3039, 2
        %v3041 = vadd.f32 %v3039, %v3040
        %v3042 = vrot.slane %v3041, 1
        %v3043 = vadd.f32 %v3041, %v3042
        %3044 = vadd.xlane.f32.xlu0 %v2644
        %v3045 = vpop.xlane.xlu0 %3044
        %3046 = vadd.xlane.f32.xlu0 %v2646
        %v3047 = vpop.xlane.xlu0 %3046
        %3048 = vadd.xlane.f32.xlu0 %v2648
        %v3049 = vpop.xlane.xlu0 %3048
        %3050 = vadd.xlane.f32.xlu0 %v2650
        %v3051 = vpop.xlane.xlu0 %3050
        %3052 = vadd.xlane.f32.xlu0 %v2652
        %v3053 = vpop.xlane.xlu0 %3052
        %3054 = vadd.xlane.f32.xlu0 %v2654
        %v3055 = vpop.xlane.xlu0 %3054
        %3056 = vadd.xlane.f32.xlu0 %v2656
        %v3057 = vpop.xlane.xlu0 %3056
        %3058 = vadd.xlane.f32.xlu0 %v2658
        %v3059 = vpop.xlane.xlu0 %3058
        %3060 = vadd.xlane.f32.xlu0 %v2660
        %v3061 = vpop.xlane.xlu0 %3060
        %3062 = vadd.xlane.f32.xlu0 %v2662
        %v3063 = vpop.xlane.xlu0 %3062
        %3064 = vadd.xlane.f32.xlu0 %v2664
        %v3065 = vpop.xlane.xlu0 %3064
        %3066 = vadd.xlane.f32.xlu0 %v2666
        %v3067 = vpop.xlane.xlu0 %3066
        %3068 = vadd.xlane.f32.xlu0 %v2668
        %v3069 = vpop.xlane.xlu0 %3068
        %3070 = vadd.xlane.f32.xlu0 %v2670
        %v3071 = vpop.xlane.xlu0 %3070
        %3072 = vadd.xlane.f32.xlu0 %v2672
        %v3073 = vpop.xlane.xlu0 %3072
        %3074 = vadd.xlane.f32.xlu0 %v2674
        %v3075 = vpop.xlane.xlu0 %3074
        %v3076 = vmul.f32 %v3045, %v1543
        %v3077 = vmul.f32 %v3047, %v1543
        %v3078 = vmul.f32 %v3049, %v1543
        %v3079 = vmul.f32 %v3051, %v1543
        %v3080 = vmul.f32 %v3053, %v1543
        %v3081 = vmul.f32 %v3055, %v1543
        %v3082 = vmul.f32 %v3057, %v1543
        %v3083 = vmul.f32 %v3059, %v1543
        %v3084 = vmul.f32 %v3061, %v1543
        %v3085 = vmul.f32 %v3063, %v1543
        %v3086 = vmul.f32 %v3065, %v1543
        %v3087 = vmul.f32 %v3067, %v1543
        %v3088 = vmul.f32 %v3069, %v1543
        %v3089 = vmul.f32 %v3071, %v1543
        %v3090 = vmul.f32 %v3073, %v1543
        %v3091 = vmul.f32 %v3075, %v1543
        %v3092 = vsub.f32 %v2644, %v3076
        %v3093 = vsub.f32 %v2646, %v3077
        %v3094 = vsub.f32 %v2648, %v3078
        %v3095 = vsub.f32 %v2650, %v3079
        %v3096 = vsub.f32 %v2652, %v3080
        %v3097 = vsub.f32 %v2654, %v3081
        %v3098 = vsub.f32 %v2656, %v3082
        %v3099 = vsub.f32 %v2658, %v3083
        %v3100 = vsub.f32 %v2660, %v3084
        %v3101 = vsub.f32 %v2662, %v3085
        %v3102 = vsub.f32 %v2664, %v3086
        %v3103 = vsub.f32 %v2666, %v3087
        %v3104 = vsub.f32 %v2668, %v3088
        %v3105 = vsub.f32 %v2670, %v3089
        %v3106 = vsub.f32 %v2672, %v3090
        %v3107 = vsub.f32 %v2674, %v3091
        %v3108 = vmul.f32 %v3092, %v3092
        %v3109 = vmul.f32 %v3093, %v3093
        %v3110 = vmul.f32 %v3094, %v3094
        %v3111 = vmul.f32 %v3095, %v3095
        %v3112 = vmul.f32 %v3096, %v3096
        %v3113 = vmul.f32 %v3097, %v3097
        %v3114 = vmul.f32 %v3098, %v3098
        %v3115 = vmul.f32 %v3099, %v3099
        %v3116 = vmul.f32 %v3100, %v3100
        %v3117 = vmul.f32 %v3101, %v3101
        %v3118 = vmul.f32 %v3102, %v3102
        %v3119 = vmul.f32 %v3103, %v3103
        %v3120 = vmul.f32 %v3104, %v3104
        %v3121 = vmul.f32 %v3105, %v3105
        %v3122 = vmul.f32 %v3106, %v3106
        %v3123 = vmul.f32 %v3107, %v3107
        %3124 = vadd.xlane.f32.xlu0 %v3108
        %v3125 = vpop.xlane.xlu0 %3124
        %3126 = vadd.xlane.f32.xlu0 %v3109
        %v3127 = vpop.xlane.xlu0 %3126
        %3128 = vadd.xlane.f32.xlu0 %v3110
        %v3129 = vpop.xlane.xlu0 %3128
        %3130 = vadd.xlane.f32.xlu0 %v3111
        %v3131 = vpop.xlane.xlu0 %3130
        %3132 = vadd.xlane.f32.xlu0 %v3112
        %v3133 = vpop.xlane.xlu0 %3132
        %3134 = vadd.xlane.f32.xlu0 %v3113
        %v3135 = vpop.xlane.xlu0 %3134
        %3136 = vadd.xlane.f32.xlu0 %v3114
        %v3137 = vpop.xlane.xlu0 %3136
        %3138 = vadd.xlane.f32.xlu0 %v3115
        %v3139 = vpop.xlane.xlu0 %3138
        %3140 = vadd.xlane.f32.xlu0 %v3116
        %v3141 = vpop.xlane.xlu0 %3140
        %3142 = vadd.xlane.f32.xlu0 %v3117
        %v3143 = vpop.xlane.xlu0 %3142
        %3144 = vadd.xlane.f32.xlu0 %v3118
        %v3145 = vpop.xlane.xlu0 %3144
        %3146 = vadd.xlane.f32.xlu0 %v3119
        %v3147 = vpop.xlane.xlu0 %3146
        %3148 = vadd.xlane.f32.xlu0 %v3120
        %v3149 = vpop.xlane.xlu0 %3148
        %3150 = vadd.xlane.f32.xlu0 %v3121
        %v3151 = vpop.xlane.xlu0 %3150
        %3152 = vadd.xlane.f32.xlu0 %v3122
        %v3153 = vpop.xlane.xlu0 %3152
        %3154 = vadd.xlane.f32.xlu0 %v3123
        %v3155 = vpop.xlane.xlu0 %3154
        %v3156 = vmul.f32 %v3125, %v1543
        %v3157 = vmul.f32 %v3127, %v1543
        %v3158 = vmul.f32 %v3129, %v1543
        %v3159 = vmul.f32 %v3131, %v1543
        %v3160 = vmul.f32 %v3133, %v1543
        %v3161 = vmul.f32 %v3135, %v1543
        %v3162 = vmul.f32 %v3137, %v1543
        %v3163 = vmul.f32 %v3139, %v1543
        %v3164 = vmul.f32 %v3141, %v1543
        %v3165 = vmul.f32 %v3143, %v1543
        %v3166 = vmul.f32 %v3145, %v1543
        %v3167 = vmul.f32 %v3147, %v1543
        %v3168 = vmul.f32 %v3149, %v1543
        %v3169 = vmul.f32 %v3151, %v1543
        %v3170 = vmul.f32 %v3153, %v1543
        %v3171 = vmul.f32 %v3155, %v1543
        %v3172 = vadd.f32 %v3156, 1e-05
        %v3173 = vadd.f32 %v3157, 1e-05
        %v3174 = vadd.f32 %v3158, 1e-05
        %v3175 = vadd.f32 %v3159, 1e-05
        %v3176 = vadd.f32 %v3160, 1e-05
        %v3177 = vadd.f32 %v3161, 1e-05
        %v3178 = vadd.f32 %v3162, 1e-05
        %v3179 = vadd.f32 %v3163, 1e-05
        %v3180 = vadd.f32 %v3164, 1e-05
        %v3181 = vadd.f32 %v3165, 1e-05
        %v3182 = vadd.f32 %v3166, 1e-05
        %v3183 = vadd.f32 %v3167, 1e-05
        %v3184 = vadd.f32 %v3168, 1e-05
        %v3185 = vadd.f32 %v3169, 1e-05
        %v3186 = vadd.f32 %v3170, 1e-05
        %v3187 = vadd.f32 %v3171, 1e-05
        %v3188 = vrsqrt.pop %v3172
        %v3189 = vrsqrt.pop %v3173
        %v3190 = vrsqrt.pop %v3174
        %v3191 = vrsqrt.pop %v3175
        %v3192 = vrsqrt.pop %v3176
        %v3193 = vrsqrt.pop %v3177
        %v3194 = vrsqrt.pop %v3178
        %v3195 = vrsqrt.pop %v3179
        %v3196 = vrsqrt.pop %v3180
        %v3197 = vrsqrt.pop %v3181
        %v3198 = vrsqrt.pop %v3182
        %v3199 = vrsqrt.pop %v3183
        %v3200 = vrsqrt.pop %v3184
        %v3201 = vrsqrt.pop %v3185
        %v3202 = vrsqrt.pop %v3186
        %v3203 = vrsqrt.pop %v3187
        %v3204 = vmul.f32 %v3092, %v3188
        %v3205 = vmul.f32 %v3093, %v3189
        %v3206 = vmul.f32 %v3094, %v3190
        %v3207 = vmul.f32 %v3095, %v3191
        %v3208 = vmul.f32 %v3096, %v3192
        %v3209 = vmul.f32 %v3097, %v3193
        %v3210 = vmul.f32 %v3098, %v3194
        %v3211 = vmul.f32 %v3099, %v3195
        %v3212 = vmul.f32 %v3100, %v3196
        %v3213 = vmul.f32 %v3101, %v3197
        %v3214 = vmul.f32 %v3102, %v3198
        %v3215 = vmul.f32 %v3103, %v3199
        %v3216 = vmul.f32 %v3104, %v3200
        %v3217 = vmul.f32 %v3105, %v3201
        %v3218 = vmul.f32 %v3106, %v3202
        %v3219 = vmul.f32 %v3107, %v3203
        %v3220 = vmul.f32 %v3204, %v2855
        %v3221 = vmul.f32 %v3205, %v2855
        %v3222 = vmul.f32 %v3206, %v2855
        %v3223 = vmul.f32 %v3207, %v2855
        %v3224 = vmul.f32 %v3208, %v2855
        %v3225 = vmul.f32 %v3209, %v2855
        %v3226 = vmul.f32 %v3210, %v2855
        %v3227 = vmul.f32 %v3211, %v2855
        %v3228 = vmul.f32 %v3212, %v2855
        %v3229 = vmul.f32 %v3213, %v2855
        %v3230 = vmul.f32 %v3214, %v2855
        %v3231 = vmul.f32 %v3215, %v2855
        %v3232 = vmul.f32 %v3216, %v2855
        %v3233 = vmul.f32 %v3217, %v2855
        %v3234 = vmul.f32 %v3218, %v2855
        %v3235 = vmul.f32 %v3219, %v2855
        %v3236 = vadd.f32 %v3220, %v2877
        %v3237 = vadd.f32 %v3221, %v2877
        %v3238 = vadd.f32 %v3222, %v2877
        %v3239 = vadd.f32 %v3223, %v2877
        %v3240 = vadd.f32 %v3224, %v2877
        %v3241 = vadd.f32 %v3225, %v2877
        %v3242 = vadd.f32 %v3226, %v2877
        %v3243 = vadd.f32 %v3227, %v2877
        %v3244 = vadd.f32 %v3228, %v2877
        %v3245 = vadd.f32 %v3229, %v2877
        %v3246 = vadd.f32 %v3230, %v2877
        %v3247 = vadd.f32 %v3231, %v2877
        %v3248 = vadd.f32 %v3232, %v2877
        %v3249 = vadd.f32 %v3233, %v2877
        %v3250 = vadd.f32 %v3234, %v2877
        %v3251 = vadd.f32 %v3235, %v2877
        %v3252 = vpack.c.bf16 %v3237, %v3236
        %v3253 = vpack.c.bf16 %v3239, %v3238
        %v3254 = vpack.c.bf16 %v3241, %v3240
        %v3255 = vpack.c.bf16 %v3243, %v3242
        %v3256 = vpack.c.bf16 %v3245, %v3244
        %v3257 = vpack.c.bf16 %v3247, %v3246
        %v3258 = vpack.c.bf16 %v3249, %v3248
        %v3259 = vpack.c.bf16 %v3251, %v3250
        %v3268 = vunpack.c.l.b16 %v3252
        %v3269 = vunpack.c.h.b16 %v3252
        %v3270 = vunpack.c.l.b16 %v3253
        %v3271 = vunpack.c.h.b16 %v3253
        %v3272 = vunpack.c.l.b16 %v3254
        %v3273 = vunpack.c.h.b16 %v3254
        %v3274 = vunpack.c.l.b16 %v3255
        %v3275 = vunpack.c.h.b16 %v3255
        %v3276 = vunpack.c.l.b16 %v3256
        %v3277 = vunpack.c.h.b16 %v3256
        %v3278 = vunpack.c.l.b16 %v3257
        %v3279 = vunpack.c.h.b16 %v3257
        %v3280 = vunpack.c.l.b16 %v3258
        %v3281 = vunpack.c.h.b16 %v3258
        %v3282 = vunpack.c.l.b16 %v3259
        %v3283 = vunpack.c.h.b16 %v3259
        %v3284 = vpack.c.b16 %v3268, %v3268
        %v3285 = vpack.c.b16 %v3269, %v3269
        %v3286 = vpack.c.b16 %v3270, %v3270
        %v3287 = vpack.c.b16 %v3271, %v3271
        %v3288 = vpack.c.b16 %v3272, %v3272
        %v3289 = vpack.c.b16 %v3273, %v3273
        %v3290 = vpack.c.b16 %v3274, %v3274
        %v3291 = vpack.c.b16 %v3275, %v3275
        %v3292 = vpack.c.b16 %v3276, %v3276
        %v3293 = vpack.c.b16 %v3277, %v3277
        %v3294 = vpack.c.b16 %v3278, %v3278
        %v3295 = vpack.c.b16 %v3279, %v3279
        %v3296 = vpack.c.b16 %v3280, %v3280
        %v3297 = vpack.c.b16 %v3281, %v3281
        %v3298 = vpack.c.b16 %v3282, %v3282
        %v3299 = vpack.c.b16 %v3283, %v3283
        %s3316 = scalar_lea.vmem %s751, 128 [#allocation8]
        %3317 = vst [vmem:[%s3316] sm:$0xf] %v3284
        %3318 = vst [vmem:[%s3316 + $0x4] sm:$0xf] %v3285
        %3319 = vst [vmem:[%s3316 + $0x8] sm:$0xf] %v3286
        %3320 = vst [vmem:[%s3316 + $0xc] sm:$0xf] %v3287
        %3321 = vst [vmem:[%s3316 + $0x10] sm:$0xf] %v3288
        %3322 = vst [vmem:[%s3316 + $0x14] sm:$0xf] %v3289
        %3323 = vst [vmem:[%s3316 + $0x18] sm:$0xf] %v3290
        %3324 = vst [vmem:[%s3316 + $0x1c] sm:$0xf] %v3291
        %3325 = vst [vmem:[%s3316 + $0x20] sm:$0xf] %v3292
        %3326 = vst [vmem:[%s3316 + $0x24] sm:$0xf] %v3293
        %3327 = vst [vmem:[%s3316 + $0x28] sm:$0xf] %v3294
        %3328 = vst [vmem:[%s3316 + $0x2c] sm:$0xf] %v3295
        %3329 = vst [vmem:[%s3316 + $0x30] sm:$0xf] %v3296
        %3330 = vst [vmem:[%s3316 + $0x34] sm:$0xf] %v3297
        %3331 = vst [vmem:[%s3316 + $0x38] sm:$0xf] %v3298
        %3332 = vst [vmem:[%s3316 + $0x3c] sm:$0xf] %v3299
        %3333 = vxpose.xlu0.b32.start [1/16] %v3236, 128
        %3334 = vxpose.xlu0.b32.cont [2/16] %v3237, 128
        %3335 = vxpose.xlu0.b32.cont [3/16] %v3238, 128
        %3336 = vxpose.xlu0.b32.cont [4/16] %v3239, 128
        %3337 = vxpose.xlu0.b32.cont [5/16] %v3240, 128
        %3338 = vxpose.xlu0.b32.cont [6/16] %v3241, 128
        %3339 = vxpose.xlu0.b32.cont [7/16] %v3242, 128
        %3340 = vxpose.xlu0.b32.cont [8/16] %v3243, 128
        %3341 = vxpose.xlu0.b32.cont [9/16] %v3244, 128
        %3342 = vxpose.xlu0.b32.cont [10/16] %v3245, 128
        %3343 = vxpose.xlu0.b32.cont [11/16] %v3246, 128
        %3344 = vxpose.xlu0.b32.cont [12/16] %v3247, 128
        %3345 = vxpose.xlu0.b32.cont [13/16] %v3248, 128
        %3346 = vxpose.xlu0.b32.cont [14/16] %v3249, 128
        %3347 = vxpose.xlu0.b32.cont [15/16] %v3250, 128
        %3348 = vxpose.xlu0.b32.end [16/16] %v3251, 128
        %v3349 = vpop.trf.xlu0
        %v3350 = vpop.trf.xlu0
        %v3351 = vpop.trf.xlu0
        %v3352 = vpop.trf.xlu0
        %v3353 = vpop.trf.xlu0
        %v3354 = vpop.trf.xlu0
        %v3355 = vpop.trf.xlu0
        %v3356 = vpop.trf.xlu0
        %v3357 = vpop.trf.xlu0
        %v3358 = vpop.trf.xlu0
        %v3359 = vpop.trf.xlu0
        %v3360 = vpop.trf.xlu0
        %v3361 = vpop.trf.xlu0
        %v3362 = vpop.trf.xlu0
        %v3363 = vpop.trf.xlu0
        %v3364 = vpop.trf.xlu0
        %v3365 = vmul.f32 %v3349, %v806
        %v3366 = vmul.f32 %v3350, %v811
        %v3367 = vmul.f32 %v3351, %v816
        %v3368 = vmul.f32 %v3352, %v821
        %v3369 = vmul.f32 %v3353, %v826
        %v3370 = vmul.f32 %v3354, %v831
        %v3371 = vmul.f32 %v3355, %v836
        %v3372 = vmul.f32 %v3356, %v841
        %v3373 = vmul.f32 %v3357, %v846
        %v3374 = vmul.f32 %v3358, %v851
        %v3375 = vmul.f32 %v3359, %v856
        %v3376 = vmul.f32 %v3360, %v861
        %v3377 = vmul.f32 %v3361, %v866
        %v3378 = vmul.f32 %v3362, %v871
        %v3379 = vmul.f32 %v3363, %v876
        %v3380 = vmul.f32 %v3364, %v881
        %v3381 = vadd.f32 %v3365, %v3366
        %v3382 = vadd.f32 %v3381, %v3367
        %v3383 = vadd.f32 %v3382, %v3368
        %v3384 = vadd.f32 %v3383, %v3369
        %v3385 = vadd.f32 %v3384, %v3370
        %v3386 = vadd.f32 %v3385, %v3371
        %v3387 = vadd.f32 %v3386, %v3372
        %v3388 = vadd.f32 %v3387, %v3373
        %v3389 = vadd.f32 %v3388, %v3374
        %v3390 = vadd.f32 %v3389, %v3375
        %v3391 = vadd.f32 %v3390, %v3376
        %v3392 = vadd.f32 %v3391, %v3377
        %v3393 = vadd.f32 %v3392, %v3378
        %v3394 = vadd.f32 %v3393, %v3379
        %v3395 = vadd.f32 %v3394, %v3380
        %v3396 = vrot.slane %v3395, 4
        %v3397 = vadd.f32 %v3395, %v3396
        %v3398 = vrot.slane %v3397, 2
        %v3399 = vadd.f32 %v3397, %v3398
        %v3400 = vrot.slane %v3399, 1
        %v3401 = vadd.f32 %v3399, %v3400
        %vm3402 = vcmask 1040384
        %v3403 = vsel %vm3402, %v3043, %v3401
        %v3404 = vstv %s786
        %v3405 = vadd.f32 %v3403, %v3404
        %3406 = vst [vmem:[%s779] sm:$0x3] %v3405
        %s3407 = sadd.s32 %s883, 1
        %s3408 = scalar_lea.vmem %s764, 256
        %v3409 = vld [vmem:[%s3408] sm:$0xff]
        %v3410 = vld [vmem:[%s3408 + $0x8] sm:$0xff]
        %v3411 = vld [vmem:[%s3408 + $0x10] sm:$0xff]
        %v3412 = vld [vmem:[%s3408 + $0x18] sm:$0xff]
        %v3413 = vld [vmem:[%s3408 + $0x20] sm:$0xff]
        %v3414 = vld [vmem:[%s3408 + $0x28] sm:$0xff]
        %v3415 = vld [vmem:[%s3408 + $0x30] sm:$0xff]
        %v3416 = vld [vmem:[%s3408 + $0x38] sm:$0xff]
        %v3417 = vld [vmem:[%s3408 + $0x40] sm:$0xff]
        %v3418 = vld [vmem:[%s3408 + $0x48] sm:$0xff]
        %v3419 = vld [vmem:[%s3408 + $0x50] sm:$0xff]
        %v3420 = vld [vmem:[%s3408 + $0x58] sm:$0xff]
        %v3421 = vld [vmem:[%s3408 + $0x60] sm:$0xff]
        %v3422 = vld [vmem:[%s3408 + $0x68] sm:$0xff]
        %v3423 = vld [vmem:[%s3408 + $0x70] sm:$0xff]
        %v3424 = vld [vmem:[%s3408 + $0x78] sm:$0xff]
        %v3425 = vld [vmem:[%s3408 + $0x80] sm:$0xff]
        %v3426 = vld [vmem:[%s3408 + $0x88] sm:$0xff]
        %v3427 = vld [vmem:[%s3408 + $0x90] sm:$0xff]
        %v3428 = vld [vmem:[%s3408 + $0x98] sm:$0xff]
        %v3429 = vld [vmem:[%s3408 + $0xa0] sm:$0xff]
        %v3430 = vld [vmem:[%s3408 + $0xa8] sm:$0xff]
        %v3431 = vld [vmem:[%s3408 + $0xb0] sm:$0xff]
        %v3432 = vld [vmem:[%s3408 + $0xb8] sm:$0xff]
        %v3433 = vld [vmem:[%s3408 + $0xc0] sm:$0xff]
        %v3434 = vld [vmem:[%s3408 + $0xc8] sm:$0xff]
        %v3435 = vld [vmem:[%s3408 + $0xd0] sm:$0xff]
        %v3436 = vld [vmem:[%s3408 + $0xd8] sm:$0xff]
        %v3437 = vld [vmem:[%s3408 + $0xe0] sm:$0xff]
        %v3438 = vld [vmem:[%s3408 + $0xe8] sm:$0xff]
        %v3439 = vld [vmem:[%s3408 + $0xf0] sm:$0xff]
        %v3440 = vld [vmem:[%s3408 + $0xf8] sm:$0xff]
        %s3441 = scalar_lea.vmem %s771, 256
        %v3442 = vld [vmem:[%s3441] sm:$0xff]
        %v3443 = vld [vmem:[%s3441 + $0x8] sm:$0xff]
        %v3444 = vld [vmem:[%s3441 + $0x10] sm:$0xff]
        %v3445 = vld [vmem:[%s3441 + $0x18] sm:$0xff]
        %v3446 = vld [vmem:[%s3441 + $0x20] sm:$0xff]
        %v3447 = vld [vmem:[%s3441 + $0x28] sm:$0xff]
        %v3448 = vld [vmem:[%s3441 + $0x30] sm:$0xff]
        %v3449 = vld [vmem:[%s3441 + $0x38] sm:$0xff]
        %v3450 = vld [vmem:[%s3441 + $0x40] sm:$0xff]
        %v3451 = vld [vmem:[%s3441 + $0x48] sm:$0xff]
        %v3452 = vld [vmem:[%s3441 + $0x50] sm:$0xff]
        %v3453 = vld [vmem:[%s3441 + $0x58] sm:$0xff]
        %v3454 = vld [vmem:[%s3441 + $0x60] sm:$0xff]
        %v3455 = vld [vmem:[%s3441 + $0x68] sm:$0xff]
        %v3456 = vld [vmem:[%s3441 + $0x70] sm:$0xff]
        %v3457 = vld [vmem:[%s3441 + $0x78] sm:$0xff]
        %v3458 = vld [vmem:[%s3441 + $0x80] sm:$0xff]
        %v3459 = vld [vmem:[%s3441 + $0x88] sm:$0xff]
        %v3460 = vld [vmem:[%s3441 + $0x90] sm:$0xff]
        %v3461 = vld [vmem:[%s3441 + $0x98] sm:$0xff]
        %v3462 = vld [vmem:[%s3441 + $0xa0] sm:$0xff]
        %v3463 = vld [vmem:[%s3441 + $0xa8] sm:$0xff]
        %v3464 = vld [vmem:[%s3441 + $0xb0] sm:$0xff]
        %v3465 = vld [vmem:[%s3441 + $0xb8] sm:$0xff]
        %v3466 = vld [vmem:[%s3441 + $0xc0] sm:$0xff]
        %v3467 = vld [vmem:[%s3441 + $0xc8] sm:$0xff]
        %v3468 = vld [vmem:[%s3441 + $0xd0] sm:$0xff]
        %v3469 = vld [vmem:[%s3441 + $0xd8] sm:$0xff]
        %v3470 = vld [vmem:[%s3441 + $0xe0] sm:$0xff]
        %v3471 = vld [vmem:[%s3441 + $0xe8] sm:$0xff]
        %v3472 = vld [vmem:[%s3441 + $0xf0] sm:$0xff]
        %v3473 = vld [vmem:[%s3441 + $0xf8] sm:$0xff]
        %v3475 = vsel %vm948, %v3409, 0
        %v3478 = vsel %vm948, %v3410, 0
        %v3481 = vsel %vm948, %v3411, 0
        %v3484 = vsel %vm948, %v3412, 0
        %v3487 = vsel %vm948, %v3413, 0
        %v3490 = vsel %vm948, %v3414, 0
        %v3493 = vsel %vm948, %v3415, 0
        %v3496 = vsel %vm948, %v3416, 0
        %v3499 = vsel %vm948, %v3417, 0
        %v3502 = vsel %vm948, %v3418, 0
        %v3505 = vsel %vm948, %v3419, 0
        %v3508 = vsel %vm948, %v3420, 0
        %v3511 = vsel %vm948, %v3421, 0
        %v3514 = vsel %vm948, %v3422, 0
        %v3517 = vsel %vm948, %v3423, 0
        %v3520 = vsel %vm948, %v3424, 0
        %v3523 = vsel %vm948, %v3425, 0
        %v3526 = vsel %vm948, %v3426, 0
        %v3529 = vsel %vm948, %v3427, 0
        %v3532 = vsel %vm948, %v3428, 0
        %v3535 = vsel %vm948, %v3429, 0
        %v3538 = vsel %vm948, %v3430, 0
        %v3541 = vsel %vm948, %v3431, 0
        %v3544 = vsel %vm948, %v3432, 0
        %v3547 = vsel %vm948, %v3433, 0
        %v3550 = vsel %vm948, %v3434, 0
        %v3553 = vsel %vm948, %v3435, 0
        %v3556 = vsel %vm948, %v3436, 0
        %v3559 = vsel %vm948, %v3437, 0
        %v3562 = vsel %vm948, %v3438, 0
        %v3565 = vsel %vm948, %v3439, 0
        %v3568 = vsel %vm948, %v3440, 0
        %3570 = vmatprep.subr.mxu0 0.0
        %3571 = vmatpush1.msra.mxu0 %v781
        %3572 = vmatprep.subr.mxu0 0.0
        %3573 = vmatpush1.msra.mxu0 0.0
        %3574 = vmatprep.subr.mxu0 0.0
        %3575 = vmatpush1.msra.mxu0 0.0
        %3576 = vmatprep.subr.mxu0 0.0
        %3577 = vmatpush1.msra.mxu0 0.0
        %3578 = vmatprep.subr.mxu0 0.0
        %3579 = vmatpush1.msra.mxu0 0.0
        %3580 = vmatprep.subr.mxu0 0.0
        %3581 = vmatpush1.msra.mxu0 0.0
        %3582 = vmatprep.subr.mxu0 0.0
        %3583 = vmatpush1.msra.mxu0 0.0
        %3584 = vmatprep.subr.mxu0 0.0
        %3585 = vmatpush1.msra.mxu0 0.0
        %3586 = vmatprep.subr.mxu0 0.0
        %3587 = vmatpush1.msra.mxu0 0.0
        %3588 = vmatprep.subr.mxu0 0.0
        %3589 = vmatpush1.msra.mxu0 0.0
        %3590 = vmatprep.subr.mxu0 0.0
        %3591 = vmatpush1.msra.mxu0 0.0
        %3592 = vmatprep.subr.mxu0 0.0
        %3593 = vmatpush1.msra.mxu0 0.0
        %3594 = vmatprep.subr.mxu0 0.0
        %3595 = vmatpush1.msra.mxu0 0.0
        %3596 = vmatprep.subr.mxu0 0.0
        %3597 = vmatpush1.msra.mxu0 0.0
        %3598 = vmatprep.subr.mxu0 0.0
        %3599 = vmatpush1.msra.mxu0 0.0
        %3600 = vmatprep.subr.mxu0 0.0
        %3601 = vmatpush1.msra.mxu0 0.0
        %3602 = vmatprep.subr.mxu0 0.0
        %3603 = vmatpush1.msra.mxu0 0.0
        %3604 = vmatprep.subr.mxu0 0.0
        %3605 = vmatpush1.msra.mxu0 0.0
        %3606 = vmatprep.subr.mxu0 0.0
        %3607 = vmatpush1.msra.mxu0 0.0
        %3608 = vmatprep.subr.mxu0 0.0
        %3609 = vmatpush1.msra.mxu0 0.0
        %3610 = vmatprep.subr.mxu0 0.0
        %3611 = vmatpush1.msra.mxu0 0.0
        %3612 = vmatprep.subr.mxu0 0.0
        %3613 = vmatpush1.msra.mxu0 0.0
        %3614 = vmatprep.subr.mxu0 0.0
        %3615 = vmatpush1.msra.mxu0 0.0
        %3616 = vmatprep.subr.mxu0 0.0
        %3617 = vmatpush1.msra.mxu0 0.0
        %3618 = vmatprep.subr.mxu0 0.0
        %3619 = vmatpush1.msra.mxu0 0.0
        %3620 = vmatprep.subr.mxu0 0.0
        %3621 = vmatpush1.msra.mxu0 0.0
        %3622 = vmatprep.subr.mxu0 0.0
        %3623 = vmatpush1.msra.mxu0 0.0
        %3624 = vmatprep.subr.mxu0 0.0
        %3625 = vmatpush1.msra.mxu0 0.0
        %3626 = vmatprep.subr.mxu0 0.0
        %3627 = vmatpush1.msra.mxu0 0.0
        %3628 = vmatprep.subr.mxu0 0.0
        %3629 = vmatpush1.msra.mxu0 0.0
        %3630 = vmatprep.subr.mxu0 0.0
        %3631 = vmatpush1.msra.mxu0 0.0
        %3632 = vmatprep.subr.mxu0 0.0
        %3633 = vmatpush1.msra.mxu0 0.0
        %3634 = vmatprep.mubr.f32.mxu0 0.0
        %3635 = vmatmul.mubr.f32.gmra.mrb[0].mxu0 %v3475
        %v3636 = vpop.f32.mrb[0].mxu0
        %v3637 = vadd.f32 0.0, %v3636
        %v3638 = vpop.f32.mrb[0].mxu0
        %3639 = vmatprep.mubr.f32.mxu0 0.0
        %3640 = vmatmul.mubr.f32.gmra.mrb[0].mxu0 %v3478
        %v3641 = vpop.f32.mrb[0].mxu0
        %v3642 = vadd.f32 0.0, %v3641
        %v3643 = vpop.f32.mrb[0].mxu0
        %3644 = vmatprep.mubr.f32.mxu0 0.0
        %3645 = vmatmul.mubr.f32.gmra.mrb[0].mxu0 %v3481
        %v3646 = vpop.f32.mrb[0].mxu0
        %v3647 = vadd.f32 0.0, %v3646
        %v3648 = vpop.f32.mrb[0].mxu0
        %3649 = vmatprep.mubr.f32.mxu0 0.0
        %3650 = vmatmul.mubr.f32.gmra.mrb[0].mxu0 %v3484
        %v3651 = vpop.f32.mrb[0].mxu0
        %v3652 = vadd.f32 0.0, %v3651
        %v3653 = vpop.f32.mrb[0].mxu0
        %3654 = vmatprep.mubr.f32.mxu0 0.0
        %3655 = vmatmul.mubr.f32.gmra.mrb[0].mxu0 %v3487
        %v3656 = vpop.f32.mrb[0].mxu0
        %v3657 = vadd.f32 0.0, %v3656
        %v3658 = vpop.f32.mrb[0].mxu0
        %3659 = vmatprep.mubr.f32.mxu0 0.0
        %3660 = vmatmul.mubr.f32.gmra.mrb[0].mxu0 %v3490
        %v3661 = vpop.f32.mrb[0].mxu0
        %v3662 = vadd.f32 0.0, %v3661
        %v3663 = vpop.f32.mrb[0].mxu0
        %3664 = vmatprep.mubr.f32.mxu0 0.0
        %3665 = vmatmul.mubr.f32.gmra.mrb[0].mxu0 %v3493
        %v3666 = vpop.f32.mrb[0].mxu0
        %v3667 = vadd.f32 0.0, %v3666
        %v3668 = vpop.f32.mrb[0].mxu0
        %3669 = vmatprep.mubr.f32.mxu0 0.0
        %3670 = vmatmul.mubr.f32.gmra.mrb[0].mxu0 %v3496
        %v3671 = vpop.f32.mrb[0].mxu0
        %v3672 = vadd.f32 0.0, %v3671
        %v3673 = vpop.f32.mrb[0].mxu0
        %3674 = vmatprep.mubr.f32.mxu0 0.0
        %3675 = vmatmul.mubr.f32.gmra.mrb[0].mxu0 %v3499
        %v3676 = vpop.f32.mrb[0].mxu0
        %v3677 = vadd.f32 0.0, %v3676
        %v3678 = vpop.f32.mrb[0].mxu0
        %3679 = vmatprep.mubr.f32.mxu0 0.0
        %3680 = vmatmul.mubr.f32.gmra.mrb[0].mxu0 %v3502
        %v3681 = vpop.f32.mrb[0].mxu0
        %v3682 = vadd.f32 0.0, %v3681
        %v3683 = vpop.f32.mrb[0].mxu0
        %3684 = vmatprep.mubr.f32.mxu0 0.0
        %3685 = vmatmul.mubr.f32.gmra.mrb[0].mxu0 %v3505
        %v3686 = vpop.f32.mrb[0].mxu0
        %v3687 = vadd.f32 0.0, %v3686
        %v3688 = vpop.f32.mrb[0].mxu0
        %3689 = vmatprep.mubr.f32.mxu0 0.0
        %3690 = vmatmul.mubr.f32.gmra.mrb[0].mxu0 %v3508
        %v3691 = vpop.f32.mrb[0].mxu0
        %v3692 = vadd.f32 0.0, %v3691
        %v3693 = vpop.f32.mrb[0].mxu0
        %3694 = vmatprep.mubr.f32.mxu0 0.0
        %3695 = vmatmul.mubr.f32.gmra.mrb[0].mxu0 %v3511
        %v3696 = vpop.f32.mrb[0].mxu0
        %v3697 = vadd.f32 0.0, %v3696
        %v3698 = vpop.f32.mrb[0].mxu0
        %3699 = vmatprep.mubr.f32.mxu0 0.0
        %3700 = vmatmul.mubr.f32.gmra.mrb[0].mxu0 %v3514
        %v3701 = vpop.f32.mrb[0].mxu0
        %v3702 = vadd.f32 0.0, %v3701
        %v3703 = vpop.f32.mrb[0].mxu0
        %3704 = vmatprep.mubr.f32.mxu0 0.0
        %3705 = vmatmul.mubr.f32.gmra.mrb[0].mxu0 %v3517
        %v3706 = vpop.f32.mrb[0].mxu0
        %v3707 = vadd.f32 0.0, %v3706
        %v3708 = vpop.f32.mrb[0].mxu0
        %3709 = vmatprep.mubr.f32.mxu0 0.0
        %3710 = vmatmul.mubr.f32.gmra.mrb[0].mxu0 %v3520
        %v3711 = vpop.f32.mrb[0].mxu0
        %v3712 = vadd.f32 0.0, %v3711
        %v3713 = vpop.f32.mrb[0].mxu0
        %3714 = vmatprep.mubr.f32.mxu0 0.0
        %3715 = vmatmul.mubr.f32.gmra.mrb[0].mxu0 %v3523
        %v3716 = vpop.f32.mrb[0].mxu0
        %v3717 = vadd.f32 0.0, %v3716
        %v3718 = vpop.f32.mrb[0].mxu0
        %3719 = vmatprep.mubr.f32.mxu0 0.0
        %3720 = vmatmul.mubr.f32.gmra.mrb[0].mxu0 %v3526
        %v3721 = vpop.f32.mrb[0].mxu0
        %v3722 = vadd.f32 0.0, %v3721
        %v3723 = vpop.f32.mrb[0].mxu0
        %3724 = vmatprep.mubr.f32.mxu0 0.0
        %3725 = vmatmul.mubr.f32.gmra.mrb[0].mxu0 %v3529
        %v3726 = vpop.f32.mrb[0].mxu0
        %v3727 = vadd.f32 0.0, %v3726
        %v3728 = vpop.f32.mrb[0].mxu0
        %3729 = vmatprep.mubr.f32.mxu0 0.0
        %3730 = vmatmul.mubr.f32.gmra.mrb[0].mxu0 %v3532
        %v3731 = vpop.f32.mrb[0].mxu0
        %v3732 = vadd.f32 0.0, %v3731
        %v3733 = vpop.f32.mrb[0].mxu0
        %3734 = vmatprep.mubr.f32.mxu0 0.0
        %3735 = vmatmul.mubr.f32.gmra.mrb[0].mxu0 %v3535
        %v3736 = vpop.f32.mrb[0].mxu0
        %v3737 = vadd.f32 0.0, %v3736
        %v3738 = vpop.f32.mrb[0].mxu0
        %3739 = vmatprep.mubr.f32.mxu0 0.0
        %3740 = vmatmul.mubr.f32.gmra.mrb[0].mxu0 %v3538
        %v3741 = vpop.f32.mrb[0].mxu0
        %v3742 = vadd.f32 0.0, %v3741
        %v3743 = vpop.f32.mrb[0].mxu0
        %3744 = vmatprep.mubr.f32.mxu0 0.0
        %3745 = vmatmul.mubr.f32.gmra.mrb[0].mxu0 %v3541
        %v3746 = vpop.f32.mrb[0].mxu0
        %v3747 = vadd.f32 0.0, %v3746
        %v3748 = vpop.f32.mrb[0].mxu0
        %3749 = vmatprep.mubr.f32.mxu0 0.0
        %3750 = vmatmul.mubr.f32.gmra.mrb[0].mxu0 %v3544
        %v3751 = vpop.f32.mrb[0].mxu0
        %v3752 = vadd.f32 0.0, %v3751
        %v3753 = vpop.f32.mrb[0].mxu0
        %3754 = vmatprep.mubr.f32.mxu0 0.0
        %3755 = vmatmul.mubr.f32.gmra.mrb[0].mxu0 %v3547
        %v3756 = vpop.f32.mrb[0].mxu0
        %v3757 = vadd.f32 0.0, %v3756
        %v3758 = vpop.f32.mrb[0].mxu0
        %3759 = vmatprep.mubr.f32.mxu0 0.0
        %3760 = vmatmul.mubr.f32.gmra.mrb[0].mxu0 %v3550
        %v3761 = vpop.f32.mrb[0].mxu0
        %v3762 = vadd.f32 0.0, %v3761
        %v3763 = vpop.f32.mrb[0].mxu0
        %3764 = vmatprep.mubr.f32.mxu0 0.0
        %3765 = vmatmul.mubr.f32.gmra.mrb[0].mxu0 %v3553
        %v3766 = vpop.f32.mrb[0].mxu0
        %v3767 = vadd.f32 0.0, %v3766
        %v3768 = vpop.f32.mrb[0].mxu0
        %3769 = vmatprep.mubr.f32.mxu0 0.0
        %3770 = vmatmul.mubr.f32.gmra.mrb[0].mxu0 %v3556
        %v3771 = vpop.f32.mrb[0].mxu0
        %v3772 = vadd.f32 0.0, %v3771
        %v3773 = vpop.f32.mrb[0].mxu0
        %3774 = vmatprep.mubr.f32.mxu0 0.0
        %3775 = vmatmul.mubr.f32.gmra.mrb[0].mxu0 %v3559
        %v3776 = vpop.f32.mrb[0].mxu0
        %v3777 = vadd.f32 0.0, %v3776
        %v3778 = vpop.f32.mrb[0].mxu0
        %3779 = vmatprep.mubr.f32.mxu0 0.0
        %3780 = vmatmul.mubr.f32.gmra.mrb[0].mxu0 %v3562
        %v3781 = vpop.f32.mrb[0].mxu0
        %v3782 = vadd.f32 0.0, %v3781
        %v3783 = vpop.f32.mrb[0].mxu0
        %3784 = vmatprep.mubr.f32.mxu0 0.0
        %3785 = vmatmul.mubr.f32.gmra.mrb[0].mxu0 %v3565
        %v3786 = vpop.f32.mrb[0].mxu0
        %v3787 = vadd.f32 0.0, %v3786
        %v3788 = vpop.f32.mrb[0].mxu0
        %3789 = vmatprep.mubr.f32.mxu0 0.0
        %3790 = vmatmul.mubr.f32.gmra.mrb[0].mxu0 %v3568
        %v3791 = vpop.f32.mrb[0].mxu0
        %v3792 = vadd.f32 0.0, %v3791
        %v3793 = vpop.f32.mrb[0].mxu0
        %3794 = vdwg.mxu0
        %v3796 = vsel %vm948, %v3637, 0
        %v3799 = vsel %vm948, %v3642, 0
        %v3802 = vsel %vm948, %v3647, 0
        %v3805 = vsel %vm948, %v3652, 0
        %v3808 = vsel %vm948, %v3657, 0
        %v3811 = vsel %vm948, %v3662, 0
        %v3814 = vsel %vm948, %v3667, 0
        %v3817 = vsel %vm948, %v3672, 0
        %v3820 = vsel %vm948, %v3677, 0
        %v3823 = vsel %vm948, %v3682, 0
        %v3826 = vsel %vm948, %v3687, 0
        %v3829 = vsel %vm948, %v3692, 0
        %v3832 = vsel %vm948, %v3697, 0
        %v3835 = vsel %vm948, %v3702, 0
        %v3838 = vsel %vm948, %v3707, 0
        %v3841 = vsel %vm948, %v3712, 0
        %v3844 = vsel %vm948, %v3442, 0
        %v3847 = vsel %vm948, %v3443, 0
        %v3850 = vsel %vm948, %v3444, 0
        %v3853 = vsel %vm948, %v3445, 0
        %v3856 = vsel %vm948, %v3446, 0
        %v3859 = vsel %vm948, %v3447, 0
        %v3862 = vsel %vm948, %v3448, 0
        %v3865 = vsel %vm948, %v3449, 0
        %v3868 = vsel %vm948, %v3450, 0
        %v3871 = vsel %vm948, %v3451, 0
        %v3874 = vsel %vm948, %v3452, 0
        %v3877 = vsel %vm948, %v3453, 0
        %v3880 = vsel %vm948, %v3454, 0
        %v3883 = vsel %vm948, %v3455, 0
        %v3886 = vsel %vm948, %v3456, 0
        %v3889 = vsel %vm948, %v3457, 0
        %3891 = vmatprep.subr.mxu0 0.0
        %3892 = vmatpush1.xpose.msra.mxu0 %v3844
        %3893 = vmatprep.subr.mxu0 0.0
        %3894 = vmatpush1.xpose.msra.mxu0 %v3847
        %3895 = vmatprep.subr.mxu0 0.0
        %3896 = vmatpush1.xpose.msra.mxu0 %v3850
        %3897 = vmatprep.subr.mxu0 0.0
        %3898 = vmatpush1.xpose.msra.mxu0 %v3853
        %3899 = vmatprep.subr.mxu0 0.0
        %3900 = vmatpush1.xpose.msra.mxu0 %v3856
        %3901 = vmatprep.subr.mxu0 0.0
        %3902 = vmatpush1.xpose.msra.mxu0 %v3859
        %3903 = vmatprep.subr.mxu0 0.0
        %3904 = vmatpush1.xpose.msra.mxu0 %v3862
        %3905 = vmatprep.subr.mxu0 0.0
        %3906 = vmatpush1.xpose.msra.mxu0 %v3865
        %3907 = vmatprep.subr.mxu0 0.0
        %3908 = vmatpush1.xpose.msra.mxu0 %v3868
        %3909 = vmatprep.subr.mxu0 0.0
        %3910 = vmatpush1.xpose.msra.mxu0 %v3871
        %3911 = vmatprep.subr.mxu0 0.0
        %3912 = vmatpush1.xpose.msra.mxu0 %v3874
        %3913 = vmatprep.subr.mxu0 0.0
        %3914 = vmatpush1.xpose.msra.mxu0 %v3877
        %3915 = vmatprep.subr.mxu0 0.0
        %3916 = vmatpush1.xpose.msra.mxu0 %v3880
        %3917 = vmatprep.subr.mxu0 0.0
        %3918 = vmatpush1.xpose.msra.mxu0 %v3883
        %3919 = vmatprep.subr.mxu0 0.0
        %3920 = vmatpush1.xpose.msra.mxu0 %v3886
        %3921 = vmatprep.subr.mxu0 0.0
        %3922 = vmatpush1.xpose.msra.mxu0 %v3889
        %3923 = vmatprep.subr.mxu0 0.0
        %3924 = vmatpush1.xpose.msra.mxu0 0.0
        %3925 = vmatprep.subr.mxu0 0.0
        %3926 = vmatpush1.xpose.msra.mxu0 0.0
        %3927 = vmatprep.subr.mxu0 0.0
        %3928 = vmatpush1.xpose.msra.mxu0 0.0
        %3929 = vmatprep.subr.mxu0 0.0
        %3930 = vmatpush1.xpose.msra.mxu0 0.0
        %3931 = vmatprep.subr.mxu0 0.0
        %3932 = vmatpush1.xpose.msra.mxu0 0.0
        %3933 = vmatprep.subr.mxu0 0.0
        %3934 = vmatpush1.xpose.msra.mxu0 0.0
        %3935 = vmatprep.subr.mxu0 0.0
        %3936 = vmatpush1.xpose.msra.mxu0 0.0
        %3937 = vmatprep.subr.mxu0 0.0
        %3938 = vmatpush1.xpose.msra.mxu0 0.0
        %3939 = vmatprep.subr.mxu0 0.0
        %3940 = vmatpush1.xpose.msra.mxu0 0.0
        %3941 = vmatprep.subr.mxu0 0.0
        %3942 = vmatpush1.xpose.msra.mxu0 0.0
        %3943 = vmatprep.subr.mxu0 0.0
        %3944 = vmatpush1.xpose.msra.mxu0 0.0
        %3945 = vmatprep.subr.mxu0 0.0
        %3946 = vmatpush1.xpose.msra.mxu0 0.0
        %3947 = vmatprep.subr.mxu0 0.0
        %3948 = vmatpush1.xpose.msra.mxu0 0.0
        %3949 = vmatprep.subr.mxu0 0.0
        %3950 = vmatpush1.xpose.msra.mxu0 0.0
        %3951 = vmatprep.subr.mxu0 0.0
        %3952 = vmatpush1.xpose.msra.mxu0 0.0
        %3953 = vmatprep.subr.mxu0 0.0
        %3954 = vmatpush1.xpose.msra.mxu0 0.0
        %3955 = vmatprep.mubr.f32.mxu0 0.0
        %3956 = vmatmul.mubr.f32.gmra.mrb[0].mxu0 %v3796
        %v3957 = vpop.f32.mrb[0].mxu0
        %v3958 = vadd.f32 0.0, %v3957
        %v3959 = vpop.f32.mrb[0].mxu0
        %3960 = vmatprep.mubr.f32.mxu0 0.0
        %3961 = vmatmul.mubr.f32.gmra.mrb[0].mxu0 %v3799
        %v3962 = vpop.f32.mrb[0].mxu0
        %v3963 = vadd.f32 0.0, %v3962
        %v3964 = vpop.f32.mrb[0].mxu0
        %3965 = vmatprep.mubr.f32.mxu0 0.0
        %3966 = vmatmul.mubr.f32.gmra.mrb[0].mxu0 %v3802
        %v3967 = vpop.f32.mrb[0].mxu0
        %v3968 = vadd.f32 0.0, %v3967
        %v3969 = vpop.f32.mrb[0].mxu0
        %3970 = vmatprep.mubr.f32.mxu0 0.0
        %3971 = vmatmul.mubr.f32.gmra.mrb[0].mxu0 %v3805
        %v3972 = vpop.f32.mrb[0].mxu0
        %v3973 = vadd.f32 0.0, %v3972
        %v3974 = vpop.f32.mrb[0].mxu0
        %3975 = vmatprep.mubr.f32.mxu0 0.0
        %3976 = vmatmul.mubr.f32.gmra.mrb[0].mxu0 %v3808
        %v3977 = vpop.f32.mrb[0].mxu0
        %v3978 = vadd.f32 0.0, %v3977
        %v3979 = vpop.f32.mrb[0].mxu0
        %3980 = vmatprep.mubr.f32.mxu0 0.0
        %3981 = vmatmul.mubr.f32.gmra.mrb[0].mxu0 %v3811
        %v3982 = vpop.f32.mrb[0].mxu0
        %v3983 = vadd.f32 0.0, %v3982
        %v3984 = vpop.f32.mrb[0].mxu0
        %3985 = vmatprep.mubr.f32.mxu0 0.0
        %3986 = vmatmul.mubr.f32.gmra.mrb[0].mxu0 %v3814
        %v3987 = vpop.f32.mrb[0].mxu0
        %v3988 = vadd.f32 0.0, %v3987
        %v3989 = vpop.f32.mrb[0].mxu0
        %3990 = vmatprep.mubr.f32.mxu0 0.0
        %3991 = vmatmul.mubr.f32.gmra.mrb[0].mxu0 %v3817
        %v3992 = vpop.f32.mrb[0].mxu0
        %v3993 = vadd.f32 0.0, %v3992
        %v3994 = vpop.f32.mrb[0].mxu0
        %3995 = vmatprep.mubr.f32.mxu0 0.0
        %3996 = vmatmul.mubr.f32.gmra.mrb[0].mxu0 %v3820
        %v3997 = vpop.f32.mrb[0].mxu0
        %v3998 = vadd.f32 0.0, %v3997
        %v3999 = vpop.f32.mrb[0].mxu0
        %4000 = vmatprep.mubr.f32.mxu0 0.0
        %4001 = vmatmul.mubr.f32.gmra.mrb[0].mxu0 %v3823
        %v4002 = vpop.f32.mrb[0].mxu0
        %v4003 = vadd.f32 0.0, %v4002
        %v4004 = vpop.f32.mrb[0].mxu0
        %4005 = vmatprep.mubr.f32.mxu0 0.0
        %4006 = vmatmul.mubr.f32.gmra.mrb[0].mxu0 %v3826
        %v4007 = vpop.f32.mrb[0].mxu0
        %v4008 = vadd.f32 0.0, %v4007
        %v4009 = vpop.f32.mrb[0].mxu0
        %4010 = vmatprep.mubr.f32.mxu0 0.0
        %4011 = vmatmul.mubr.f32.gmra.mrb[0].mxu0 %v3829
        %v4012 = vpop.f32.mrb[0].mxu0
        %v4013 = vadd.f32 0.0, %v4012
        %v4014 = vpop.f32.mrb[0].mxu0
        %4015 = vmatprep.mubr.f32.mxu0 0.0
        %4016 = vmatmul.mubr.f32.gmra.mrb[0].mxu0 %v3832
        %v4017 = vpop.f32.mrb[0].mxu0
        %v4018 = vadd.f32 0.0, %v4017
        %v4019 = vpop.f32.mrb[0].mxu0
        %4020 = vmatprep.mubr.f32.mxu0 0.0
        %4021 = vmatmul.mubr.f32.gmra.mrb[0].mxu0 %v3835
        %v4022 = vpop.f32.mrb[0].mxu0
        %v4023 = vadd.f32 0.0, %v4022
        %v4024 = vpop.f32.mrb[0].mxu0
        %4025 = vmatprep.mubr.f32.mxu0 0.0
        %4026 = vmatmul.mubr.f32.gmra.mrb[0].mxu0 %v3838
        %v4027 = vpop.f32.mrb[0].mxu0
        %v4028 = vadd.f32 0.0, %v4027
        %v4029 = vpop.f32.mrb[0].mxu0
        %4030 = vmatprep.mubr.f32.mxu0 0.0
        %4031 = vmatmul.mubr.f32.gmra.mrb[0].mxu0 %v3841
        %v4032 = vpop.f32.mrb[0].mxu0
        %v4033 = vadd.f32 0.0, %v4032
        %v4034 = vpop.f32.mrb[0].mxu0
        %4035 = vdwg.mxu0
        %4036 = vadd.xlane.f32.xlu0 %v3958
        %v4037 = vpop.xlane.xlu0 %4036
        %4038 = vadd.xlane.f32.xlu0 %v3963
        %v4039 = vpop.xlane.xlu0 %4038
        %4040 = vadd.xlane.f32.xlu0 %v3968
        %v4041 = vpop.xlane.xlu0 %4040
        %4042 = vadd.xlane.f32.xlu0 %v3973
        %v4043 = vpop.xlane.xlu0 %4042
        %4044 = vadd.xlane.f32.xlu0 %v3978
        %v4045 = vpop.xlane.xlu0 %4044
        %4046 = vadd.xlane.f32.xlu0 %v3983
        %v4047 = vpop.xlane.xlu0 %4046
        %4048 = vadd.xlane.f32.xlu0 %v3988
        %v4049 = vpop.xlane.xlu0 %4048
        %4050 = vadd.xlane.f32.xlu0 %v3993
        %v4051 = vpop.xlane.xlu0 %4050
        %4052 = vadd.xlane.f32.xlu0 %v3998
        %v4053 = vpop.xlane.xlu0 %4052
        %4054 = vadd.xlane.f32.xlu0 %v4003
        %v4055 = vpop.xlane.xlu0 %4054
        %4056 = vadd.xlane.f32.xlu0 %v4008
        %v4057 = vpop.xlane.xlu0 %4056
        %4058 = vadd.xlane.f32.xlu0 %v4013
        %v4059 = vpop.xlane.xlu0 %4058
        %4060 = vadd.xlane.f32.xlu0 %v4018
        %v4061 = vpop.xlane.xlu0 %4060
        %4062 = vadd.xlane.f32.xlu0 %v4023
        %v4063 = vpop.xlane.xlu0 %4062
        %4064 = vadd.xlane.f32.xlu0 %v4028
        %v4065 = vpop.xlane.xlu0 %4064
        %4066 = vadd.xlane.f32.xlu0 %v4033
        %v4067 = vpop.xlane.xlu0 %4066
        %v4068 = vmul.f32 %v4037, %v1543
        %v4069 = vmul.f32 %v4039, %v1543
        %v4070 = vmul.f32 %v4041, %v1543
        %v4071 = vmul.f32 %v4043, %v1543
        %v4072 = vmul.f32 %v4045, %v1543
        %v4073 = vmul.f32 %v4047, %v1543
        %v4074 = vmul.f32 %v4049, %v1543
        %v4075 = vmul.f32 %v4051, %v1543
        %v4076 = vmul.f32 %v4053, %v1543
        %v4077 = vmul.f32 %v4055, %v1543
        %v4078 = vmul.f32 %v4057, %v1543
        %v4079 = vmul.f32 %v4059, %v1543
        %v4080 = vmul.f32 %v4061, %v1543
        %v4081 = vmul.f32 %v4063, %v1543
        %v4082 = vmul.f32 %v4065, %v1543
        %v4083 = vmul.f32 %v4067, %v1543
        %v4084 = vsub.f32 %v3958, %v4068
        %v4085 = vsub.f32 %v3963, %v4069
        %v4086 = vsub.f32 %v3968, %v4070
        %v4087 = vsub.f32 %v3973, %v4071
        %v4088 = vsub.f32 %v3978, %v4072
        %v4089 = vsub.f32 %v3983, %v4073
        %v4090 = vsub.f32 %v3988, %v4074
        %v4091 = vsub.f32 %v3993, %v4075
        %v4092 = vsub.f32 %v3998, %v4076
        %v4093 = vsub.f32 %v4003, %v4077
        %v4094 = vsub.f32 %v4008, %v4078
        %v4095 = vsub.f32 %v4013, %v4079
        %v4096 = vsub.f32 %v4018, %v4080
        %v4097 = vsub.f32 %v4023, %v4081
        %v4098 = vsub.f32 %v4028, %v4082
        %v4099 = vsub.f32 %v4033, %v4083
        %v4100 = vmul.f32 %v4084, %v4084
        %v4101 = vmul.f32 %v4085, %v4085
        %v4102 = vmul.f32 %v4086, %v4086
        %v4103 = vmul.f32 %v4087, %v4087
        %v4104 = vmul.f32 %v4088, %v4088
        %v4105 = vmul.f32 %v4089, %v4089
        %v4106 = vmul.f32 %v4090, %v4090
        %v4107 = vmul.f32 %v4091, %v4091
        %v4108 = vmul.f32 %v4092, %v4092
        %v4109 = vmul.f32 %v4093, %v4093
        %v4110 = vmul.f32 %v4094, %v4094
        %v4111 = vmul.f32 %v4095, %v4095
        %v4112 = vmul.f32 %v4096, %v4096
        %v4113 = vmul.f32 %v4097, %v4097
        %v4114 = vmul.f32 %v4098, %v4098
        %v4115 = vmul.f32 %v4099, %v4099
        %4116 = vadd.xlane.f32.xlu0 %v4100
        %v4117 = vpop.xlane.xlu0 %4116
        %4118 = vadd.xlane.f32.xlu0 %v4101
        %v4119 = vpop.xlane.xlu0 %4118
        %4120 = vadd.xlane.f32.xlu0 %v4102
        %v4121 = vpop.xlane.xlu0 %4120
        %4122 = vadd.xlane.f32.xlu0 %v4103
        %v4123 = vpop.xlane.xlu0 %4122
        %4124 = vadd.xlane.f32.xlu0 %v4104
        %v4125 = vpop.xlane.xlu0 %4124
        %4126 = vadd.xlane.f32.xlu0 %v4105
        %v4127 = vpop.xlane.xlu0 %4126
        %4128 = vadd.xlane.f32.xlu0 %v4106
        %v4129 = vpop.xlane.xlu0 %4128
        %4130 = vadd.xlane.f32.xlu0 %v4107
        %v4131 = vpop.xlane.xlu0 %4130
        %4132 = vadd.xlane.f32.xlu0 %v4108
        %v4133 = vpop.xlane.xlu0 %4132
        %4134 = vadd.xlane.f32.xlu0 %v4109
        %v4135 = vpop.xlane.xlu0 %4134
        %4136 = vadd.xlane.f32.xlu0 %v4110
        %v4137 = vpop.xlane.xlu0 %4136
        %4138 = vadd.xlane.f32.xlu0 %v4111
        %v4139 = vpop.xlane.xlu0 %4138
        %4140 = vadd.xlane.f32.xlu0 %v4112
        %v4141 = vpop.xlane.xlu0 %4140
        %4142 = vadd.xlane.f32.xlu0 %v4113
        %v4143 = vpop.xlane.xlu0 %4142
        %4144 = vadd.xlane.f32.xlu0 %v4114
        %v4145 = vpop.xlane.xlu0 %4144
        %4146 = vadd.xlane.f32.xlu0 %v4115
        %v4147 = vpop.xlane.xlu0 %4146
        %v4148 = vmul.f32 %v4117, %v1543
        %v4149 = vmul.f32 %v4119, %v1543
        %v4150 = vmul.f32 %v4121, %v1543
        %v4151 = vmul.f32 %v4123, %v1543
        %v4152 = vmul.f32 %v4125, %v1543
        %v4153 = vmul.f32 %v4127, %v1543
        %v4154 = vmul.f32 %v4129, %v1543
        %v4155 = vmul.f32 %v4131, %v1543
        %v4156 = vmul.f32 %v4133, %v1543
        %v4157 = vmul.f32 %v4135, %v1543
        %v4158 = vmul.f32 %v4137, %v1543
        %v4159 = vmul.f32 %v4139, %v1543
        %v4160 = vmul.f32 %v4141, %v1543
        %v4161 = vmul.f32 %v4143, %v1543
        %v4162 = vmul.f32 %v4145, %v1543
        %v4163 = vmul.f32 %v4147, %v1543
        %v4164 = vadd.f32 %v4148, 1e-05
        %v4165 = vadd.f32 %v4149, 1e-05
        %v4166 = vadd.f32 %v4150, 1e-05
        %v4167 = vadd.f32 %v4151, 1e-05
        %v4168 = vadd.f32 %v4152, 1e-05
        %v4169 = vadd.f32 %v4153, 1e-05
        %v4170 = vadd.f32 %v4154, 1e-05
        %v4171 = vadd.f32 %v4155, 1e-05
        %v4172 = vadd.f32 %v4156, 1e-05
        %v4173 = vadd.f32 %v4157, 1e-05
        %v4174 = vadd.f32 %v4158, 1e-05
        %v4175 = vadd.f32 %v4159, 1e-05
        %v4176 = vadd.f32 %v4160, 1e-05
        %v4177 = vadd.f32 %v4161, 1e-05
        %v4178 = vadd.f32 %v4162, 1e-05
        %v4179 = vadd.f32 %v4163, 1e-05
        %v4180 = vrsqrt.pop %v4164
        %v4181 = vrsqrt.pop %v4165
        %v4182 = vrsqrt.pop %v4166
        %v4183 = vrsqrt.pop %v4167
        %v4184 = vrsqrt.pop %v4168
        %v4185 = vrsqrt.pop %v4169
        %v4186 = vrsqrt.pop %v4170
        %v4187 = vrsqrt.pop %v4171
        %v4188 = vrsqrt.pop %v4172
        %v4189 = vrsqrt.pop %v4173
        %v4190 = vrsqrt.pop %v4174
        %v4191 = vrsqrt.pop %v4175
        %v4192 = vrsqrt.pop %v4176
        %v4193 = vrsqrt.pop %v4177
        %v4194 = vrsqrt.pop %v4178
        %v4195 = vrsqrt.pop %v4179
        %v4196 = vmul.f32 %v4084, %v4180
        %v4197 = vmul.f32 %v4085, %v4181
        %v4198 = vmul.f32 %v4086, %v4182
        %v4199 = vmul.f32 %v4087, %v4183
        %v4200 = vmul.f32 %v4088, %v4184
        %v4201 = vmul.f32 %v4089, %v4185
        %v4202 = vmul.f32 %v4090, %v4186
        %v4203 = vmul.f32 %v4091, %v4187
        %v4204 = vmul.f32 %v4092, %v4188
        %v4205 = vmul.f32 %v4093, %v4189
        %v4206 = vmul.f32 %v4094, %v4190
        %v4207 = vmul.f32 %v4095, %v4191
        %v4208 = vmul.f32 %v4096, %v4192
        %v4209 = vmul.f32 %v4097, %v4193
        %v4210 = vmul.f32 %v4098, %v4194
        %v4211 = vmul.f32 %v4099, %v4195
        %v4212 = vmul.f32 %v4196, %v1692
        %v4213 = vmul.f32 %v4197, %v1692
        %v4214 = vmul.f32 %v4198, %v1692
        %v4215 = vmul.f32 %v4199, %v1692
        %v4216 = vmul.f32 %v4200, %v1692
        %v4217 = vmul.f32 %v4201, %v1692
        %v4218 = vmul.f32 %v4202, %v1692
        %v4219 = vmul.f32 %v4203, %v1692
        %v4220 = vmul.f32 %v4204, %v1692
        %v4221 = vmul.f32 %v4205, %v1692
        %v4222 = vmul.f32 %v4206, %v1692
        %v4223 = vmul.f32 %v4207, %v1692
        %v4224 = vmul.f32 %v4208, %v1692
        %v4225 = vmul.f32 %v4209, %v1692
        %v4226 = vmul.f32 %v4210, %v1692
        %v4227 = vmul.f32 %v4211, %v1692
        %v4228 = vadd.f32 %v4212, %v1714
        %v4229 = vadd.f32 %v4213, %v1714
        %v4230 = vadd.f32 %v4214, %v1714
        %v4231 = vadd.f32 %v4215, %v1714
        %v4232 = vadd.f32 %v4216, %v1714
        %v4233 = vadd.f32 %v4217, %v1714
        %v4234 = vadd.f32 %v4218, %v1714
        %v4235 = vadd.f32 %v4219, %v1714
        %v4236 = vadd.f32 %v4220, %v1714
        %v4237 = vadd.f32 %v4221, %v1714
        %v4238 = vadd.f32 %v4222, %v1714
        %v4239 = vadd.f32 %v4223, %v1714
        %v4240 = vadd.f32 %v4224, %v1714
        %v4241 = vadd.f32 %v4225, %v1714
        %v4242 = vadd.f32 %v4226, %v1714
        %v4243 = vadd.f32 %v4227, %v1714
        %4244 = vst [vmem:[#allocation2] sm:$0xff] %v4228
        %4245 = vst [vmem:[#allocation2 + $0x10] sm:$0xff] %v4229
        %4246 = vst [vmem:[#allocation2 + $0x20] sm:$0xff] %v4230
        %4247 = vst [vmem:[#allocation2 + $0x30] sm:$0xff] %v4231
        %4248 = vst [vmem:[#allocation2 + $0x40] sm:$0xff] %v4232
        %4249 = vst [vmem:[#allocation2 + $0x50] sm:$0xff] %v4233
        %4250 = vst [vmem:[#allocation2 + $0x60] sm:$0xff] %v4234
        %4251 = vst [vmem:[#allocation2 + $0x70] sm:$0xff] %v4235
        %4252 = vst [vmem:[#allocation2 + $0x80] sm:$0xff] %v4236
        %4253 = vst [vmem:[#allocation2 + $0x90] sm:$0xff] %v4237
        %4254 = vst [vmem:[#allocation2 + $0xa0] sm:$0xff] %v4238
        %4255 = vst [vmem:[#allocation2 + $0xb0] sm:$0xff] %v4239
        %4256 = vst [vmem:[#allocation2 + $0xc0] sm:$0xff] %v4240
        %4257 = vst [vmem:[#allocation2 + $0xd0] sm:$0xff] %v4241
        %4258 = vst [vmem:[#allocation2 + $0xe0] sm:$0xff] %v4242
        %4259 = vst [vmem:[#allocation2 + $0xf0] sm:$0xff] %v4243
        %v4261 = vsel %vm948, %v3717, 0
        %v4264 = vsel %vm948, %v3722, 0
        %v4267 = vsel %vm948, %v3727, 0
        %v4270 = vsel %vm948, %v3732, 0
        %v4273 = vsel %vm948, %v3737, 0
        %v4276 = vsel %vm948, %v3742, 0
        %v4279 = vsel %vm948, %v3747, 0
        %v4282 = vsel %vm948, %v3752, 0
        %v4285 = vsel %vm948, %v3757, 0
        %v4288 = vsel %vm948, %v3762, 0
        %v4291 = vsel %vm948, %v3767, 0
        %v4294 = vsel %vm948, %v3772, 0
        %v4297 = vsel %vm948, %v3777, 0
        %v4300 = vsel %vm948, %v3782, 0
        %v4303 = vsel %vm948, %v3787, 0
        %v4306 = vsel %vm948, %v3792, 0
        %v4309 = vsel %vm948, %v3458, 0
        %v4312 = vsel %vm948, %v3459, 0
        %v4315 = vsel %vm948, %v3460, 0
        %v4318 = vsel %vm948, %v3461, 0
        %v4321 = vsel %vm948, %v3462, 0
        %v4324 = vsel %vm948, %v3463, 0
        %v4327 = vsel %vm948, %v3464, 0
        %v4330 = vsel %vm948, %v3465, 0
        %v4333 = vsel %vm948, %v3466, 0
        %v4336 = vsel %vm948, %v3467, 0
        %v4339 = vsel %vm948, %v3468, 0
        %v4342 = vsel %vm948, %v3469, 0
        %v4345 = vsel %vm948, %v3470, 0
        %v4348 = vsel %vm948, %v3471, 0
        %v4351 = vsel %vm948, %v3472, 0
        %v4354 = vsel %vm948, %v3473, 0
        %4356 = vmatprep.subr.mxu0 0.0
        %4357 = vmatpush1.xpose.msra.mxu0 %v4309
        %4358 = vmatprep.subr.mxu0 0.0
        %4359 = vmatpush1.xpose.msra.mxu0 %v4312
        %4360 = vmatprep.subr.mxu0 0.0
        %4361 = vmatpush1.xpose.msra.mxu0 %v4315
        %4362 = vmatprep.subr.mxu0 0.0
        %4363 = vmatpush1.xpose.msra.mxu0 %v4318
        %4364 = vmatprep.subr.mxu0 0.0
        %4365 = vmatpush1.xpose.msra.mxu0 %v4321
        %4366 = vmatprep.subr.mxu0 0.0
        %4367 = vmatpush1.xpose.msra.mxu0 %v4324
        %4368 = vmatprep.subr.mxu0 0.0
        %4369 = vmatpush1.xpose.msra.mxu0 %v4327
        %4370 = vmatprep.subr.mxu0 0.0
        %4371 = vmatpush1.xpose.msra.mxu0 %v4330
        %4372 = vmatprep.subr.mxu0 0.0
        %4373 = vmatpush1.xpose.msra.mxu0 %v4333
        %4374 = vmatprep.subr.mxu0 0.0
        %4375 = vmatpush1.xpose.msra.mxu0 %v4336
        %4376 = vmatprep.subr.mxu0 0.0
        %4377 = vmatpush1.xpose.msra.mxu0 %v4339
        %4378 = vmatprep.subr.mxu0 0.0
        %4379 = vmatpush1.xpose.msra.mxu0 %v4342
        %4380 = vmatprep.subr.mxu0 0.0
        %4381 = vmatpush1.xpose.msra.mxu0 %v4345
        %4382 = vmatprep.subr.mxu0 0.0
        %4383 = vmatpush1.xpose.msra.mxu0 %v4348
        %4384 = vmatprep.subr.mxu0 0.0
        %4385 = vmatpush1.xpose.msra.mxu0 %v4351
        %4386 = vmatprep.subr.mxu0 0.0
        %4387 = vmatpush1.xpose.msra.mxu0 %v4354
        %4388 = vmatprep.subr.mxu0 0.0
        %4389 = vmatpush1.xpose.msra.mxu0 0.0
        %4390 = vmatprep.subr.mxu0 0.0
        %4391 = vmatpush1.xpose.msra.mxu0 0.0
        %4392 = vmatprep.subr.mxu0 0.0
        %4393 = vmatpush1.xpose.msra.mxu0 0.0
        %4394 = vmatprep.subr.mxu0 0.0
        %4395 = vmatpush1.xpose.msra.mxu0 0.0
        %4396 = vmatprep.subr.mxu0 0.0
        %4397 = vmatpush1.xpose.msra.mxu0 0.0
        %4398 = vmatprep.subr.mxu0 0.0
        %4399 = vmatpush1.xpose.msra.mxu0 0.0
        %4400 = vmatprep.subr.mxu0 0.0
        %4401 = vmatpush1.xpose.msra.mxu0 0.0
        %4402 = vmatprep.subr.mxu0 0.0
        %4403 = vmatpush1.xpose.msra.mxu0 0.0
        %4404 = vmatprep.subr.mxu0 0.0
        %4405 = vmatpush1.xpose.msra.mxu0 0.0
        %4406 = vmatprep.subr.mxu0 0.0
        %4407 = vmatpush1.xpose.msra.mxu0 0.0
        %4408 = vmatprep.subr.mxu0 0.0
        %4409 = vmatpush1.xpose.msra.mxu0 0.0
        %4410 = vmatprep.subr.mxu0 0.0
        %4411 = vmatpush1.xpose.msra.mxu0 0.0
        %4412 = vmatprep.subr.mxu0 0.0
        %4413 = vmatpush1.xpose.msra.mxu0 0.0
        %4414 = vmatprep.subr.mxu0 0.0
        %4415 = vmatpush1.xpose.msra.mxu0 0.0
        %4416 = vmatprep.subr.mxu0 0.0
        %4417 = vmatpush1.xpose.msra.mxu0 0.0
        %4418 = vmatprep.subr.mxu0 0.0
        %4419 = vmatpush1.xpose.msra.mxu0 0.0
        %4420 = vmatprep.mubr.f32.mxu0 0.0
        %4421 = vmatmul.mubr.f32.gmra.mrb[0].mxu0 %v4261
        %v4422 = vpop.f32.mrb[0].mxu0
        %v4423 = vadd.f32 0.0, %v4422
        %v4424 = vpop.f32.mrb[0].mxu0
        %4425 = vmatprep.mubr.f32.mxu0 0.0
        %4426 = vmatmul.mubr.f32.gmra.mrb[0].mxu0 %v4264
        %v4427 = vpop.f32.mrb[0].mxu0
        %v4428 = vadd.f32 0.0, %v4427
        %v4429 = vpop.f32.mrb[0].mxu0
        %4430 = vmatprep.mubr.f32.mxu0 0.0
        %4431 = vmatmul.mubr.f32.gmra.mrb[0].mxu0 %v4267
        %v4432 = vpop.f32.mrb[0].mxu0
        %v4433 = vadd.f32 0.0, %v4432
        %v4434 = vpop.f32.mrb[0].mxu0
        %4435 = vmatprep.mubr.f32.mxu0 0.0
        %4436 = vmatmul.mubr.f32.gmra.mrb[0].mxu0 %v4270
        %v4437 = vpop.f32.mrb[0].mxu0
        %v4438 = vadd.f32 0.0, %v4437
        %v4439 = vpop.f32.mrb[0].mxu0
        %4440 = vmatprep.mubr.f32.mxu0 0.0
        %4441 = vmatmul.mubr.f32.gmra.mrb[0].mxu0 %v4273
        %v4442 = vpop.f32.mrb[0].mxu0
        %v4443 = vadd.f32 0.0, %v4442
        %v4444 = vpop.f32.mrb[0].mxu0
        %4445 = vmatprep.mubr.f32.mxu0 0.0
        %4446 = vmatmul.mubr.f32.gmra.mrb[0].mxu0 %v4276
        %v4447 = vpop.f32.mrb[0].mxu0
        %v4448 = vadd.f32 0.0, %v4447
        %v4449 = vpop.f32.mrb[0].mxu0
        %4450 = vmatprep.mubr.f32.mxu0 0.0
        %4451 = vmatmul.mubr.f32.gmra.mrb[0].mxu0 %v4279
        %v4452 = vpop.f32.mrb[0].mxu0
        %v4453 = vadd.f32 0.0, %v4452
        %v4454 = vpop.f32.mrb[0].mxu0
        %4455 = vmatprep.mubr.f32.mxu0 0.0
        %4456 = vmatmul.mubr.f32.gmra.mrb[0].mxu0 %v4282
        %v4457 = vpop.f32.mrb[0].mxu0
        %v4458 = vadd.f32 0.0, %v4457
        %v4459 = vpop.f32.mrb[0].mxu0
        %4460 = vmatprep.mubr.f32.mxu0 0.0
        %4461 = vmatmul.mubr.f32.gmra.mrb[0].mxu0 %v4285
        %v4462 = vpop.f32.mrb[0].mxu0
        %v4463 = vadd.f32 0.0, %v4462
        %v4464 = vpop.f32.mrb[0].mxu0
        %4465 = vmatprep.mubr.f32.mxu0 0.0
        %4466 = vmatmul.mubr.f32.gmra.mrb[0].mxu0 %v4288
        %v4467 = vpop.f32.mrb[0].mxu0
        %v4468 = vadd.f32 0.0, %v4467
        %v4469 = vpop.f32.mrb[0].mxu0
        %4470 = vmatprep.mubr.f32.mxu0 0.0
        %4471 = vmatmul.mubr.f32.gmra.mrb[0].mxu0 %v4291
        %v4472 = vpop.f32.mrb[0].mxu0
        %v4473 = vadd.f32 0.0, %v4472
        %v4474 = vpop.f32.mrb[0].mxu0
        %4475 = vmatprep.mubr.f32.mxu0 0.0
        %4476 = vmatmul.mubr.f32.gmra.mrb[0].mxu0 %v4294
        %v4477 = vpop.f32.mrb[0].mxu0
        %v4478 = vadd.f32 0.0, %v4477
        %v4479 = vpop.f32.mrb[0].mxu0
        %4480 = vmatprep.mubr.f32.mxu0 0.0
        %4481 = vmatmul.mubr.f32.gmra.mrb[0].mxu0 %v4297
        %v4482 = vpop.f32.mrb[0].mxu0
        %v4483 = vadd.f32 0.0, %v4482
        %v4484 = vpop.f32.mrb[0].mxu0
        %4485 = vmatprep.mubr.f32.mxu0 0.0
        %4486 = vmatmul.mubr.f32.gmra.mrb[0].mxu0 %v4300
        %v4487 = vpop.f32.mrb[0].mxu0
        %v4488 = vadd.f32 0.0, %v4487
        %v4489 = vpop.f32.mrb[0].mxu0
        %4490 = vmatprep.mubr.f32.mxu0 0.0
        %4491 = vmatmul.mubr.f32.gmra.mrb[0].mxu0 %v4303
        %v4492 = vpop.f32.mrb[0].mxu0
        %v4493 = vadd.f32 0.0, %v4492
        %v4494 = vpop.f32.mrb[0].mxu0
        %4495 = vmatprep.mubr.f32.mxu0 0.0
        %4496 = vmatmul.mubr.f32.gmra.mrb[0].mxu0 %v4306
        %v4497 = vpop.f32.mrb[0].mxu0
        %v4498 = vadd.f32 0.0, %v4497
        %v4499 = vpop.f32.mrb[0].mxu0
        %4500 = vdwg.mxu0
        %4501 = vadd.xlane.f32.xlu0 %v4423
        %v4502 = vpop.xlane.xlu0 %4501
        %4503 = vadd.xlane.f32.xlu0 %v4428
        %v4504 = vpop.xlane.xlu0 %4503
        %4505 = vadd.xlane.f32.xlu0 %v4433
        %v4506 = vpop.xlane.xlu0 %4505
        %4507 = vadd.xlane.f32.xlu0 %v4438
        %v4508 = vpop.xlane.xlu0 %4507
        %4509 = vadd.xlane.f32.xlu0 %v4443
        %v4510 = vpop.xlane.xlu0 %4509
        %4511 = vadd.xlane.f32.xlu0 %v4448
        %v4512 = vpop.xlane.xlu0 %4511
        %4513 = vadd.xlane.f32.xlu0 %v4453
        %v4514 = vpop.xlane.xlu0 %4513
        %4515 = vadd.xlane.f32.xlu0 %v4458
        %v4516 = vpop.xlane.xlu0 %4515
        %4517 = vadd.xlane.f32.xlu0 %v4463
        %v4518 = vpop.xlane.xlu0 %4517
        %4519 = vadd.xlane.f32.xlu0 %v4468
        %v4520 = vpop.xlane.xlu0 %4519
        %4521 = vadd.xlane.f32.xlu0 %v4473
        %v4522 = vpop.xlane.xlu0 %4521
        %4523 = vadd.xlane.f32.xlu0 %v4478
        %v4524 = vpop.xlane.xlu0 %4523
        %4525 = vadd.xlane.f32.xlu0 %v4483
        %v4526 = vpop.xlane.xlu0 %4525
        %4527 = vadd.xlane.f32.xlu0 %v4488
        %v4528 = vpop.xlane.xlu0 %4527
        %4529 = vadd.xlane.f32.xlu0 %v4493
        %v4530 = vpop.xlane.xlu0 %4529
        %4531 = vadd.xlane.f32.xlu0 %v4498
        %v4532 = vpop.xlane.xlu0 %4531
        %v4533 = vmul.f32 %v4502, %v1543
        %v4534 = vmul.f32 %v4504, %v1543
        %v4535 = vmul.f32 %v4506, %v1543
        %v4536 = vmul.f32 %v4508, %v1543
        %v4537 = vmul.f32 %v4510, %v1543
        %v4538 = vmul.f32 %v4512, %v1543
        %v4539 = vmul.f32 %v4514, %v1543
        %v4540 = vmul.f32 %v4516, %v1543
        %v4541 = vmul.f32 %v4518, %v1543
        %v4542 = vmul.f32 %v4520, %v1543
        %v4543 = vmul.f32 %v4522, %v1543
        %v4544 = vmul.f32 %v4524, %v1543
        %v4545 = vmul.f32 %v4526, %v1543
        %v4546 = vmul.f32 %v4528, %v1543
        %v4547 = vmul.f32 %v4530, %v1543
        %v4548 = vmul.f32 %v4532, %v1543
        %v4549 = vsub.f32 %v4423, %v4533
        %v4550 = vsub.f32 %v4428, %v4534
        %v4551 = vsub.f32 %v4433, %v4535
        %v4552 = vsub.f32 %v4438, %v4536
        %v4553 = vsub.f32 %v4443, %v4537
        %v4554 = vsub.f32 %v4448, %v4538
        %v4555 = vsub.f32 %v4453, %v4539
        %v4556 = vsub.f32 %v4458, %v4540
        %v4557 = vsub.f32 %v4463, %v4541
        %v4558 = vsub.f32 %v4468, %v4542
        %v4559 = vsub.f32 %v4473, %v4543
        %v4560 = vsub.f32 %v4478, %v4544
        %v4561 = vsub.f32 %v4483, %v4545
        %v4562 = vsub.f32 %v4488, %v4546
        %v4563 = vsub.f32 %v4493, %v4547
        %v4564 = vsub.f32 %v4498, %v4548
        %v4565 = vmul.f32 %v4549, %v4549
        %v4566 = vmul.f32 %v4550, %v4550
        %v4567 = vmul.f32 %v4551, %v4551
        %v4568 = vmul.f32 %v4552, %v4552
        %v4569 = vmul.f32 %v4553, %v4553
        %v4570 = vmul.f32 %v4554, %v4554
        %v4571 = vmul.f32 %v4555, %v4555
        %v4572 = vmul.f32 %v4556, %v4556
        %v4573 = vmul.f32 %v4557, %v4557
        %v4574 = vmul.f32 %v4558, %v4558
        %v4575 = vmul.f32 %v4559, %v4559
        %v4576 = vmul.f32 %v4560, %v4560
        %v4577 = vmul.f32 %v4561, %v4561
        %v4578 = vmul.f32 %v4562, %v4562
        %v4579 = vmul.f32 %v4563, %v4563
        %v4580 = vmul.f32 %v4564, %v4564
        %4581 = vadd.xlane.f32.xlu0 %v4565
        %v4582 = vpop.xlane.xlu0 %4581
        %4583 = vadd.xlane.f32.xlu0 %v4566
        %v4584 = vpop.xlane.xlu0 %4583
        %4585 = vadd.xlane.f32.xlu0 %v4567
        %v4586 = vpop.xlane.xlu0 %4585
        %4587 = vadd.xlane.f32.xlu0 %v4568
        %v4588 = vpop.xlane.xlu0 %4587
        %4589 = vadd.xlane.f32.xlu0 %v4569
        %v4590 = vpop.xlane.xlu0 %4589
        %4591 = vadd.xlane.f32.xlu0 %v4570
        %v4592 = vpop.xlane.xlu0 %4591
        %4593 = vadd.xlane.f32.xlu0 %v4571
        %v4594 = vpop.xlane.xlu0 %4593
        %4595 = vadd.xlane.f32.xlu0 %v4572
        %v4596 = vpop.xlane.xlu0 %4595
        %4597 = vadd.xlane.f32.xlu0 %v4573
        %v4598 = vpop.xlane.xlu0 %4597
        %4599 = vadd.xlane.f32.xlu0 %v4574
        %v4600 = vpop.xlane.xlu0 %4599
        %4601 = vadd.xlane.f32.xlu0 %v4575
        %v4602 = vpop.xlane.xlu0 %4601
        %4603 = vadd.xlane.f32.xlu0 %v4576
        %v4604 = vpop.xlane.xlu0 %4603
        %4605 = vadd.xlane.f32.xlu0 %v4577
        %v4606 = vpop.xlane.xlu0 %4605
        %4607 = vadd.xlane.f32.xlu0 %v4578
        %v4608 = vpop.xlane.xlu0 %4607
        %4609 = vadd.xlane.f32.xlu0 %v4579
        %v4610 = vpop.xlane.xlu0 %4609
        %4611 = vadd.xlane.f32.xlu0 %v4580
        %v4612 = vpop.xlane.xlu0 %4611
        %v4613 = vmul.f32 %v4582, %v1543
        %v4614 = vmul.f32 %v4584, %v1543
        %v4615 = vmul.f32 %v4586, %v1543
        %v4616 = vmul.f32 %v4588, %v1543
        %v4617 = vmul.f32 %v4590, %v1543
        %v4618 = vmul.f32 %v4592, %v1543
        %v4619 = vmul.f32 %v4594, %v1543
        %v4620 = vmul.f32 %v4596, %v1543
        %v4621 = vmul.f32 %v4598, %v1543
        %v4622 = vmul.f32 %v4600, %v1543
        %v4623 = vmul.f32 %v4602, %v1543
        %v4624 = vmul.f32 %v4604, %v1543
        %v4625 = vmul.f32 %v4606, %v1543
        %v4626 = vmul.f32 %v4608, %v1543
        %v4627 = vmul.f32 %v4610, %v1543
        %v4628 = vmul.f32 %v4612, %v1543
        %v4629 = vadd.f32 %v4613, 1e-05
        %v4630 = vadd.f32 %v4614, 1e-05
        %v4631 = vadd.f32 %v4615, 1e-05
        %v4632 = vadd.f32 %v4616, 1e-05
        %v4633 = vadd.f32 %v4617, 1e-05
        %v4634 = vadd.f32 %v4618, 1e-05
        %v4635 = vadd.f32 %v4619, 1e-05
        %v4636 = vadd.f32 %v4620, 1e-05
        %v4637 = vadd.f32 %v4621, 1e-05
        %v4638 = vadd.f32 %v4622, 1e-05
        %v4639 = vadd.f32 %v4623, 1e-05
        %v4640 = vadd.f32 %v4624, 1e-05
        %v4641 = vadd.f32 %v4625, 1e-05
        %v4642 = vadd.f32 %v4626, 1e-05
        %v4643 = vadd.f32 %v4627, 1e-05
        %v4644 = vadd.f32 %v4628, 1e-05
        %v4645 = vrsqrt.pop %v4629
        %v4646 = vrsqrt.pop %v4630
        %v4647 = vrsqrt.pop %v4631
        %v4648 = vrsqrt.pop %v4632
        %v4649 = vrsqrt.pop %v4633
        %v4650 = vrsqrt.pop %v4634
        %v4651 = vrsqrt.pop %v4635
        %v4652 = vrsqrt.pop %v4636
        %v4653 = vrsqrt.pop %v4637
        %v4654 = vrsqrt.pop %v4638
        %v4655 = vrsqrt.pop %v4639
        %v4656 = vrsqrt.pop %v4640
        %v4657 = vrsqrt.pop %v4641
        %v4658 = vrsqrt.pop %v4642
        %v4659 = vrsqrt.pop %v4643
        %v4660 = vrsqrt.pop %v4644
        %v4661 = vmul.f32 %v4549, %v4645
        %v4662 = vmul.f32 %v4550, %v4646
        %v4663 = vmul.f32 %v4551, %v4647
        %v4664 = vmul.f32 %v4552, %v4648
        %v4665 = vmul.f32 %v4553, %v4649
        %v4666 = vmul.f32 %v4554, %v4650
        %v4667 = vmul.f32 %v4555, %v4651
        %v4668 = vmul.f32 %v4556, %v4652
        %v4669 = vmul.f32 %v4557, %v4653
        %v4670 = vmul.f32 %v4558, %v4654
        %v4671 = vmul.f32 %v4559, %v4655
        %v4672 = vmul.f32 %v4560, %v4656
        %v4673 = vmul.f32 %v4561, %v4657
        %v4674 = vmul.f32 %v4562, %v4658
        %v4675 = vmul.f32 %v4563, %v4659
        %v4676 = vmul.f32 %v4564, %v4660
        %v4677 = vmul.f32 %v4661, %v1692
        %v4678 = vmul.f32 %v4662, %v1692
        %v4679 = vmul.f32 %v4663, %v1692
        %v4680 = vmul.f32 %v4664, %v1692
        %v4681 = vmul.f32 %v4665, %v1692
        %v4682 = vmul.f32 %v4666, %v1692
        %v4683 = vmul.f32 %v4667, %v1692
        %v4684 = vmul.f32 %v4668, %v1692
        %v4685 = vmul.f32 %v4669, %v1692
        %v4686 = vmul.f32 %v4670, %v1692
        %v4687 = vmul.f32 %v4671, %v1692
        %v4688 = vmul.f32 %v4672, %v1692
        %v4689 = vmul.f32 %v4673, %v1692
        %v4690 = vmul.f32 %v4674, %v1692
        %v4691 = vmul.f32 %v4675, %v1692
        %v4692 = vmul.f32 %v4676, %v1692
        %v4693 = vadd.f32 %v4677, %v1714
        %v4694 = vadd.f32 %v4678, %v1714
        %v4695 = vadd.f32 %v4679, %v1714
        %v4696 = vadd.f32 %v4680, %v1714
        %v4697 = vadd.f32 %v4681, %v1714
        %v4698 = vadd.f32 %v4682, %v1714
        %v4699 = vadd.f32 %v4683, %v1714
        %v4700 = vadd.f32 %v4684, %v1714
        %v4701 = vadd.f32 %v4685, %v1714
        %v4702 = vadd.f32 %v4686, %v1714
        %v4703 = vadd.f32 %v4687, %v1714
        %v4704 = vadd.f32 %v4688, %v1714
        %v4705 = vadd.f32 %v4689, %v1714
        %v4706 = vadd.f32 %v4690, %v1714
        %v4707 = vadd.f32 %v4691, %v1714
        %v4708 = vadd.f32 %v4692, %v1714
        %4709 = vst [vmem:[#allocation2 + $0x8] sm:$0xff] %v4693
        %4710 = vst [vmem:[#allocation2 + $0x18] sm:$0xff] %v4694
        %4711 = vst [vmem:[#allocation2 + $0x28] sm:$0xff] %v4695
        %4712 = vst [vmem:[#allocation2 + $0x38] sm:$0xff] %v4696
        %4713 = vst [vmem:[#allocation2 + $0x48] sm:$0xff] %v4697
        %4714 = vst [vmem:[#allocation2 + $0x58] sm:$0xff] %v4698
        %4715 = vst [vmem:[#allocation2 + $0x68] sm:$0xff] %v4699
        %4716 = vst [vmem:[#allocation2 + $0x78] sm:$0xff] %v4700
        %4717 = vst [vmem:[#allocation2 + $0x88] sm:$0xff] %v4701
        %4718 = vst [vmem:[#allocation2 + $0x98] sm:$0xff] %v4702
        %4719 = vst [vmem:[#allocation2 + $0xa8] sm:$0xff] %v4703
        %4720 = vst [vmem:[#allocation2 + $0xb8] sm:$0xff] %v4704
        %4721 = vst [vmem:[#allocation2 + $0xc8] sm:$0xff] %v4705
        %4722 = vst [vmem:[#allocation2 + $0xd8] sm:$0xff] %v4706
        %4723 = vst [vmem:[#allocation2 + $0xe8] sm:$0xff] %v4707
        %4724 = vst [vmem:[#allocation2 + $0xf8] sm:$0xff] %v4708
        %v4725 = vld [vmem:[#allocation2] sm:$0xff]
        %v4726 = vld [vmem:[#allocation2 + $0x8] sm:$0xff]
        %v4727 = vld [vmem:[#allocation2 + $0x10] sm:$0xff]
        %v4728 = vld [vmem:[#allocation2 + $0x18] sm:$0xff]
        %v4729 = vld [vmem:[#allocation2 + $0x20] sm:$0xff]
        %v4730 = vld [vmem:[#allocation2 + $0x28] sm:$0xff]
        %v4731 = vld [vmem:[#allocation2 + $0x30] sm:$0xff]
        %v4732 = vld [vmem:[#allocation2 + $0x38] sm:$0xff]
        %v4733 = vld [vmem:[#allocation2 + $0x40] sm:$0xff]
        %v4734 = vld [vmem:[#allocation2 + $0x48] sm:$0xff]
        %v4735 = vld [vmem:[#allocation2 + $0x50] sm:$0xff]
        %v4736 = vld [vmem:[#allocation2 + $0x58] sm:$0xff]
        %v4737 = vld [vmem:[#allocation2 + $0x60] sm:$0xff]
        %v4738 = vld [vmem:[#allocation2 + $0x68] sm:$0xff]
        %v4739 = vld [vmem:[#allocation2 + $0x70] sm:$0xff]
        %v4740 = vld [vmem:[#allocation2 + $0x78] sm:$0xff]
        %v4741 = vld [vmem:[#allocation2 + $0x80] sm:$0xff]
        %v4742 = vld [vmem:[#allocation2 + $0x88] sm:$0xff]
        %v4743 = vld [vmem:[#allocation2 + $0x90] sm:$0xff]
        %v4744 = vld [vmem:[#allocation2 + $0x98] sm:$0xff]
        %v4745 = vld [vmem:[#allocation2 + $0xa0] sm:$0xff]
        %v4746 = vld [vmem:[#allocation2 + $0xa8] sm:$0xff]
        %v4747 = vld [vmem:[#allocation2 + $0xb0] sm:$0xff]
        %v4748 = vld [vmem:[#allocation2 + $0xb8] sm:$0xff]
        %v4749 = vld [vmem:[#allocation2 + $0xc0] sm:$0xff]
        %v4750 = vld [vmem:[#allocation2 + $0xc8] sm:$0xff]
        %v4751 = vld [vmem:[#allocation2 + $0xd0] sm:$0xff]
        %v4752 = vld [vmem:[#allocation2 + $0xd8] sm:$0xff]
        %v4753 = vld [vmem:[#allocation2 + $0xe0] sm:$0xff]
        %v4754 = vld [vmem:[#allocation2 + $0xe8] sm:$0xff]
        %v4755 = vld [vmem:[#allocation2 + $0xf0] sm:$0xff]
        %v4756 = vld [vmem:[#allocation2 + $0xf8] sm:$0xff]
        %s4757 = scalar_lea.vmem %s698, 128 [#allocation4]
        %v4758 = vld [vmem:[%s4757] sm:$0xff]
        %v4759 = vld [vmem:[%s4757 + $0x8] sm:$0xff]
        %v4760 = vld [vmem:[%s4757 + $0x10] sm:$0xff]
        %v4761 = vld [vmem:[%s4757 + $0x18] sm:$0xff]
        %v4762 = vld [vmem:[%s4757 + $0x20] sm:$0xff]
        %v4763 = vld [vmem:[%s4757 + $0x28] sm:$0xff]
        %v4764 = vld [vmem:[%s4757 + $0x30] sm:$0xff]
        %v4765 = vld [vmem:[%s4757 + $0x38] sm:$0xff]
        %v4766 = vld [vmem:[%s4757 + $0x40] sm:$0xff]
        %v4767 = vld [vmem:[%s4757 + $0x48] sm:$0xff]
        %v4768 = vld [vmem:[%s4757 + $0x50] sm:$0xff]
        %v4769 = vld [vmem:[%s4757 + $0x58] sm:$0xff]
        %v4770 = vld [vmem:[%s4757 + $0x60] sm:$0xff]
        %v4771 = vld [vmem:[%s4757 + $0x68] sm:$0xff]
        %v4772 = vld [vmem:[%s4757 + $0x70] sm:$0xff]
        %v4773 = vld [vmem:[%s4757 + $0x78] sm:$0xff]
        %s4774 = sld [smem:[#allocation5 + %s3407]]
        %v4775 = vstv %s4774
        %4776 = vmatprep.subr.mxu0 %v4726
        %4777 = vmatpush1.msra.mxu0 %v4725
        %4778 = vmatprep.subr.mxu0 %v4728
        %4779 = vmatpush1.msra.mxu0 %v4727
        %4780 = vmatprep.subr.mxu0 %v4730
        %4781 = vmatpush1.msra.mxu0 %v4729
        %4782 = vmatprep.subr.mxu0 %v4732
        %4783 = vmatpush1.msra.mxu0 %v4731
        %4784 = vmatprep.subr.mxu0 %v4734
        %4785 = vmatpush1.msra.mxu0 %v4733
        %4786 = vmatprep.subr.mxu0 %v4736
        %4787 = vmatpush1.msra.mxu0 %v4735
        %4788 = vmatprep.subr.mxu0 %v4738
        %4789 = vmatpush1.msra.mxu0 %v4737
        %4790 = vmatprep.subr.mxu0 %v4740
        %4791 = vmatpush1.msra.mxu0 %v4739
        %4792 = vmatprep.subr.mxu0 %v4742
        %4793 = vmatpush1.msra.mxu0 %v4741
        %4794 = vmatprep.subr.mxu0 %v4744
        %4795 = vmatpush1.msra.mxu0 %v4743
        %4796 = vmatprep.subr.mxu0 %v4746
        %4797 = vmatpush1.msra.mxu0 %v4745
        %4798 = vmatprep.subr.mxu0 %v4748
        %4799 = vmatpush1.msra.mxu0 %v4747
        %4800 = vmatprep.subr.mxu0 %v4750
        %4801 = vmatpush1.msra.mxu0 %v4749
        %4802 = vmatprep.subr.mxu0 %v4752
        %4803 = vmatpush1.msra.mxu0 %v4751
        %4804 = vmatprep.subr.mxu0 %v4754
        %4805 = vmatpush1.msra.mxu0 %v4753
        %4806 = vmatprep.subr.mxu0 %v4756
        %4807 = vmatpush1.msra.mxu0 %v4755
        %4808 = vmatprep.subr.mxu0 0.0
        %4809 = vmatpush1.msra.mxu0 0.0
        %4810 = vmatprep.subr.mxu0 0.0
        %4811 = vmatpush1.msra.mxu0 0.0
        %4812 = vmatprep.subr.mxu0 0.0
        %4813 = vmatpush1.msra.mxu0 0.0
        %4814 = vmatprep.subr.mxu0 0.0
        %4815 = vmatpush1.msra.mxu0 0.0
        %4816 = vmatprep.subr.mxu0 0.0
        %4817 = vmatpush1.msra.mxu0 0.0
        %4818 = vmatprep.subr.mxu0 0.0
        %4819 = vmatpush1.msra.mxu0 0.0
        %4820 = vmatprep.subr.mxu0 0.0
        %4821 = vmatpush1.msra.mxu0 0.0
        %4822 = vmatprep.subr.mxu0 0.0
        %4823 = vmatpush1.msra.mxu0 0.0
        %4824 = vmatprep.subr.mxu0 0.0
        %4825 = vmatpush1.msra.mxu0 0.0
        %4826 = vmatprep.subr.mxu0 0.0
        %4827 = vmatpush1.msra.mxu0 0.0
        %4828 = vmatprep.subr.mxu0 0.0
        %4829 = vmatpush1.msra.mxu0 0.0
        %4830 = vmatprep.subr.mxu0 0.0
        %4831 = vmatpush1.msra.mxu0 0.0
        %4832 = vmatprep.subr.mxu0 0.0
        %4833 = vmatpush1.msra.mxu0 0.0
        %4834 = vmatprep.subr.mxu0 0.0
        %4835 = vmatpush1.msra.mxu0 0.0
        %4836 = vmatprep.subr.mxu0 0.0
        %4837 = vmatpush1.msra.mxu0 0.0
        %4838 = vmatprep.subr.mxu0 0.0
        %4839 = vmatpush1.msra.mxu0 0.0
        %4840 = vmatprep.mubr.f32.mxu0 0.0
        %4841 = vmatmul.mubr.f32.gmra.mrb[0].mxu0 %v4758
        %v4842 = vpop.f32.mrb[0].mxu0
        %v4843 = vadd.f32 %v4775, %v4842
        %v4844 = vpop.f32.mrb[0].mxu0
        %v4845 = vadd.f32 %v4775, %v4844
        %4846 = vmatprep.mubr.f32.mxu0 0.0
        %4847 = vmatmul.mubr.f32.gmra.mrb[0].mxu0 %v4759
        %v4848 = vpop.f32.mrb[0].mxu0
        %v4849 = vadd.f32 %v4775, %v4848
        %v4850 = vpop.f32.mrb[0].mxu0
        %v4851 = vadd.f32 %v4775, %v4850
        %4852 = vmatprep.mubr.f32.mxu0 0.0
        %4853 = vmatmul.mubr.f32.gmra.mrb[0].mxu0 %v4760
        %v4854 = vpop.f32.mrb[0].mxu0
        %v4855 = vadd.f32 %v4775, %v4854
        %v4856 = vpop.f32.mrb[0].mxu0
        %v4857 = vadd.f32 %v4775, %v4856
        %4858 = vmatprep.mubr.f32.mxu0 0.0
        %4859 = vmatmul.mubr.f32.gmra.mrb[0].mxu0 %v4761
        %v4860 = vpop.f32.mrb[0].mxu0
        %v4861 = vadd.f32 %v4775, %v4860
        %v4862 = vpop.f32.mrb[0].mxu0
        %v4863 = vadd.f32 %v4775, %v4862
        %4864 = vmatprep.mubr.f32.mxu0 0.0
        %4865 = vmatmul.mubr.f32.gmra.mrb[0].mxu0 %v4762
        %v4866 = vpop.f32.mrb[0].mxu0
        %v4867 = vadd.f32 %v4775, %v4866
        %v4868 = vpop.f32.mrb[0].mxu0
        %v4869 = vadd.f32 %v4775, %v4868
        %4870 = vmatprep.mubr.f32.mxu0 0.0
        %4871 = vmatmul.mubr.f32.gmra.mrb[0].mxu0 %v4763
        %v4872 = vpop.f32.mrb[0].mxu0
        %v4873 = vadd.f32 %v4775, %v4872
        %v4874 = vpop.f32.mrb[0].mxu0
        %v4875 = vadd.f32 %v4775, %v4874
        %4876 = vmatprep.mubr.f32.mxu0 0.0
        %4877 = vmatmul.mubr.f32.gmra.mrb[0].mxu0 %v4764
        %v4878 = vpop.f32.mrb[0].mxu0
        %v4879 = vadd.f32 %v4775, %v4878
        %v4880 = vpop.f32.mrb[0].mxu0
        %v4881 = vadd.f32 %v4775, %v4880
        %4882 = vmatprep.mubr.f32.mxu0 0.0
        %4883 = vmatmul.mubr.f32.gmra.mrb[0].mxu0 %v4765
        %v4884 = vpop.f32.mrb[0].mxu0
        %v4885 = vadd.f32 %v4775, %v4884
        %v4886 = vpop.f32.mrb[0].mxu0
        %v4887 = vadd.f32 %v4775, %v4886
        %4888 = vmatprep.mubr.f32.mxu0 0.0
        %4889 = vmatmul.mubr.f32.gmra.mrb[0].mxu0 %v4766
        %v4890 = vpop.f32.mrb[0].mxu0
        %v4891 = vadd.f32 %v4775, %v4890
        %v4892 = vpop.f32.mrb[0].mxu0
        %v4893 = vadd.f32 %v4775, %v4892
        %4894 = vmatprep.mubr.f32.mxu0 0.0
        %4895 = vmatmul.mubr.f32.gmra.mrb[0].mxu0 %v4767
        %v4896 = vpop.f32.mrb[0].mxu0
        %v4897 = vadd.f32 %v4775, %v4896
        %v4898 = vpop.f32.mrb[0].mxu0
        %v4899 = vadd.f32 %v4775, %v4898
        %4900 = vmatprep.mubr.f32.mxu0 0.0
        %4901 = vmatmul.mubr.f32.gmra.mrb[0].mxu0 %v4768
        %v4902 = vpop.f32.mrb[0].mxu0
        %v4903 = vadd.f32 %v4775, %v4902
        %v4904 = vpop.f32.mrb[0].mxu0
        %v4905 = vadd.f32 %v4775, %v4904
        %4906 = vmatprep.mubr.f32.mxu0 0.0
        %4907 = vmatmul.mubr.f32.gmra.mrb[0].mxu0 %v4769
        %v4908 = vpop.f32.mrb[0].mxu0
        %v4909 = vadd.f32 %v4775, %v4908
        %v4910 = vpop.f32.mrb[0].mxu0
        %v4911 = vadd.f32 %v4775, %v4910
        %4912 = vmatprep.mubr.f32.mxu0 0.0
        %4913 = vmatmul.mubr.f32.gmra.mrb[0].mxu0 %v4770
        %v4914 = vpop.f32.mrb[0].mxu0
        %v4915 = vadd.f32 %v4775, %v4914
        %v4916 = vpop.f32.mrb[0].mxu0
        %v4917 = vadd.f32 %v4775, %v4916
        %4918 = vmatprep.mubr.f32.mxu0 0.0
        %4919 = vmatmul.mubr.f32.gmra.mrb[0].mxu0 %v4771
        %v4920 = vpop.f32.mrb[0].mxu0
        %v4921 = vadd.f32 %v4775, %v4920
        %v4922 = vpop.f32.mrb[0].mxu0
        %v4923 = vadd.f32 %v4775, %v4922
        %4924 = vmatprep.mubr.f32.mxu0 0.0
        %4925 = vmatmul.mubr.f32.gmra.mrb[0].mxu0 %v4772
        %v4926 = vpop.f32.mrb[0].mxu0
        %v4927 = vadd.f32 %v4775, %v4926
        %v4928 = vpop.f32.mrb[0].mxu0
        %v4929 = vadd.f32 %v4775, %v4928
        %4930 = vmatprep.mubr.f32.mxu0 0.0
        %4931 = vmatmul.mubr.f32.gmra.mrb[0].mxu0 %v4773
        %v4932 = vpop.f32.mrb[0].mxu0
        %v4933 = vadd.f32 %v4775, %v4932
        %v4934 = vpop.f32.mrb[0].mxu0
        %v4935 = vadd.f32 %v4775, %v4934
        %4936 = vdwg.mxu0
        %v4937 = vmax.f32 %v4843, 0.0
        %v4938 = vmax.f32 %v4845, 0.0
        %v4939 = vmax.f32 %v4849, 0.0
        %v4940 = vmax.f32 %v4851, 0.0
        %v4941 = vmax.f32 %v4855, 0.0
        %v4942 = vmax.f32 %v4857, 0.0
        %v4943 = vmax.f32 %v4861, 0.0
        %v4944 = vmax.f32 %v4863, 0.0
        %v4945 = vmax.f32 %v4867, 0.0
        %v4946 = vmax.f32 %v4869, 0.0
        %v4947 = vmax.f32 %v4873, 0.0
        %v4948 = vmax.f32 %v4875, 0.0
        %v4949 = vmax.f32 %v4879, 0.0
        %v4950 = vmax.f32 %v4881, 0.0
        %v4951 = vmax.f32 %v4885, 0.0
        %v4952 = vmax.f32 %v4887, 0.0
        %v4953 = vmax.f32 %v4891, 0.0
        %v4954 = vmax.f32 %v4893, 0.0
        %v4955 = vmax.f32 %v4897, 0.0
        %v4956 = vmax.f32 %v4899, 0.0
        %v4957 = vmax.f32 %v4903, 0.0
        %v4958 = vmax.f32 %v4905, 0.0
        %v4959 = vmax.f32 %v4909, 0.0
        %v4960 = vmax.f32 %v4911, 0.0
        %v4961 = vmax.f32 %v4915, 0.0
        %v4962 = vmax.f32 %v4917, 0.0
        %v4963 = vmax.f32 %v4921, 0.0
        %v4964 = vmax.f32 %v4923, 0.0
        %v4965 = vmax.f32 %v4927, 0.0
        %v4966 = vmax.f32 %v4929, 0.0
        %v4967 = vmax.f32 %v4933, 0.0
        %v4968 = vmax.f32 %v4935, 0.0
        %s4969 = scalar_lea.vmem %s698, 384 [#allocation4]
        %v4970 = vld [vmem:[%s4969] sm:$0xff]
        %v4971 = vld [vmem:[%s4969 + $0x8] sm:$0xff]
        %v4972 = vld [vmem:[%s4969 + $0x10] sm:$0xff]
        %v4973 = vld [vmem:[%s4969 + $0x18] sm:$0xff]
        %v4974 = vld [vmem:[%s4969 + $0x20] sm:$0xff]
        %v4975 = vld [vmem:[%s4969 + $0x28] sm:$0xff]
        %v4976 = vld [vmem:[%s4969 + $0x30] sm:$0xff]
        %v4977 = vld [vmem:[%s4969 + $0x38] sm:$0xff]
        %v4978 = vld [vmem:[%s4969 + $0x40] sm:$0xff]
        %v4979 = vld [vmem:[%s4969 + $0x48] sm:$0xff]
        %v4980 = vld [vmem:[%s4969 + $0x50] sm:$0xff]
        %v4981 = vld [vmem:[%s4969 + $0x58] sm:$0xff]
        %v4982 = vld [vmem:[%s4969 + $0x60] sm:$0xff]
        %v4983 = vld [vmem:[%s4969 + $0x68] sm:$0xff]
        %v4984 = vld [vmem:[%s4969 + $0x70] sm:$0xff]
        %v4985 = vld [vmem:[%s4969 + $0x78] sm:$0xff]
        %s4986 = sshra.s32 %s3407, 7
        %s4987 = sand.u32 %s3407, 127
        %s4988 = sadd.s32 %s4986, 1
        %s4989 = smul.u32 %s4988, 128
        %s4990 = sshra.s32 %s3407, 7
        %s4991 = sand.u32 %s3407, 127
        %s4992 = sadd.s32 %s4989, %s4991
        %s4993 = sld [smem:[#allocation5 + %s4992]]
        %v4994 = vstv %s4993
        %4995 = vmatprep.subr.mxu0 %v4938
        %4996 = vmatpush1.msra.mxu0 %v4937
        %4997 = vmatprep.subr.mxu0 %v4940
        %4998 = vmatpush1.msra.mxu0 %v4939
        %4999 = vmatprep.subr.mxu0 %v4942
        %5000 = vmatpush1.msra.mxu0 %v4941
        %5001 = vmatprep.subr.mxu0 %v4944
        %5002 = vmatpush1.msra.mxu0 %v4943
        %5003 = vmatprep.subr.mxu0 %v4946
        %5004 = vmatpush1.msra.mxu0 %v4945
        %5005 = vmatprep.subr.mxu0 %v4948
        %5006 = vmatpush1.msra.mxu0 %v4947
        %5007 = vmatprep.subr.mxu0 %v4950
        %5008 = vmatpush1.msra.mxu0 %v4949
        %5009 = vmatprep.subr.mxu0 %v4952
        %5010 = vmatpush1.msra.mxu0 %v4951
        %5011 = vmatprep.subr.mxu0 %v4954
        %5012 = vmatpush1.msra.mxu0 %v4953
        %5013 = vmatprep.subr.mxu0 %v4956
        %5014 = vmatpush1.msra.mxu0 %v4955
        %5015 = vmatprep.subr.mxu0 %v4958
        %5016 = vmatpush1.msra.mxu0 %v4957
        %5017 = vmatprep.subr.mxu0 %v4960
        %5018 = vmatpush1.msra.mxu0 %v4959
        %5019 = vmatprep.subr.mxu0 %v4962
        %5020 = vmatpush1.msra.mxu0 %v4961
        %5021 = vmatprep.subr.mxu0 %v4964
        %5022 = vmatpush1.msra.mxu0 %v4963
        %5023 = vmatprep.subr.mxu0 %v4966
        %5024 = vmatpush1.msra.mxu0 %v4965
        %5025 = vmatprep.subr.mxu0 %v4968
        %5026 = vmatpush1.msra.mxu0 %v4967
        %5027 = vmatprep.subr.mxu0 0.0
        %5028 = vmatpush1.msra.mxu0 0.0
        %5029 = vmatprep.subr.mxu0 0.0
        %5030 = vmatpush1.msra.mxu0 0.0
        %5031 = vmatprep.subr.mxu0 0.0
        %5032 = vmatpush1.msra.mxu0 0.0
        %5033 = vmatprep.subr.mxu0 0.0
        %5034 = vmatpush1.msra.mxu0 0.0
        %5035 = vmatprep.subr.mxu0 0.0
        %5036 = vmatpush1.msra.mxu0 0.0
        %5037 = vmatprep.subr.mxu0 0.0
        %5038 = vmatpush1.msra.mxu0 0.0
        %5039 = vmatprep.subr.mxu0 0.0
        %5040 = vmatpush1.msra.mxu0 0.0
        %5041 = vmatprep.subr.mxu0 0.0
        %5042 = vmatpush1.msra.mxu0 0.0
        %5043 = vmatprep.subr.mxu0 0.0
        %5044 = vmatpush1.msra.mxu0 0.0
        %5045 = vmatprep.subr.mxu0 0.0
        %5046 = vmatpush1.msra.mxu0 0.0
        %5047 = vmatprep.subr.mxu0 0.0
        %5048 = vmatpush1.msra.mxu0 0.0
        %5049 = vmatprep.subr.mxu0 0.0
        %5050 = vmatpush1.msra.mxu0 0.0
        %5051 = vmatprep.subr.mxu0 0.0
        %5052 = vmatpush1.msra.mxu0 0.0
        %5053 = vmatprep.subr.mxu0 0.0
        %5054 = vmatpush1.msra.mxu0 0.0
        %5055 = vmatprep.subr.mxu0 0.0
        %5056 = vmatpush1.msra.mxu0 0.0
        %5057 = vmatprep.subr.mxu0 0.0
        %5058 = vmatpush1.msra.mxu0 0.0
        %5059 = vmatprep.mubr.f32.mxu0 0.0
        %5060 = vmatmul.mubr.f32.gmra.mrb[0].mxu0 %v4970
        %v5061 = vpop.f32.mrb[0].mxu0
        %v5062 = vadd.f32 %v4994, %v5061
        %v5063 = vpop.f32.mrb[0].mxu0
        %v5064 = vadd.f32 %v4994, %v5063
        %5065 = vmatprep.mubr.f32.mxu0 0.0
        %5066 = vmatmul.mubr.f32.gmra.mrb[0].mxu0 %v4971
        %v5067 = vpop.f32.mrb[0].mxu0
        %v5068 = vadd.f32 %v4994, %v5067
        %v5069 = vpop.f32.mrb[0].mxu0
        %v5070 = vadd.f32 %v4994, %v5069
        %5071 = vmatprep.mubr.f32.mxu0 0.0
        %5072 = vmatmul.mubr.f32.gmra.mrb[0].mxu0 %v4972
        %v5073 = vpop.f32.mrb[0].mxu0
        %v5074 = vadd.f32 %v4994, %v5073
        %v5075 = vpop.f32.mrb[0].mxu0
        %v5076 = vadd.f32 %v4994, %v5075
        %5077 = vmatprep.mubr.f32.mxu0 0.0
        %5078 = vmatmul.mubr.f32.gmra.mrb[0].mxu0 %v4973
        %v5079 = vpop.f32.mrb[0].mxu0
        %v5080 = vadd.f32 %v4994, %v5079
        %v5081 = vpop.f32.mrb[0].mxu0
        %v5082 = vadd.f32 %v4994, %v5081
        %5083 = vmatprep.mubr.f32.mxu0 0.0
        %5084 = vmatmul.mubr.f32.gmra.mrb[0].mxu0 %v4974
        %v5085 = vpop.f32.mrb[0].mxu0
        %v5086 = vadd.f32 %v4994, %v5085
        %v5087 = vpop.f32.mrb[0].mxu0
        %v5088 = vadd.f32 %v4994, %v5087
        %5089 = vmatprep.mubr.f32.mxu0 0.0
        %5090 = vmatmul.mubr.f32.gmra.mrb[0].mxu0 %v4975
        %v5091 = vpop.f32.mrb[0].mxu0
        %v5092 = vadd.f32 %v4994, %v5091
        %v5093 = vpop.f32.mrb[0].mxu0
        %v5094 = vadd.f32 %v4994, %v5093
        %5095 = vmatprep.mubr.f32.mxu0 0.0
        %5096 = vmatmul.mubr.f32.gmra.mrb[0].mxu0 %v4976
        %v5097 = vpop.f32.mrb[0].mxu0
        %v5098 = vadd.f32 %v4994, %v5097
        %v5099 = vpop.f32.mrb[0].mxu0
        %v5100 = vadd.f32 %v4994, %v5099
        %5101 = vmatprep.mubr.f32.mxu0 0.0
        %5102 = vmatmul.mubr.f32.gmra.mrb[0].mxu0 %v4977
        %v5103 = vpop.f32.mrb[0].mxu0
        %v5104 = vadd.f32 %v4994, %v5103
        %v5105 = vpop.f32.mrb[0].mxu0
        %v5106 = vadd.f32 %v4994, %v5105
        %5107 = vmatprep.mubr.f32.mxu0 0.0
        %5108 = vmatmul.mubr.f32.gmra.mrb[0].mxu0 %v4978
        %v5109 = vpop.f32.mrb[0].mxu0
        %v5110 = vadd.f32 %v4994, %v5109
        %v5111 = vpop.f32.mrb[0].mxu0
        %v5112 = vadd.f32 %v4994, %v5111
        %5113 = vmatprep.mubr.f32.mxu0 0.0
        %5114 = vmatmul.mubr.f32.gmra.mrb[0].mxu0 %v4979
        %v5115 = vpop.f32.mrb[0].mxu0
        %v5116 = vadd.f32 %v4994, %v5115
        %v5117 = vpop.f32.mrb[0].mxu0
        %v5118 = vadd.f32 %v4994, %v5117
        %5119 = vmatprep.mubr.f32.mxu0 0.0
        %5120 = vmatmul.mubr.f32.gmra.mrb[0].mxu0 %v4980
        %v5121 = vpop.f32.mrb[0].mxu0
        %v5122 = vadd.f32 %v4994, %v5121
        %v5123 = vpop.f32.mrb[0].mxu0
        %v5124 = vadd.f32 %v4994, %v5123
        %5125 = vmatprep.mubr.f32.mxu0 0.0
        %5126 = vmatmul.mubr.f32.gmra.mrb[0].mxu0 %v4981
        %v5127 = vpop.f32.mrb[0].mxu0
        %v5128 = vadd.f32 %v4994, %v5127
        %v5129 = vpop.f32.mrb[0].mxu0
        %v5130 = vadd.f32 %v4994, %v5129
        %5131 = vmatprep.mubr.f32.mxu0 0.0
        %5132 = vmatmul.mubr.f32.gmra.mrb[0].mxu0 %v4982
        %v5133 = vpop.f32.mrb[0].mxu0
        %v5134 = vadd.f32 %v4994, %v5133
        %v5135 = vpop.f32.mrb[0].mxu0
        %v5136 = vadd.f32 %v4994, %v5135
        %5137 = vmatprep.mubr.f32.mxu0 0.0
        %5138 = vmatmul.mubr.f32.gmra.mrb[0].mxu0 %v4983
        %v5139 = vpop.f32.mrb[0].mxu0
        %v5140 = vadd.f32 %v4994, %v5139
        %v5141 = vpop.f32.mrb[0].mxu0
        %v5142 = vadd.f32 %v4994, %v5141
        %5143 = vmatprep.mubr.f32.mxu0 0.0
        %5144 = vmatmul.mubr.f32.gmra.mrb[0].mxu0 %v4984
        %v5145 = vpop.f32.mrb[0].mxu0
        %v5146 = vadd.f32 %v4994, %v5145
        %v5147 = vpop.f32.mrb[0].mxu0
        %v5148 = vadd.f32 %v4994, %v5147
        %5149 = vmatprep.mubr.f32.mxu0 0.0
        %5150 = vmatmul.mubr.f32.gmra.mrb[0].mxu0 %v4985
        %v5151 = vpop.f32.mrb[0].mxu0
        %v5152 = vadd.f32 %v4994, %v5151
        %v5153 = vpop.f32.mrb[0].mxu0
        %v5154 = vadd.f32 %v4994, %v5153
        %5155 = vdwg.mxu0
        %v5156 = vmax.f32 %v5062, 0.0
        %v5157 = vmax.f32 %v5064, 0.0
        %v5158 = vmax.f32 %v5068, 0.0
        %v5159 = vmax.f32 %v5070, 0.0
        %v5160 = vmax.f32 %v5074, 0.0
        %v5161 = vmax.f32 %v5076, 0.0
        %v5162 = vmax.f32 %v5080, 0.0
        %v5163 = vmax.f32 %v5082, 0.0
        %v5164 = vmax.f32 %v5086, 0.0
        %v5165 = vmax.f32 %v5088, 0.0
        %v5166 = vmax.f32 %v5092, 0.0
        %v5167 = vmax.f32 %v5094, 0.0
        %v5168 = vmax.f32 %v5098, 0.0
        %v5169 = vmax.f32 %v5100, 0.0
        %v5170 = vmax.f32 %v5104, 0.0
        %v5171 = vmax.f32 %v5106, 0.0
        %v5172 = vmax.f32 %v5110, 0.0
        %v5173 = vmax.f32 %v5112, 0.0
        %v5174 = vmax.f32 %v5116, 0.0
        %v5175 = vmax.f32 %v5118, 0.0
        %v5176 = vmax.f32 %v5122, 0.0
        %v5177 = vmax.f32 %v5124, 0.0
        %v5178 = vmax.f32 %v5128, 0.0
        %v5179 = vmax.f32 %v5130, 0.0
        %v5180 = vmax.f32 %v5134, 0.0
        %v5181 = vmax.f32 %v5136, 0.0
        %v5182 = vmax.f32 %v5140, 0.0
        %v5183 = vmax.f32 %v5142, 0.0
        %v5184 = vmax.f32 %v5146, 0.0
        %v5185 = vmax.f32 %v5148, 0.0
        %v5186 = vmax.f32 %v5152, 0.0
        %v5187 = vmax.f32 %v5154, 0.0
        %5188 = vadd.xlane.f32.xlu0 %v5156
        %v5189 = vpop.xlane.xlu0 %5188
        %5190 = vadd.xlane.f32.xlu0 %v5158
        %v5191 = vpop.xlane.xlu0 %5190
        %5192 = vadd.xlane.f32.xlu0 %v5160
        %v5193 = vpop.xlane.xlu0 %5192
        %5194 = vadd.xlane.f32.xlu0 %v5162
        %v5195 = vpop.xlane.xlu0 %5194
        %5196 = vadd.xlane.f32.xlu0 %v5164
        %v5197 = vpop.xlane.xlu0 %5196
        %5198 = vadd.xlane.f32.xlu0 %v5166
        %v5199 = vpop.xlane.xlu0 %5198
        %5200 = vadd.xlane.f32.xlu0 %v5168
        %v5201 = vpop.xlane.xlu0 %5200
        %5202 = vadd.xlane.f32.xlu0 %v5170
        %v5203 = vpop.xlane.xlu0 %5202
        %5204 = vadd.xlane.f32.xlu0 %v5172
        %v5205 = vpop.xlane.xlu0 %5204
        %5206 = vadd.xlane.f32.xlu0 %v5174
        %v5207 = vpop.xlane.xlu0 %5206
        %5208 = vadd.xlane.f32.xlu0 %v5176
        %v5209 = vpop.xlane.xlu0 %5208
        %5210 = vadd.xlane.f32.xlu0 %v5178
        %v5211 = vpop.xlane.xlu0 %5210
        %5212 = vadd.xlane.f32.xlu0 %v5180
        %v5213 = vpop.xlane.xlu0 %5212
        %5214 = vadd.xlane.f32.xlu0 %v5182
        %v5215 = vpop.xlane.xlu0 %5214
        %5216 = vadd.xlane.f32.xlu0 %v5184
        %v5217 = vpop.xlane.xlu0 %5216
        %5218 = vadd.xlane.f32.xlu0 %v5186
        %v5219 = vpop.xlane.xlu0 %5218
        %v5220 = vmul.f32 %v5189, %v1543
        %v5221 = vmul.f32 %v5191, %v1543
        %v5222 = vmul.f32 %v5193, %v1543
        %v5223 = vmul.f32 %v5195, %v1543
        %v5224 = vmul.f32 %v5197, %v1543
        %v5225 = vmul.f32 %v5199, %v1543
        %v5226 = vmul.f32 %v5201, %v1543
        %v5227 = vmul.f32 %v5203, %v1543
        %v5228 = vmul.f32 %v5205, %v1543
        %v5229 = vmul.f32 %v5207, %v1543
        %v5230 = vmul.f32 %v5209, %v1543
        %v5231 = vmul.f32 %v5211, %v1543
        %v5232 = vmul.f32 %v5213, %v1543
        %v5233 = vmul.f32 %v5215, %v1543
        %v5234 = vmul.f32 %v5217, %v1543
        %v5235 = vmul.f32 %v5219, %v1543
        %v5236 = vsub.f32 %v5156, %v5220
        %v5237 = vsub.f32 %v5158, %v5221
        %v5238 = vsub.f32 %v5160, %v5222
        %v5239 = vsub.f32 %v5162, %v5223
        %v5240 = vsub.f32 %v5164, %v5224
        %v5241 = vsub.f32 %v5166, %v5225
        %v5242 = vsub.f32 %v5168, %v5226
        %v5243 = vsub.f32 %v5170, %v5227
        %v5244 = vsub.f32 %v5172, %v5228
        %v5245 = vsub.f32 %v5174, %v5229
        %v5246 = vsub.f32 %v5176, %v5230
        %v5247 = vsub.f32 %v5178, %v5231
        %v5248 = vsub.f32 %v5180, %v5232
        %v5249 = vsub.f32 %v5182, %v5233
        %v5250 = vsub.f32 %v5184, %v5234
        %v5251 = vsub.f32 %v5186, %v5235
        %v5252 = vmul.f32 %v5236, %v5236
        %v5253 = vmul.f32 %v5237, %v5237
        %v5254 = vmul.f32 %v5238, %v5238
        %v5255 = vmul.f32 %v5239, %v5239
        %v5256 = vmul.f32 %v5240, %v5240
        %v5257 = vmul.f32 %v5241, %v5241
        %v5258 = vmul.f32 %v5242, %v5242
        %v5259 = vmul.f32 %v5243, %v5243
        %v5260 = vmul.f32 %v5244, %v5244
        %v5261 = vmul.f32 %v5245, %v5245
        %v5262 = vmul.f32 %v5246, %v5246
        %v5263 = vmul.f32 %v5247, %v5247
        %v5264 = vmul.f32 %v5248, %v5248
        %v5265 = vmul.f32 %v5249, %v5249
        %v5266 = vmul.f32 %v5250, %v5250
        %v5267 = vmul.f32 %v5251, %v5251
        %5268 = vadd.xlane.f32.xlu0 %v5252
        %v5269 = vpop.xlane.xlu0 %5268
        %5270 = vadd.xlane.f32.xlu0 %v5253
        %v5271 = vpop.xlane.xlu0 %5270
        %5272 = vadd.xlane.f32.xlu0 %v5254
        %v5273 = vpop.xlane.xlu0 %5272
        %5274 = vadd.xlane.f32.xlu0 %v5255
        %v5275 = vpop.xlane.xlu0 %5274
        %5276 = vadd.xlane.f32.xlu0 %v5256
        %v5277 = vpop.xlane.xlu0 %5276
        %5278 = vadd.xlane.f32.xlu0 %v5257
        %v5279 = vpop.xlane.xlu0 %5278
        %5280 = vadd.xlane.f32.xlu0 %v5258
        %v5281 = vpop.xlane.xlu0 %5280
        %5282 = vadd.xlane.f32.xlu0 %v5259
        %v5283 = vpop.xlane.xlu0 %5282
        %5284 = vadd.xlane.f32.xlu0 %v5260
        %v5285 = vpop.xlane.xlu0 %5284
        %5286 = vadd.xlane.f32.xlu0 %v5261
        %v5287 = vpop.xlane.xlu0 %5286
        %5288 = vadd.xlane.f32.xlu0 %v5262
        %v5289 = vpop.xlane.xlu0 %5288
        %5290 = vadd.xlane.f32.xlu0 %v5263
        %v5291 = vpop.xlane.xlu0 %5290
        %5292 = vadd.xlane.f32.xlu0 %v5264
        %v5293 = vpop.xlane.xlu0 %5292
        %5294 = vadd.xlane.f32.xlu0 %v5265
        %v5295 = vpop.xlane.xlu0 %5294
        %5296 = vadd.xlane.f32.xlu0 %v5266
        %v5297 = vpop.xlane.xlu0 %5296
        %5298 = vadd.xlane.f32.xlu0 %v5267
        %v5299 = vpop.xlane.xlu0 %5298
        %v5300 = vmul.f32 %v5269, %v1543
        %v5301 = vmul.f32 %v5271, %v1543
        %v5302 = vmul.f32 %v5273, %v1543
        %v5303 = vmul.f32 %v5275, %v1543
        %v5304 = vmul.f32 %v5277, %v1543
        %v5305 = vmul.f32 %v5279, %v1543
        %v5306 = vmul.f32 %v5281, %v1543
        %v5307 = vmul.f32 %v5283, %v1543
        %v5308 = vmul.f32 %v5285, %v1543
        %v5309 = vmul.f32 %v5287, %v1543
        %v5310 = vmul.f32 %v5289, %v1543
        %v5311 = vmul.f32 %v5291, %v1543
        %v5312 = vmul.f32 %v5293, %v1543
        %v5313 = vmul.f32 %v5295, %v1543
        %v5314 = vmul.f32 %v5297, %v1543
        %v5315 = vmul.f32 %v5299, %v1543
        %v5316 = vadd.f32 %v5300, 1e-05
        %v5317 = vadd.f32 %v5301, 1e-05
        %v5318 = vadd.f32 %v5302, 1e-05
        %v5319 = vadd.f32 %v5303, 1e-05
        %v5320 = vadd.f32 %v5304, 1e-05
        %v5321 = vadd.f32 %v5305, 1e-05
        %v5322 = vadd.f32 %v5306, 1e-05
        %v5323 = vadd.f32 %v5307, 1e-05
        %v5324 = vadd.f32 %v5308, 1e-05
        %v5325 = vadd.f32 %v5309, 1e-05
        %v5326 = vadd.f32 %v5310, 1e-05
        %v5327 = vadd.f32 %v5311, 1e-05
        %v5328 = vadd.f32 %v5312, 1e-05
        %v5329 = vadd.f32 %v5313, 1e-05
        %v5330 = vadd.f32 %v5314, 1e-05
        %v5331 = vadd.f32 %v5315, 1e-05
        %v5332 = vrsqrt.pop %v5316
        %v5333 = vrsqrt.pop %v5317
        %v5334 = vrsqrt.pop %v5318
        %v5335 = vrsqrt.pop %v5319
        %v5336 = vrsqrt.pop %v5320
        %v5337 = vrsqrt.pop %v5321
        %v5338 = vrsqrt.pop %v5322
        %v5339 = vrsqrt.pop %v5323
        %v5340 = vrsqrt.pop %v5324
        %v5341 = vrsqrt.pop %v5325
        %v5342 = vrsqrt.pop %v5326
        %v5343 = vrsqrt.pop %v5327
        %v5344 = vrsqrt.pop %v5328
        %v5345 = vrsqrt.pop %v5329
        %v5346 = vrsqrt.pop %v5330
        %v5347 = vrsqrt.pop %v5331
        %v5348 = vmul.f32 %v5236, %v5332
        %v5349 = vmul.f32 %v5237, %v5333
        %v5350 = vmul.f32 %v5238, %v5334
        %v5351 = vmul.f32 %v5239, %v5335
        %v5352 = vmul.f32 %v5240, %v5336
        %v5353 = vmul.f32 %v5241, %v5337
        %v5354 = vmul.f32 %v5242, %v5338
        %v5355 = vmul.f32 %v5243, %v5339
        %v5356 = vmul.f32 %v5244, %v5340
        %v5357 = vmul.f32 %v5245, %v5341
        %v5358 = vmul.f32 %v5246, %v5342
        %v5359 = vmul.f32 %v5247, %v5343
        %v5360 = vmul.f32 %v5248, %v5344
        %v5361 = vmul.f32 %v5249, %v5345
        %v5362 = vmul.f32 %v5250, %v5346
        %v5363 = vmul.f32 %v5251, %v5347
        %v5364 = vmul.f32 %v5348, %v2855
        %v5365 = vmul.f32 %v5349, %v2855
        %v5366 = vmul.f32 %v5350, %v2855
        %v5367 = vmul.f32 %v5351, %v2855
        %v5368 = vmul.f32 %v5352, %v2855
        %v5369 = vmul.f32 %v5353, %v2855
        %v5370 = vmul.f32 %v5354, %v2855
        %v5371 = vmul.f32 %v5355, %v2855
        %v5372 = vmul.f32 %v5356, %v2855
        %v5373 = vmul.f32 %v5357, %v2855
        %v5374 = vmul.f32 %v5358, %v2855
        %v5375 = vmul.f32 %v5359, %v2855
        %v5376 = vmul.f32 %v5360, %v2855
        %v5377 = vmul.f32 %v5361, %v2855
        %v5378 = vmul.f32 %v5362, %v2855
        %v5379 = vmul.f32 %v5363, %v2855
        %v5380 = vadd.f32 %v5364, %v2877
        %v5381 = vadd.f32 %v5365, %v2877
        %v5382 = vadd.f32 %v5366, %v2877
        %v5383 = vadd.f32 %v5367, %v2877
        %v5384 = vadd.f32 %v5368, %v2877
        %v5385 = vadd.f32 %v5369, %v2877
        %v5386 = vadd.f32 %v5370, %v2877
        %v5387 = vadd.f32 %v5371, %v2877
        %v5388 = vadd.f32 %v5372, %v2877
        %v5389 = vadd.f32 %v5373, %v2877
        %v5390 = vadd.f32 %v5374, %v2877
        %v5391 = vadd.f32 %v5375, %v2877
        %v5392 = vadd.f32 %v5376, %v2877
        %v5393 = vadd.f32 %v5377, %v2877
        %v5394 = vadd.f32 %v5378, %v2877
        %v5395 = vadd.f32 %v5379, %v2877
        %v5396 = vpack.c.bf16 %v5381, %v5380
        %v5397 = vpack.c.bf16 %v5383, %v5382
        %v5398 = vpack.c.bf16 %v5385, %v5384
        %v5399 = vpack.c.bf16 %v5387, %v5386
        %v5400 = vpack.c.bf16 %v5389, %v5388
        %v5401 = vpack.c.bf16 %v5391, %v5390
        %v5402 = vpack.c.bf16 %v5393, %v5392
        %v5403 = vpack.c.bf16 %v5395, %v5394
        %v5412 = vunpack.c.l.b16 %v5396
        %v5413 = vunpack.c.h.b16 %v5396
        %v5414 = vunpack.c.l.b16 %v5397
        %v5415 = vunpack.c.h.b16 %v5397
        %v5416 = vunpack.c.l.b16 %v5398
        %v5417 = vunpack.c.h.b16 %v5398
        %v5418 = vunpack.c.l.b16 %v5399
        %v5419 = vunpack.c.h.b16 %v5399
        %v5420 = vunpack.c.l.b16 %v5400
        %v5421 = vunpack.c.h.b16 %v5400
        %v5422 = vunpack.c.l.b16 %v5401
        %v5423 = vunpack.c.h.b16 %v5401
        %v5424 = vunpack.c.l.b16 %v5402
        %v5425 = vunpack.c.h.b16 %v5402
        %v5426 = vunpack.c.l.b16 %v5403
        %v5427 = vunpack.c.h.b16 %v5403
        %v5428 = vpack.c.b16 %v5412, %v5412
        %v5429 = vpack.c.b16 %v5413, %v5413
        %v5430 = vpack.c.b16 %v5414, %v5414
        %v5431 = vpack.c.b16 %v5415, %v5415
        %v5432 = vpack.c.b16 %v5416, %v5416
        %v5433 = vpack.c.b16 %v5417, %v5417
        %v5434 = vpack.c.b16 %v5418, %v5418
        %v5435 = vpack.c.b16 %v5419, %v5419
        %v5436 = vpack.c.b16 %v5420, %v5420
        %v5437 = vpack.c.b16 %v5421, %v5421
        %v5438 = vpack.c.b16 %v5422, %v5422
        %v5439 = vpack.c.b16 %v5423, %v5423
        %v5440 = vpack.c.b16 %v5424, %v5424
        %v5441 = vpack.c.b16 %v5425, %v5425
        %v5442 = vpack.c.b16 %v5426, %v5426
        %v5443 = vpack.c.b16 %v5427, %v5427
        %s5460 = scalar_lea.vmem %s751, 64 [#allocation8]
        %5461 = vst [vmem:[%s5460] sm:$0xf] %v5428
        %5462 = vst [vmem:[%s5460 + $0x4] sm:$0xf] %v5429
        %5463 = vst [vmem:[%s5460 + $0x8] sm:$0xf] %v5430
        %5464 = vst [vmem:[%s5460 + $0xc] sm:$0xf] %v5431
        %5465 = vst [vmem:[%s5460 + $0x10] sm:$0xf] %v5432
        %5466 = vst [vmem:[%s5460 + $0x14] sm:$0xf] %v5433
        %5467 = vst [vmem:[%s5460 + $0x18] sm:$0xf] %v5434
        %5468 = vst [vmem:[%s5460 + $0x1c] sm:$0xf] %v5435
        %5469 = vst [vmem:[%s5460 + $0x20] sm:$0xf] %v5436
        %5470 = vst [vmem:[%s5460 + $0x24] sm:$0xf] %v5437
        %5471 = vst [vmem:[%s5460 + $0x28] sm:$0xf] %v5438
        %5472 = vst [vmem:[%s5460 + $0x2c] sm:$0xf] %v5439
        %5473 = vst [vmem:[%s5460 + $0x30] sm:$0xf] %v5440
        %5474 = vst [vmem:[%s5460 + $0x34] sm:$0xf] %v5441
        %5475 = vst [vmem:[%s5460 + $0x38] sm:$0xf] %v5442
        %5476 = vst [vmem:[%s5460 + $0x3c] sm:$0xf] %v5443
        %5477 = vxpose.xlu0.b32.start [1/16] %v5380, 128
        %5478 = vxpose.xlu0.b32.cont [2/16] %v5381, 128
        %5479 = vxpose.xlu0.b32.cont [3/16] %v5382, 128
        %5480 = vxpose.xlu0.b32.cont [4/16] %v5383, 128
        %5481 = vxpose.xlu0.b32.cont [5/16] %v5384, 128
        %5482 = vxpose.xlu0.b32.cont [6/16] %v5385, 128
        %5483 = vxpose.xlu0.b32.cont [7/16] %v5386, 128
        %5484 = vxpose.xlu0.b32.cont [8/16] %v5387, 128
        %5485 = vxpose.xlu0.b32.cont [9/16] %v5388, 128
        %5486 = vxpose.xlu0.b32.cont [10/16] %v5389, 128
        %5487 = vxpose.xlu0.b32.cont [11/16] %v5390, 128
        %5488 = vxpose.xlu0.b32.cont [12/16] %v5391, 128
        %5489 = vxpose.xlu0.b32.cont [13/16] %v5392, 128
        %5490 = vxpose.xlu0.b32.cont [14/16] %v5393, 128
        %5491 = vxpose.xlu0.b32.cont [15/16] %v5394, 128
        %5492 = vxpose.xlu0.b32.end [16/16] %v5395, 128
        %v5493 = vpop.trf.xlu0
        %v5494 = vpop.trf.xlu0
        %v5495 = vpop.trf.xlu0
        %v5496 = vpop.trf.xlu0
        %v5497 = vpop.trf.xlu0
        %v5498 = vpop.trf.xlu0
        %v5499 = vpop.trf.xlu0
        %v5500 = vpop.trf.xlu0
        %v5501 = vpop.trf.xlu0
        %v5502 = vpop.trf.xlu0
        %v5503 = vpop.trf.xlu0
        %v5504 = vpop.trf.xlu0
        %v5505 = vpop.trf.xlu0
        %v5506 = vpop.trf.xlu0
        %v5507 = vpop.trf.xlu0
        %v5508 = vpop.trf.xlu0
        %v5509 = vmul.f32 %v5493, %v806
        %v5510 = vmul.f32 %v5494, %v811
        %v5511 = vmul.f32 %v5495, %v816
        %v5512 = vmul.f32 %v5496, %v821
        %v5513 = vmul.f32 %v5497, %v826
        %v5514 = vmul.f32 %v5498, %v831
        %v5515 = vmul.f32 %v5499, %v836
        %v5516 = vmul.f32 %v5500, %v841
        %v5517 = vmul.f32 %v5501, %v846
        %v5518 = vmul.f32 %v5502, %v851
        %v5519 = vmul.f32 %v5503, %v856
        %v5520 = vmul.f32 %v5504, %v861
        %v5521 = vmul.f32 %v5505, %v866
        %v5522 = vmul.f32 %v5506, %v871
        %v5523 = vmul.f32 %v5507, %v876
        %v5524 = vmul.f32 %v5508, %v881
        %v5525 = vadd.f32 %v5509, %v5510
        %v5526 = vadd.f32 %v5525, %v5511
        %v5527 = vadd.f32 %v5526, %v5512
        %v5528 = vadd.f32 %v5527, %v5513
        %v5529 = vadd.f32 %v5528, %v5514
        %v5530 = vadd.f32 %v5529, %v5515
        %v5531 = vadd.f32 %v5530, %v5516
        %v5532 = vadd.f32 %v5531, %v5517
        %v5533 = vadd.f32 %v5532, %v5518
        %v5534 = vadd.f32 %v5533, %v5519
        %v5535 = vadd.f32 %v5534, %v5520
        %v5536 = vadd.f32 %v5535, %v5521
        %v5537 = vadd.f32 %v5536, %v5522
        %v5538 = vadd.f32 %v5537, %v5523
        %v5539 = vadd.f32 %v5538, %v5524
        %v5540 = vrot.slane %v5539, 4
        %v5541 = vadd.f32 %v5539, %v5540
        %v5542 = vrot.slane %v5541, 2
        %v5543 = vadd.f32 %v5541, %v5542
        %v5544 = vrot.slane %v5543, 1
        %v5545 = vadd.f32 %v5543, %v5544
        %5546 = vadd.xlane.f32.xlu0 %v5157
        %v5547 = vpop.xlane.xlu0 %5546
        %5548 = vadd.xlane.f32.xlu0 %v5159
        %v5549 = vpop.xlane.xlu0 %5548
        %5550 = vadd.xlane.f32.xlu0 %v5161
        %v5551 = vpop.xlane.xlu0 %5550
        %5552 = vadd.xlane.f32.xlu0 %v5163
        %v5553 = vpop.xlane.xlu0 %5552
        %5554 = vadd.xlane.f32.xlu0 %v5165
        %v5555 = vpop.xlane.xlu0 %5554
        %5556 = vadd.xlane.f32.xlu0 %v5167
        %v5557 = vpop.xlane.xlu0 %5556
        %5558 = vadd.xlane.f32.xlu0 %v5169
        %v5559 = vpop.xlane.xlu0 %5558
        %5560 = vadd.xlane.f32.xlu0 %v5171
        %v5561 = vpop.xlane.xlu0 %5560
        %5562 = vadd.xlane.f32.xlu0 %v5173
        %v5563 = vpop.xlane.xlu0 %5562
        %5564 = vadd.xlane.f32.xlu0 %v5175
        %v5565 = vpop.xlane.xlu0 %5564
        %5566 = vadd.xlane.f32.xlu0 %v5177
        %v5567 = vpop.xlane.xlu0 %5566
        %5568 = vadd.xlane.f32.xlu0 %v5179
        %v5569 = vpop.xlane.xlu0 %5568
        %5570 = vadd.xlane.f32.xlu0 %v5181
        %v5571 = vpop.xlane.xlu0 %5570
        %5572 = vadd.xlane.f32.xlu0 %v5183
        %v5573 = vpop.xlane.xlu0 %5572
        %5574 = vadd.xlane.f32.xlu0 %v5185
        %v5575 = vpop.xlane.xlu0 %5574
        %5576 = vadd.xlane.f32.xlu0 %v5187
        %v5577 = vpop.xlane.xlu0 %5576
        %v5578 = vmul.f32 %v5547, %v1543
        %v5579 = vmul.f32 %v5549, %v1543
        %v5580 = vmul.f32 %v5551, %v1543
        %v5581 = vmul.f32 %v5553, %v1543
        %v5582 = vmul.f32 %v5555, %v1543
        %v5583 = vmul.f32 %v5557, %v1543
        %v5584 = vmul.f32 %v5559, %v1543
        %v5585 = vmul.f32 %v5561, %v1543
        %v5586 = vmul.f32 %v5563, %v1543
        %v5587 = vmul.f32 %v5565, %v1543
        %v5588 = vmul.f32 %v5567, %v1543
        %v5589 = vmul.f32 %v5569, %v1543
        %v5590 = vmul.f32 %v5571, %v1543
        %v5591 = vmul.f32 %v5573, %v1543
        %v5592 = vmul.f32 %v5575, %v1543
        %v5593 = vmul.f32 %v5577, %v1543
        %v5594 = vsub.f32 %v5157, %v5578
        %v5595 = vsub.f32 %v5159, %v5579
        %v5596 = vsub.f32 %v5161, %v5580
        %v5597 = vsub.f32 %v5163, %v5581
        %v5598 = vsub.f32 %v5165, %v5582
        %v5599 = vsub.f32 %v5167, %v5583
        %v5600 = vsub.f32 %v5169, %v5584
        %v5601 = vsub.f32 %v5171, %v5585
        %v5602 = vsub.f32 %v5173, %v5586
        %v5603 = vsub.f32 %v5175, %v5587
        %v5604 = vsub.f32 %v5177, %v5588
        %v5605 = vsub.f32 %v5179, %v5589
        %v5606 = vsub.f32 %v5181, %v5590
        %v5607 = vsub.f32 %v5183, %v5591
        %v5608 = vsub.f32 %v5185, %v5592
        %v5609 = vsub.f32 %v5187, %v5593
        %v5610 = vmul.f32 %v5594, %v5594
        %v5611 = vmul.f32 %v5595, %v5595
        %v5612 = vmul.f32 %v5596, %v5596
        %v5613 = vmul.f32 %v5597, %v5597
        %v5614 = vmul.f32 %v5598, %v5598
        %v5615 = vmul.f32 %v5599, %v5599
        %v5616 = vmul.f32 %v5600, %v5600
        %v5617 = vmul.f32 %v5601, %v5601
        %v5618 = vmul.f32 %v5602, %v5602
        %v5619 = vmul.f32 %v5603, %v5603
        %v5620 = vmul.f32 %v5604, %v5604
        %v5621 = vmul.f32 %v5605, %v5605
        %v5622 = vmul.f32 %v5606, %v5606
        %v5623 = vmul.f32 %v5607, %v5607
        %v5624 = vmul.f32 %v5608, %v5608
        %v5625 = vmul.f32 %v5609, %v5609
        %5626 = vadd.xlane.f32.xlu0 %v5610
        %v5627 = vpop.xlane.xlu0 %5626
        %5628 = vadd.xlane.f32.xlu0 %v5611
        %v5629 = vpop.xlane.xlu0 %5628
        %5630 = vadd.xlane.f32.xlu0 %v5612
        %v5631 = vpop.xlane.xlu0 %5630
        %5632 = vadd.xlane.f32.xlu0 %v5613
        %v5633 = vpop.xlane.xlu0 %5632
        %5634 = vadd.xlane.f32.xlu0 %v5614
        %v5635 = vpop.xlane.xlu0 %5634
        %5636 = vadd.xlane.f32.xlu0 %v5615
        %v5637 = vpop.xlane.xlu0 %5636
        %5638 = vadd.xlane.f32.xlu0 %v5616
        %v5639 = vpop.xlane.xlu0 %5638
        %5640 = vadd.xlane.f32.xlu0 %v5617
        %v5641 = vpop.xlane.xlu0 %5640
        %5642 = vadd.xlane.f32.xlu0 %v5618
        %v5643 = vpop.xlane.xlu0 %5642
        %5644 = vadd.xlane.f32.xlu0 %v5619
        %v5645 = vpop.xlane.xlu0 %5644
        %5646 = vadd.xlane.f32.xlu0 %v5620
        %v5647 = vpop.xlane.xlu0 %5646
        %5648 = vadd.xlane.f32.xlu0 %v5621
        %v5649 = vpop.xlane.xlu0 %5648
        %5650 = vadd.xlane.f32.xlu0 %v5622
        %v5651 = vpop.xlane.xlu0 %5650
        %5652 = vadd.xlane.f32.xlu0 %v5623
        %v5653 = vpop.xlane.xlu0 %5652
        %5654 = vadd.xlane.f32.xlu0 %v5624
        %v5655 = vpop.xlane.xlu0 %5654
        %5656 = vadd.xlane.f32.xlu0 %v5625
        %v5657 = vpop.xlane.xlu0 %5656
        %v5658 = vmul.f32 %v5627, %v1543
        %v5659 = vmul.f32 %v5629, %v1543
        %v5660 = vmul.f32 %v5631, %v1543
        %v5661 = vmul.f32 %v5633, %v1543
        %v5662 = vmul.f32 %v5635, %v1543
        %v5663 = vmul.f32 %v5637, %v1543
        %v5664 = vmul.f32 %v5639, %v1543
        %v5665 = vmul.f32 %v5641, %v1543
        %v5666 = vmul.f32 %v5643, %v1543
        %v5667 = vmul.f32 %v5645, %v1543
        %v5668 = vmul.f32 %v5647, %v1543
        %v5669 = vmul.f32 %v5649, %v1543
        %v5670 = vmul.f32 %v5651, %v1543
        %v5671 = vmul.f32 %v5653, %v1543
        %v5672 = vmul.f32 %v5655, %v1543
        %v5673 = vmul.f32 %v5657, %v1543
        %v5674 = vadd.f32 %v5658, 1e-05
        %v5675 = vadd.f32 %v5659, 1e-05
        %v5676 = vadd.f32 %v5660, 1e-05
        %v5677 = vadd.f32 %v5661, 1e-05
        %v5678 = vadd.f32 %v5662, 1e-05
        %v5679 = vadd.f32 %v5663, 1e-05
        %v5680 = vadd.f32 %v5664, 1e-05
        %v5681 = vadd.f32 %v5665, 1e-05
        %v5682 = vadd.f32 %v5666, 1e-05
        %v5683 = vadd.f32 %v5667, 1e-05
        %v5684 = vadd.f32 %v5668, 1e-05
        %v5685 = vadd.f32 %v5669, 1e-05
        %v5686 = vadd.f32 %v5670, 1e-05
        %v5687 = vadd.f32 %v5671, 1e-05
        %v5688 = vadd.f32 %v5672, 1e-05
        %v5689 = vadd.f32 %v5673, 1e-05
        %v5690 = vrsqrt.pop %v5674
        %v5691 = vrsqrt.pop %v5675
        %v5692 = vrsqrt.pop %v5676
        %v5693 = vrsqrt.pop %v5677
        %v5694 = vrsqrt.pop %v5678
        %v5695 = vrsqrt.pop %v5679
        %v5696 = vrsqrt.pop %v5680
        %v5697 = vrsqrt.pop %v5681
        %v5698 = vrsqrt.pop %v5682
        %v5699 = vrsqrt.pop %v5683
        %v5700 = vrsqrt.pop %v5684
        %v5701 = vrsqrt.pop %v5685
        %v5702 = vrsqrt.pop %v5686
        %v5703 = vrsqrt.pop %v5687
        %v5704 = vrsqrt.pop %v5688
        %v5705 = vrsqrt.pop %v5689
        %v5706 = vmul.f32 %v5594, %v5690
        %v5707 = vmul.f32 %v5595, %v5691
        %v5708 = vmul.f32 %v5596, %v5692
        %v5709 = vmul.f32 %v5597, %v5693
        %v5710 = vmul.f32 %v5598, %v5694
        %v5711 = vmul.f32 %v5599, %v5695
        %v5712 = vmul.f32 %v5600, %v5696
        %v5713 = vmul.f32 %v5601, %v5697
        %v5714 = vmul.f32 %v5602, %v5698
        %v5715 = vmul.f32 %v5603, %v5699
        %v5716 = vmul.f32 %v5604, %v5700
        %v5717 = vmul.f32 %v5605, %v5701
        %v5718 = vmul.f32 %v5606, %v5702
        %v5719 = vmul.f32 %v5607, %v5703
        %v5720 = vmul.f32 %v5608, %v5704
        %v5721 = vmul.f32 %v5609, %v5705
        %v5722 = vmul.f32 %v5706, %v2855
        %v5723 = vmul.f32 %v5707, %v2855
        %v5724 = vmul.f32 %v5708, %v2855
        %v5725 = vmul.f32 %v5709, %v2855
        %v5726 = vmul.f32 %v5710, %v2855
        %v5727 = vmul.f32 %v5711, %v2855
        %v5728 = vmul.f32 %v5712, %v2855
        %v5729 = vmul.f32 %v5713, %v2855
        %v5730 = vmul.f32 %v5714, %v2855
        %v5731 = vmul.f32 %v5715, %v2855
        %v5732 = vmul.f32 %v5716, %v2855
        %v5733 = vmul.f32 %v5717, %v2855
        %v5734 = vmul.f32 %v5718, %v2855
        %v5735 = vmul.f32 %v5719, %v2855
        %v5736 = vmul.f32 %v5720, %v2855
        %v5737 = vmul.f32 %v5721, %v2855
        %v5738 = vadd.f32 %v5722, %v2877
        %v5739 = vadd.f32 %v5723, %v2877
        %v5740 = vadd.f32 %v5724, %v2877
        %v5741 = vadd.f32 %v5725, %v2877
        %v5742 = vadd.f32 %v5726, %v2877
        %v5743 = vadd.f32 %v5727, %v2877
        %v5744 = vadd.f32 %v5728, %v2877
        %v5745 = vadd.f32 %v5729, %v2877
        %v5746 = vadd.f32 %v5730, %v2877
        %v5747 = vadd.f32 %v5731, %v2877
        %v5748 = vadd.f32 %v5732, %v2877
        %v5749 = vadd.f32 %v5733, %v2877
        %v5750 = vadd.f32 %v5734, %v2877
        %v5751 = vadd.f32 %v5735, %v2877
        %v5752 = vadd.f32 %v5736, %v2877
        %v5753 = vadd.f32 %v5737, %v2877
        %v5754 = vpack.c.bf16 %v5739, %v5738
        %v5755 = vpack.c.bf16 %v5741, %v5740
        %v5756 = vpack.c.bf16 %v5743, %v5742
        %v5757 = vpack.c.bf16 %v5745, %v5744
        %v5758 = vpack.c.bf16 %v5747, %v5746
        %v5759 = vpack.c.bf16 %v5749, %v5748
        %v5760 = vpack.c.bf16 %v5751, %v5750
        %v5761 = vpack.c.bf16 %v5753, %v5752
        %v5770 = vunpack.c.l.b16 %v5754
        %v5771 = vunpack.c.h.b16 %v5754
        %v5772 = vunpack.c.l.b16 %v5755
        %v5773 = vunpack.c.h.b16 %v5755
        %v5774 = vunpack.c.l.b16 %v5756
        %v5775 = vunpack.c.h.b16 %v5756
        %v5776 = vunpack.c.l.b16 %v5757
        %v5777 = vunpack.c.h.b16 %v5757
        %v5778 = vunpack.c.l.b16 %v5758
        %v5779 = vunpack.c.h.b16 %v5758
        %v5780 = vunpack.c.l.b16 %v5759
        %v5781 = vunpack.c.h.b16 %v5759
        %v5782 = vunpack.c.l.b16 %v5760
        %v5783 = vunpack.c.h.b16 %v5760
        %v5784 = vunpack.c.l.b16 %v5761
        %v5785 = vunpack.c.h.b16 %v5761
        %v5786 = vpack.c.b16 %v5770, %v5770
        %v5787 = vpack.c.b16 %v5771, %v5771
        %v5788 = vpack.c.b16 %v5772, %v5772
        %v5789 = vpack.c.b16 %v5773, %v5773
        %v5790 = vpack.c.b16 %v5774, %v5774
        %v5791 = vpack.c.b16 %v5775, %v5775
        %v5792 = vpack.c.b16 %v5776, %v5776
        %v5793 = vpack.c.b16 %v5777, %v5777
        %v5794 = vpack.c.b16 %v5778, %v5778
        %v5795 = vpack.c.b16 %v5779, %v5779
        %v5796 = vpack.c.b16 %v5780, %v5780
        %v5797 = vpack.c.b16 %v5781, %v5781
        %v5798 = vpack.c.b16 %v5782, %v5782
        %v5799 = vpack.c.b16 %v5783, %v5783
        %v5800 = vpack.c.b16 %v5784, %v5784
        %v5801 = vpack.c.b16 %v5785, %v5785
        %s5818 = scalar_lea.vmem %s751, 192 [#allocation8]
        %5819 = vst [vmem:[%s5818] sm:$0xf] %v5786
        %5820 = vst [vmem:[%s5818 + $0x4] sm:$0xf] %v5787
        %5821 = vst [vmem:[%s5818 + $0x8] sm:$0xf] %v5788
        %5822 = vst [vmem:[%s5818 + $0xc] sm:$0xf] %v5789
        %5823 = vst [vmem:[%s5818 + $0x10] sm:$0xf] %v5790
        %5824 = vst [vmem:[%s5818 + $0x14] sm:$0xf] %v5791
        %5825 = vst [vmem:[%s5818 + $0x18] sm:$0xf] %v5792
        %5826 = vst [vmem:[%s5818 + $0x1c] sm:$0xf] %v5793
        %5827 = vst [vmem:[%s5818 + $0x20] sm:$0xf] %v5794
        %5828 = vst [vmem:[%s5818 + $0x24] sm:$0xf] %v5795
        %5829 = vst [vmem:[%s5818 + $0x28] sm:$0xf] %v5796
        %5830 = vst [vmem:[%s5818 + $0x2c] sm:$0xf] %v5797
        %5831 = vst [vmem:[%s5818 + $0x30] sm:$0xf] %v5798
        %5832 = vst [vmem:[%s5818 + $0x34] sm:$0xf] %v5799
        %5833 = vst [vmem:[%s5818 + $0x38] sm:$0xf] %v5800
        %5834 = vst [vmem:[%s5818 + $0x3c] sm:$0xf] %v5801
        %5835 = vxpose.xlu0.b32.start [1/16] %v5738, 128
        %5836 = vxpose.xlu0.b32.cont [2/16] %v5739, 128
        %5837 = vxpose.xlu0.b32.cont [3/16] %v5740, 128
        %5838 = vxpose.xlu0.b32.cont [4/16] %v5741, 128
        %5839 = vxpose.xlu0.b32.cont [5/16] %v5742, 128
        %5840 = vxpose.xlu0.b32.cont [6/16] %v5743, 128
        %5841 = vxpose.xlu0.b32.cont [7/16] %v5744, 128
        %5842 = vxpose.xlu0.b32.cont [8/16] %v5745, 128
        %5843 = vxpose.xlu0.b32.cont [9/16] %v5746, 128
        %5844 = vxpose.xlu0.b32.cont [10/16] %v5747, 128
        %5845 = vxpose.xlu0.b32.cont [11/16] %v5748, 128
        %5846 = vxpose.xlu0.b32.cont [12/16] %v5749, 128
        %5847 = vxpose.xlu0.b32.cont [13/16] %v5750, 128
        %5848 = vxpose.xlu0.b32.cont [14/16] %v5751, 128
        %5849 = vxpose.xlu0.b32.cont [15/16] %v5752, 128
        %5850 = vxpose.xlu0.b32.end [16/16] %v5753, 128
        %v5851 = vpop.trf.xlu0
        %v5852 = vpop.trf.xlu0
        %v5853 = vpop.trf.xlu0
        %v5854 = vpop.trf.xlu0
        %v5855 = vpop.trf.xlu0
        %v5856 = vpop.trf.xlu0
        %v5857 = vpop.trf.xlu0
        %v5858 = vpop.trf.xlu0
        %v5859 = vpop.trf.xlu0
        %v5860 = vpop.trf.xlu0
        %v5861 = vpop.trf.xlu0
        %v5862 = vpop.trf.xlu0
        %v5863 = vpop.trf.xlu0
        %v5864 = vpop.trf.xlu0
        %v5865 = vpop.trf.xlu0
        %v5866 = vpop.trf.xlu0
        %v5867 = vmul.f32 %v5851, %v806
        %v5868 = vmul.f32 %v5852, %v811
        %v5869 = vmul.f32 %v5853, %v816
        %v5870 = vmul.f32 %v5854, %v821
        %v5871 = vmul.f32 %v5855, %v826
        %v5872 = vmul.f32 %v5856, %v831
        %v5873 = vmul.f32 %v5857, %v836
        %v5874 = vmul.f32 %v5858, %v841
        %v5875 = vmul.f32 %v5859, %v846
        %v5876 = vmul.f32 %v5860, %v851
        %v5877 = vmul.f32 %v5861, %v856
        %v5878 = vmul.f32 %v5862, %v861
        %v5879 = vmul.f32 %v5863, %v866
        %v5880 = vmul.f32 %v5864, %v871
        %v5881 = vmul.f32 %v5865, %v876
        %v5882 = vmul.f32 %v5866, %v881
        %v5883 = vadd.f32 %v5867, %v5868
        %v5884 = vadd.f32 %v5883, %v5869
        %v5885 = vadd.f32 %v5884, %v5870
        %v5886 = vadd.f32 %v5885, %v5871
        %v5887 = vadd.f32 %v5886, %v5872
        %v5888 = vadd.f32 %v5887, %v5873
        %v5889 = vadd.f32 %v5888, %v5874
        %v5890 = vadd.f32 %v5889, %v5875
        %v5891 = vadd.f32 %v5890, %v5876
        %v5892 = vadd.f32 %v5891, %v5877
        %v5893 = vadd.f32 %v5892, %v5878
        %v5894 = vadd.f32 %v5893, %v5879
        %v5895 = vadd.f32 %v5894, %v5880
        %v5896 = vadd.f32 %v5895, %v5881
        %v5897 = vadd.f32 %v5896, %v5882
        %v5898 = vrot.slane %v5897, 4
        %v5899 = vadd.f32 %v5897, %v5898
        %v5900 = vrot.slane %v5899, 2
        %v5901 = vadd.f32 %v5899, %v5900
        %v5902 = vrot.slane %v5901, 1
        %v5903 = vadd.f32 %v5901, %v5902
        %v5904 = vsel %vm3402, %v5545, %v5903
        %v5905 = vadd.f32 %v5904, %v3404
        %s5906 = scalar_lea.vmem %s779, 2
        %5907 = vst [vmem:[%s5906] sm:$0x3] %v5905
        %s5908 = sand.u32 %s283, 1
        %s5909 = scalar_lea.sflag [#allocation6], %s5908
        %s5910 = sand.u32 %s283, 1
        %s5911 = smul.addr %s5910, 256
        %s5912 = scalar_lea.vmem [#allocation8], %s5911
        %s5913 = smul.u32 2, %s29
        %p5914 = scmp.lt.s32.totalorder %s5913, 3
        %s5915 = scalar_select %p5914, %s5913, 3
        %s5916 = smul.addr %s5915, 2
        %s5917 = scalar_lea.vmem %s12, %s5916
        // Predicated region
        $region107: #{lorcnn_predictor.1} parent=97 // pred_check
          %p5918 = pneg %p293
        $region108: #{lorcnn_predictor.1} parent=97 // pred_check_branch
          %5920 = sbr.rel (%p5918) target = $region110
        $region109: #{lorcnn_predictor.1} parent=97 // pred_region
          #allocation10 [shape = 'u32[6]{0}', space=smem, size = 0x18, scoped, tag = 'DMA stride descriptor']
          %s5921 = smul.u32 2, %s29
          %s5923 = ssub.s32 4096, 4096
          %5924 = vsyncadd %s5909, %s5923
          %s5925 = smul.addr %s5921, 16
          %s5926 = smul.addr %s5925, 64
          %s5927 = scalar_lea.hbm %s11, %s5926
          %s5929 = sshll.u32 1, 14
          %s5930 = sxor.u32 4294967295, %s5929
          %s5933 = sshll.u32 7, 18
          %s5934 = sxor.u32 4294967295, %s5933
          %s5935 = sand.u32 0, %s5934
          %s5937 = sor.u32 %s5935, 0
          %s5939 = sshll.u32 3, 24
          %s5940 = sxor.u32 4294967295, %s5939
          %s5941 = sand.u32 %s5937, %s5940
          %s5943 = sor.u32 %s5941, 0
          %s5944 = sshll.u32 %s5912, 4
          %s5945 = int_to_ptr.vmem [resolvable:$true] %s5944
          %5951 = sst [smem:[#allocation10]] 2048
          %s5952 = scalar_lea.smem [#allocation10], 1
          %5953 = sst [smem:[%s5952]] 4096
          %s5954 = scalar_lea.smem [#allocation10], 2
          %5955 = sst [smem:[%s5954]] 32
          %s5956 = scalar_lea.smem [#allocation10], 3
          %5957 = sst [smem:[%s5956]] 64
          %s5958 = scalar_lea.smem [#allocation10], 4
          %5959 = sst [smem:[%s5958]] 64
          %s5960 = scalar_lea.smem [#allocation10], 5
          %5961 = sst [smem:[%s5960]] 4
          %5963 = dma.general %s5945, 4096, %s5927, %s5909, [#allocation9], [#allocation10], %s5943, 0
        $region110: #{lorcnn_predictor.1} parent=97 // pred_fallthru
          _
        // Predicated region
        $region111: #{lorcnn_predictor.1} parent=97 // pred_check
          %p5964 = pneg %p319
        $region112: #{lorcnn_predictor.1} parent=97 // pred_check_branch
          %5966 = sbr.rel (%p5964) target = $region114
        $region113: #{lorcnn_predictor.1} parent=97 // pred_region
          %s5967 = smul.u32 2, %s29
        $region114: #{lorcnn_predictor.1} parent=97 // pred_fallthru
          _
      $region98: #{lorcnn_predictor.1} parent=5 // pred_fallthru
        _
      %p5968 = scmp.le.s32.totalorder 2, %s24
      // Predicated region
      $region115: #{lorcnn_predictor.1} parent=5 // pred_check
        %p5969 = pneg %p5968
      $region116: #{lorcnn_predictor.1} parent=5 // pred_check_branch
        %5971 = sbr.rel (%p5969) target = $region118
      $region117: #{lorcnn_predictor.1} parent=5 // pred_region
        %s5972 = ssub.s32 %s24, 2
        // Predicated region
        $region119: #{lorcnn_predictor.1} parent=117 // pred_check
          %p5973 = pneg %p299
        $region120: #{lorcnn_predictor.1} parent=117 // pred_check_branch
          %5975 = sbr.rel (%p5973) target = $region122
        $region121: #{lorcnn_predictor.1} parent=117 // pred_region
          %s5976 = sand.u32 %s284, 1
          %s5977 = scalar_lea.sflag [#allocation6], %s5976
          %s5978 = sand.u32 %s284, 1
          %s5979 = smul.addr %s5978, 256
          %s5980 = scalar_lea.vmem [#allocation8], %s5979
          %5981 = dma.done %s5977, 4096
        $region122: #{lorcnn_predictor.1} parent=117 // pred_fallthru
          _
        // Predicated region
        $region123: #{lorcnn_predictor.1} parent=117 // pred_check
          %p5982 = pneg %p325
        $region124: #{lorcnn_predictor.1} parent=117 // pred_check_branch
          %5984 = sbr.rel (%p5982) target = $region126
        $region125: #{lorcnn_predictor.1} parent=117 // pred_region
          %s5985 = smul.u32 2, %s30
          %p5986 = scmp.lt.s32.totalorder %s5985, 3
          %s5987 = scalar_select %p5986, %s5985, 3
          %s5988 = smul.addr %s5987, 2
          %s5989 = scalar_lea.vmem %s12, %s5988
        $region126: #{lorcnn_predictor.1} parent=117 // pred_fallthru
          _
      $region118: #{lorcnn_predictor.1} parent=5 // pred_fallthru
        _
    $region6: #{lorcnn_predictor.1} parent=1 // loop_footer
      %s28 = sadd.s32 1, %s24
    $region7: #{lorcnn_predictor.1} parent=1 // loop_footer_branch
      %23 = sbr.rel target = $region3
    $region8: #{lorcnn_predictor.1} parent=1 // loop_exit
      _
    %5990 = vsyncpa [#allocation6], 1
    %s5991 = scalar_lea.sflag [#allocation6], 1
    %5992 = vsyncpa %s5991, 1
    %5993 = vsyncpa [#allocation7], 1
    %s5994 = scalar_lea.sflag [#allocation7], 1
    %5995 = vsyncpa %s5994, 1

</llo_original>
